<compile_context>
chip_gen: v7x
topology: tpu7x:2x2x1
jax: 0.10.0
libtpu: 0.0.40
codegen_flags: <defaults>
</compile_context>

<pallas_src>
import functools

import jax
import jax.numpy as jnp
from jax.experimental import pallas as pl
from jax.experimental.pallas import tpu as pltpu


# ----------------------------------------------------------------------------
# In-kernel helpers
# ----------------------------------------------------------------------------
def _conv3x3_bias(ap, w_kflat, b):
    """3x3 conv (padding already present in `ap`) + bias.

    ap:      (H+2, W+2, Cin) f32 padded activation (value).
    w_kflat: (3, 3*Cin, Cout) bf16 weights; rows of w_kflat[kh] ordered (kw, cin).
    b:       (1, Cout) f32 bias.
    returns: (H*W, Cout) f32 pre-activation.
    """
    hp, wp, cin = ap.shape
    h, w = hp - 2, wp - 2
    acc = None
    for kh in range(3):
        rows = ap[kh:kh + h]                                      # (H, W+2, Cin)
        patch = jnp.concatenate(
            [rows[:, kw:kw + w, :] for kw in range(3)], axis=-1)  # (H, W, 3*Cin)
        patch = patch.reshape(h * w, 3 * cin).astype(jnp.bfloat16)
        d = jnp.dot(patch, w_kflat[kh], preferred_element_type=jnp.float32)
        acc = d if acc is None else acc + d                       # f32 accumulate
    return acc + b                                                # (H*W, Cout) f32


def _sfe_kernel(x_ref, hw_ref, hb_ref, rw_ref, rb_ref, tw_ref, tb_ref,
                o_ref, xpad_ref, apad_ref, *, num_res_blocks, res_scale):
    """Whole SFE forward for one batch element; activation never leaves VMEM."""
    _, h, w, f = o_ref.shape

    # Zero the padded scratch buffers (borders stay zero; interiors overwritten).
    xpad_ref[...] = jnp.zeros_like(xpad_ref)
    apad_ref[...] = jnp.zeros_like(apad_ref)

    # ---- head: y = relu(conv_head(x)) ---------------------------------------
    xpad_ref[1:h + 1, 1:w + 1, :] = x_ref[0].astype(jnp.float32)
    cur = _conv3x3_bias(xpad_ref[...], hw_ref[...], hb_ref[...])   # (H*W, F) f32
    cur = jnp.maximum(cur, 0.0)
    x1 = cur                                                       # tail skip

    # ---- ResBlocks: y = conv2(relu(conv1(y))) * res_scale + y ----------------
    for i in range(num_res_blocks):
        apad_ref[1:h + 1, 1:w + 1, :] = cur.reshape(h, w, f)
        t = _conv3x3_bias(apad_ref[...], rw_ref[i, 0], rb_ref[i, 0])
        t = jnp.maximum(t, 0.0)
        # residual is kept as the value `cur`, so the pad buffer can be reused
        apad_ref[1:h + 1, 1:w + 1, :] = t.reshape(h, w, f)
        y = _conv3x3_bias(apad_ref[...], rw_ref[i, 1], rb_ref[i, 1])
        cur = y * res_scale + cur

    # ---- tail: y = conv_tail(y) + x1 -----------------------------------------
    apad_ref[1:h + 1, 1:w + 1, :] = cur.reshape(h, w, f)
    y = _conv3x3_bias(apad_ref[...], tw_ref[...], tb_ref[...])
    out = y + x1
    o_ref[...] = out.reshape(1, h, w, f).astype(o_ref.dtype)


# ----------------------------------------------------------------------------
# Wrapper
# ----------------------------------------------------------------------------
def sfe_forward(params, x_nchw, num_res_blocks, res_scale):
    """x_nchw: (N, 3, H, W) float32 -> (N, n_feats, H, W) float32."""
    assert num_res_blocks >= 1
    x = jnp.transpose(x_nchw, (0, 2, 3, 1)).astype(jnp.float32)    # NCHW -> NHWC
    n, h, w, cin = x.shape

    hw, hb = params["conv_head"]
    f = hw.shape[-1]
    # Flatten (kh, kw, cin) -> (kh, kw*cin) so each kh tap is one K=3*Cin matmul.
    head_w = hw.reshape(3, 3 * cin, f).astype(jnp.bfloat16)
    head_b = hb.reshape(1, f).astype(jnp.float32)

    rws, rbs = [], []
    for (w1, b1), (w2, b2) in params["RBs"]:
        rws.append(jnp.stack([w1.reshape(3, 3 * f, f), w2.reshape(3, 3 * f, f)]))
        rbs.append(jnp.stack([b1.reshape(1, f), b2.reshape(1, f)]))
    rb_w = jnp.stack(rws).astype(jnp.bfloat16)                     # (R, 2, 3, 3F, F)
    rb_b = jnp.stack(rbs).astype(jnp.float32)                      # (R, 2, 1, F)

    tw, tb = params["conv_tail"]
    tail_w = tw.reshape(3, 3 * f, f).astype(jnp.bfloat16)
    tail_b = tb.reshape(1, f).astype(jnp.float32)

    kernel = functools.partial(_sfe_kernel,
                               num_res_blocks=num_res_blocks,
                               res_scale=float(res_scale))

    # Whole-image blocks are fine at these sizes; at real TTSR resolutions the H
    # axis should be halo-tiled (H_tile+2) so blocks stay within v7x's 64 MiB VMEM.
    out = pl.pallas_call(
        kernel,
        out_shape=jax.ShapeDtypeStruct((n, h, w, f), jnp.float32),
        grid=(n,),
        in_specs=[
            pl.BlockSpec((1, h, w, cin), lambda i: (i, 0, 0, 0)),          # x
            pl.BlockSpec((3, 3 * cin, f), lambda i: (0, 0, 0)),            # head W
            pl.BlockSpec((1, f), lambda i: (0, 0)),                        # head b
            pl.BlockSpec((num_res_blocks, 2, 3, 3 * f, f),
                         lambda i: (0, 0, 0, 0, 0)),                       # RB W
            pl.BlockSpec((num_res_blocks, 2, 1, f),
                         lambda i: (0, 0, 0, 0)),                          # RB b
            pl.BlockSpec((3, 3 * f, f), lambda i: (0, 0, 0)),              # tail W
            pl.BlockSpec((1, f), lambda i: (0, 0)),                        # tail b
        ],
        out_specs=pl.BlockSpec((1, h, w, f), lambda i: (i, 0, 0, 0)),
        scratch_shapes=[
            pltpu.VMEM((h + 2, w + 2, cin), jnp.float32),   # padded head input
            pltpu.VMEM((h + 2, w + 2, f), jnp.float32),     # padded activation
        ],
        compiler_params=pltpu.CompilerParams(
            dimension_semantics=("parallel",)),
    )(x, head_w, head_b, rb_w, rb_b, tail_w, tail_b)

    return jnp.transpose(out, (0, 3, 1, 2))                       # NHWC -> NCHW


# ----------------------------------------------------------------------------
# Parameters and pure-JAX reference (for a loose sanity check)
# ----------------------------------------------------------------------------
def init_sfe_params(key, num_res_blocks, n_feats):
    """Deterministic synthetic parameters (weights in HWIO layout)."""
    def conv_params(k, cin, cout):
        kw_, kb_ = jax.random.split(k)
        w = jax.random.normal(kw_, (3, 3, cin, cout), jnp.float32) * 0.05
        b = jax.random.normal(kb_, (cout,), jnp.float32) * 0.05
        return w, b

    keys = jax.random.split(key, 2 + 2 * num_res_blocks)
    params = {"conv_head": conv_params(keys[0], 3, n_feats), "RBs": []}
    for i in range(num_res_blocks):
        c1 = conv_params(keys[1 + 2 * i], n_feats, n_feats)
        c2 = conv_params(keys[2 + 2 * i], n_feats, n_feats)
        params["RBs"].append((c1, c2))
    params["conv_tail"] = conv_params(keys[-1], n_feats, n_feats)
    return params


def _sfe_reference(params, x_nchw, num_res_blocks, res_scale):
    def conv(x, w, b):
        y = jax.lax.conv_general_dilated(
            x, w, window_strides=(1, 1), padding="SAME",
            dimension_numbers=("NHWC", "HWIO", "NHWC"))
        return y + b

    x = jnp.transpose(x_nchw, (0, 2, 3, 1))
    hw, hb = params["conv_head"]
    x = jax.nn.relu(conv(x, hw, hb))
    x1 = x
    for (w1, b1), (w2, b2) in params["RBs"]:
        t = jax.nn.relu(conv(x, w1, b1))
        x = conv(t, w2, b2) * res_scale + x
    tw, tb = params["conv_tail"]
    x = conv(x, tw, tb) + x1
    return jnp.transpose(x, (0, 3, 1, 2))


# ----------------------------------------------------------------------------
if __name__ == "__main__":
    num_res_blocks = 2
    n_feats = 32
    res_scale = 1.0

    key = jax.random.PRNGKey(0)
    k_params, k_x = jax.random.split(key)

    params = init_sfe_params(k_params, num_res_blocks, n_feats)
    x = jax.random.normal(k_x, (2, 3, 16, 16), jnp.float32)   # NCHW like PyTorch

    out = sfe_forward(params, x, num_res_blocks, res_scale)
    out = jax.block_until_ready(out)

    assert out.shape == (2, n_feats, 16, 16), out.shape
    assert bool(jnp.all(jnp.isfinite(out)))

    # Loose numerical sanity check vs. a pure-JAX reference (bf16 MXU inputs in the
    # Pallas kernel introduce small, bounded deviations from the f32 reference).
    ref = _sfe_reference(params, x, num_res_blocks, res_scale)
    assert bool(jnp.allclose(out, ref, rtol=5e-2, atol=5e-2))

    print("KERNEL_OK")
</pallas_src>

<mosaic_0001>
module attributes {stable_mosaic.version = 11 : i64} {
  func.func @_sfe_kernel(%arg0: i32, %arg1: memref<1x16x16x3xf32, #tpu.memory_space<vmem>>, %arg2: memref<3x9x32xbf16, #tpu.memory_space<vmem>>, %arg3: memref<1x32xf32, #tpu.memory_space<vmem>>, %arg4: memref<2x2x3x96x32xbf16, #tpu.memory_space<vmem>>, %arg5: memref<2x2x1x32xf32, #tpu.memory_space<vmem>>, %arg6: memref<3x96x32xbf16, #tpu.memory_space<vmem>>, %arg7: memref<1x32xf32, #tpu.memory_space<vmem>>, %arg8: memref<1x16x16x32xf32, #tpu.memory_space<vmem>>, %arg9: memref<18x18x3xf32, #tpu.memory_space<vmem>>, %arg10: memref<18x18x32xf32, #tpu.memory_space<vmem>>) attributes {dimension_semantics = [#tpu.dimension_semantics<parallel>], iteration_bounds = array<i64: 2>, scalar_prefetch = 0 : i64, scratch_operands = 2 : i64, tpu.core_type = #tpu.core_type<tc>, window_params = [{transform_indices = @transform_0, window_bounds = array<i64: 1, 16, 16, 3>}, {pipeline_mode = #tpu.pipeline_mode<synchronous>, transform_indices = @transform_1, window_bounds = array<i64: 3, 9, 32>}, {pipeline_mode = #tpu.pipeline_mode<synchronous>, transform_indices = @transform_2, window_bounds = array<i64: 1, 32>}, {pipeline_mode = #tpu.pipeline_mode<synchronous>, transform_indices = @transform_3, window_bounds = array<i64: 2, 2, 3, 96, 32>}, {pipeline_mode = #tpu.pipeline_mode<synchronous>, transform_indices = @transform_4, window_bounds = array<i64: 2, 2, 1, 32>}, {pipeline_mode = #tpu.pipeline_mode<synchronous>, transform_indices = @transform_5, window_bounds = array<i64: 3, 96, 32>}, {pipeline_mode = #tpu.pipeline_mode<synchronous>, transform_indices = @transform_6, window_bounds = array<i64: 1, 32>}, {transform_indices = @transform_7, window_bounds = array<i64: 1, 16, 16, 32>}]} {
    %cst = arith.constant 0.000000e+00 : f32
    %0 = vector.broadcast %cst : f32 to vector<18x18x3xf32>
    %c0 = arith.constant 0 : index
    %c0_0 = arith.constant 0 : index
    %c0_1 = arith.constant 0 : index
    %1 = vector.load %arg9[%c0, %c0_0, %c0_1] : memref<18x18x3xf32, #tpu.memory_space<vmem>>, vector<18x18x3xf32>
    tpu.vector_store %arg9[%c0, %c0_0, %c0_1], %0 {strides = array<i32>} : memref<18x18x3xf32, #tpu.memory_space<vmem>>, vector<18x18x3xf32>,
    %cst_2 = arith.constant 0.000000e+00 : f32
    %2 = vector.broadcast %cst_2 : f32 to vector<18x18x32xf32>
    %c0_3 = arith.constant 0 : index
    %c0_4 = arith.constant 0 : index
    %c0_5 = arith.constant 0 : index
    %3 = vector.load %arg10[%c0_3, %c0_4, %c0_5] : memref<18x18x32xf32, #tpu.memory_space<vmem>>, vector<18x18x32xf32>
    tpu.vector_store %arg10[%c0_3, %c0_4, %c0_5], %2 {strides = array<i32>} : memref<18x18x32xf32, #tpu.memory_space<vmem>>, vector<18x18x32xf32>,
    %c0_6 = arith.constant 0 : index
    %c0_7 = arith.constant 0 : index
    %c0_8 = arith.constant 0 : index
    %c0_9 = arith.constant 0 : index
    %4 = vector.load %arg1[%c0_6, %c0_7, %c0_8, %c0_9] : memref<1x16x16x3xf32, #tpu.memory_space<vmem>>, vector<1x16x16x3xf32>
    %5 = vector.shape_cast %4 : vector<1x16x16x3xf32> to vector<16x16x3xf32>
    %c1 = arith.constant 1 : index
    %c1_10 = arith.constant 1 : index
    %c0_11 = arith.constant 0 : index
    %6 = vector.load %arg9[%c1, %c1_10, %c0_11] : memref<18x18x3xf32, #tpu.memory_space<vmem>>, vector<16x16x3xf32>
    tpu.vector_store %arg9[%c1, %c1_10, %c0_11], %5 {strides = array<i32>} : memref<18x18x3xf32, #tpu.memory_space<vmem>>, vector<16x16x3xf32>,
    %c0_12 = arith.constant 0 : index
    %c0_13 = arith.constant 0 : index
    %c0_14 = arith.constant 0 : index
    %7 = vector.load %arg9[%c0_12, %c0_13, %c0_14] : memref<18x18x3xf32, #tpu.memory_space<vmem>>, vector<18x18x3xf32>
    %c0_15 = arith.constant 0 : index
    %c0_16 = arith.constant 0 : index
    %c0_17 = arith.constant 0 : index
    %8 = vector.load %arg2[%c0_15, %c0_16, %c0_17] : memref<3x9x32xbf16, #tpu.memory_space<vmem>>, vector<3x9x32xbf16>
    %c0_18 = arith.constant 0 : index
    %c0_19 = arith.constant 0 : index
    %9 = vector.load %arg3[%c0_18, %c0_19] : memref<1x32xf32, #tpu.memory_space<vmem>>, vector<1x32xf32>
    %10 = vector.extract_strided_slice %7 {offsets = [0, 0, 0], sizes = [16, 18, 3], strides = [1, 1, 1]} : vector<18x18x3xf32> to vector<16x18x3xf32>
    %11 = vector.extract_strided_slice %10 {offsets = [0, 0, 0], sizes = [16, 16, 3], strides = [1, 1, 1]} : vector<16x18x3xf32> to vector<16x16x3xf32>
    %12 = vector.extract_strided_slice %10 {offsets = [0, 1, 0], sizes = [16, 16, 3], strides = [1, 1, 1]} : vector<16x18x3xf32> to vector<16x16x3xf32>
    %13 = vector.extract_strided_slice %10 {offsets = [0, 2, 0], sizes = [16, 16, 3], strides = [1, 1, 1]} : vector<16x18x3xf32> to vector<16x16x3xf32>
    %14 = tpu.concatenate %11, %12, %13 in 2 : vector<16x16x3xf32>, vector<16x16x3xf32>, vector<16x16x3xf32> -> vector<16x16x9xf32>
    %15 = vector.shape_cast %14 : vector<16x16x9xf32> to vector<256x9xf32>
    %16 = arith.truncf %15 : vector<256x9xf32> to vector<256x9xbf16>
    %17 = vector.extract_strided_slice %8 {offsets = [0, 0, 0], sizes = [1, 9, 32], strides = [1, 1, 1]} : vector<3x9x32xbf16> to vector<1x9x32xbf16>
    %18 = vector.shape_cast %17 : vector<1x9x32xbf16> to vector<9x32xbf16>
    %cst_20 = arith.constant dense<0.000000e+00> : vector<256x32xf32>
    %19 = tpu.matmul %16, %18, %cst_20 {dimension_numbers = #tpu.dot_dimension_numbers<[1], [0], [0], [1], [0, 0, 1, 1], [], []>} : vector<256x9xbf16>, vector<9x32xbf16>, vector<256x32xf32> -> vector<256x32xf32>
    %20 = vector.extract_strided_slice %7 {offsets = [1, 0, 0], sizes = [16, 18, 3], strides = [1, 1, 1]} : vector<18x18x3xf32> to vector<16x18x3xf32>
    %21 = vector.extract_strided_slice %20 {offsets = [0, 0, 0], sizes = [16, 16, 3], strides = [1, 1, 1]} : vector<16x18x3xf32> to vector<16x16x3xf32>
    %22 = vector.extract_strided_slice %20 {offsets = [0, 1, 0], sizes = [16, 16, 3], strides = [1, 1, 1]} : vector<16x18x3xf32> to vector<16x16x3xf32>
    %23 = vector.extract_strided_slice %20 {offsets = [0, 2, 0], sizes = [16, 16, 3], strides = [1, 1, 1]} : vector<16x18x3xf32> to vector<16x16x3xf32>
    %24 = tpu.concatenate %21, %22, %23 in 2 : vector<16x16x3xf32>, vector<16x16x3xf32>, vector<16x16x3xf32> -> vector<16x16x9xf32>
    %25 = vector.shape_cast %24 : vector<16x16x9xf32> to vector<256x9xf32>
    %26 = arith.truncf %25 : vector<256x9xf32> to vector<256x9xbf16>
    %27 = vector.extract_strided_slice %8 {offsets = [1, 0, 0], sizes = [1, 9, 32], strides = [1, 1, 1]} : vector<3x9x32xbf16> to vector<1x9x32xbf16>
    %28 = vector.shape_cast %27 : vector<1x9x32xbf16> to vector<9x32xbf16>
    %cst_21 = arith.constant dense<0.000000e+00> : vector<256x32xf32>
    %29 = tpu.matmul %26, %28, %cst_21 {dimension_numbers = #tpu.dot_dimension_numbers<[1], [0], [0], [1], [0, 0, 1, 1], [], []>} : vector<256x9xbf16>, vector<9x32xbf16>, vector<256x32xf32> -> vector<256x32xf32>
    %30 = arith.addf %19, %29 : vector<256x32xf32>
    %31 = vector.extract_strided_slice %7 {offsets = [2, 0, 0], sizes = [16, 18, 3], strides = [1, 1, 1]} : vector<18x18x3xf32> to vector<16x18x3xf32>
    %32 = vector.extract_strided_slice %31 {offsets = [0, 0, 0], sizes = [16, 16, 3], strides = [1, 1, 1]} : vector<16x18x3xf32> to vector<16x16x3xf32>
    %33 = vector.extract_strided_slice %31 {offsets = [0, 1, 0], sizes = [16, 16, 3], strides = [1, 1, 1]} : vector<16x18x3xf32> to vector<16x16x3xf32>
    %34 = vector.extract_strided_slice %31 {offsets = [0, 2, 0], sizes = [16, 16, 3], strides = [1, 1, 1]} : vector<16x18x3xf32> to vector<16x16x3xf32>
    %35 = tpu.concatenate %32, %33, %34 in 2 : vector<16x16x3xf32>, vector<16x16x3xf32>, vector<16x16x3xf32> -> vector<16x16x9xf32>
    %36 = vector.shape_cast %35 : vector<16x16x9xf32> to vector<256x9xf32>
    %37 = arith.truncf %36 : vector<256x9xf32> to vector<256x9xbf16>
    %38 = vector.extract_strided_slice %8 {offsets = [2, 0, 0], sizes = [1, 9, 32], strides = [1, 1, 1]} : vector<3x9x32xbf16> to vector<1x9x32xbf16>
    %39 = vector.shape_cast %38 : vector<1x9x32xbf16> to vector<9x32xbf16>
    %cst_22 = arith.constant dense<0.000000e+00> : vector<256x32xf32>
    %40 = tpu.matmul %37, %39, %cst_22 {dimension_numbers = #tpu.dot_dimension_numbers<[1], [0], [0], [1], [0, 0, 1, 1], [], []>} : vector<256x9xbf16>, vector<9x32xbf16>, vector<256x32xf32> -> vector<256x32xf32>
    %41 = arith.addf %30, %40 : vector<256x32xf32>
    %42 = vector.broadcast %9 : vector<1x32xf32> to vector<256x32xf32>
    %43 = arith.addf %41, %42 : vector<256x32xf32>
    %cst_23 = arith.constant 0.000000e+00 : f32
    %44 = vector.broadcast %cst_23 : f32 to vector<256x32xf32>
    %45 = arith.maximumf %43, %44 : vector<256x32xf32>
    %46 = vector.shape_cast %45 : vector<256x32xf32> to vector<16x16x32xf32>
    %c1_24 = arith.constant 1 : index
    %c1_25 = arith.constant 1 : index
    %c0_26 = arith.constant 0 : index
    %47 = vector.load %arg10[%c1_24, %c1_25, %c0_26] : memref<18x18x32xf32, #tpu.memory_space<vmem>>, vector<16x16x32xf32>
    tpu.vector_store %arg10[%c1_24, %c1_25, %c0_26], %46 {strides = array<i32>} : memref<18x18x32xf32, #tpu.memory_space<vmem>>, vector<16x16x32xf32>,
    %c0_27 = arith.constant 0 : index
    %c0_28 = arith.constant 0 : index
    %c0_29 = arith.constant 0 : index
    %48 = vector.load %arg10[%c0_27, %c0_28, %c0_29] : memref<18x18x32xf32, #tpu.memory_space<vmem>>, vector<18x18x32xf32>
    %c0_30 = arith.constant 0 : index
    %c0_31 = arith.constant 0 : index
    %c0_32 = arith.constant 0 : index
    %c0_33 = arith.constant 0 : index
    %c0_34 = arith.constant 0 : index
    %49 = vector.load %arg4[%c0_30, %c0_31, %c0_32, %c0_33, %c0_34] : memref<2x2x3x96x32xbf16, #tpu.memory_space<vmem>>, vector<1x1x3x96x32xbf16>
    %50 = vector.shape_cast %49 : vector<1x1x3x96x32xbf16> to vector<3x96x32xbf16>
    %c0_35 = arith.constant 0 : index
    %c0_36 = arith.constant 0 : index
    %c0_37 = arith.constant 0 : index
    %c0_38 = arith.constant 0 : index
    %51 = vector.load %arg5[%c0_35, %c0_36, %c0_37, %c0_38] : memref<2x2x1x32xf32, #tpu.memory_space<vmem>>, vector<1x1x1x32xf32>
    %52 = vector.shape_cast %51 : vector<1x1x1x32xf32> to vector<1x32xf32>
    %53 = vector.extract_strided_slice %48 {offsets = [0, 0, 0], sizes = [16, 18, 32], strides = [1, 1, 1]} : vector<18x18x32xf32> to vector<16x18x32xf32>
    %54 = vector.extract_strided_slice %53 {offsets = [0, 0, 0], sizes = [16, 16, 32], strides = [1, 1, 1]} : vector<16x18x32xf32> to vector<16x16x32xf32>
    %55 = vector.extract_strided_slice %53 {offsets = [0, 1, 0], sizes = [16, 16, 32], strides = [1, 1, 1]} : vector<16x18x32xf32> to vector<16x16x32xf32>
    %56 = vector.extract_strided_slice %53 {offsets = [0, 2, 0], sizes = [16, 16, 32], strides = [1, 1, 1]} : vector<16x18x32xf32> to vector<16x16x32xf32>
    %57 = tpu.concatenate %54, %55, %56 in 2 : vector<16x16x32xf32>, vector<16x16x32xf32>, vector<16x16x32xf32> -> vector<16x16x96xf32>
    %58 = vector.shape_cast %57 : vector<16x16x96xf32> to vector<256x96xf32>
    %59 = arith.truncf %58 : vector<256x96xf32> to vector<256x96xbf16>
    %60 = vector.extract_strided_slice %50 {offsets = [0, 0, 0], sizes = [1, 96, 32], strides = [1, 1, 1]} : vector<3x96x32xbf16> to vector<1x96x32xbf16>
    %61 = vector.shape_cast %60 : vector<1x96x32xbf16> to vector<96x32xbf16>
    %cst_39 = arith.constant dense<0.000000e+00> : vector<256x32xf32>
    %62 = tpu.matmul %59, %61, %cst_39 {dimension_numbers = #tpu.dot_dimension_numbers<[1], [0], [0], [1], [0, 0, 1, 1], [], []>} : vector<256x96xbf16>, vector<96x32xbf16>, vector<256x32xf32> -> vector<256x32xf32>
    %63 = vector.extract_strided_slice %48 {offsets = [1, 0, 0], sizes = [16, 18, 32], strides = [1, 1, 1]} : vector<18x18x32xf32> to vector<16x18x32xf32>
    %64 = vector.extract_strided_slice %63 {offsets = [0, 0, 0], sizes = [16, 16, 32], strides = [1, 1, 1]} : vector<16x18x32xf32> to vector<16x16x32xf32>
    %65 = vector.extract_strided_slice %63 {offsets = [0, 1, 0], sizes = [16, 16, 32], strides = [1, 1, 1]} : vector<16x18x32xf32> to vector<16x16x32xf32>
    %66 = vector.extract_strided_slice %63 {offsets = [0, 2, 0], sizes = [16, 16, 32], strides = [1, 1, 1]} : vector<16x18x32xf32> to vector<16x16x32xf32>
    %67 = tpu.concatenate %64, %65, %66 in 2 : vector<16x16x32xf32>, vector<16x16x32xf32>, vector<16x16x32xf32> -> vector<16x16x96xf32>
    %68 = vector.shape_cast %67 : vector<16x16x96xf32> to vector<256x96xf32>
    %69 = arith.truncf %68 : vector<256x96xf32> to vector<256x96xbf16>
    %70 = vector.extract_strided_slice %50 {offsets = [1, 0, 0], sizes = [1, 96, 32], strides = [1, 1, 1]} : vector<3x96x32xbf16> to vector<1x96x32xbf16>
    %71 = vector.shape_cast %70 : vector<1x96x32xbf16> to vector<96x32xbf16>
    %cst_40 = arith.constant dense<0.000000e+00> : vector<256x32xf32>
    %72 = tpu.matmul %69, %71, %cst_40 {dimension_numbers = #tpu.dot_dimension_numbers<[1], [0], [0], [1], [0, 0, 1, 1], [], []>} : vector<256x96xbf16>, vector<96x32xbf16>, vector<256x32xf32> -> vector<256x32xf32>
    %73 = arith.addf %62, %72 : vector<256x32xf32>
    %74 = vector.extract_strided_slice %48 {offsets = [2, 0, 0], sizes = [16, 18, 32], strides = [1, 1, 1]} : vector<18x18x32xf32> to vector<16x18x32xf32>
    %75 = vector.extract_strided_slice %74 {offsets = [0, 0, 0], sizes = [16, 16, 32], strides = [1, 1, 1]} : vector<16x18x32xf32> to vector<16x16x32xf32>
    %76 = vector.extract_strided_slice %74 {offsets = [0, 1, 0], sizes = [16, 16, 32], strides = [1, 1, 1]} : vector<16x18x32xf32> to vector<16x16x32xf32>
    %77 = vector.extract_strided_slice %74 {offsets = [0, 2, 0], sizes = [16, 16, 32], strides = [1, 1, 1]} : vector<16x18x32xf32> to vector<16x16x32xf32>
    %78 = tpu.concatenate %75, %76, %77 in 2 : vector<16x16x32xf32>, vector<16x16x32xf32>, vector<16x16x32xf32> -> vector<16x16x96xf32>
    %79 = vector.shape_cast %78 : vector<16x16x96xf32> to vector<256x96xf32>
    %80 = arith.truncf %79 : vector<256x96xf32> to vector<256x96xbf16>
    %81 = vector.extract_strided_slice %50 {offsets = [2, 0, 0], sizes = [1, 96, 32], strides = [1, 1, 1]} : vector<3x96x32xbf16> to vector<1x96x32xbf16>
    %82 = vector.shape_cast %81 : vector<1x96x32xbf16> to vector<96x32xbf16>
    %cst_41 = arith.constant dense<0.000000e+00> : vector<256x32xf32>
    %83 = tpu.matmul %80, %82, %cst_41 {dimension_numbers = #tpu.dot_dimension_numbers<[1], [0], [0], [1], [0, 0, 1, 1], [], []>} : vector<256x96xbf16>, vector<96x32xbf16>, vector<256x32xf32> -> vector<256x32xf32>
    %84 = arith.addf %73, %83 : vector<256x32xf32>
    %85 = vector.broadcast %52 : vector<1x32xf32> to vector<256x32xf32>
    %86 = arith.addf %84, %85 : vector<256x32xf32>
    %cst_42 = arith.constant 0.000000e+00 : f32
    %87 = vector.broadcast %cst_42 : f32 to vector<256x32xf32>
    %88 = arith.maximumf %86, %87 : vector<256x32xf32>
    %89 = vector.shape_cast %88 : vector<256x32xf32> to vector<16x16x32xf32>
    %c1_43 = arith.constant 1 : index
    %c1_44 = arith.constant 1 : index
    %c0_45 = arith.constant 0 : index
    %90 = vector.load %arg10[%c1_43, %c1_44, %c0_45] : memref<18x18x32xf32, #tpu.memory_space<vmem>>, vector<16x16x32xf32>
    tpu.vector_store %arg10[%c1_43, %c1_44, %c0_45], %89 {strides = array<i32>} : memref<18x18x32xf32, #tpu.memory_space<vmem>>, vector<16x16x32xf32>,
    %c0_46 = arith.constant 0 : index
    %c0_47 = arith.constant 0 : index
    %c0_48 = arith.constant 0 : index
    %91 = vector.load %arg10[%c0_46, %c0_47, %c0_48] : memref<18x18x32xf32, #tpu.memory_space<vmem>>, vector<18x18x32xf32>
    %c0_49 = arith.constant 0 : index
    %c1_50 = arith.constant 1 : index
    %c0_51 = arith.constant 0 : index
    %c0_52 = arith.constant 0 : index
    %c0_53 = arith.constant 0 : index
    %92 = vector.load %arg4[%c0_49, %c1_50, %c0_51, %c0_52, %c0_53] : memref<2x2x3x96x32xbf16, #tpu.memory_space<vmem>>, vector<1x1x3x96x32xbf16>
    %93 = vector.shape_cast %92 : vector<1x1x3x96x32xbf16> to vector<3x96x32xbf16>
    %c0_54 = arith.constant 0 : index
    %c1_55 = arith.constant 1 : index
    %c0_56 = arith.constant 0 : index
    %c0_57 = arith.constant 0 : index
    %94 = vector.load %arg5[%c0_54, %c1_55, %c0_56, %c0_57] : memref<2x2x1x32xf32, #tpu.memory_space<vmem>>, vector<1x1x1x32xf32>
    %95 = vector.shape_cast %94 : vector<1x1x1x32xf32> to vector<1x32xf32>
    %96 = vector.extract_strided_slice %91 {offsets = [0, 0, 0], sizes = [16, 18, 32], strides = [1, 1, 1]} : vector<18x18x32xf32> to vector<16x18x32xf32>
    %97 = vector.extract_strided_slice %96 {offsets = [0, 0, 0], sizes = [16, 16, 32], strides = [1, 1, 1]} : vector<16x18x32xf32> to vector<16x16x32xf32>
    %98 = vector.extract_strided_slice %96 {offsets = [0, 1, 0], sizes = [16, 16, 32], strides = [1, 1, 1]} : vector<16x18x32xf32> to vector<16x16x32xf32>
    %99 = vector.extract_strided_slice %96 {offsets = [0, 2, 0], sizes = [16, 16, 32], strides = [1, 1, 1]} : vector<16x18x32xf32> to vector<16x16x32xf32>
    %100 = tpu.concatenate %97, %98, %99 in 2 : vector<16x16x32xf32>, vector<16x16x32xf32>, vector<16x16x32xf32> -> vector<16x16x96xf32>
    %101 = vector.shape_cast %100 : vector<16x16x96xf32> to vector<256x96xf32>
    %102 = arith.truncf %101 : vector<256x96xf32> to vector<256x96xbf16>
    %103 = vector.extract_strided_slice %93 {offsets = [0, 0, 0], sizes = [1, 96, 32], strides = [1, 1, 1]} : vector<3x96x32xbf16> to vector<1x96x32xbf16>
    %104 = vector.shape_cast %103 : vector<1x96x32xbf16> to vector<96x32xbf16>
    %cst_58 = arith.constant dense<0.000000e+00> : vector<256x32xf32>
    %105 = tpu.matmul %102, %104, %cst_58 {dimension_numbers = #tpu.dot_dimension_numbers<[1], [0], [0], [1], [0, 0, 1, 1], [], []>} : vector<256x96xbf16>, vector<96x32xbf16>, vector<256x32xf32> -> vector<256x32xf32>
    %106 = vector.extract_strided_slice %91 {offsets = [1, 0, 0], sizes = [16, 18, 32], strides = [1, 1, 1]} : vector<18x18x32xf32> to vector<16x18x32xf32>
    %107 = vector.extract_strided_slice %106 {offsets = [0, 0, 0], sizes = [16, 16, 32], strides = [1, 1, 1]} : vector<16x18x32xf32> to vector<16x16x32xf32>
    %108 = vector.extract_strided_slice %106 {offsets = [0, 1, 0], sizes = [16, 16, 32], strides = [1, 1, 1]} : vector<16x18x32xf32> to vector<16x16x32xf32>
    %109 = vector.extract_strided_slice %106 {offsets = [0, 2, 0], sizes = [16, 16, 32], strides = [1, 1, 1]} : vector<16x18x32xf32> to vector<16x16x32xf32>
    %110 = tpu.concatenate %107, %108, %109 in 2 : vector<16x16x32xf32>, vector<16x16x32xf32>, vector<16x16x32xf32> -> vector<16x16x96xf32>
    %111 = vector.shape_cast %110 : vector<16x16x96xf32> to vector<256x96xf32>
    %112 = arith.truncf %111 : vector<256x96xf32> to vector<256x96xbf16>
    %113 = vector.extract_strided_slice %93 {offsets = [1, 0, 0], sizes = [1, 96, 32], strides = [1, 1, 1]} : vector<3x96x32xbf16> to vector<1x96x32xbf16>
    %114 = vector.shape_cast %113 : vector<1x96x32xbf16> to vector<96x32xbf16>
    %cst_59 = arith.constant dense<0.000000e+00> : vector<256x32xf32>
    %115 = tpu.matmul %112, %114, %cst_59 {dimension_numbers = #tpu.dot_dimension_numbers<[1], [0], [0], [1], [0, 0, 1, 1], [], []>} : vector<256x96xbf16>, vector<96x32xbf16>, vector<256x32xf32> -> vector<256x32xf32>
    %116 = arith.addf %105, %115 : vector<256x32xf32>
    %117 = vector.extract_strided_slice %91 {offsets = [2, 0, 0], sizes = [16, 18, 32], strides = [1, 1, 1]} : vector<18x18x32xf32> to vector<16x18x32xf32>
    %118 = vector.extract_strided_slice %117 {offsets = [0, 0, 0], sizes = [16, 16, 32], strides = [1, 1, 1]} : vector<16x18x32xf32> to vector<16x16x32xf32>
    %119 = vector.extract_strided_slice %117 {offsets = [0, 1, 0], sizes = [16, 16, 32], strides = [1, 1, 1]} : vector<16x18x32xf32> to vector<16x16x32xf32>
    %120 = vector.extract_strided_slice %117 {offsets = [0, 2, 0], sizes = [16, 16, 32], strides = [1, 1, 1]} : vector<16x18x32xf32> to vector<16x16x32xf32>
    %121 = tpu.concatenate %118, %119, %120 in 2 : vector<16x16x32xf32>, vector<16x16x32xf32>, vector<16x16x32xf32> -> vector<16x16x96xf32>
    %122 = vector.shape_cast %121 : vector<16x16x96xf32> to vector<256x96xf32>
    %123 = arith.truncf %122 : vector<256x96xf32> to vector<256x96xbf16>
    %124 = vector.extract_strided_slice %93 {offsets = [2, 0, 0], sizes = [1, 96, 32], strides = [1, 1, 1]} : vector<3x96x32xbf16> to vector<1x96x32xbf16>
    %125 = vector.shape_cast %124 : vector<1x96x32xbf16> to vector<96x32xbf16>
    %cst_60 = arith.constant dense<0.000000e+00> : vector<256x32xf32>
    %126 = tpu.matmul %123, %125, %cst_60 {dimension_numbers = #tpu.dot_dimension_numbers<[1], [0], [0], [1], [0, 0, 1, 1], [], []>} : vector<256x96xbf16>, vector<96x32xbf16>, vector<256x32xf32> -> vector<256x32xf32>
    %127 = arith.addf %116, %126 : vector<256x32xf32>
    %128 = vector.broadcast %95 : vector<1x32xf32> to vector<256x32xf32>
    %129 = arith.addf %127, %128 : vector<256x32xf32>
    %cst_61 = arith.constant 1.000000e+00 : f32
    %130 = vector.broadcast %cst_61 : f32 to vector<256x32xf32>
    %131 = arith.mulf %129, %130 : vector<256x32xf32>
    %132 = arith.addf %131, %45 : vector<256x32xf32>
    %133 = vector.shape_cast %132 : vector<256x32xf32> to vector<16x16x32xf32>
    %c1_62 = arith.constant 1 : index
    %c1_63 = arith.constant 1 : index
    %c0_64 = arith.constant 0 : index
    %134 = vector.load %arg10[%c1_62, %c1_63, %c0_64] : memref<18x18x32xf32, #tpu.memory_space<vmem>>, vector<16x16x32xf32>
    tpu.vector_store %arg10[%c1_62, %c1_63, %c0_64], %133 {strides = array<i32>} : memref<18x18x32xf32, #tpu.memory_space<vmem>>, vector<16x16x32xf32>,
    %c0_65 = arith.constant 0 : index
    %c0_66 = arith.constant 0 : index
    %c0_67 = arith.constant 0 : index
    %135 = vector.load %arg10[%c0_65, %c0_66, %c0_67] : memref<18x18x32xf32, #tpu.memory_space<vmem>>, vector<18x18x32xf32>
    %c1_68 = arith.constant 1 : index
    %c0_69 = arith.constant 0 : index
    %c0_70 = arith.constant 0 : index
    %c0_71 = arith.constant 0 : index
    %c0_72 = arith.constant 0 : index
    %136 = vector.load %arg4[%c1_68, %c0_69, %c0_70, %c0_71, %c0_72] : memref<2x2x3x96x32xbf16, #tpu.memory_space<vmem>>, vector<1x1x3x96x32xbf16>
    %137 = vector.shape_cast %136 : vector<1x1x3x96x32xbf16> to vector<3x96x32xbf16>
    %c1_73 = arith.constant 1 : index
    %c0_74 = arith.constant 0 : index
    %c0_75 = arith.constant 0 : index
    %c0_76 = arith.constant 0 : index
    %138 = vector.load %arg5[%c1_73, %c0_74, %c0_75, %c0_76] : memref<2x2x1x32xf32, #tpu.memory_space<vmem>>, vector<1x1x1x32xf32>
    %139 = vector.shape_cast %138 : vector<1x1x1x32xf32> to vector<1x32xf32>
    %140 = vector.extract_strided_slice %135 {offsets = [0, 0, 0], sizes = [16, 18, 32], strides = [1, 1, 1]} : vector<18x18x32xf32> to vector<16x18x32xf32>
    %141 = vector.extract_strided_slice %140 {offsets = [0, 0, 0], sizes = [16, 16, 32], strides = [1, 1, 1]} : vector<16x18x32xf32> to vector<16x16x32xf32>
    %142 = vector.extract_strided_slice %140 {offsets = [0, 1, 0], sizes = [16, 16, 32], strides = [1, 1, 1]} : vector<16x18x32xf32> to vector<16x16x32xf32>
    %143 = vector.extract_strided_slice %140 {offsets = [0, 2, 0], sizes = [16, 16, 32], strides = [1, 1, 1]} : vector<16x18x32xf32> to vector<16x16x32xf32>
    %144 = tpu.concatenate %141, %142, %143 in 2 : vector<16x16x32xf32>, vector<16x16x32xf32>, vector<16x16x32xf32> -> vector<16x16x96xf32>
    %145 = vector.shape_cast %144 : vector<16x16x96xf32> to vector<256x96xf32>
    %146 = arith.truncf %145 : vector<256x96xf32> to vector<256x96xbf16>
    %147 = vector.extract_strided_slice %137 {offsets = [0, 0, 0], sizes = [1, 96, 32], strides = [1, 1, 1]} : vector<3x96x32xbf16> to vector<1x96x32xbf16>
    %148 = vector.shape_cast %147 : vector<1x96x32xbf16> to vector<96x32xbf16>
    %cst_77 = arith.constant dense<0.000000e+00> : vector<256x32xf32>
    %149 = tpu.matmul %146, %148, %cst_77 {dimension_numbers = #tpu.dot_dimension_numbers<[1], [0], [0], [1], [0, 0, 1, 1], [], []>} : vector<256x96xbf16>, vector<96x32xbf16>, vector<256x32xf32> -> vector<256x32xf32>
    %150 = vector.extract_strided_slice %135 {offsets = [1, 0, 0], sizes = [16, 18, 32], strides = [1, 1, 1]} : vector<18x18x32xf32> to vector<16x18x32xf32>
    %151 = vector.extract_strided_slice %150 {offsets = [0, 0, 0], sizes = [16, 16, 32], strides = [1, 1, 1]} : vector<16x18x32xf32> to vector<16x16x32xf32>
    %152 = vector.extract_strided_slice %150 {offsets = [0, 1, 0], sizes = [16, 16, 32], strides = [1, 1, 1]} : vector<16x18x32xf32> to vector<16x16x32xf32>
    %153 = vector.extract_strided_slice %150 {offsets = [0, 2, 0], sizes = [16, 16, 32], strides = [1, 1, 1]} : vector<16x18x32xf32> to vector<16x16x32xf32>
    %154 = tpu.concatenate %151, %152, %153 in 2 : vector<16x16x32xf32>, vector<16x16x32xf32>, vector<16x16x32xf32> -> vector<16x16x96xf32>
    %155 = vector.shape_cast %154 : vector<16x16x96xf32> to vector<256x96xf32>
    %156 = arith.truncf %155 : vector<256x96xf32> to vector<256x96xbf16>
    %157 = vector.extract_strided_slice %137 {offsets = [1, 0, 0], sizes = [1, 96, 32], strides = [1, 1, 1]} : vector<3x96x32xbf16> to vector<1x96x32xbf16>
    %158 = vector.shape_cast %157 : vector<1x96x32xbf16> to vector<96x32xbf16>
    %cst_78 = arith.constant dense<0.000000e+00> : vector<256x32xf32>
    %159 = tpu.matmul %156, %158, %cst_78 {dimension_numbers = #tpu.dot_dimension_numbers<[1], [0], [0], [1], [0, 0, 1, 1], [], []>} : vector<256x96xbf16>, vector<96x32xbf16>, vector<256x32xf32> -> vector<256x32xf32>
    %160 = arith.addf %149, %159 : vector<256x32xf32>
    %161 = vector.extract_strided_slice %135 {offsets = [2, 0, 0], sizes = [16, 18, 32], strides = [1, 1, 1]} : vector<18x18x32xf32> to vector<16x18x32xf32>
    %162 = vector.extract_strided_slice %161 {offsets = [0, 0, 0], sizes = [16, 16, 32], strides = [1, 1, 1]} : vector<16x18x32xf32> to vector<16x16x32xf32>
    %163 = vector.extract_strided_slice %161 {offsets = [0, 1, 0], sizes = [16, 16, 32], strides = [1, 1, 1]} : vector<16x18x32xf32> to vector<16x16x32xf32>
    %164 = vector.extract_strided_slice %161 {offsets = [0, 2, 0], sizes = [16, 16, 32], strides = [1, 1, 1]} : vector<16x18x32xf32> to vector<16x16x32xf32>
    %165 = tpu.concatenate %162, %163, %164 in 2 : vector<16x16x32xf32>, vector<16x16x32xf32>, vector<16x16x32xf32> -> vector<16x16x96xf32>
    %166 = vector.shape_cast %165 : vector<16x16x96xf32> to vector<256x96xf32>
    %167 = arith.truncf %166 : vector<256x96xf32> to vector<256x96xbf16>
    %168 = vector.extract_strided_slice %137 {offsets = [2, 0, 0], sizes = [1, 96, 32], strides = [1, 1, 1]} : vector<3x96x32xbf16> to vector<1x96x32xbf16>
    %169 = vector.shape_cast %168 : vector<1x96x32xbf16> to vector<96x32xbf16>
    %cst_79 = arith.constant dense<0.000000e+00> : vector<256x32xf32>
    %170 = tpu.matmul %167, %169, %cst_79 {dimension_numbers = #tpu.dot_dimension_numbers<[1], [0], [0], [1], [0, 0, 1, 1], [], []>} : vector<256x96xbf16>, vector<96x32xbf16>, vector<256x32xf32> -> vector<256x32xf32>
    %171 = arith.addf %160, %170 : vector<256x32xf32>
    %172 = vector.broadcast %139 : vector<1x32xf32> to vector<256x32xf32>
    %173 = arith.addf %171, %172 : vector<256x32xf32>
    %cst_80 = arith.constant 0.000000e+00 : f32
    %174 = vector.broadcast %cst_80 : f32 to vector<256x32xf32>
    %175 = arith.maximumf %173, %174 : vector<256x32xf32>
    %176 = vector.shape_cast %175 : vector<256x32xf32> to vector<16x16x32xf32>
    %c1_81 = arith.constant 1 : index
    %c1_82 = arith.constant 1 : index
    %c0_83 = arith.constant 0 : index
    %177 = vector.load %arg10[%c1_81, %c1_82, %c0_83] : memref<18x18x32xf32, #tpu.memory_space<vmem>>, vector<16x16x32xf32>
    tpu.vector_store %arg10[%c1_81, %c1_82, %c0_83], %176 {strides = array<i32>} : memref<18x18x32xf32, #tpu.memory_space<vmem>>, vector<16x16x32xf32>,
    %c0_84 = arith.constant 0 : index
    %c0_85 = arith.constant 0 : index
    %c0_86 = arith.constant 0 : index
    %178 = vector.load %arg10[%c0_84, %c0_85, %c0_86] : memref<18x18x32xf32, #tpu.memory_space<vmem>>, vector<18x18x32xf32>
    %c1_87 = arith.constant 1 : index
    %c1_88 = arith.constant 1 : index
    %c0_89 = arith.constant 0 : index
    %c0_90 = arith.constant 0 : index
    %c0_91 = arith.constant 0 : index
    %179 = vector.load %arg4[%c1_87, %c1_88, %c0_89, %c0_90, %c0_91] : memref<2x2x3x96x32xbf16, #tpu.memory_space<vmem>>, vector<1x1x3x96x32xbf16>
    %180 = vector.shape_cast %179 : vector<1x1x3x96x32xbf16> to vector<3x96x32xbf16>
    %c1_92 = arith.constant 1 : index
    %c1_93 = arith.constant 1 : index
    %c0_94 = arith.constant 0 : index
    %c0_95 = arith.constant 0 : index
    %181 = vector.load %arg5[%c1_92, %c1_93, %c0_94, %c0_95] : memref<2x2x1x32xf32, #tpu.memory_space<vmem>>, vector<1x1x1x32xf32>
    %182 = vector.shape_cast %181 : vector<1x1x1x32xf32> to vector<1x32xf32>
    %183 = vector.extract_strided_slice %178 {offsets = [0, 0, 0], sizes = [16, 18, 32], strides = [1, 1, 1]} : vector<18x18x32xf32> to vector<16x18x32xf32>
    %184 = vector.extract_strided_slice %183 {offsets = [0, 0, 0], sizes = [16, 16, 32], strides = [1, 1, 1]} : vector<16x18x32xf32> to vector<16x16x32xf32>
    %185 = vector.extract_strided_slice %183 {offsets = [0, 1, 0], sizes = [16, 16, 32], strides = [1, 1, 1]} : vector<16x18x32xf32> to vector<16x16x32xf32>
    %186 = vector.extract_strided_slice %183 {offsets = [0, 2, 0], sizes = [16, 16, 32], strides = [1, 1, 1]} : vector<16x18x32xf32> to vector<16x16x32xf32>
    %187 = tpu.concatenate %184, %185, %186 in 2 : vector<16x16x32xf32>, vector<16x16x32xf32>, vector<16x16x32xf32> -> vector<16x16x96xf32>
    %188 = vector.shape_cast %187 : vector<16x16x96xf32> to vector<256x96xf32>
    %189 = arith.truncf %188 : vector<256x96xf32> to vector<256x96xbf16>
    %190 = vector.extract_strided_slice %180 {offsets = [0, 0, 0], sizes = [1, 96, 32], strides = [1, 1, 1]} : vector<3x96x32xbf16> to vector<1x96x32xbf16>
    %191 = vector.shape_cast %190 : vector<1x96x32xbf16> to vector<96x32xbf16>
    %cst_96 = arith.constant dense<0.000000e+00> : vector<256x32xf32>
    %192 = tpu.matmul %189, %191, %cst_96 {dimension_numbers = #tpu.dot_dimension_numbers<[1], [0], [0], [1], [0, 0, 1, 1], [], []>} : vector<256x96xbf16>, vector<96x32xbf16>, vector<256x32xf32> -> vector<256x32xf32>
    %193 = vector.extract_strided_slice %178 {offsets = [1, 0, 0], sizes = [16, 18, 32], strides = [1, 1, 1]} : vector<18x18x32xf32> to vector<16x18x32xf32>
    %194 = vector.extract_strided_slice %193 {offsets = [0, 0, 0], sizes = [16, 16, 32], strides = [1, 1, 1]} : vector<16x18x32xf32> to vector<16x16x32xf32>
    %195 = vector.extract_strided_slice %193 {offsets = [0, 1, 0], sizes = [16, 16, 32], strides = [1, 1, 1]} : vector<16x18x32xf32> to vector<16x16x32xf32>
    %196 = vector.extract_strided_slice %193 {offsets = [0, 2, 0], sizes = [16, 16, 32], strides = [1, 1, 1]} : vector<16x18x32xf32> to vector<16x16x32xf32>
    %197 = tpu.concatenate %194, %195, %196 in 2 : vector<16x16x32xf32>, vector<16x16x32xf32>, vector<16x16x32xf32> -> vector<16x16x96xf32>
    %198 = vector.shape_cast %197 : vector<16x16x96xf32> to vector<256x96xf32>
    %199 = arith.truncf %198 : vector<256x96xf32> to vector<256x96xbf16>
    %200 = vector.extract_strided_slice %180 {offsets = [1, 0, 0], sizes = [1, 96, 32], strides = [1, 1, 1]} : vector<3x96x32xbf16> to vector<1x96x32xbf16>
    %201 = vector.shape_cast %200 : vector<1x96x32xbf16> to vector<96x32xbf16>
    %cst_97 = arith.constant dense<0.000000e+00> : vector<256x32xf32>
    %202 = tpu.matmul %199, %201, %cst_97 {dimension_numbers = #tpu.dot_dimension_numbers<[1], [0], [0], [1], [0, 0, 1, 1], [], []>} : vector<256x96xbf16>, vector<96x32xbf16>, vector<256x32xf32> -> vector<256x32xf32>
    %203 = arith.addf %192, %202 : vector<256x32xf32>
    %204 = vector.extract_strided_slice %178 {offsets = [2, 0, 0], sizes = [16, 18, 32], strides = [1, 1, 1]} : vector<18x18x32xf32> to vector<16x18x32xf32>
    %205 = vector.extract_strided_slice %204 {offsets = [0, 0, 0], sizes = [16, 16, 32], strides = [1, 1, 1]} : vector<16x18x32xf32> to vector<16x16x32xf32>
    %206 = vector.extract_strided_slice %204 {offsets = [0, 1, 0], sizes = [16, 16, 32], strides = [1, 1, 1]} : vector<16x18x32xf32> to vector<16x16x32xf32>
    %207 = vector.extract_strided_slice %204 {offsets = [0, 2, 0], sizes = [16, 16, 32], strides = [1, 1, 1]} : vector<16x18x32xf32> to vector<16x16x32xf32>
    %208 = tpu.concatenate %205, %206, %207 in 2 : vector<16x16x32xf32>, vector<16x16x32xf32>, vector<16x16x32xf32> -> vector<16x16x96xf32>
    %209 = vector.shape_cast %208 : vector<16x16x96xf32> to vector<256x96xf32>
    %210 = arith.truncf %209 : vector<256x96xf32> to vector<256x96xbf16>
    %211 = vector.extract_strided_slice %180 {offsets = [2, 0, 0], sizes = [1, 96, 32], strides = [1, 1, 1]} : vector<3x96x32xbf16> to vector<1x96x32xbf16>
    %212 = vector.shape_cast %211 : vector<1x96x32xbf16> to vector<96x32xbf16>
    %cst_98 = arith.constant dense<0.000000e+00> : vector<256x32xf32>
    %213 = tpu.matmul %210, %212, %cst_98 {dimension_numbers = #tpu.dot_dimension_numbers<[1], [0], [0], [1], [0, 0, 1, 1], [], []>} : vector<256x96xbf16>, vector<96x32xbf16>, vector<256x32xf32> -> vector<256x32xf32>
    %214 = arith.addf %203, %213 : vector<256x32xf32>
    %215 = vector.broadcast %182 : vector<1x32xf32> to vector<256x32xf32>
    %216 = arith.addf %214, %215 : vector<256x32xf32>
    %cst_99 = arith.constant 1.000000e+00 : f32
    %217 = vector.broadcast %cst_99 : f32 to vector<256x32xf32>
    %218 = arith.mulf %216, %217 : vector<256x32xf32>
    %219 = arith.addf %218, %132 : vector<256x32xf32>
    %220 = vector.shape_cast %219 : vector<256x32xf32> to vector<16x16x32xf32>
    %c1_100 = arith.constant 1 : index
    %c1_101 = arith.constant 1 : index
    %c0_102 = arith.constant 0 : index
    %221 = vector.load %arg10[%c1_100, %c1_101, %c0_102] : memref<18x18x32xf32, #tpu.memory_space<vmem>>, vector<16x16x32xf32>
    tpu.vector_store %arg10[%c1_100, %c1_101, %c0_102], %220 {strides = array<i32>} : memref<18x18x32xf32, #tpu.memory_space<vmem>>, vector<16x16x32xf32>,
    %c0_103 = arith.constant 0 : index
    %c0_104 = arith.constant 0 : index
    %c0_105 = arith.constant 0 : index
    %222 = vector.load %arg10[%c0_103, %c0_104, %c0_105] : memref<18x18x32xf32, #tpu.memory_space<vmem>>, vector<18x18x32xf32>
    %c0_106 = arith.constant 0 : index
    %c0_107 = arith.constant 0 : index
    %c0_108 = arith.constant 0 : index
    %223 = vector.load %arg6[%c0_106, %c0_107, %c0_108] : memref<3x96x32xbf16, #tpu.memory_space<vmem>>, vector<3x96x32xbf16>
    %c0_109 = arith.constant 0 : index
    %c0_110 = arith.constant 0 : index
    %224 = vector.load %arg7[%c0_109, %c0_110] : memref<1x32xf32, #tpu.memory_space<vmem>>, vector<1x32xf32>
    %225 = vector.extract_strided_slice %222 {offsets = [0, 0, 0], sizes = [16, 18, 32], strides = [1, 1, 1]} : vector<18x18x32xf32> to vector<16x18x32xf32>
    %226 = vector.extract_strided_slice %225 {offsets = [0, 0, 0], sizes = [16, 16, 32], strides = [1, 1, 1]} : vector<16x18x32xf32> to vector<16x16x32xf32>
    %227 = vector.extract_strided_slice %225 {offsets = [0, 1, 0], sizes = [16, 16, 32], strides = [1, 1, 1]} : vector<16x18x32xf32> to vector<16x16x32xf32>
    %228 = vector.extract_strided_slice %225 {offsets = [0, 2, 0], sizes = [16, 16, 32], strides = [1, 1, 1]} : vector<16x18x32xf32> to vector<16x16x32xf32>
    %229 = tpu.concatenate %226, %227, %228 in 2 : vector<16x16x32xf32>, vector<16x16x32xf32>, vector<16x16x32xf32> -> vector<16x16x96xf32>
    %230 = vector.shape_cast %229 : vector<16x16x96xf32> to vector<256x96xf32>
    %231 = arith.truncf %230 : vector<256x96xf32> to vector<256x96xbf16>
    %232 = vector.extract_strided_slice %223 {offsets = [0, 0, 0], sizes = [1, 96, 32], strides = [1, 1, 1]} : vector<3x96x32xbf16> to vector<1x96x32xbf16>
    %233 = vector.shape_cast %232 : vector<1x96x32xbf16> to vector<96x32xbf16>
    %cst_111 = arith.constant dense<0.000000e+00> : vector<256x32xf32>
    %234 = tpu.matmul %231, %233, %cst_111 {dimension_numbers = #tpu.dot_dimension_numbers<[1], [0], [0], [1], [0, 0, 1, 1], [], []>} : vector<256x96xbf16>, vector<96x32xbf16>, vector<256x32xf32> -> vector<256x32xf32>
    %235 = vector.extract_strided_slice %222 {offsets = [1, 0, 0], sizes = [16, 18, 32], strides = [1, 1, 1]} : vector<18x18x32xf32> to vector<16x18x32xf32>
    %236 = vector.extract_strided_slice %235 {offsets = [0, 0, 0], sizes = [16, 16, 32], strides = [1, 1, 1]} : vector<16x18x32xf32> to vector<16x16x32xf32>
    %237 = vector.extract_strided_slice %235 {offsets = [0, 1, 0], sizes = [16, 16, 32], strides = [1, 1, 1]} : vector<16x18x32xf32> to vector<16x16x32xf32>
    %238 = vector.extract_strided_slice %235 {offsets = [0, 2, 0], sizes = [16, 16, 32], strides = [1, 1, 1]} : vector<16x18x32xf32> to vector<16x16x32xf32>
    %239 = tpu.concatenate %236, %237, %238 in 2 : vector<16x16x32xf32>, vector<16x16x32xf32>, vector<16x16x32xf32> -> vector<16x16x96xf32>
    %240 = vector.shape_cast %239 : vector<16x16x96xf32> to vector<256x96xf32>
    %241 = arith.truncf %240 : vector<256x96xf32> to vector<256x96xbf16>
    %242 = vector.extract_strided_slice %223 {offsets = [1, 0, 0], sizes = [1, 96, 32], strides = [1, 1, 1]} : vector<3x96x32xbf16> to vector<1x96x32xbf16>
    %243 = vector.shape_cast %242 : vector<1x96x32xbf16> to vector<96x32xbf16>
    %cst_112 = arith.constant dense<0.000000e+00> : vector<256x32xf32>
    %244 = tpu.matmul %241, %243, %cst_112 {dimension_numbers = #tpu.dot_dimension_numbers<[1], [0], [0], [1], [0, 0, 1, 1], [], []>} : vector<256x96xbf16>, vector<96x32xbf16>, vector<256x32xf32> -> vector<256x32xf32>
    %245 = arith.addf %234, %244 : vector<256x32xf32>
    %246 = vector.extract_strided_slice %222 {offsets = [2, 0, 0], sizes = [16, 18, 32], strides = [1, 1, 1]} : vector<18x18x32xf32> to vector<16x18x32xf32>
    %247 = vector.extract_strided_slice %246 {offsets = [0, 0, 0], sizes = [16, 16, 32], strides = [1, 1, 1]} : vector<16x18x32xf32> to vector<16x16x32xf32>
    %248 = vector.extract_strided_slice %246 {offsets = [0, 1, 0], sizes = [16, 16, 32], strides = [1, 1, 1]} : vector<16x18x32xf32> to vector<16x16x32xf32>
    %249 = vector.extract_strided_slice %246 {offsets = [0, 2, 0], sizes = [16, 16, 32], strides = [1, 1, 1]} : vector<16x18x32xf32> to vector<16x16x32xf32>
    %250 = tpu.concatenate %247, %248, %249 in 2 : vector<16x16x32xf32>, vector<16x16x32xf32>, vector<16x16x32xf32> -> vector<16x16x96xf32>
    %251 = vector.shape_cast %250 : vector<16x16x96xf32> to vector<256x96xf32>
    %252 = arith.truncf %251 : vector<256x96xf32> to vector<256x96xbf16>
    %253 = vector.extract_strided_slice %223 {offsets = [2, 0, 0], sizes = [1, 96, 32], strides = [1, 1, 1]} : vector<3x96x32xbf16> to vector<1x96x32xbf16>
    %254 = vector.shape_cast %253 : vector<1x96x32xbf16> to vector<96x32xbf16>
    %cst_113 = arith.constant dense<0.000000e+00> : vector<256x32xf32>
    %255 = tpu.matmul %252, %254, %cst_113 {dimension_numbers = #tpu.dot_dimension_numbers<[1], [0], [0], [1], [0, 0, 1, 1], [], []>} : vector<256x96xbf16>, vector<96x32xbf16>, vector<256x32xf32> -> vector<256x32xf32>
    %256 = arith.addf %245, %255 : vector<256x32xf32>
    %257 = vector.broadcast %224 : vector<1x32xf32> to vector<256x32xf32>
    %258 = arith.addf %256, %257 : vector<256x32xf32>
    %259 = arith.addf %258, %45 : vector<256x32xf32>
    %260 = vector.shape_cast %259 : vector<256x32xf32> to vector<1x16x16x32xf32>
    %c0_114 = arith.constant 0 : index
    %c0_115 = arith.constant 0 : index
    %c0_116 = arith.constant 0 : index
    %c0_117 = arith.constant 0 : index
    %261 = vector.load %arg8[%c0_114, %c0_115, %c0_116, %c0_117] : memref<1x16x16x32xf32, #tpu.memory_space<vmem>>, vector<1x16x16x32xf32>
    tpu.vector_store %arg8[%c0_114, %c0_115, %c0_116, %c0_117], %260 {strides = array<i32>} : memref<1x16x16x32xf32, #tpu.memory_space<vmem>>, vector<1x16x16x32xf32>,
    return
  }
  func.func @transform_0(%arg0: i32) -> (i32, i32, i32, i32) {
    %c0_i32 = arith.constant 0 : i32
    %c0_i32_0 = arith.constant 0 : i32
    %c0_i32_1 = arith.constant 0 : i32
    %c0_i32_2 = arith.constant 0 : i32
    return %arg0, %c0_i32, %c0_i32_0, %c0_i32_1 : i32, i32, i32, i32
  }
  func.func @transform_1(%arg0: i32) -> (i32, i32, i32) {
    %c0_i32 = arith.constant 0 : i32
    %c0_i32_0 = arith.constant 0 : i32
    %c0_i32_1 = arith.constant 0 : i32
    %c0_i32_2 = arith.constant 0 : i32
    return %c0_i32, %c0_i32_0, %c0_i32_1 : i32, i32, i32
  }
  func.func @transform_2(%arg0: i32) -> (i32, i32) {
    %c0_i32 = arith.constant 0 : i32
    %c0_i32_0 = arith.constant 0 : i32
    %c0_i32_1 = arith.constant 0 : i32
    return %c0_i32, %c0_i32_0 : i32, i32
  }
  func.func @transform_3(%arg0: i32) -> (i32, i32, i32, i32, i32) {
    %c0_i32 = arith.constant 0 : i32
    %c0_i32_0 = arith.constant 0 : i32
    %c0_i32_1 = arith.constant 0 : i32
    %c0_i32_2 = arith.constant 0 : i32
    %c0_i32_3 = arith.constant 0 : i32
    %c0_i32_4 = arith.constant 0 : i32
    return %c0_i32, %c0_i32_0, %c0_i32_1, %c0_i32_2, %c0_i32_3 : i32, i32, i32, i32, i32
  }
  func.func @transform_4(%arg0: i32) -> (i32, i32, i32, i32) {
    %c0_i32 = arith.constant 0 : i32
    %c0_i32_0 = arith.constant 0 : i32
    %c0_i32_1 = arith.constant 0 : i32
    %c0_i32_2 = arith.constant 0 : i32
    %c0_i32_3 = arith.constant 0 : i32
    return %c0_i32, %c0_i32_0, %c0_i32_1, %c0_i32_2 : i32, i32, i32, i32
  }
  func.func @transform_5(%arg0: i32) -> (i32, i32, i32) {
    %c0_i32 = arith.constant 0 : i32
    %c0_i32_0 = arith.constant 0 : i32
    %c0_i32_1 = arith.constant 0 : i32
    %c0_i32_2 = arith.constant 0 : i32
    return %c0_i32, %c0_i32_0, %c0_i32_1 : i32, i32, i32
  }
  func.func @transform_6(%arg0: i32) -> (i32, i32) {
    %c0_i32 = arith.constant 0 : i32
    %c0_i32_0 = arith.constant 0 : i32
    %c0_i32_1 = arith.constant 0 : i32
    return %c0_i32, %c0_i32_0 : i32, i32
  }
  func.func @transform_7(%arg0: i32) -> (i32, i32, i32, i32) {
    %c0_i32 = arith.constant 0 : i32
    %c0_i32_0 = arith.constant 0 : i32
    %c0_i32_1 = arith.constant 0 : i32
    %c0_i32_2 = arith.constant 0 : i32
    return %arg0, %c0_i32, %c0_i32_0, %c0_i32_1 : i32, i32, i32, i32
  }
}

</mosaic_0001>

<llo_original>
// kernel: tpu_custom_call.1
$region0: #{tpu_custom_call.1}
  #allocation0 [shape = 'u32[]', space=smem, size = 0x4, offset = 0x4, fixed_abs, tag = 'smem constant byte address 0x4 - core index']
  #allocation1 [shape = 'u32[144,128]{1,0:T(1,128)}', space=vmem, size = 0x12000, scoped, tag = 'internal scratch']
  #allocation2 [shape = 'f32[18,18,3]{2,1,0:T(8,128)}', space=vmem, size = 0x36000, scoped, tag = 'scratch operand']
  #allocation3 [shape = 'f32[18,18,32]{2,1,0:T(8,128)}', space=vmem, size = 0x36000, scoped, tag = 'scratch operand']
  %s0 = inlined_call_operand.vmem [shape: f32[2,16,16,3], index: 0, kind: input, shape index: {}]
  %s1 = inlined_call_operand.vmem [shape: bf16[3,9,32], index: 1, kind: input, shape index: {}]
  %s2 = inlined_call_operand.vmem [shape: f32[1,32], index: 2, kind: input, shape index: {}]
  %s3 = inlined_call_operand.vmem [shape: bf16[2,2,3,96,32], index: 3, kind: input, shape index: {}]
  %s4 = inlined_call_operand.vmem [shape: f32[2,2,1,32], index: 4, kind: input, shape index: {}]
  %s5 = inlined_call_operand.vmem [shape: bf16[3,96,32], index: 5, kind: input, shape index: {}]
  %s6 = inlined_call_operand.vmem [shape: f32[1,32], index: 6, kind: input, shape index: {}]
  %s7 = inlined_call_operand.hbm [shape: f32[2,16,16,32], index: 7, kind: output, shape index: {}]
  %s8 = sld [smem:[#allocation0]]
  $region61: #{tpu_custom_call.1} parent=0
    _
  %s10 = ssub.s32 1, %s8
  %s11 = scalar_select 0, %s10, %s8
  $region1: #{tpu_custom_call.1} parent=0
    #allocation4 [shape = 'u8[262144]{0}', space=vmem, size = 0x40000, scoped, tag = 'output window, operand 0']
    #allocation5 [shape = 's32[2]{0}', space=sflag, size = 0x8, scoped, tag = 'scoped memory for tpu_custom_call.1']
    %12 = vsyncpa [#allocation5], 0
    %s13 = scalar_lea.sflag [#allocation5], 1
    %14 = vsyncpa %s13, 0
    loop: start=0, step=1, limit=4
    $region2: #{tpu_custom_call.1} parent=1 // loop_pre_header
      _
    $region3: #{tpu_custom_call.1} parent=1 // loop_header
      %s16 = sphi 0, %s20
      %p17 = scmp.ge.s32.totalorder %s16, 4
      %s26 = sphi 0, %s28
      %s29 = sphi 0, %s26
      %s30 = sphi 0, %s29
      %s46 = sphi 0, %s30
      %s50 = sphi 0, %s50
      %s52 = sphi 0, %s50
      %s53 = sphi 0, %s52
      %s67 = sphi 0, %s53
      %s71 = sphi 0, %s71
      %s73 = sphi 0, %s71
      %s74 = sphi 0, %s73
      %s88 = sphi 0, %s74
      %s92 = sphi 0, %s92
      %s94 = sphi 0, %s92
      %s95 = sphi 0, %s94
      %s109 = sphi 0, %s95
      %s113 = sphi 0, %s113
      %s115 = sphi 0, %s113
      %s116 = sphi 0, %s115
      %s130 = sphi 0, %s116
      %s134 = sphi 0, %s134
      %s136 = sphi 0, %s134
      %s137 = sphi 0, %s136
      %s151 = sphi 0, %s137
      %s155 = sphi 0, %s155
      %s157 = sphi 0, %s155
      %s158 = sphi 0, %s157
      %s172 = sphi 0, %s158
      %s178 = sphi 0, %s180
      %s181 = sphi 0, %s178
      %s182 = sphi 0, %s181
      %s198 = sphi 0, %s182
    $region4: #{tpu_custom_call.1} parent=1 // loop_header_branch
      %19 = sbr.rel (%p17) target = $region8
    $region5: #{tpu_custom_call.1} parent=1 // loop_body
      %s21 = ssub.s32 %s16, 1
      %s22 = ssub.s32 %s16, 2
      %s23 = sadd.s32 %s16, 1
      %s24 = ssub.s32 %s16, %s23
      %p25 = scmp.eq.s32.totalorder %s24, 0
      %s27 = sadd.s32 %s26, 1
      %s28 = scalar_select %p25, %s26, %s27
      %p31 = pneg %p25
      %p32 = scmp.eq.s32.totalorder %s16, 1
      %p33 = por %p31, %p32
      %p34 = scmp.ne.s32.totalorder %s26, %s29
      %p35 = scmp.eq.s32.totalorder %s16, 0
      %p36 = por %p34, %p35
      %p37 = scmp.ne.s32.totalorder %s26, %s29
      %p38 = scmp.eq.s32.totalorder %s21, 1
      %p39 = por %p37, %p38
      %p40 = scmp.ne.s32.totalorder %s29, %s30
      %p41 = scmp.eq.s32.totalorder %s21, 0
      %p42 = por %p40, %p41
      %p43 = scmp.ne.s32.totalorder %s29, %s30
      %p44 = scmp.eq.s32.totalorder %s22, 1
      %p45 = por %p43, %p44
      %p47 = scmp.ne.s32.totalorder %s30, %s46
      %p48 = scmp.eq.s32.totalorder %s22, 0
      %p49 = por %p47, %p48
      %s51 = sadd.s32 %s50, 1
      %p54 = scmp.eq.s32.totalorder %s16, 1
      %p55 = scmp.ne.s32.totalorder %s50, %s52
      %p56 = scmp.eq.s32.totalorder %s16, 0
      %p57 = por %p55, %p56
      %p58 = scmp.ne.s32.totalorder %s50, %s52
      %p59 = scmp.eq.s32.totalorder %s21, 1
      %p60 = por %p58, %p59
      %p61 = scmp.ne.s32.totalorder %s52, %s53
      %p62 = scmp.eq.s32.totalorder %s21, 0
      %p63 = por %p61, %p62
      %p64 = scmp.ne.s32.totalorder %s52, %s53
      %p65 = scmp.eq.s32.totalorder %s22, 1
      %p66 = por %p64, %p65
      %p68 = scmp.ne.s32.totalorder %s53, %s67
      %p69 = scmp.eq.s32.totalorder %s22, 0
      %p70 = por %p68, %p69
      %s72 = sadd.s32 %s71, 1
      %p75 = scmp.eq.s32.totalorder %s16, 1
      %p76 = scmp.ne.s32.totalorder %s71, %s73
      %p77 = scmp.eq.s32.totalorder %s16, 0
      %p78 = por %p76, %p77
      %p79 = scmp.ne.s32.totalorder %s71, %s73
      %p80 = scmp.eq.s32.totalorder %s21, 1
      %p81 = por %p79, %p80
      %p82 = scmp.ne.s32.totalorder %s73, %s74
      %p83 = scmp.eq.s32.totalorder %s21, 0
      %p84 = por %p82, %p83
      %p85 = scmp.ne.s32.totalorder %s73, %s74
      %p86 = scmp.eq.s32.totalorder %s22, 1
      %p87 = por %p85, %p86
      %p89 = scmp.ne.s32.totalorder %s74, %s88
      %p90 = scmp.eq.s32.totalorder %s22, 0
      %p91 = por %p89, %p90
      %s93 = sadd.s32 %s92, 1
      %p96 = scmp.eq.s32.totalorder %s16, 1
      %p97 = scmp.ne.s32.totalorder %s92, %s94
      %p98 = scmp.eq.s32.totalorder %s16, 0
      %p99 = por %p97, %p98
      %p100 = scmp.ne.s32.totalorder %s92, %s94
      %p101 = scmp.eq.s32.totalorder %s21, 1
      %p102 = por %p100, %p101
      %p103 = scmp.ne.s32.totalorder %s94, %s95
      %p104 = scmp.eq.s32.totalorder %s21, 0
      %p105 = por %p103, %p104
      %p106 = scmp.ne.s32.totalorder %s94, %s95
      %p107 = scmp.eq.s32.totalorder %s22, 1
      %p108 = por %p106, %p107
      %p110 = scmp.ne.s32.totalorder %s95, %s109
      %p111 = scmp.eq.s32.totalorder %s22, 0
      %p112 = por %p110, %p111
      %s114 = sadd.s32 %s113, 1
      %p117 = scmp.eq.s32.totalorder %s16, 1
      %p118 = scmp.ne.s32.totalorder %s113, %s115
      %p119 = scmp.eq.s32.totalorder %s16, 0
      %p120 = por %p118, %p119
      %p121 = scmp.ne.s32.totalorder %s113, %s115
      %p122 = scmp.eq.s32.totalorder %s21, 1
      %p123 = por %p121, %p122
      %p124 = scmp.ne.s32.totalorder %s115, %s116
      %p125 = scmp.eq.s32.totalorder %s21, 0
      %p126 = por %p124, %p125
      %p127 = scmp.ne.s32.totalorder %s115, %s116
      %p128 = scmp.eq.s32.totalorder %s22, 1
      %p129 = por %p127, %p128
      %p131 = scmp.ne.s32.totalorder %s116, %s130
      %p132 = scmp.eq.s32.totalorder %s22, 0
      %p133 = por %p131, %p132
      %s135 = sadd.s32 %s134, 1
      %p138 = scmp.eq.s32.totalorder %s16, 1
      %p139 = scmp.ne.s32.totalorder %s134, %s136
      %p140 = scmp.eq.s32.totalorder %s16, 0
      %p141 = por %p139, %p140
      %p142 = scmp.ne.s32.totalorder %s134, %s136
      %p143 = scmp.eq.s32.totalorder %s21, 1
      %p144 = por %p142, %p143
      %p145 = scmp.ne.s32.totalorder %s136, %s137
      %p146 = scmp.eq.s32.totalorder %s21, 0
      %p147 = por %p145, %p146
      %p148 = scmp.ne.s32.totalorder %s136, %s137
      %p149 = scmp.eq.s32.totalorder %s22, 1
      %p150 = por %p148, %p149
      %p152 = scmp.ne.s32.totalorder %s137, %s151
      %p153 = scmp.eq.s32.totalorder %s22, 0
      %p154 = por %p152, %p153
      %s156 = sadd.s32 %s155, 1
      %p159 = scmp.eq.s32.totalorder %s16, 1
      %p160 = scmp.ne.s32.totalorder %s155, %s157
      %p161 = scmp.eq.s32.totalorder %s16, 0
      %p162 = por %p160, %p161
      %p163 = scmp.ne.s32.totalorder %s155, %s157
      %p164 = scmp.eq.s32.totalorder %s21, 1
      %p165 = por %p163, %p164
      %p166 = scmp.ne.s32.totalorder %s157, %s158
      %p167 = scmp.eq.s32.totalorder %s21, 0
      %p168 = por %p166, %p167
      %p169 = scmp.ne.s32.totalorder %s157, %s158
      %p170 = scmp.eq.s32.totalorder %s22, 1
      %p171 = por %p169, %p170
      %p173 = scmp.ne.s32.totalorder %s158, %s172
      %p174 = scmp.eq.s32.totalorder %s22, 0
      %p175 = por %p173, %p174
      %s176 = ssub.s32 %s16, %s23
      %p177 = scmp.eq.s32.totalorder %s176, 0
      %s179 = sadd.s32 %s178, 1
      %s180 = scalar_select %p177, %s178, %s179
      %p183 = pneg %p177
      %p184 = scmp.eq.s32.totalorder %s16, 1
      %p185 = por %p183, %p184
      %p186 = scmp.ne.s32.totalorder %s178, %s181
      %p187 = scmp.eq.s32.totalorder %s16, 0
      %p188 = por %p186, %p187
      %p189 = scmp.ne.s32.totalorder %s178, %s181
      %p190 = scmp.eq.s32.totalorder %s21, 1
      %p191 = por %p189, %p190
      %p192 = scmp.ne.s32.totalorder %s181, %s182
      %p193 = scmp.eq.s32.totalorder %s21, 0
      %p194 = por %p192, %p193
      %p195 = scmp.ne.s32.totalorder %s181, %s182
      %p196 = scmp.eq.s32.totalorder %s22, 1
      %p197 = por %p195, %p196
      %p199 = scmp.ne.s32.totalorder %s182, %s198
      %p200 = scmp.eq.s32.totalorder %s22, 0
      %p201 = por %p199, %p200
      %p202 = scmp.le.s32.totalorder 1, %s16
      %p203 = scmp.lt.s32.totalorder %s16, 3
      %p204 = pnand %p202, %p203
      %p205 = pneg %p204
      // Predicated region
      $region9: #{tpu_custom_call.1} parent=5 // pred_check
        _
      $region10: #{tpu_custom_call.1} parent=5 // pred_check_branch
        %207 = sbr.rel (%p204) target = $region12
      $region11: #{tpu_custom_call.1} parent=5 // pred_region
        %s208 = ssub.s32 %s16, 1
        // Predicated region
        $region13: #{tpu_custom_call.1} parent=11 // pred_check
          %p209 = pneg %p63
        $region14: #{tpu_custom_call.1} parent=11 // pred_check_branch
          %211 = sbr.rel (%p209) target = $region16
        $region15: #{tpu_custom_call.1} parent=11 // pred_region
          _
        $region16: #{tpu_custom_call.1} parent=11 // pred_fallthru
          _
        // Predicated region
        $region17: #{tpu_custom_call.1} parent=11 // pred_check
          %p212 = pneg %p84
        $region18: #{tpu_custom_call.1} parent=11 // pred_check_branch
          %214 = sbr.rel (%p212) target = $region20
        $region19: #{tpu_custom_call.1} parent=11 // pred_region
          _
        $region20: #{tpu_custom_call.1} parent=11 // pred_fallthru
          _
        // Predicated region
        $region21: #{tpu_custom_call.1} parent=11 // pred_check
          %p215 = pneg %p105
        $region22: #{tpu_custom_call.1} parent=11 // pred_check_branch
          %217 = sbr.rel (%p215) target = $region24
        $region23: #{tpu_custom_call.1} parent=11 // pred_region
          _
        $region24: #{tpu_custom_call.1} parent=11 // pred_fallthru
          _
        // Predicated region
        $region25: #{tpu_custom_call.1} parent=11 // pred_check
          %p218 = pneg %p126
        $region26: #{tpu_custom_call.1} parent=11 // pred_check_branch
          %220 = sbr.rel (%p218) target = $region28
        $region27: #{tpu_custom_call.1} parent=11 // pred_region
          _
        $region28: #{tpu_custom_call.1} parent=11 // pred_fallthru
          _
        // Predicated region
        $region29: #{tpu_custom_call.1} parent=11 // pred_check
          %p221 = pneg %p147
        $region30: #{tpu_custom_call.1} parent=11 // pred_check_branch
          %223 = sbr.rel (%p221) target = $region32
        $region31: #{tpu_custom_call.1} parent=11 // pred_region
          _
        $region32: #{tpu_custom_call.1} parent=11 // pred_fallthru
          _
        // Predicated region
        $region33: #{tpu_custom_call.1} parent=11 // pred_check
          %p224 = pneg %p168
        $region34: #{tpu_custom_call.1} parent=11 // pred_check_branch
          %226 = sbr.rel (%p224) target = $region36
        $region35: #{tpu_custom_call.1} parent=11 // pred_region
          _
        $region36: #{tpu_custom_call.1} parent=11 // pred_fallthru
          _
      $region12: #{tpu_custom_call.1} parent=5 // pred_fallthru
        _
      %p227 = scmp.lt.s32.totalorder %s16, 2
      // Predicated region
      $region37: #{tpu_custom_call.1} parent=5 // pred_check
        %p228 = pneg %p227
      $region38: #{tpu_custom_call.1} parent=5 // pred_check_branch
        %230 = sbr.rel (%p228) target = $region40
      $region39: #{tpu_custom_call.1} parent=5 // pred_region
        // Predicated region
        $region41: #{tpu_custom_call.1} parent=39 // pred_check
          %p231 = pneg %p36
        $region42: #{tpu_custom_call.1} parent=39 // pred_check_branch
          %233 = sbr.rel (%p231) target = $region44
        $region43: #{tpu_custom_call.1} parent=39 // pred_region
          %p234 = scmp.lt.s32.totalorder %s16, 1
          %s235 = scalar_select %p234, %s16, 1
          %s236 = smul.addr %s235, 32
          %s237 = smul.addr %s236, 8
          %s238 = scalar_lea.vmem %s0, %s237
        $region44: #{tpu_custom_call.1} parent=39 // pred_fallthru
          _
      $region40: #{tpu_custom_call.1} parent=5 // pred_fallthru
        _
      %p239 = scmp.le.s32.totalorder 1, %s16
      %p240 = scmp.lt.s32.totalorder %s16, 3
      %p241 = pnand %p239, %p240
      %p242 = pneg %p241
      // Predicated region
      $region45: #{tpu_custom_call.1} parent=5 // pred_check
        _
      $region46: #{tpu_custom_call.1} parent=5 // pred_check_branch
        %244 = sbr.rel (%p241) target = $region48
      $region47: #{tpu_custom_call.1} parent=5 // pred_region
        %s245 = ssub.s32 %s16, 1
        %p246 = scmp.lt.s32.totalorder %s21, 1
        %s247 = scalar_select %p246, %s21, 1
        %s248 = smul.addr %s247, 32
        %s249 = smul.addr %s248, 8
        %s250 = scalar_lea.vmem %s0, %s249
        %p251 = pneg %p42
        %p252 = pneg %p39
        %p253 = pneg %p63
        %p254 = pneg %p60
        %p255 = pneg %p84
        %p256 = pneg %p81
        %p257 = pneg %p105
        %p258 = pneg %p102
        %p259 = pneg %p126
        %p260 = pneg %p123
        %p261 = pneg %p147
        %p262 = pneg %p144
        %p263 = pneg %p168
        %p264 = pneg %p165
        %p265 = pneg %p194
        %p266 = pneg %p191
        %s267 = sand.u32 %s181, 1
        %s268 = scalar_lea.sflag [#allocation5], %s267
        %s269 = sand.u32 %s181, 1
        %s270 = smul.addr %s269, 256
        %s271 = scalar_lea.vmem [#allocation4], %s270
        %p272 = scmp.lt.s32.totalorder %s21, 1
        %s273 = scalar_select %p272, %s21, 1
        %s274 = smul.addr %s273, 32
        %s275 = smul.addr %s274, 8
        %s276 = scalar_lea.vmem %s0, %s275
        %vm278 = vcmask 23552
        %279 = vst.msk [vmem:[#allocation2] sm:$0xff] %vm278, 0.0
        %280 = vst.msk [vmem:[#allocation2 + $0x8] sm:$0xff] %vm278, 0.0
        %vm281 = vcmask 17408
        %282 = vst.msk [vmem:[#allocation2 + $0x10] sm:$0x3] %vm281, 0.0
        %283 = vst.msk [vmem:[#allocation2 + $0x18] sm:$0xff] %vm278, 0.0
        %284 = vst.msk [vmem:[#allocation2 + $0x20] sm:$0xff] %vm278, 0.0
        %285 = vst.msk [vmem:[#allocation2 + $0x28] sm:$0x3] %vm281, 0.0
        %286 = vst.msk [vmem:[#allocation2 + $0x30] sm:$0xff] %vm278, 0.0
        %287 = vst.msk [vmem:[#allocation2 + $0x38] sm:$0xff] %vm278, 0.0
        %288 = vst.msk [vmem:[#allocation2 + $0x40] sm:$0x3] %vm281, 0.0
        %289 = vst.msk [vmem:[#allocation2 + $0x48] sm:$0xff] %vm278, 0.0
        %290 = vst.msk [vmem:[#allocation2 + $0x50] sm:$0xff] %vm278, 0.0
        %291 = vst.msk [vmem:[#allocation2 + $0x58] sm:$0x3] %vm281, 0.0
        %292 = vst.msk [vmem:[#allocation2 + $0x60] sm:$0xff] %vm278, 0.0
        %293 = vst.msk [vmem:[#allocation2 + $0x68] sm:$0xff] %vm278, 0.0
        %294 = vst.msk [vmem:[#allocation2 + $0x70] sm:$0x3] %vm281, 0.0
        %295 = vst.msk [vmem:[#allocation2 + $0x78] sm:$0xff] %vm278, 0.0
        %296 = vst.msk [vmem:[#allocation2 + $0x80] sm:$0xff] %vm278, 0.0
        %297 = vst.msk [vmem:[#allocation2 + $0x88] sm:$0x3] %vm281, 0.0
        %298 = vst.msk [vmem:[#allocation2 + $0x90] sm:$0xff] %vm278, 0.0
        %299 = vst.msk [vmem:[#allocation2 + $0x98] sm:$0xff] %vm278, 0.0
        %300 = vst.msk [vmem:[#allocation2 + $0xa0] sm:$0x3] %vm281, 0.0
        %301 = vst.msk [vmem:[#allocation2 + $0xa8] sm:$0xff] %vm278, 0.0
        %302 = vst.msk [vmem:[#allocation2 + $0xb0] sm:$0xff] %vm278, 0.0
        %303 = vst.msk [vmem:[#allocation2 + $0xb8] sm:$0x3] %vm281, 0.0
        %304 = vst.msk [vmem:[#allocation2 + $0xc0] sm:$0xff] %vm278, 0.0
        %305 = vst.msk [vmem:[#allocation2 + $0xc8] sm:$0xff] %vm278, 0.0
        %306 = vst.msk [vmem:[#allocation2 + $0xd0] sm:$0x3] %vm281, 0.0
        %307 = vst.msk [vmem:[#allocation2 + $0xd8] sm:$0xff] %vm278, 0.0
        %308 = vst.msk [vmem:[#allocation2 + $0xe0] sm:$0xff] %vm278, 0.0
        %309 = vst.msk [vmem:[#allocation2 + $0xe8] sm:$0x3] %vm281, 0.0
        %310 = vst.msk [vmem:[#allocation2 + $0xf0] sm:$0xff] %vm278, 0.0
        %311 = vst.msk [vmem:[#allocation2 + $0xf8] sm:$0xff] %vm278, 0.0
        %312 = vst.msk [vmem:[#allocation2 + $0x100] sm:$0x3] %vm281, 0.0
        %313 = vst.msk [vmem:[#allocation2 + $0x108] sm:$0xff] %vm278, 0.0
        %314 = vst.msk [vmem:[#allocation2 + $0x110] sm:$0xff] %vm278, 0.0
        %315 = vst.msk [vmem:[#allocation2 + $0x118] sm:$0x3] %vm281, 0.0
        %316 = vst.msk [vmem:[#allocation2 + $0x120] sm:$0xff] %vm278, 0.0
        %317 = vst.msk [vmem:[#allocation2 + $0x128] sm:$0xff] %vm278, 0.0
        %318 = vst.msk [vmem:[#allocation2 + $0x130] sm:$0x3] %vm281, 0.0
        %319 = vst.msk [vmem:[#allocation2 + $0x138] sm:$0xff] %vm278, 0.0
        %320 = vst.msk [vmem:[#allocation2 + $0x140] sm:$0xff] %vm278, 0.0
        %321 = vst.msk [vmem:[#allocation2 + $0x148] sm:$0x3] %vm281, 0.0
        %322 = vst.msk [vmem:[#allocation2 + $0x150] sm:$0xff] %vm278, 0.0
        %323 = vst.msk [vmem:[#allocation2 + $0x158] sm:$0xff] %vm278, 0.0
        %324 = vst.msk [vmem:[#allocation2 + $0x160] sm:$0x3] %vm281, 0.0
        %325 = vst.msk [vmem:[#allocation2 + $0x168] sm:$0xff] %vm278, 0.0
        %326 = vst.msk [vmem:[#allocation2 + $0x170] sm:$0xff] %vm278, 0.0
        %327 = vst.msk [vmem:[#allocation2 + $0x178] sm:$0x3] %vm281, 0.0
        %328 = vst.msk [vmem:[#allocation2 + $0x180] sm:$0xff] %vm278, 0.0
        %329 = vst.msk [vmem:[#allocation2 + $0x188] sm:$0xff] %vm278, 0.0
        %330 = vst.msk [vmem:[#allocation2 + $0x190] sm:$0x3] %vm281, 0.0
        %331 = vst.msk [vmem:[#allocation2 + $0x198] sm:$0xff] %vm278, 0.0
        %332 = vst.msk [vmem:[#allocation2 + $0x1a0] sm:$0xff] %vm278, 0.0
        %333 = vst.msk [vmem:[#allocation2 + $0x1a8] sm:$0x3] %vm281, 0.0
        %vm334 = vcmask 261120
        %335 = vst.msk [vmem:[#allocation3] sm:$0xff] %vm334, 0.0
        %336 = vst.msk [vmem:[#allocation3 + $0x8] sm:$0xff] %vm334, 0.0
        %vm337 = vcmask 254976
        %338 = vst.msk [vmem:[#allocation3 + $0x10] sm:$0x3] %vm337, 0.0
        %339 = vst.msk [vmem:[#allocation3 + $0x18] sm:$0xff] %vm334, 0.0
        %340 = vst.msk [vmem:[#allocation3 + $0x20] sm:$0xff] %vm334, 0.0
        %341 = vst.msk [vmem:[#allocation3 + $0x28] sm:$0x3] %vm337, 0.0
        %342 = vst.msk [vmem:[#allocation3 + $0x30] sm:$0xff] %vm334, 0.0
        %343 = vst.msk [vmem:[#allocation3 + $0x38] sm:$0xff] %vm334, 0.0
        %344 = vst.msk [vmem:[#allocation3 + $0x40] sm:$0x3] %vm337, 0.0
        %345 = vst.msk [vmem:[#allocation3 + $0x48] sm:$0xff] %vm334, 0.0
        %346 = vst.msk [vmem:[#allocation3 + $0x50] sm:$0xff] %vm334, 0.0
        %347 = vst.msk [vmem:[#allocation3 + $0x58] sm:$0x3] %vm337, 0.0
        %348 = vst.msk [vmem:[#allocation3 + $0x60] sm:$0xff] %vm334, 0.0
        %349 = vst.msk [vmem:[#allocation3 + $0x68] sm:$0xff] %vm334, 0.0
        %350 = vst.msk [vmem:[#allocation3 + $0x70] sm:$0x3] %vm337, 0.0
        %351 = vst.msk [vmem:[#allocation3 + $0x78] sm:$0xff] %vm334, 0.0
        %352 = vst.msk [vmem:[#allocation3 + $0x80] sm:$0xff] %vm334, 0.0
        %353 = vst.msk [vmem:[#allocation3 + $0x88] sm:$0x3] %vm337, 0.0
        %354 = vst.msk [vmem:[#allocation3 + $0x90] sm:$0xff] %vm334, 0.0
        %355 = vst.msk [vmem:[#allocation3 + $0x98] sm:$0xff] %vm334, 0.0
        %356 = vst.msk [vmem:[#allocation3 + $0xa0] sm:$0x3] %vm337, 0.0
        %357 = vst.msk [vmem:[#allocation3 + $0xa8] sm:$0xff] %vm334, 0.0
        %358 = vst.msk [vmem:[#allocation3 + $0xb0] sm:$0xff] %vm334, 0.0
        %359 = vst.msk [vmem:[#allocation3 + $0xb8] sm:$0x3] %vm337, 0.0
        %360 = vst.msk [vmem:[#allocation3 + $0xc0] sm:$0xff] %vm334, 0.0
        %361 = vst.msk [vmem:[#allocation3 + $0xc8] sm:$0xff] %vm334, 0.0
        %362 = vst.msk [vmem:[#allocation3 + $0xd0] sm:$0x3] %vm337, 0.0
        %363 = vst.msk [vmem:[#allocation3 + $0xd8] sm:$0xff] %vm334, 0.0
        %364 = vst.msk [vmem:[#allocation3 + $0xe0] sm:$0xff] %vm334, 0.0
        %365 = vst.msk [vmem:[#allocation3 + $0xe8] sm:$0x3] %vm337, 0.0
        %366 = vst.msk [vmem:[#allocation3 + $0xf0] sm:$0xff] %vm334, 0.0
        %367 = vst.msk [vmem:[#allocation3 + $0xf8] sm:$0xff] %vm334, 0.0
        %368 = vst.msk [vmem:[#allocation3 + $0x100] sm:$0x3] %vm337, 0.0
        %369 = vst.msk [vmem:[#allocation3 + $0x108] sm:$0xff] %vm334, 0.0
        %370 = vst.msk [vmem:[#allocation3 + $0x110] sm:$0xff] %vm334, 0.0
        %371 = vst.msk [vmem:[#allocation3 + $0x118] sm:$0x3] %vm337, 0.0
        %372 = vst.msk [vmem:[#allocation3 + $0x120] sm:$0xff] %vm334, 0.0
        %373 = vst.msk [vmem:[#allocation3 + $0x128] sm:$0xff] %vm334, 0.0
        %374 = vst.msk [vmem:[#allocation3 + $0x130] sm:$0x3] %vm337, 0.0
        %375 = vst.msk [vmem:[#allocation3 + $0x138] sm:$0xff] %vm334, 0.0
        %376 = vst.msk [vmem:[#allocation3 + $0x140] sm:$0xff] %vm334, 0.0
        %377 = vst.msk [vmem:[#allocation3 + $0x148] sm:$0x3] %vm337, 0.0
        %378 = vst.msk [vmem:[#allocation3 + $0x150] sm:$0xff] %vm334, 0.0
        %379 = vst.msk [vmem:[#allocation3 + $0x158] sm:$0xff] %vm334, 0.0
        %380 = vst.msk [vmem:[#allocation3 + $0x160] sm:$0x3] %vm337, 0.0
        %381 = vst.msk [vmem:[#allocation3 + $0x168] sm:$0xff] %vm334, 0.0
        %382 = vst.msk [vmem:[#allocation3 + $0x170] sm:$0xff] %vm334, 0.0
        %383 = vst.msk [vmem:[#allocation3 + $0x178] sm:$0x3] %vm337, 0.0
        %384 = vst.msk [vmem:[#allocation3 + $0x180] sm:$0xff] %vm334, 0.0
        %385 = vst.msk [vmem:[#allocation3 + $0x188] sm:$0xff] %vm334, 0.0
        %386 = vst.msk [vmem:[#allocation3 + $0x190] sm:$0x3] %vm337, 0.0
        %387 = vst.msk [vmem:[#allocation3 + $0x198] sm:$0xff] %vm334, 0.0
        %388 = vst.msk [vmem:[#allocation3 + $0x1a0] sm:$0xff] %vm334, 0.0
        %389 = vst.msk [vmem:[#allocation3 + $0x1a8] sm:$0x3] %vm337, 0.0
        %v390 = vld [vmem:[%s276] sm:$0xff]
        %v391 = vld [vmem:[%s276 + $0x8] sm:$0xff]
        %v392 = vld [vmem:[%s276 + $0x10] sm:$0xff]
        %v393 = vld [vmem:[%s276 + $0x18] sm:$0xff]
        %v394 = vld [vmem:[%s276 + $0x20] sm:$0xff]
        %v395 = vld [vmem:[%s276 + $0x28] sm:$0xff]
        %v396 = vld [vmem:[%s276 + $0x30] sm:$0xff]
        %v397 = vld [vmem:[%s276 + $0x38] sm:$0xff]
        %v398 = vld [vmem:[%s276 + $0x40] sm:$0xff]
        %v399 = vld [vmem:[%s276 + $0x48] sm:$0xff]
        %v400 = vld [vmem:[%s276 + $0x50] sm:$0xff]
        %v401 = vld [vmem:[%s276 + $0x58] sm:$0xff]
        %v402 = vld [vmem:[%s276 + $0x60] sm:$0xff]
        %v403 = vld [vmem:[%s276 + $0x68] sm:$0xff]
        %v404 = vld [vmem:[%s276 + $0x70] sm:$0xff]
        %v405 = vld [vmem:[%s276 + $0x78] sm:$0xff]
        %v406 = vld [vmem:[%s276 + $0x80] sm:$0xff]
        %v407 = vld [vmem:[%s276 + $0x88] sm:$0xff]
        %v408 = vld [vmem:[%s276 + $0x90] sm:$0xff]
        %v409 = vld [vmem:[%s276 + $0x98] sm:$0xff]
        %v410 = vld [vmem:[%s276 + $0xa0] sm:$0xff]
        %v411 = vld [vmem:[%s276 + $0xa8] sm:$0xff]
        %v412 = vld [vmem:[%s276 + $0xb0] sm:$0xff]
        %v413 = vld [vmem:[%s276 + $0xb8] sm:$0xff]
        %v414 = vld [vmem:[%s276 + $0xc0] sm:$0xff]
        %v415 = vld [vmem:[%s276 + $0xc8] sm:$0xff]
        %v416 = vld [vmem:[%s276 + $0xd0] sm:$0xff]
        %v417 = vld [vmem:[%s276 + $0xd8] sm:$0xff]
        %v418 = vld [vmem:[%s276 + $0xe0] sm:$0xff]
        %v419 = vld [vmem:[%s276 + $0xe8] sm:$0xff]
        %v420 = vld [vmem:[%s276 + $0xf0] sm:$0xff]
        %v421 = vld [vmem:[%s276 + $0xf8] sm:$0xff]
        %s422 = scalar_lea.vmem [#allocation2], 24
        %423 = vst.msk [vmem:[%s422 + $0x1] sm:$0xff] %vm278, %v390
        %424 = vst.msk [vmem:[%s422 + $0x9] sm:$0xff] %vm278, %v391
        %425 = vst.msk [vmem:[%s422 + $0x19] sm:$0xff] %vm278, %v392
        %426 = vst.msk [vmem:[%s422 + $0x21] sm:$0xff] %vm278, %v393
        %427 = vst.msk [vmem:[%s422 + $0x31] sm:$0xff] %vm278, %v394
        %428 = vst.msk [vmem:[%s422 + $0x39] sm:$0xff] %vm278, %v395
        %429 = vst.msk [vmem:[%s422 + $0x49] sm:$0xff] %vm278, %v396
        %430 = vst.msk [vmem:[%s422 + $0x51] sm:$0xff] %vm278, %v397
        %431 = vst.msk [vmem:[%s422 + $0x61] sm:$0xff] %vm278, %v398
        %432 = vst.msk [vmem:[%s422 + $0x69] sm:$0xff] %vm278, %v399
        %433 = vst.msk [vmem:[%s422 + $0x79] sm:$0xff] %vm278, %v400
        %434 = vst.msk [vmem:[%s422 + $0x81] sm:$0xff] %vm278, %v401
        %435 = vst.msk [vmem:[%s422 + $0x91] sm:$0xff] %vm278, %v402
        %436 = vst.msk [vmem:[%s422 + $0x99] sm:$0xff] %vm278, %v403
        %437 = vst.msk [vmem:[%s422 + $0xa9] sm:$0xff] %vm278, %v404
        %438 = vst.msk [vmem:[%s422 + $0xb1] sm:$0xff] %vm278, %v405
        %439 = vst.msk [vmem:[%s422 + $0xc1] sm:$0xff] %vm278, %v406
        %440 = vst.msk [vmem:[%s422 + $0xc9] sm:$0xff] %vm278, %v407
        %441 = vst.msk [vmem:[%s422 + $0xd9] sm:$0xff] %vm278, %v408
        %442 = vst.msk [vmem:[%s422 + $0xe1] sm:$0xff] %vm278, %v409
        %443 = vst.msk [vmem:[%s422 + $0xf1] sm:$0xff] %vm278, %v410
        %444 = vst.msk [vmem:[%s422 + $0xf9] sm:$0xff] %vm278, %v411
        %445 = vst.msk [vmem:[%s422 + $0x109] sm:$0xff] %vm278, %v412
        %446 = vst.msk [vmem:[%s422 + $0x111] sm:$0xff] %vm278, %v413
        %447 = vst.msk [vmem:[%s422 + $0x121] sm:$0xff] %vm278, %v414
        %448 = vst.msk [vmem:[%s422 + $0x129] sm:$0xff] %vm278, %v415
        %449 = vst.msk [vmem:[%s422 + $0x139] sm:$0xff] %vm278, %v416
        %450 = vst.msk [vmem:[%s422 + $0x141] sm:$0xff] %vm278, %v417
        %451 = vst.msk [vmem:[%s422 + $0x151] sm:$0xff] %vm278, %v418
        %452 = vst.msk [vmem:[%s422 + $0x159] sm:$0xff] %vm278, %v419
        %453 = vst.msk [vmem:[%s422 + $0x169] sm:$0xff] %vm278, %v420
        %454 = vst.msk [vmem:[%s422 + $0x171] sm:$0xff] %vm278, %v421
        %v455 = vld [vmem:[#allocation2] sm:$0xff]
        %v456 = vld [vmem:[#allocation2 + $0x8] sm:$0xff]
        %v457 = vld [vmem:[#allocation2 + $0x10] sm:$0x3]
        %v458 = vld [vmem:[#allocation2 + $0x18] sm:$0xff]
        %v459 = vld [vmem:[#allocation2 + $0x20] sm:$0xff]
        %v460 = vld [vmem:[#allocation2 + $0x28] sm:$0x3]
        %v461 = vld [vmem:[#allocation2 + $0x30] sm:$0xff]
        %v462 = vld [vmem:[#allocation2 + $0x38] sm:$0xff]
        %v463 = vld [vmem:[#allocation2 + $0x40] sm:$0x3]
        %v464 = vld [vmem:[#allocation2 + $0x48] sm:$0xff]
        %v465 = vld [vmem:[#allocation2 + $0x50] sm:$0xff]
        %v466 = vld [vmem:[#allocation2 + $0x58] sm:$0x3]
        %v467 = vld [vmem:[#allocation2 + $0x60] sm:$0xff]
        %v468 = vld [vmem:[#allocation2 + $0x68] sm:$0xff]
        %v469 = vld [vmem:[#allocation2 + $0x70] sm:$0x3]
        %v470 = vld [vmem:[#allocation2 + $0x78] sm:$0xff]
        %v471 = vld [vmem:[#allocation2 + $0x80] sm:$0xff]
        %v472 = vld [vmem:[#allocation2 + $0x88] sm:$0x3]
        %v473 = vld [vmem:[#allocation2 + $0x90] sm:$0xff]
        %v474 = vld [vmem:[#allocation2 + $0x98] sm:$0xff]
        %v475 = vld [vmem:[#allocation2 + $0xa0] sm:$0x3]
        %v476 = vld [vmem:[#allocation2 + $0xa8] sm:$0xff]
        %v477 = vld [vmem:[#allocation2 + $0xb0] sm:$0xff]
        %v478 = vld [vmem:[#allocation2 + $0xb8] sm:$0x3]
        %v479 = vld [vmem:[#allocation2 + $0xc0] sm:$0xff]
        %v480 = vld [vmem:[#allocation2 + $0xc8] sm:$0xff]
        %v481 = vld [vmem:[#allocation2 + $0xd0] sm:$0x3]
        %v482 = vld [vmem:[#allocation2 + $0xd8] sm:$0xff]
        %v483 = vld [vmem:[#allocation2 + $0xe0] sm:$0xff]
        %v484 = vld [vmem:[#allocation2 + $0xe8] sm:$0x3]
        %v485 = vld [vmem:[#allocation2 + $0xf0] sm:$0xff]
        %v486 = vld [vmem:[#allocation2 + $0xf8] sm:$0xff]
        %v487 = vld [vmem:[#allocation2 + $0x100] sm:$0x3]
        %v488 = vld [vmem:[#allocation2 + $0x108] sm:$0xff]
        %v489 = vld [vmem:[#allocation2 + $0x110] sm:$0xff]
        %v490 = vld [vmem:[#allocation2 + $0x118] sm:$0x3]
        %v491 = vld [vmem:[#allocation2 + $0x120] sm:$0xff]
        %v492 = vld [vmem:[#allocation2 + $0x128] sm:$0xff]
        %v493 = vld [vmem:[#allocation2 + $0x130] sm:$0x3]
        %v494 = vld [vmem:[#allocation2 + $0x138] sm:$0xff]
        %v495 = vld [vmem:[#allocation2 + $0x140] sm:$0xff]
        %v496 = vld [vmem:[#allocation2 + $0x148] sm:$0x3]
        %v497 = vld [vmem:[#allocation2 + $0x150] sm:$0xff]
        %v498 = vld [vmem:[#allocation2 + $0x158] sm:$0xff]
        %v499 = vld [vmem:[#allocation2 + $0x160] sm:$0x3]
        %v500 = vld [vmem:[#allocation2 + $0x168] sm:$0xff]
        %v501 = vld [vmem:[#allocation2 + $0x170] sm:$0xff]
        %v502 = vld [vmem:[#allocation2 + $0x178] sm:$0x3]
        %v503 = vld [vmem:[#allocation2 + $0x180] sm:$0xff]
        %v504 = vld [vmem:[#allocation2 + $0x188] sm:$0xff]
        %v505 = vld [vmem:[#allocation2 + $0x190] sm:$0x3]
        %v506 = vld [vmem:[#allocation2 + $0x198] sm:$0xff]
        %v507 = vld [vmem:[#allocation2 + $0x1a0] sm:$0xff]
        %v508 = vld [vmem:[#allocation2 + $0x1a8] sm:$0x3]
        %v509 = vld [vmem:[%s1] sm:$0xf]
        %v510 = vld [vmem:[%s1 + $0x4] sm:$0x1]
        %v511 = vld [vmem:[%s1 + $0x8] sm:$0xf]
        %v512 = vld [vmem:[%s1 + $0xc] sm:$0x1]
        %v513 = vld [vmem:[%s1 + $0x10] sm:$0xf]
        %v514 = vld [vmem:[%s1 + $0x14] sm:$0x1]
        %v515 = vld [vmem:[%s2] sm:$0x1]
        %vm564 = vcmask 1046528
        %v565 = vrot.slane %v455, 1
        %v566 = vrot.slane %v456, 1
        %v567 = vsel %vm564, %v565, %v566
        %v568 = vrot.slane %v457, 1
        %v569 = vsel %vm564, %v566, %v568
        %v570 = vrot.slane %v458, 1
        %v571 = vrot.slane %v459, 1
        %v572 = vsel %vm564, %v570, %v571
        %v573 = vrot.slane %v460, 1
        %v574 = vsel %vm564, %v571, %v573
        %v575 = vrot.slane %v461, 1
        %v576 = vrot.slane %v462, 1
        %v577 = vsel %vm564, %v575, %v576
        %v578 = vrot.slane %v463, 1
        %v579 = vsel %vm564, %v576, %v578
        %v580 = vrot.slane %v464, 1
        %v581 = vrot.slane %v465, 1
        %v582 = vsel %vm564, %v580, %v581
        %v583 = vrot.slane %v466, 1
        %v584 = vsel %vm564, %v581, %v583
        %v585 = vrot.slane %v467, 1
        %v586 = vrot.slane %v468, 1
        %v587 = vsel %vm564, %v585, %v586
        %v588 = vrot.slane %v469, 1
        %v589 = vsel %vm564, %v586, %v588
        %v590 = vrot.slane %v470, 1
        %v591 = vrot.slane %v471, 1
        %v592 = vsel %vm564, %v590, %v591
        %v593 = vrot.slane %v472, 1
        %v594 = vsel %vm564, %v591, %v593
        %v595 = vrot.slane %v473, 1
        %v596 = vrot.slane %v474, 1
        %v597 = vsel %vm564, %v595, %v596
        %v598 = vrot.slane %v475, 1
        %v599 = vsel %vm564, %v596, %v598
        %v600 = vrot.slane %v476, 1
        %v601 = vrot.slane %v477, 1
        %v602 = vsel %vm564, %v600, %v601
        %v603 = vrot.slane %v478, 1
        %v604 = vsel %vm564, %v601, %v603
        %v605 = vrot.slane %v479, 1
        %v606 = vrot.slane %v480, 1
        %v607 = vsel %vm564, %v605, %v606
        %v608 = vrot.slane %v481, 1
        %v609 = vsel %vm564, %v606, %v608
        %v610 = vrot.slane %v482, 1
        %v611 = vrot.slane %v483, 1
        %v612 = vsel %vm564, %v610, %v611
        %v613 = vrot.slane %v484, 1
        %v614 = vsel %vm564, %v611, %v613
        %v615 = vrot.slane %v485, 1
        %v616 = vrot.slane %v486, 1
        %v617 = vsel %vm564, %v615, %v616
        %v618 = vrot.slane %v487, 1
        %v619 = vsel %vm564, %v616, %v618
        %v620 = vrot.slane %v488, 1
        %v621 = vrot.slane %v489, 1
        %v622 = vsel %vm564, %v620, %v621
        %v623 = vrot.slane %v490, 1
        %v624 = vsel %vm564, %v621, %v623
        %v625 = vrot.slane %v491, 1
        %v626 = vrot.slane %v492, 1
        %v627 = vsel %vm564, %v625, %v626
        %v628 = vrot.slane %v493, 1
        %v629 = vsel %vm564, %v626, %v628
        %v630 = vrot.slane %v494, 1
        %v631 = vrot.slane %v495, 1
        %v632 = vsel %vm564, %v630, %v631
        %v633 = vrot.slane %v496, 1
        %v634 = vsel %vm564, %v631, %v633
        %v635 = vrot.slane %v497, 1
        %v636 = vrot.slane %v498, 1
        %v637 = vsel %vm564, %v635, %v636
        %v638 = vrot.slane %v499, 1
        %v639 = vsel %vm564, %v636, %v638
        %v640 = vrot.slane %v500, 1
        %v641 = vrot.slane %v501, 1
        %v642 = vsel %vm564, %v640, %v641
        %v643 = vrot.slane %v502, 1
        %v644 = vsel %vm564, %v641, %v643
        %645 = vrot.lane.b32.xlu0 %v567, 3
        %v646 = vpop.permute.xlu0 %645
        %647 = vrot.lane.b32.xlu0 %v569, 3
        %v648 = vpop.permute.xlu0 %647
        %649 = vrot.lane.b32.xlu0 %v572, 3
        %v650 = vpop.permute.xlu0 %649
        %651 = vrot.lane.b32.xlu0 %v574, 3
        %v652 = vpop.permute.xlu0 %651
        %653 = vrot.lane.b32.xlu0 %v577, 3
        %v654 = vpop.permute.xlu0 %653
        %655 = vrot.lane.b32.xlu0 %v579, 3
        %v656 = vpop.permute.xlu0 %655
        %657 = vrot.lane.b32.xlu0 %v582, 3
        %v658 = vpop.permute.xlu0 %657
        %659 = vrot.lane.b32.xlu0 %v584, 3
        %v660 = vpop.permute.xlu0 %659
        %661 = vrot.lane.b32.xlu0 %v587, 3
        %v662 = vpop.permute.xlu0 %661
        %663 = vrot.lane.b32.xlu0 %v589, 3
        %v664 = vpop.permute.xlu0 %663
        %665 = vrot.lane.b32.xlu0 %v592, 3
        %v666 = vpop.permute.xlu0 %665
        %667 = vrot.lane.b32.xlu0 %v594, 3
        %v668 = vpop.permute.xlu0 %667
        %669 = vrot.lane.b32.xlu0 %v597, 3
        %v670 = vpop.permute.xlu0 %669
        %671 = vrot.lane.b32.xlu0 %v599, 3
        %v672 = vpop.permute.xlu0 %671
        %673 = vrot.lane.b32.xlu0 %v602, 3
        %v674 = vpop.permute.xlu0 %673
        %675 = vrot.lane.b32.xlu0 %v604, 3
        %v676 = vpop.permute.xlu0 %675
        %677 = vrot.lane.b32.xlu0 %v607, 3
        %v678 = vpop.permute.xlu0 %677
        %679 = vrot.lane.b32.xlu0 %v609, 3
        %v680 = vpop.permute.xlu0 %679
        %681 = vrot.lane.b32.xlu0 %v612, 3
        %v682 = vpop.permute.xlu0 %681
        %683 = vrot.lane.b32.xlu0 %v614, 3
        %v684 = vpop.permute.xlu0 %683
        %685 = vrot.lane.b32.xlu0 %v617, 3
        %v686 = vpop.permute.xlu0 %685
        %687 = vrot.lane.b32.xlu0 %v619, 3
        %v688 = vpop.permute.xlu0 %687
        %689 = vrot.lane.b32.xlu0 %v622, 3
        %v690 = vpop.permute.xlu0 %689
        %691 = vrot.lane.b32.xlu0 %v624, 3
        %v692 = vpop.permute.xlu0 %691
        %693 = vrot.lane.b32.xlu0 %v627, 3
        %v694 = vpop.permute.xlu0 %693
        %695 = vrot.lane.b32.xlu0 %v629, 3
        %v696 = vpop.permute.xlu0 %695
        %697 = vrot.lane.b32.xlu0 %v632, 3
        %v698 = vpop.permute.xlu0 %697
        %699 = vrot.lane.b32.xlu0 %v634, 3
        %v700 = vpop.permute.xlu0 %699
        %701 = vrot.lane.b32.xlu0 %v637, 3
        %v702 = vpop.permute.xlu0 %701
        %703 = vrot.lane.b32.xlu0 %v639, 3
        %v704 = vpop.permute.xlu0 %703
        %705 = vrot.lane.b32.xlu0 %v642, 3
        %v706 = vpop.permute.xlu0 %705
        %707 = vrot.lane.b32.xlu0 %v644, 3
        %v708 = vpop.permute.xlu0 %707
        %vm741 = vcmask 1045504
        %v742 = vrot.slane %v455, 2
        %v743 = vrot.slane %v456, 2
        %v744 = vsel %vm741, %v742, %v743
        %v745 = vrot.slane %v457, 2
        %v746 = vsel %vm741, %v743, %v745
        %v747 = vrot.slane %v458, 2
        %v748 = vrot.slane %v459, 2
        %v749 = vsel %vm741, %v747, %v748
        %v750 = vrot.slane %v460, 2
        %v751 = vsel %vm741, %v748, %v750
        %v752 = vrot.slane %v461, 2
        %v753 = vrot.slane %v462, 2
        %v754 = vsel %vm741, %v752, %v753
        %v755 = vrot.slane %v463, 2
        %v756 = vsel %vm741, %v753, %v755
        %v757 = vrot.slane %v464, 2
        %v758 = vrot.slane %v465, 2
        %v759 = vsel %vm741, %v757, %v758
        %v760 = vrot.slane %v466, 2
        %v761 = vsel %vm741, %v758, %v760
        %v762 = vrot.slane %v467, 2
        %v763 = vrot.slane %v468, 2
        %v764 = vsel %vm741, %v762, %v763
        %v765 = vrot.slane %v469, 2
        %v766 = vsel %vm741, %v763, %v765
        %v767 = vrot.slane %v470, 2
        %v768 = vrot.slane %v471, 2
        %v769 = vsel %vm741, %v767, %v768
        %v770 = vrot.slane %v472, 2
        %v771 = vsel %vm741, %v768, %v770
        %v772 = vrot.slane %v473, 2
        %v773 = vrot.slane %v474, 2
        %v774 = vsel %vm741, %v772, %v773
        %v775 = vrot.slane %v475, 2
        %v776 = vsel %vm741, %v773, %v775
        %v777 = vrot.slane %v476, 2
        %v778 = vrot.slane %v477, 2
        %v779 = vsel %vm741, %v777, %v778
        %v780 = vrot.slane %v478, 2
        %v781 = vsel %vm741, %v778, %v780
        %v782 = vrot.slane %v479, 2
        %v783 = vrot.slane %v480, 2
        %v784 = vsel %vm741, %v782, %v783
        %v785 = vrot.slane %v481, 2
        %v786 = vsel %vm741, %v783, %v785
        %v787 = vrot.slane %v482, 2
        %v788 = vrot.slane %v483, 2
        %v789 = vsel %vm741, %v787, %v788
        %v790 = vrot.slane %v484, 2
        %v791 = vsel %vm741, %v788, %v790
        %v792 = vrot.slane %v485, 2
        %v793 = vrot.slane %v486, 2
        %v794 = vsel %vm741, %v792, %v793
        %v795 = vrot.slane %v487, 2
        %v796 = vsel %vm741, %v793, %v795
        %v797 = vrot.slane %v488, 2
        %v798 = vrot.slane %v489, 2
        %v799 = vsel %vm741, %v797, %v798
        %v800 = vrot.slane %v490, 2
        %v801 = vsel %vm741, %v798, %v800
        %v802 = vrot.slane %v491, 2
        %v803 = vrot.slane %v492, 2
        %v804 = vsel %vm741, %v802, %v803
        %v805 = vrot.slane %v493, 2
        %v806 = vsel %vm741, %v803, %v805
        %v807 = vrot.slane %v494, 2
        %v808 = vrot.slane %v495, 2
        %v809 = vsel %vm741, %v807, %v808
        %v810 = vrot.slane %v496, 2
        %v811 = vsel %vm741, %v808, %v810
        %v812 = vrot.slane %v497, 2
        %v813 = vrot.slane %v498, 2
        %v814 = vsel %vm741, %v812, %v813
        %v815 = vrot.slane %v499, 2
        %v816 = vsel %vm741, %v813, %v815
        %v817 = vrot.slane %v500, 2
        %v818 = vrot.slane %v501, 2
        %v819 = vsel %vm741, %v817, %v818
        %v820 = vrot.slane %v502, 2
        %v821 = vsel %vm741, %v818, %v820
        %822 = vrot.lane.b32.xlu0 %v744, 6
        %v823 = vpop.permute.xlu0 %822
        %824 = vrot.lane.b32.xlu0 %v746, 6
        %v825 = vpop.permute.xlu0 %824
        %826 = vrot.lane.b32.xlu0 %v749, 6
        %v827 = vpop.permute.xlu0 %826
        %828 = vrot.lane.b32.xlu0 %v751, 6
        %v829 = vpop.permute.xlu0 %828
        %830 = vrot.lane.b32.xlu0 %v754, 6
        %v831 = vpop.permute.xlu0 %830
        %832 = vrot.lane.b32.xlu0 %v756, 6
        %v833 = vpop.permute.xlu0 %832
        %834 = vrot.lane.b32.xlu0 %v759, 6
        %v835 = vpop.permute.xlu0 %834
        %836 = vrot.lane.b32.xlu0 %v761, 6
        %v837 = vpop.permute.xlu0 %836
        %838 = vrot.lane.b32.xlu0 %v764, 6
        %v839 = vpop.permute.xlu0 %838
        %840 = vrot.lane.b32.xlu0 %v766, 6
        %v841 = vpop.permute.xlu0 %840
        %842 = vrot.lane.b32.xlu0 %v769, 6
        %v843 = vpop.permute.xlu0 %842
        %844 = vrot.lane.b32.xlu0 %v771, 6
        %v845 = vpop.permute.xlu0 %844
        %846 = vrot.lane.b32.xlu0 %v774, 6
        %v847 = vpop.permute.xlu0 %846
        %848 = vrot.lane.b32.xlu0 %v776, 6
        %v849 = vpop.permute.xlu0 %848
        %850 = vrot.lane.b32.xlu0 %v779, 6
        %v851 = vpop.permute.xlu0 %850
        %852 = vrot.lane.b32.xlu0 %v781, 6
        %v853 = vpop.permute.xlu0 %852
        %854 = vrot.lane.b32.xlu0 %v784, 6
        %v855 = vpop.permute.xlu0 %854
        %856 = vrot.lane.b32.xlu0 %v786, 6
        %v857 = vpop.permute.xlu0 %856
        %858 = vrot.lane.b32.xlu0 %v789, 6
        %v859 = vpop.permute.xlu0 %858
        %860 = vrot.lane.b32.xlu0 %v791, 6
        %v861 = vpop.permute.xlu0 %860
        %862 = vrot.lane.b32.xlu0 %v794, 6
        %v863 = vpop.permute.xlu0 %862
        %864 = vrot.lane.b32.xlu0 %v796, 6
        %v865 = vpop.permute.xlu0 %864
        %866 = vrot.lane.b32.xlu0 %v799, 6
        %v867 = vpop.permute.xlu0 %866
        %868 = vrot.lane.b32.xlu0 %v801, 6
        %v869 = vpop.permute.xlu0 %868
        %870 = vrot.lane.b32.xlu0 %v804, 6
        %v871 = vpop.permute.xlu0 %870
        %872 = vrot.lane.b32.xlu0 %v806, 6
        %v873 = vpop.permute.xlu0 %872
        %874 = vrot.lane.b32.xlu0 %v809, 6
        %v875 = vpop.permute.xlu0 %874
        %876 = vrot.lane.b32.xlu0 %v811, 6
        %v877 = vpop.permute.xlu0 %876
        %878 = vrot.lane.b32.xlu0 %v814, 6
        %v879 = vpop.permute.xlu0 %878
        %880 = vrot.lane.b32.xlu0 %v816, 6
        %v881 = vpop.permute.xlu0 %880
        %882 = vrot.lane.b32.xlu0 %v819, 6
        %v883 = vpop.permute.xlu0 %882
        %884 = vrot.lane.b32.xlu0 %v821, 6
        %v885 = vpop.permute.xlu0 %884
        %v918 = vsel %vm278, %v455, %v646
        %v919 = vsel %vm278, %v456, %v648
        %v920 = vsel %vm278, %v458, %v650
        %v921 = vsel %vm278, %v459, %v652
        %v922 = vsel %vm278, %v461, %v654
        %v923 = vsel %vm278, %v462, %v656
        %v924 = vsel %vm278, %v464, %v658
        %v925 = vsel %vm278, %v465, %v660
        %v926 = vsel %vm278, %v467, %v662
        %v927 = vsel %vm278, %v468, %v664
        %v928 = vsel %vm278, %v470, %v666
        %v929 = vsel %vm278, %v471, %v668
        %v930 = vsel %vm278, %v473, %v670
        %v931 = vsel %vm278, %v474, %v672
        %v932 = vsel %vm278, %v476, %v674
        %v933 = vsel %vm278, %v477, %v676
        %v934 = vsel %vm278, %v479, %v678
        %v935 = vsel %vm278, %v480, %v680
        %v936 = vsel %vm278, %v482, %v682
        %v937 = vsel %vm278, %v483, %v684
        %v938 = vsel %vm278, %v485, %v686
        %v939 = vsel %vm278, %v486, %v688
        %v940 = vsel %vm278, %v488, %v690
        %v941 = vsel %vm278, %v489, %v692
        %v942 = vsel %vm278, %v491, %v694
        %v943 = vsel %vm278, %v492, %v696
        %v944 = vsel %vm278, %v494, %v698
        %v945 = vsel %vm278, %v495, %v700
        %v946 = vsel %vm278, %v497, %v702
        %v947 = vsel %vm278, %v498, %v704
        %v948 = vsel %vm278, %v500, %v706
        %v949 = vsel %vm278, %v501, %v708
        %vm950 = vcmask 48128
        %v951 = vsel %vm950, %v918, %v823
        %v952 = vsel %vm950, %v919, %v825
        %v953 = vsel %vm950, %v920, %v827
        %v954 = vsel %vm950, %v921, %v829
        %v955 = vsel %vm950, %v922, %v831
        %v956 = vsel %vm950, %v923, %v833
        %v957 = vsel %vm950, %v924, %v835
        %v958 = vsel %vm950, %v925, %v837
        %v959 = vsel %vm950, %v926, %v839
        %v960 = vsel %vm950, %v927, %v841
        %v961 = vsel %vm950, %v928, %v843
        %v962 = vsel %vm950, %v929, %v845
        %v963 = vsel %vm950, %v930, %v847
        %v964 = vsel %vm950, %v931, %v849
        %v965 = vsel %vm950, %v932, %v851
        %v966 = vsel %vm950, %v933, %v853
        %v967 = vsel %vm950, %v934, %v855
        %v968 = vsel %vm950, %v935, %v857
        %v969 = vsel %vm950, %v936, %v859
        %v970 = vsel %vm950, %v937, %v861
        %v971 = vsel %vm950, %v938, %v863
        %v972 = vsel %vm950, %v939, %v865
        %v973 = vsel %vm950, %v940, %v867
        %v974 = vsel %vm950, %v941, %v869
        %v975 = vsel %vm950, %v942, %v871
        %v976 = vsel %vm950, %v943, %v873
        %v977 = vsel %vm950, %v944, %v875
        %v978 = vsel %vm950, %v945, %v877
        %v979 = vsel %vm950, %v946, %v879
        %v980 = vsel %vm950, %v947, %v881
        %v981 = vsel %vm950, %v948, %v883
        %v982 = vsel %vm950, %v949, %v885
        %v983 = vpack.c.bf16 %v952, %v951
        %v984 = vpack.c.bf16 %v954, %v953
        %v985 = vpack.c.bf16 %v956, %v955
        %v986 = vpack.c.bf16 %v958, %v957
        %v987 = vpack.c.bf16 %v960, %v959
        %v988 = vpack.c.bf16 %v962, %v961
        %v989 = vpack.c.bf16 %v964, %v963
        %v990 = vpack.c.bf16 %v966, %v965
        %v991 = vpack.c.bf16 %v968, %v967
        %v992 = vpack.c.bf16 %v970, %v969
        %v993 = vpack.c.bf16 %v972, %v971
        %v994 = vpack.c.bf16 %v974, %v973
        %v995 = vpack.c.bf16 %v976, %v975
        %v996 = vpack.c.bf16 %v978, %v977
        %v997 = vpack.c.bf16 %v980, %v979
        %v998 = vpack.c.bf16 %v982, %v981
        %v1002 = vrot.slane %v503, 1
        %v1003 = vrot.slane %v504, 1
        %v1004 = vsel %vm564, %v1002, %v1003
        %v1005 = vrot.slane %v505, 1
        %v1006 = vsel %vm564, %v1003, %v1005
        %1007 = vrot.lane.b32.xlu0 %v1004, 3
        %v1008 = vpop.permute.xlu0 %1007
        %1009 = vrot.lane.b32.xlu0 %v1006, 3
        %v1010 = vpop.permute.xlu0 %1009
        %v1013 = vrot.slane %v503, 2
        %v1014 = vrot.slane %v504, 2
        %v1015 = vsel %vm741, %v1013, %v1014
        %v1016 = vrot.slane %v505, 2
        %v1017 = vsel %vm741, %v1014, %v1016
        %1018 = vrot.lane.b32.xlu0 %v1015, 6
        %v1019 = vpop.permute.xlu0 %1018
        %1020 = vrot.lane.b32.xlu0 %v1017, 6
        %v1021 = vpop.permute.xlu0 %1020
        %v1024 = vsel %vm278, %v503, %v1008
        %v1025 = vsel %vm278, %v504, %v1010
        %v1026 = vsel %vm950, %v1024, %v1019
        %v1027 = vsel %vm950, %v1025, %v1021
        %v1028 = vpack.c.bf16 %v1027, %v1026
        %v1031 = vunpack.c.l.b16 %v511
        %v1032 = vunpack.c.l.b16 %v512
        %v1033 = vpack.c.b16 %v1032, %v1031
        %vm1034 = vcmask 72704
        %v1036 = vsel %vm1034, %v984, 0
        %v1039 = vsel %vm1034, %v985, 0
        %v1042 = vsel %vm1034, %v986, 0
        %v1045 = vsel %vm1034, %v987, 0
        %v1048 = vsel %vm1034, %v988, 0
        %v1051 = vsel %vm1034, %v989, 0
        %v1054 = vsel %vm1034, %v990, 0
        %v1057 = vsel %vm1034, %v991, 0
        %v1060 = vsel %vm1034, %v992, 0
        %v1063 = vsel %vm1034, %v993, 0
        %v1066 = vsel %vm1034, %v994, 0
        %v1069 = vsel %vm1034, %v995, 0
        %v1072 = vsel %vm1034, %v996, 0
        %v1075 = vsel %vm1034, %v997, 0
        %v1078 = vsel %vm1034, %v998, 0
        %v1081 = vsel %vm1034, %v1028, 0
        %vm1083 = vcmask 1043456
        %vm1084 = vcmask 1044480
        %v1085 = vsel %vm1083, 4294967295, 65535
        %v1086 = vsel %vm1084, %v1085, 0
        %v1088 = vand.u32 %v1033, %v1086
        %1090 = vmatprep.subr.bf16.mxu0 0
        %1091 = vmatpush1.bf16.msra.mxu0 %v1088
        %1092 = vmatprep.subr.bf16.mxu0 0
        %1093 = vmatpush1.bf16.msra.mxu0 0
        %1094 = vmatprep.subr.bf16.mxu0 0
        %1095 = vmatpush1.bf16.msra.mxu0 0
        %1096 = vmatprep.subr.bf16.mxu0 0
        %1097 = vmatpush1.bf16.msra.mxu0 0
        %1098 = vmatprep.subr.bf16.mxu0 0
        %1099 = vmatpush1.bf16.msra.mxu0 0
        %1100 = vmatprep.subr.bf16.mxu0 0
        %1101 = vmatpush1.bf16.msra.mxu0 0
        %1102 = vmatprep.subr.bf16.mxu0 0
        %1103 = vmatpush1.bf16.msra.mxu0 0
        %1104 = vmatprep.subr.bf16.mxu0 0
        %1105 = vmatpush1.bf16.msra.mxu0 0
        %1106 = vmatprep.subr.bf16.mxu0 0
        %1107 = vmatpush1.bf16.msra.mxu0 0
        %1108 = vmatprep.subr.bf16.mxu0 0
        %1109 = vmatpush1.bf16.msra.mxu0 0
        %1110 = vmatprep.subr.bf16.mxu0 0
        %1111 = vmatpush1.bf16.msra.mxu0 0
        %1112 = vmatprep.subr.bf16.mxu0 0
        %1113 = vmatpush1.bf16.msra.mxu0 0
        %1114 = vmatprep.subr.bf16.mxu0 0
        %1115 = vmatpush1.bf16.msra.mxu0 0
        %1116 = vmatprep.subr.bf16.mxu0 0
        %1117 = vmatpush1.bf16.msra.mxu0 0
        %1118 = vmatprep.subr.bf16.mxu0 0
        %1119 = vmatpush1.bf16.msra.mxu0 0
        %1120 = vmatprep.subr.bf16.mxu0 0
        %1121 = vmatpush1.bf16.msra.mxu0 0
        %1122 = vmatprep.mubr.bf16.mxu0 0
        %1123 = vmatmul.mubr.bf16.gmra.mrb[0].mxu0 %v1036
        %v1124 = vpop.f32.mrb[0].mxu0
        %v1125 = vadd.f32 0.0, %v1124
        %v1126 = vpop.f32.mrb[0].mxu0
        %v1127 = vpop.f32.mrb[0].mxu0
        %v1128 = vadd.f32 0.0, %v1127
        %v1129 = vpop.f32.mrb[0].mxu0
        %1130 = vmatprep.mubr.bf16.mxu0 0
        %1131 = vmatmul.mubr.bf16.gmra.mrb[0].mxu0 %v1039
        %v1132 = vpop.f32.mrb[0].mxu0
        %v1133 = vadd.f32 0.0, %v1132
        %v1134 = vpop.f32.mrb[0].mxu0
        %v1135 = vpop.f32.mrb[0].mxu0
        %v1136 = vadd.f32 0.0, %v1135
        %v1137 = vpop.f32.mrb[0].mxu0
        %1138 = vmatprep.mubr.bf16.mxu0 0
        %1139 = vmatmul.mubr.bf16.gmra.mrb[0].mxu0 %v1042
        %v1140 = vpop.f32.mrb[0].mxu0
        %v1141 = vadd.f32 0.0, %v1140
        %v1142 = vpop.f32.mrb[0].mxu0
        %v1143 = vpop.f32.mrb[0].mxu0
        %v1144 = vadd.f32 0.0, %v1143
        %v1145 = vpop.f32.mrb[0].mxu0
        %1146 = vmatprep.mubr.bf16.mxu0 0
        %1147 = vmatmul.mubr.bf16.gmra.mrb[0].mxu0 %v1045
        %v1148 = vpop.f32.mrb[0].mxu0
        %v1149 = vadd.f32 0.0, %v1148
        %v1150 = vpop.f32.mrb[0].mxu0
        %v1151 = vpop.f32.mrb[0].mxu0
        %v1152 = vadd.f32 0.0, %v1151
        %v1153 = vpop.f32.mrb[0].mxu0
        %1154 = vmatprep.mubr.bf16.mxu0 0
        %1155 = vmatmul.mubr.bf16.gmra.mrb[0].mxu0 %v1048
        %v1156 = vpop.f32.mrb[0].mxu0
        %v1157 = vadd.f32 0.0, %v1156
        %v1158 = vpop.f32.mrb[0].mxu0
        %v1159 = vpop.f32.mrb[0].mxu0
        %v1160 = vadd.f32 0.0, %v1159
        %v1161 = vpop.f32.mrb[0].mxu0
        %1162 = vmatprep.mubr.bf16.mxu0 0
        %1163 = vmatmul.mubr.bf16.gmra.mrb[0].mxu0 %v1051
        %v1164 = vpop.f32.mrb[0].mxu0
        %v1165 = vadd.f32 0.0, %v1164
        %v1166 = vpop.f32.mrb[0].mxu0
        %v1167 = vpop.f32.mrb[0].mxu0
        %v1168 = vadd.f32 0.0, %v1167
        %v1169 = vpop.f32.mrb[0].mxu0
        %1170 = vmatprep.mubr.bf16.mxu0 0
        %1171 = vmatmul.mubr.bf16.gmra.mrb[0].mxu0 %v1054
        %v1172 = vpop.f32.mrb[0].mxu0
        %v1173 = vadd.f32 0.0, %v1172
        %v1174 = vpop.f32.mrb[0].mxu0
        %v1175 = vpop.f32.mrb[0].mxu0
        %v1176 = vadd.f32 0.0, %v1175
        %v1177 = vpop.f32.mrb[0].mxu0
        %1178 = vmatprep.mubr.bf16.mxu0 0
        %1179 = vmatmul.mubr.bf16.gmra.mrb[0].mxu0 %v1057
        %v1180 = vpop.f32.mrb[0].mxu0
        %v1181 = vadd.f32 0.0, %v1180
        %v1182 = vpop.f32.mrb[0].mxu0
        %v1183 = vpop.f32.mrb[0].mxu0
        %v1184 = vadd.f32 0.0, %v1183
        %v1185 = vpop.f32.mrb[0].mxu0
        %1186 = vmatprep.mubr.bf16.mxu0 0
        %1187 = vmatmul.mubr.bf16.gmra.mrb[0].mxu0 %v1060
        %v1188 = vpop.f32.mrb[0].mxu0
        %v1189 = vadd.f32 0.0, %v1188
        %v1190 = vpop.f32.mrb[0].mxu0
        %v1191 = vpop.f32.mrb[0].mxu0
        %v1192 = vadd.f32 0.0, %v1191
        %v1193 = vpop.f32.mrb[0].mxu0
        %1194 = vmatprep.mubr.bf16.mxu0 0
        %1195 = vmatmul.mubr.bf16.gmra.mrb[0].mxu0 %v1063
        %v1196 = vpop.f32.mrb[0].mxu0
        %v1197 = vadd.f32 0.0, %v1196
        %v1198 = vpop.f32.mrb[0].mxu0
        %v1199 = vpop.f32.mrb[0].mxu0
        %v1200 = vadd.f32 0.0, %v1199
        %v1201 = vpop.f32.mrb[0].mxu0
        %1202 = vmatprep.mubr.bf16.mxu0 0
        %1203 = vmatmul.mubr.bf16.gmra.mrb[0].mxu0 %v1066
        %v1204 = vpop.f32.mrb[0].mxu0
        %v1205 = vadd.f32 0.0, %v1204
        %v1206 = vpop.f32.mrb[0].mxu0
        %v1207 = vpop.f32.mrb[0].mxu0
        %v1208 = vadd.f32 0.0, %v1207
        %v1209 = vpop.f32.mrb[0].mxu0
        %1210 = vmatprep.mubr.bf16.mxu0 0
        %1211 = vmatmul.mubr.bf16.gmra.mrb[0].mxu0 %v1069
        %v1212 = vpop.f32.mrb[0].mxu0
        %v1213 = vadd.f32 0.0, %v1212
        %v1214 = vpop.f32.mrb[0].mxu0
        %v1215 = vpop.f32.mrb[0].mxu0
        %v1216 = vadd.f32 0.0, %v1215
        %v1217 = vpop.f32.mrb[0].mxu0
        %1218 = vmatprep.mubr.bf16.mxu0 0
        %1219 = vmatmul.mubr.bf16.gmra.mrb[0].mxu0 %v1072
        %v1220 = vpop.f32.mrb[0].mxu0
        %v1221 = vadd.f32 0.0, %v1220
        %v1222 = vpop.f32.mrb[0].mxu0
        %v1223 = vpop.f32.mrb[0].mxu0
        %v1224 = vadd.f32 0.0, %v1223
        %v1225 = vpop.f32.mrb[0].mxu0
        %1226 = vmatprep.mubr.bf16.mxu0 0
        %1227 = vmatmul.mubr.bf16.gmra.mrb[0].mxu0 %v1075
        %v1228 = vpop.f32.mrb[0].mxu0
        %v1229 = vadd.f32 0.0, %v1228
        %v1230 = vpop.f32.mrb[0].mxu0
        %v1231 = vpop.f32.mrb[0].mxu0
        %v1232 = vadd.f32 0.0, %v1231
        %v1233 = vpop.f32.mrb[0].mxu0
        %1234 = vmatprep.mubr.bf16.mxu0 0
        %1235 = vmatmul.mubr.bf16.gmra.mrb[0].mxu0 %v1078
        %v1236 = vpop.f32.mrb[0].mxu0
        %v1237 = vadd.f32 0.0, %v1236
        %v1238 = vpop.f32.mrb[0].mxu0
        %v1239 = vpop.f32.mrb[0].mxu0
        %v1240 = vadd.f32 0.0, %v1239
        %v1241 = vpop.f32.mrb[0].mxu0
        %1242 = vmatprep.mubr.bf16.mxu0 0
        %1243 = vmatmul.mubr.bf16.gmra.mrb[0].mxu0 %v1081
        %v1244 = vpop.f32.mrb[0].mxu0
        %v1245 = vadd.f32 0.0, %v1244
        %v1246 = vpop.f32.mrb[0].mxu0
        %v1247 = vpop.f32.mrb[0].mxu0
        %v1248 = vadd.f32 0.0, %v1247
        %v1249 = vpop.f32.mrb[0].mxu0
        %1250 = vdwg.mxu0
        %v1253 = vunpack.c.l.b16 %v509
        %v1254 = vunpack.c.l.b16 %v510
        %v1255 = vpack.c.b16 %v1254, %v1253
        %v1257 = vsel %vm1034, %v983, 0
        %v1260 = vand.u32 %v1255, %v1086
        %1262 = vmatprep.subr.bf16.mxu0 0
        %1263 = vmatpush1.bf16.msra.mxu0 %v1260
        %1264 = vmatprep.subr.bf16.mxu0 0
        %1265 = vmatpush1.bf16.msra.mxu0 0
        %1266 = vmatprep.subr.bf16.mxu0 0
        %1267 = vmatpush1.bf16.msra.mxu0 0
        %1268 = vmatprep.subr.bf16.mxu0 0
        %1269 = vmatpush1.bf16.msra.mxu0 0
        %1270 = vmatprep.subr.bf16.mxu0 0
        %1271 = vmatpush1.bf16.msra.mxu0 0
        %1272 = vmatprep.subr.bf16.mxu0 0
        %1273 = vmatpush1.bf16.msra.mxu0 0
        %1274 = vmatprep.subr.bf16.mxu0 0
        %1275 = vmatpush1.bf16.msra.mxu0 0
        %1276 = vmatprep.subr.bf16.mxu0 0
        %1277 = vmatpush1.bf16.msra.mxu0 0
        %1278 = vmatprep.subr.bf16.mxu0 0
        %1279 = vmatpush1.bf16.msra.mxu0 0
        %1280 = vmatprep.subr.bf16.mxu0 0
        %1281 = vmatpush1.bf16.msra.mxu0 0
        %1282 = vmatprep.subr.bf16.mxu0 0
        %1283 = vmatpush1.bf16.msra.mxu0 0
        %1284 = vmatprep.subr.bf16.mxu0 0
        %1285 = vmatpush1.bf16.msra.mxu0 0
        %1286 = vmatprep.subr.bf16.mxu0 0
        %1287 = vmatpush1.bf16.msra.mxu0 0
        %1288 = vmatprep.subr.bf16.mxu0 0
        %1289 = vmatpush1.bf16.msra.mxu0 0
        %1290 = vmatprep.subr.bf16.mxu0 0
        %1291 = vmatpush1.bf16.msra.mxu0 0
        %1292 = vmatprep.subr.bf16.mxu0 0
        %1293 = vmatpush1.bf16.msra.mxu0 0
        %1294 = vmatprep.mubr.bf16.mxu0 0
        %1295 = vmatmul.mubr.bf16.gmra.mrb[0].mxu0 %v1257
        %v1296 = vpop.f32.mrb[0].mxu0
        %v1297 = vadd.f32 %v1125, %v1296
        %v1298 = vpop.f32.mrb[0].mxu0
        %v1299 = vpop.f32.mrb[0].mxu0
        %v1300 = vadd.f32 %v1128, %v1299
        %v1301 = vpop.f32.mrb[0].mxu0
        %1302 = vmatprep.mubr.bf16.mxu0 0
        %1303 = vmatmul.mubr.bf16.gmra.mrb[0].mxu0 %v1036
        %v1304 = vpop.f32.mrb[0].mxu0
        %v1305 = vadd.f32 %v1133, %v1304
        %v1306 = vpop.f32.mrb[0].mxu0
        %v1307 = vpop.f32.mrb[0].mxu0
        %v1308 = vadd.f32 %v1136, %v1307
        %v1309 = vpop.f32.mrb[0].mxu0
        %1310 = vmatprep.mubr.bf16.mxu0 0
        %1311 = vmatmul.mubr.bf16.gmra.mrb[0].mxu0 %v1039
        %v1312 = vpop.f32.mrb[0].mxu0
        %v1313 = vadd.f32 %v1141, %v1312
        %v1314 = vpop.f32.mrb[0].mxu0
        %v1315 = vpop.f32.mrb[0].mxu0
        %v1316 = vadd.f32 %v1144, %v1315
        %v1317 = vpop.f32.mrb[0].mxu0
        %1318 = vmatprep.mubr.bf16.mxu0 0
        %1319 = vmatmul.mubr.bf16.gmra.mrb[0].mxu0 %v1042
        %v1320 = vpop.f32.mrb[0].mxu0
        %v1321 = vadd.f32 %v1149, %v1320
        %v1322 = vpop.f32.mrb[0].mxu0
        %v1323 = vpop.f32.mrb[0].mxu0
        %v1324 = vadd.f32 %v1152, %v1323
        %v1325 = vpop.f32.mrb[0].mxu0
        %1326 = vmatprep.mubr.bf16.mxu0 0
        %1327 = vmatmul.mubr.bf16.gmra.mrb[0].mxu0 %v1045
        %v1328 = vpop.f32.mrb[0].mxu0
        %v1329 = vadd.f32 %v1157, %v1328
        %v1330 = vpop.f32.mrb[0].mxu0
        %v1331 = vpop.f32.mrb[0].mxu0
        %v1332 = vadd.f32 %v1160, %v1331
        %v1333 = vpop.f32.mrb[0].mxu0
        %1334 = vmatprep.mubr.bf16.mxu0 0
        %1335 = vmatmul.mubr.bf16.gmra.mrb[0].mxu0 %v1048
        %v1336 = vpop.f32.mrb[0].mxu0
        %v1337 = vadd.f32 %v1165, %v1336
        %v1338 = vpop.f32.mrb[0].mxu0
        %v1339 = vpop.f32.mrb[0].mxu0
        %v1340 = vadd.f32 %v1168, %v1339
        %v1341 = vpop.f32.mrb[0].mxu0
        %1342 = vmatprep.mubr.bf16.mxu0 0
        %1343 = vmatmul.mubr.bf16.gmra.mrb[0].mxu0 %v1051
        %v1344 = vpop.f32.mrb[0].mxu0
        %v1345 = vadd.f32 %v1173, %v1344
        %v1346 = vpop.f32.mrb[0].mxu0
        %v1347 = vpop.f32.mrb[0].mxu0
        %v1348 = vadd.f32 %v1176, %v1347
        %v1349 = vpop.f32.mrb[0].mxu0
        %1350 = vmatprep.mubr.bf16.mxu0 0
        %1351 = vmatmul.mubr.bf16.gmra.mrb[0].mxu0 %v1054
        %v1352 = vpop.f32.mrb[0].mxu0
        %v1353 = vadd.f32 %v1181, %v1352
        %v1354 = vpop.f32.mrb[0].mxu0
        %v1355 = vpop.f32.mrb[0].mxu0
        %v1356 = vadd.f32 %v1184, %v1355
        %v1357 = vpop.f32.mrb[0].mxu0
        %1358 = vmatprep.mubr.bf16.mxu0 0
        %1359 = vmatmul.mubr.bf16.gmra.mrb[0].mxu0 %v1057
        %v1360 = vpop.f32.mrb[0].mxu0
        %v1361 = vadd.f32 %v1189, %v1360
        %v1362 = vpop.f32.mrb[0].mxu0
        %v1363 = vpop.f32.mrb[0].mxu0
        %v1364 = vadd.f32 %v1192, %v1363
        %v1365 = vpop.f32.mrb[0].mxu0
        %1366 = vmatprep.mubr.bf16.mxu0 0
        %1367 = vmatmul.mubr.bf16.gmra.mrb[0].mxu0 %v1060
        %v1368 = vpop.f32.mrb[0].mxu0
        %v1369 = vadd.f32 %v1197, %v1368
        %v1370 = vpop.f32.mrb[0].mxu0
        %v1371 = vpop.f32.mrb[0].mxu0
        %v1372 = vadd.f32 %v1200, %v1371
        %v1373 = vpop.f32.mrb[0].mxu0
        %1374 = vmatprep.mubr.bf16.mxu0 0
        %1375 = vmatmul.mubr.bf16.gmra.mrb[0].mxu0 %v1063
        %v1376 = vpop.f32.mrb[0].mxu0
        %v1377 = vadd.f32 %v1205, %v1376
        %v1378 = vpop.f32.mrb[0].mxu0
        %v1379 = vpop.f32.mrb[0].mxu0
        %v1380 = vadd.f32 %v1208, %v1379
        %v1381 = vpop.f32.mrb[0].mxu0
        %1382 = vmatprep.mubr.bf16.mxu0 0
        %1383 = vmatmul.mubr.bf16.gmra.mrb[0].mxu0 %v1066
        %v1384 = vpop.f32.mrb[0].mxu0
        %v1385 = vadd.f32 %v1213, %v1384
        %v1386 = vpop.f32.mrb[0].mxu0
        %v1387 = vpop.f32.mrb[0].mxu0
        %v1388 = vadd.f32 %v1216, %v1387
        %v1389 = vpop.f32.mrb[0].mxu0
        %1390 = vmatprep.mubr.bf16.mxu0 0
        %1391 = vmatmul.mubr.bf16.gmra.mrb[0].mxu0 %v1069
        %v1392 = vpop.f32.mrb[0].mxu0
        %v1393 = vadd.f32 %v1221, %v1392
        %v1394 = vpop.f32.mrb[0].mxu0
        %v1395 = vpop.f32.mrb[0].mxu0
        %v1396 = vadd.f32 %v1224, %v1395
        %v1397 = vpop.f32.mrb[0].mxu0
        %1398 = vmatprep.mubr.bf16.mxu0 0
        %1399 = vmatmul.mubr.bf16.gmra.mrb[0].mxu0 %v1072
        %v1400 = vpop.f32.mrb[0].mxu0
        %v1401 = vadd.f32 %v1229, %v1400
        %v1402 = vpop.f32.mrb[0].mxu0
        %v1403 = vpop.f32.mrb[0].mxu0
        %v1404 = vadd.f32 %v1232, %v1403
        %v1405 = vpop.f32.mrb[0].mxu0
        %1406 = vmatprep.mubr.bf16.mxu0 0
        %1407 = vmatmul.mubr.bf16.gmra.mrb[0].mxu0 %v1075
        %v1408 = vpop.f32.mrb[0].mxu0
        %v1409 = vadd.f32 %v1237, %v1408
        %v1410 = vpop.f32.mrb[0].mxu0
        %v1411 = vpop.f32.mrb[0].mxu0
        %v1412 = vadd.f32 %v1240, %v1411
        %v1413 = vpop.f32.mrb[0].mxu0
        %1414 = vmatprep.mubr.bf16.mxu0 0
        %1415 = vmatmul.mubr.bf16.gmra.mrb[0].mxu0 %v1078
        %v1416 = vpop.f32.mrb[0].mxu0
        %v1417 = vadd.f32 %v1245, %v1416
        %v1418 = vpop.f32.mrb[0].mxu0
        %v1419 = vpop.f32.mrb[0].mxu0
        %v1420 = vadd.f32 %v1248, %v1419
        %v1421 = vpop.f32.mrb[0].mxu0
        %1422 = vdwg.mxu0
        %v1426 = vrot.slane %v506, 1
        %v1427 = vrot.slane %v507, 1
        %v1428 = vsel %vm564, %v1426, %v1427
        %v1429 = vrot.slane %v508, 1
        %v1430 = vsel %vm564, %v1427, %v1429
        %1431 = vrot.lane.b32.xlu0 %v1428, 3
        %v1432 = vpop.permute.xlu0 %1431
        %1433 = vrot.lane.b32.xlu0 %v1430, 3
        %v1434 = vpop.permute.xlu0 %1433
        %v1437 = vrot.slane %v506, 2
        %v1438 = vrot.slane %v507, 2
        %v1439 = vsel %vm741, %v1437, %v1438
        %v1440 = vrot.slane %v508, 2
        %v1441 = vsel %vm741, %v1438, %v1440
        %1442 = vrot.lane.b32.xlu0 %v1439, 6
        %v1443 = vpop.permute.xlu0 %1442
        %1444 = vrot.lane.b32.xlu0 %v1441, 6
        %v1445 = vpop.permute.xlu0 %1444
        %v1448 = vsel %vm278, %v506, %v1432
        %v1449 = vsel %vm278, %v507, %v1434
        %v1450 = vsel %vm950, %v1448, %v1443
        %v1451 = vsel %vm950, %v1449, %v1445
        %v1452 = vpack.c.bf16 %v1451, %v1450
        %v1455 = vunpack.c.l.b16 %v513
        %v1456 = vunpack.c.l.b16 %v514
        %v1457 = vpack.c.b16 %v1456, %v1455
        %v1459 = vsel %vm1034, %v1452, 0
        %v1462 = vand.u32 %v1457, %v1086
        %1464 = vmatprep.subr.bf16.mxu0 0
        %1465 = vmatpush1.bf16.msra.mxu0 %v1462
        %1466 = vmatprep.subr.bf16.mxu0 0
        %1467 = vmatpush1.bf16.msra.mxu0 0
        %1468 = vmatprep.subr.bf16.mxu0 0
        %1469 = vmatpush1.bf16.msra.mxu0 0
        %1470 = vmatprep.subr.bf16.mxu0 0
        %1471 = vmatpush1.bf16.msra.mxu0 0
        %1472 = vmatprep.subr.bf16.mxu0 0
        %1473 = vmatpush1.bf16.msra.mxu0 0
        %1474 = vmatprep.subr.bf16.mxu0 0
        %1475 = vmatpush1.bf16.msra.mxu0 0
        %1476 = vmatprep.subr.bf16.mxu0 0
        %1477 = vmatpush1.bf16.msra.mxu0 0
        %1478 = vmatprep.subr.bf16.mxu0 0
        %1479 = vmatpush1.bf16.msra.mxu0 0
        %1480 = vmatprep.subr.bf16.mxu0 0
        %1481 = vmatpush1.bf16.msra.mxu0 0
        %1482 = vmatprep.subr.bf16.mxu0 0
        %1483 = vmatpush1.bf16.msra.mxu0 0
        %1484 = vmatprep.subr.bf16.mxu0 0
        %1485 = vmatpush1.bf16.msra.mxu0 0
        %1486 = vmatprep.subr.bf16.mxu0 0
        %1487 = vmatpush1.bf16.msra.mxu0 0
        %1488 = vmatprep.subr.bf16.mxu0 0
        %1489 = vmatpush1.bf16.msra.mxu0 0
        %1490 = vmatprep.subr.bf16.mxu0 0
        %1491 = vmatpush1.bf16.msra.mxu0 0
        %1492 = vmatprep.subr.bf16.mxu0 0
        %1493 = vmatpush1.bf16.msra.mxu0 0
        %1494 = vmatprep.subr.bf16.mxu0 0
        %1495 = vmatpush1.bf16.msra.mxu0 0
        %1496 = vmatprep.mubr.bf16.mxu0 0
        %1497 = vmatmul.mubr.bf16.gmra.mrb[0].mxu0 %v1039
        %v1498 = vpop.f32.mrb[0].mxu0
        %v1499 = vadd.f32 0.0, %v1498
        %v1500 = vpop.f32.mrb[0].mxu0
        %v1501 = vpop.f32.mrb[0].mxu0
        %v1502 = vadd.f32 0.0, %v1501
        %v1503 = vpop.f32.mrb[0].mxu0
        %1504 = vmatprep.mubr.bf16.mxu0 0
        %1505 = vmatmul.mubr.bf16.gmra.mrb[0].mxu0 %v1042
        %v1506 = vpop.f32.mrb[0].mxu0
        %v1507 = vadd.f32 0.0, %v1506
        %v1508 = vpop.f32.mrb[0].mxu0
        %v1509 = vpop.f32.mrb[0].mxu0
        %v1510 = vadd.f32 0.0, %v1509
        %v1511 = vpop.f32.mrb[0].mxu0
        %1512 = vmatprep.mubr.bf16.mxu0 0
        %1513 = vmatmul.mubr.bf16.gmra.mrb[0].mxu0 %v1045
        %v1514 = vpop.f32.mrb[0].mxu0
        %v1515 = vadd.f32 0.0, %v1514
        %v1516 = vpop.f32.mrb[0].mxu0
        %v1517 = vpop.f32.mrb[0].mxu0
        %v1518 = vadd.f32 0.0, %v1517
        %v1519 = vpop.f32.mrb[0].mxu0
        %1520 = vmatprep.mubr.bf16.mxu0 0
        %1521 = vmatmul.mubr.bf16.gmra.mrb[0].mxu0 %v1048
        %v1522 = vpop.f32.mrb[0].mxu0
        %v1523 = vadd.f32 0.0, %v1522
        %v1524 = vpop.f32.mrb[0].mxu0
        %v1525 = vpop.f32.mrb[0].mxu0
        %v1526 = vadd.f32 0.0, %v1525
        %v1527 = vpop.f32.mrb[0].mxu0
        %1528 = vmatprep.mubr.bf16.mxu0 0
        %1529 = vmatmul.mubr.bf16.gmra.mrb[0].mxu0 %v1051
        %v1530 = vpop.f32.mrb[0].mxu0
        %v1531 = vadd.f32 0.0, %v1530
        %v1532 = vpop.f32.mrb[0].mxu0
        %v1533 = vpop.f32.mrb[0].mxu0
        %v1534 = vadd.f32 0.0, %v1533
        %v1535 = vpop.f32.mrb[0].mxu0
        %1536 = vmatprep.mubr.bf16.mxu0 0
        %1537 = vmatmul.mubr.bf16.gmra.mrb[0].mxu0 %v1054
        %v1538 = vpop.f32.mrb[0].mxu0
        %v1539 = vadd.f32 0.0, %v1538
        %v1540 = vpop.f32.mrb[0].mxu0
        %v1541 = vpop.f32.mrb[0].mxu0
        %v1542 = vadd.f32 0.0, %v1541
        %v1543 = vpop.f32.mrb[0].mxu0
        %1544 = vmatprep.mubr.bf16.mxu0 0
        %1545 = vmatmul.mubr.bf16.gmra.mrb[0].mxu0 %v1057
        %v1546 = vpop.f32.mrb[0].mxu0
        %v1547 = vadd.f32 0.0, %v1546
        %v1548 = vpop.f32.mrb[0].mxu0
        %v1549 = vpop.f32.mrb[0].mxu0
        %v1550 = vadd.f32 0.0, %v1549
        %v1551 = vpop.f32.mrb[0].mxu0
        %1552 = vmatprep.mubr.bf16.mxu0 0
        %1553 = vmatmul.mubr.bf16.gmra.mrb[0].mxu0 %v1060
        %v1554 = vpop.f32.mrb[0].mxu0
        %v1555 = vadd.f32 0.0, %v1554
        %v1556 = vpop.f32.mrb[0].mxu0
        %v1557 = vpop.f32.mrb[0].mxu0
        %v1558 = vadd.f32 0.0, %v1557
        %v1559 = vpop.f32.mrb[0].mxu0
        %1560 = vmatprep.mubr.bf16.mxu0 0
        %1561 = vmatmul.mubr.bf16.gmra.mrb[0].mxu0 %v1063
        %v1562 = vpop.f32.mrb[0].mxu0
        %v1563 = vadd.f32 0.0, %v1562
        %v1564 = vpop.f32.mrb[0].mxu0
        %v1565 = vpop.f32.mrb[0].mxu0
        %v1566 = vadd.f32 0.0, %v1565
        %v1567 = vpop.f32.mrb[0].mxu0
        %1568 = vmatprep.mubr.bf16.mxu0 0
        %1569 = vmatmul.mubr.bf16.gmra.mrb[0].mxu0 %v1066
        %v1570 = vpop.f32.mrb[0].mxu0
        %v1571 = vadd.f32 0.0, %v1570
        %v1572 = vpop.f32.mrb[0].mxu0
        %v1573 = vpop.f32.mrb[0].mxu0
        %v1574 = vadd.f32 0.0, %v1573
        %v1575 = vpop.f32.mrb[0].mxu0
        %1576 = vmatprep.mubr.bf16.mxu0 0
        %1577 = vmatmul.mubr.bf16.gmra.mrb[0].mxu0 %v1069
        %v1578 = vpop.f32.mrb[0].mxu0
        %v1579 = vadd.f32 0.0, %v1578
        %v1580 = vpop.f32.mrb[0].mxu0
        %v1581 = vpop.f32.mrb[0].mxu0
        %v1582 = vadd.f32 0.0, %v1581
        %v1583 = vpop.f32.mrb[0].mxu0
        %1584 = vmatprep.mubr.bf16.mxu0 0
        %1585 = vmatmul.mubr.bf16.gmra.mrb[0].mxu0 %v1072
        %v1586 = vpop.f32.mrb[0].mxu0
        %v1587 = vadd.f32 0.0, %v1586
        %v1588 = vpop.f32.mrb[0].mxu0
        %v1589 = vpop.f32.mrb[0].mxu0
        %v1590 = vadd.f32 0.0, %v1589
        %v1591 = vpop.f32.mrb[0].mxu0
        %1592 = vmatprep.mubr.bf16.mxu0 0
        %1593 = vmatmul.mubr.bf16.gmra.mrb[0].mxu0 %v1075
        %v1594 = vpop.f32.mrb[0].mxu0
        %v1595 = vadd.f32 0.0, %v1594
        %v1596 = vpop.f32.mrb[0].mxu0
        %v1597 = vpop.f32.mrb[0].mxu0
        %v1598 = vadd.f32 0.0, %v1597
        %v1599 = vpop.f32.mrb[0].mxu0
        %1600 = vmatprep.mubr.bf16.mxu0 0
        %1601 = vmatmul.mubr.bf16.gmra.mrb[0].mxu0 %v1078
        %v1602 = vpop.f32.mrb[0].mxu0
        %v1603 = vadd.f32 0.0, %v1602
        %v1604 = vpop.f32.mrb[0].mxu0
        %v1605 = vpop.f32.mrb[0].mxu0
        %v1606 = vadd.f32 0.0, %v1605
        %v1607 = vpop.f32.mrb[0].mxu0
        %1608 = vmatprep.mubr.bf16.mxu0 0
        %1609 = vmatmul.mubr.bf16.gmra.mrb[0].mxu0 %v1081
        %v1610 = vpop.f32.mrb[0].mxu0
        %v1611 = vadd.f32 0.0, %v1610
        %v1612 = vpop.f32.mrb[0].mxu0
        %v1613 = vpop.f32.mrb[0].mxu0
        %v1614 = vadd.f32 0.0, %v1613
        %v1615 = vpop.f32.mrb[0].mxu0
        %1616 = vmatprep.mubr.bf16.mxu0 0
        %1617 = vmatmul.mubr.bf16.gmra.mrb[0].mxu0 %v1459
        %v1618 = vpop.f32.mrb[0].mxu0
        %v1619 = vadd.f32 0.0, %v1618
        %v1620 = vpop.f32.mrb[0].mxu0
        %v1621 = vpop.f32.mrb[0].mxu0
        %v1622 = vadd.f32 0.0, %v1621
        %v1623 = vpop.f32.mrb[0].mxu0
        %1624 = vdwg.mxu0
        %v1625 = vadd.f32 %v1297, %v1499
        %v1626 = vadd.f32 %v1300, %v1502
        %v1627 = vadd.f32 %v1305, %v1507
        %v1628 = vadd.f32 %v1308, %v1510
        %v1629 = vadd.f32 %v1313, %v1515
        %v1630 = vadd.f32 %v1316, %v1518
        %v1631 = vadd.f32 %v1321, %v1523
        %v1632 = vadd.f32 %v1324, %v1526
        %v1633 = vadd.f32 %v1329, %v1531
        %v1634 = vadd.f32 %v1332, %v1534
        %v1635 = vadd.f32 %v1337, %v1539
        %v1636 = vadd.f32 %v1340, %v1542
        %v1637 = vadd.f32 %v1345, %v1547
        %v1638 = vadd.f32 %v1348, %v1550
        %v1639 = vadd.f32 %v1353, %v1555
        %v1640 = vadd.f32 %v1356, %v1558
        %v1641 = vadd.f32 %v1361, %v1563
        %v1642 = vadd.f32 %v1364, %v1566
        %v1643 = vadd.f32 %v1369, %v1571
        %v1644 = vadd.f32 %v1372, %v1574
        %v1645 = vadd.f32 %v1377, %v1579
        %v1646 = vadd.f32 %v1380, %v1582
        %v1647 = vadd.f32 %v1385, %v1587
        %v1648 = vadd.f32 %v1388, %v1590
        %v1649 = vadd.f32 %v1393, %v1595
        %v1650 = vadd.f32 %v1396, %v1598
        %v1651 = vadd.f32 %v1401, %v1603
        %v1652 = vadd.f32 %v1404, %v1606
        %v1653 = vadd.f32 %v1409, %v1611
        %v1654 = vadd.f32 %v1412, %v1614
        %v1655 = vadd.f32 %v1417, %v1619
        %v1656 = vadd.f32 %v1420, %v1622
        %v1658 = vlaneseq
        %v1659 = vshrl.u32 %v1658, 7
        %v1660 = vsub.s32 0, %v1659
        %v1661 = vrot.slane %v515, %v1660
        %v1663 = vadd.f32 %v1625, %v1661
        %v1664 = vadd.f32 %v1626, %v1661
        %v1665 = vadd.f32 %v1627, %v1661
        %v1666 = vadd.f32 %v1628, %v1661
        %v1667 = vadd.f32 %v1629, %v1661
        %v1668 = vadd.f32 %v1630, %v1661
        %v1669 = vadd.f32 %v1631, %v1661
        %v1670 = vadd.f32 %v1632, %v1661
        %v1671 = vadd.f32 %v1633, %v1661
        %v1672 = vadd.f32 %v1634, %v1661
        %v1673 = vadd.f32 %v1635, %v1661
        %v1674 = vadd.f32 %v1636, %v1661
        %v1675 = vadd.f32 %v1637, %v1661
        %v1676 = vadd.f32 %v1638, %v1661
        %v1677 = vadd.f32 %v1639, %v1661
        %v1678 = vadd.f32 %v1640, %v1661
        %v1679 = vadd.f32 %v1641, %v1661
        %v1680 = vadd.f32 %v1642, %v1661
        %v1681 = vadd.f32 %v1643, %v1661
        %v1682 = vadd.f32 %v1644, %v1661
        %v1683 = vadd.f32 %v1645, %v1661
        %v1684 = vadd.f32 %v1646, %v1661
        %v1685 = vadd.f32 %v1647, %v1661
        %v1686 = vadd.f32 %v1648, %v1661
        %v1687 = vadd.f32 %v1649, %v1661
        %v1688 = vadd.f32 %v1650, %v1661
        %v1689 = vadd.f32 %v1651, %v1661
        %v1690 = vadd.f32 %v1652, %v1661
        %v1691 = vadd.f32 %v1653, %v1661
        %v1692 = vadd.f32 %v1654, %v1661
        %v1693 = vadd.f32 %v1655, %v1661
        %v1694 = vadd.f32 %v1656, %v1661
        %v1695 = vmax.f32 %v1663, 0.0
        %v1696 = vmax.f32 %v1664, 0.0
        %v1697 = vmax.f32 %v1665, 0.0
        %v1698 = vmax.f32 %v1666, 0.0
        %v1699 = vmax.f32 %v1667, 0.0
        %v1700 = vmax.f32 %v1668, 0.0
        %v1701 = vmax.f32 %v1669, 0.0
        %v1702 = vmax.f32 %v1670, 0.0
        %v1703 = vmax.f32 %v1671, 0.0
        %v1704 = vmax.f32 %v1672, 0.0
        %v1705 = vmax.f32 %v1673, 0.0
        %v1706 = vmax.f32 %v1674, 0.0
        %v1707 = vmax.f32 %v1675, 0.0
        %v1708 = vmax.f32 %v1676, 0.0
        %v1709 = vmax.f32 %v1677, 0.0
        %v1710 = vmax.f32 %v1678, 0.0
        %v1711 = vmax.f32 %v1679, 0.0
        %v1712 = vmax.f32 %v1680, 0.0
        %v1713 = vmax.f32 %v1681, 0.0
        %v1714 = vmax.f32 %v1682, 0.0
        %v1715 = vmax.f32 %v1683, 0.0
        %v1716 = vmax.f32 %v1684, 0.0
        %v1717 = vmax.f32 %v1685, 0.0
        %v1718 = vmax.f32 %v1686, 0.0
        %v1719 = vmax.f32 %v1687, 0.0
        %v1720 = vmax.f32 %v1688, 0.0
        %v1721 = vmax.f32 %v1689, 0.0
        %v1722 = vmax.f32 %v1690, 0.0
        %v1723 = vmax.f32 %v1691, 0.0
        %v1724 = vmax.f32 %v1692, 0.0
        %v1725 = vmax.f32 %v1693, 0.0
        %v1726 = vmax.f32 %v1694, 0.0
        %s1727 = scalar_lea.vmem [#allocation3], 24
        %1728 = vst.msk [vmem:[%s1727 + $0x1] sm:$0xff] %vm334, %v1695
        %1729 = vst.msk [vmem:[%s1727 + $0x9] sm:$0xff] %vm334, %v1696
        %1730 = vst.msk [vmem:[%s1727 + $0x19] sm:$0xff] %vm334, %v1697
        %1731 = vst.msk [vmem:[%s1727 + $0x21] sm:$0xff] %vm334, %v1698
        %1732 = vst.msk [vmem:[%s1727 + $0x31] sm:$0xff] %vm334, %v1699
        %1733 = vst.msk [vmem:[%s1727 + $0x39] sm:$0xff] %vm334, %v1700
        %1734 = vst.msk [vmem:[%s1727 + $0x49] sm:$0xff] %vm334, %v1701
        %1735 = vst.msk [vmem:[%s1727 + $0x51] sm:$0xff] %vm334, %v1702
        %1736 = vst.msk [vmem:[%s1727 + $0x61] sm:$0xff] %vm334, %v1703
        %1737 = vst.msk [vmem:[%s1727 + $0x69] sm:$0xff] %vm334, %v1704
        %1738 = vst.msk [vmem:[%s1727 + $0x79] sm:$0xff] %vm334, %v1705
        %1739 = vst.msk [vmem:[%s1727 + $0x81] sm:$0xff] %vm334, %v1706
        %1740 = vst.msk [vmem:[%s1727 + $0x91] sm:$0xff] %vm334, %v1707
        %1741 = vst.msk [vmem:[%s1727 + $0x99] sm:$0xff] %vm334, %v1708
        %1742 = vst.msk [vmem:[%s1727 + $0xa9] sm:$0xff] %vm334, %v1709
        %1743 = vst.msk [vmem:[%s1727 + $0xb1] sm:$0xff] %vm334, %v1710
        %1744 = vst.msk [vmem:[%s1727 + $0xc1] sm:$0xff] %vm334, %v1711
        %1745 = vst.msk [vmem:[%s1727 + $0xc9] sm:$0xff] %vm334, %v1712
        %1746 = vst.msk [vmem:[%s1727 + $0xd9] sm:$0xff] %vm334, %v1713
        %1747 = vst.msk [vmem:[%s1727 + $0xe1] sm:$0xff] %vm334, %v1714
        %1748 = vst.msk [vmem:[%s1727 + $0xf1] sm:$0xff] %vm334, %v1715
        %1749 = vst.msk [vmem:[%s1727 + $0xf9] sm:$0xff] %vm334, %v1716
        %1750 = vst.msk [vmem:[%s1727 + $0x109] sm:$0xff] %vm334, %v1717
        %1751 = vst.msk [vmem:[%s1727 + $0x111] sm:$0xff] %vm334, %v1718
        %1752 = vst.msk [vmem:[%s1727 + $0x121] sm:$0xff] %vm334, %v1719
        %1753 = vst.msk [vmem:[%s1727 + $0x129] sm:$0xff] %vm334, %v1720
        %1754 = vst.msk [vmem:[%s1727 + $0x139] sm:$0xff] %vm334, %v1721
        %1755 = vst.msk [vmem:[%s1727 + $0x141] sm:$0xff] %vm334, %v1722
        %1756 = vst.msk [vmem:[%s1727 + $0x151] sm:$0xff] %vm334, %v1723
        %1757 = vst.msk [vmem:[%s1727 + $0x159] sm:$0xff] %vm334, %v1724
        %1758 = vst.msk [vmem:[%s1727 + $0x169] sm:$0xff] %vm334, %v1725
        %1759 = vst.msk [vmem:[%s1727 + $0x171] sm:$0xff] %vm334, %v1726
        %v1760 = vld [vmem:[#allocation3] sm:$0xff]
        %v1761 = vld [vmem:[#allocation3 + $0x8] sm:$0xff]
        %v1762 = vld [vmem:[#allocation3 + $0x10] sm:$0x3]
        %v1763 = vld [vmem:[#allocation3 + $0x18] sm:$0xff]
        %v1764 = vld [vmem:[#allocation3 + $0x20] sm:$0xff]
        %v1765 = vld [vmem:[#allocation3 + $0x28] sm:$0x3]
        %v1766 = vld [vmem:[#allocation3 + $0x30] sm:$0xff]
        %v1767 = vld [vmem:[#allocation3 + $0x38] sm:$0xff]
        %v1768 = vld [vmem:[#allocation3 + $0x40] sm:$0x3]
        %v1769 = vld [vmem:[#allocation3 + $0x48] sm:$0xff]
        %v1770 = vld [vmem:[#allocation3 + $0x50] sm:$0xff]
        %v1771 = vld [vmem:[#allocation3 + $0x58] sm:$0x3]
        %v1772 = vld [vmem:[#allocation3 + $0x60] sm:$0xff]
        %v1773 = vld [vmem:[#allocation3 + $0x68] sm:$0xff]
        %v1774 = vld [vmem:[#allocation3 + $0x70] sm:$0x3]
        %v1775 = vld [vmem:[#allocation3 + $0x78] sm:$0xff]
        %v1776 = vld [vmem:[#allocation3 + $0x80] sm:$0xff]
        %v1777 = vld [vmem:[#allocation3 + $0x88] sm:$0x3]
        %v1778 = vld [vmem:[#allocation3 + $0x90] sm:$0xff]
        %v1779 = vld [vmem:[#allocation3 + $0x98] sm:$0xff]
        %v1780 = vld [vmem:[#allocation3 + $0xa0] sm:$0x3]
        %v1781 = vld [vmem:[#allocation3 + $0xa8] sm:$0xff]
        %v1782 = vld [vmem:[#allocation3 + $0xb0] sm:$0xff]
        %v1783 = vld [vmem:[#allocation3 + $0xb8] sm:$0x3]
        %v1784 = vld [vmem:[#allocation3 + $0xc0] sm:$0xff]
        %v1785 = vld [vmem:[#allocation3 + $0xc8] sm:$0xff]
        %v1786 = vld [vmem:[#allocation3 + $0xd0] sm:$0x3]
        %v1787 = vld [vmem:[#allocation3 + $0xd8] sm:$0xff]
        %v1788 = vld [vmem:[#allocation3 + $0xe0] sm:$0xff]
        %v1789 = vld [vmem:[#allocation3 + $0xe8] sm:$0x3]
        %v1790 = vld [vmem:[#allocation3 + $0xf0] sm:$0xff]
        %v1791 = vld [vmem:[#allocation3 + $0xf8] sm:$0xff]
        %v1792 = vld [vmem:[#allocation3 + $0x100] sm:$0x3]
        %v1793 = vld [vmem:[#allocation3 + $0x108] sm:$0xff]
        %v1794 = vld [vmem:[#allocation3 + $0x110] sm:$0xff]
        %v1795 = vld [vmem:[#allocation3 + $0x118] sm:$0x3]
        %v1796 = vld [vmem:[#allocation3 + $0x120] sm:$0xff]
        %v1797 = vld [vmem:[#allocation3 + $0x128] sm:$0xff]
        %v1798 = vld [vmem:[#allocation3 + $0x130] sm:$0x3]
        %v1799 = vld [vmem:[#allocation3 + $0x138] sm:$0xff]
        %v1800 = vld [vmem:[#allocation3 + $0x140] sm:$0xff]
        %v1801 = vld [vmem:[#allocation3 + $0x148] sm:$0x3]
        %v1802 = vld [vmem:[#allocation3 + $0x150] sm:$0xff]
        %v1803 = vld [vmem:[#allocation3 + $0x158] sm:$0xff]
        %v1804 = vld [vmem:[#allocation3 + $0x160] sm:$0x3]
        %v1805 = vld [vmem:[#allocation3 + $0x168] sm:$0xff]
        %v1806 = vld [vmem:[#allocation3 + $0x170] sm:$0xff]
        %v1807 = vld [vmem:[#allocation3 + $0x178] sm:$0x3]
        %v1808 = vld [vmem:[#allocation3 + $0x180] sm:$0xff]
        %v1809 = vld [vmem:[#allocation3 + $0x188] sm:$0xff]
        %v1810 = vld [vmem:[#allocation3 + $0x190] sm:$0x3]
        %v1811 = vld [vmem:[#allocation3 + $0x198] sm:$0xff]
        %v1812 = vld [vmem:[#allocation3 + $0x1a0] sm:$0xff]
        %v1813 = vld [vmem:[#allocation3 + $0x1a8] sm:$0x3]
        %v1814 = vld [vmem:[%s3] sm:$0xf]
        %v1815 = vld [vmem:[%s3 + $0x4] sm:$0xf]
        %v1816 = vld [vmem:[%s3 + $0x8] sm:$0xf]
        %v1817 = vld [vmem:[%s3 + $0xc] sm:$0xf]
        %v1818 = vld [vmem:[%s3 + $0x10] sm:$0xf]
        %v1819 = vld [vmem:[%s3 + $0x14] sm:$0xf]
        %v1820 = vld [vmem:[%s3 + $0x18] sm:$0xf]
        %v1821 = vld [vmem:[%s3 + $0x1c] sm:$0xf]
        %v1822 = vld [vmem:[%s3 + $0x20] sm:$0xf]
        %v1823 = vld [vmem:[%s3 + $0x24] sm:$0xf]
        %v1824 = vld [vmem:[%s3 + $0x28] sm:$0xf]
        %v1825 = vld [vmem:[%s3 + $0x2c] sm:$0xf]
        %v1826 = vld [vmem:[%s3 + $0x30] sm:$0xf]
        %v1827 = vld [vmem:[%s3 + $0x34] sm:$0xf]
        %v1828 = vld [vmem:[%s3 + $0x38] sm:$0xf]
        %v1829 = vld [vmem:[%s3 + $0x3c] sm:$0xf]
        %v1830 = vld [vmem:[%s3 + $0x40] sm:$0xf]
        %v1831 = vld [vmem:[%s3 + $0x44] sm:$0xf]
        %v1832 = vld [vmem:[%s3 + $0x48] sm:$0xf]
        %v1833 = vld [vmem:[%s3 + $0x4c] sm:$0xf]
        %v1834 = vld [vmem:[%s3 + $0x50] sm:$0xf]
        %v1835 = vld [vmem:[%s3 + $0x54] sm:$0xf]
        %v1836 = vld [vmem:[%s3 + $0x58] sm:$0xf]
        %v1837 = vld [vmem:[%s3 + $0x5c] sm:$0xf]
        %v1838 = vld [vmem:[%s3 + $0x60] sm:$0xf]
        %v1839 = vld [vmem:[%s3 + $0x64] sm:$0xf]
        %v1840 = vld [vmem:[%s3 + $0x68] sm:$0xf]
        %v1841 = vld [vmem:[%s3 + $0x6c] sm:$0xf]
        %v1842 = vld [vmem:[%s3 + $0x70] sm:$0xf]
        %v1843 = vld [vmem:[%s3 + $0x74] sm:$0xf]
        %v1844 = vld [vmem:[%s3 + $0x78] sm:$0xf]
        %v1845 = vld [vmem:[%s3 + $0x7c] sm:$0xf]
        %v1846 = vld [vmem:[%s3 + $0x80] sm:$0xf]
        %v1847 = vld [vmem:[%s3 + $0x84] sm:$0xf]
        %v1848 = vld [vmem:[%s3 + $0x88] sm:$0xf]
        %v1849 = vld [vmem:[%s3 + $0x8c] sm:$0xf]
        %v1850 = vld [vmem:[%s4] sm:$0x1]
        %v1899 = vrot.slane %v1760, 1
        %v1900 = vrot.slane %v1761, 1
        %v1901 = vsel %vm564, %v1899, %v1900
        %v1902 = vrot.slane %v1762, 1
        %v1903 = vsel %vm564, %v1900, %v1902
        %v1904 = vrot.slane %v1763, 1
        %v1905 = vrot.slane %v1764, 1
        %v1906 = vsel %vm564, %v1904, %v1905
        %v1907 = vrot.slane %v1765, 1
        %v1908 = vsel %vm564, %v1905, %v1907
        %v1909 = vrot.slane %v1766, 1
        %v1910 = vrot.slane %v1767, 1
        %v1911 = vsel %vm564, %v1909, %v1910
        %v1912 = vrot.slane %v1768, 1
        %v1913 = vsel %vm564, %v1910, %v1912
        %v1914 = vrot.slane %v1769, 1
        %v1915 = vrot.slane %v1770, 1
        %v1916 = vsel %vm564, %v1914, %v1915
        %v1917 = vrot.slane %v1771, 1
        %v1918 = vsel %vm564, %v1915, %v1917
        %v1919 = vrot.slane %v1772, 1
        %v1920 = vrot.slane %v1773, 1
        %v1921 = vsel %vm564, %v1919, %v1920
        %v1922 = vrot.slane %v1774, 1
        %v1923 = vsel %vm564, %v1920, %v1922
        %v1924 = vrot.slane %v1775, 1
        %v1925 = vrot.slane %v1776, 1
        %v1926 = vsel %vm564, %v1924, %v1925
        %v1927 = vrot.slane %v1777, 1
        %v1928 = vsel %vm564, %v1925, %v1927
        %v1929 = vrot.slane %v1778, 1
        %v1930 = vrot.slane %v1779, 1
        %v1931 = vsel %vm564, %v1929, %v1930
        %v1932 = vrot.slane %v1780, 1
        %v1933 = vsel %vm564, %v1930, %v1932
        %v1934 = vrot.slane %v1781, 1
        %v1935 = vrot.slane %v1782, 1
        %v1936 = vsel %vm564, %v1934, %v1935
        %v1937 = vrot.slane %v1783, 1
        %v1938 = vsel %vm564, %v1935, %v1937
        %v1939 = vrot.slane %v1784, 1
        %v1940 = vrot.slane %v1785, 1
        %v1941 = vsel %vm564, %v1939, %v1940
        %v1942 = vrot.slane %v1786, 1
        %v1943 = vsel %vm564, %v1940, %v1942
        %v1944 = vrot.slane %v1787, 1
        %v1945 = vrot.slane %v1788, 1
        %v1946 = vsel %vm564, %v1944, %v1945
        %v1947 = vrot.slane %v1789, 1
        %v1948 = vsel %vm564, %v1945, %v1947
        %v1949 = vrot.slane %v1790, 1
        %v1950 = vrot.slane %v1791, 1
        %v1951 = vsel %vm564, %v1949, %v1950
        %v1952 = vrot.slane %v1792, 1
        %v1953 = vsel %vm564, %v1950, %v1952
        %v1954 = vrot.slane %v1793, 1
        %v1955 = vrot.slane %v1794, 1
        %v1956 = vsel %vm564, %v1954, %v1955
        %v1957 = vrot.slane %v1795, 1
        %v1958 = vsel %vm564, %v1955, %v1957
        %v1959 = vrot.slane %v1796, 1
        %v1960 = vrot.slane %v1797, 1
        %v1961 = vsel %vm564, %v1959, %v1960
        %v1962 = vrot.slane %v1798, 1
        %v1963 = vsel %vm564, %v1960, %v1962
        %v1964 = vrot.slane %v1799, 1
        %v1965 = vrot.slane %v1800, 1
        %v1966 = vsel %vm564, %v1964, %v1965
        %v1967 = vrot.slane %v1801, 1
        %v1968 = vsel %vm564, %v1965, %v1967
        %v1969 = vrot.slane %v1802, 1
        %v1970 = vrot.slane %v1803, 1
        %v1971 = vsel %vm564, %v1969, %v1970
        %v1972 = vrot.slane %v1804, 1
        %v1973 = vsel %vm564, %v1970, %v1972
        %v1974 = vrot.slane %v1805, 1
        %v1975 = vrot.slane %v1806, 1
        %v1976 = vsel %vm564, %v1974, %v1975
        %v1977 = vrot.slane %v1807, 1
        %v1978 = vsel %vm564, %v1975, %v1977
        %1979 = vrot.lane.b32.xlu0 %v1901, 32
        %v1980 = vpop.permute.xlu0 %1979
        %1981 = vrot.lane.b32.xlu0 %v1903, 32
        %v1982 = vpop.permute.xlu0 %1981
        %1983 = vrot.lane.b32.xlu0 %v1906, 32
        %v1984 = vpop.permute.xlu0 %1983
        %1985 = vrot.lane.b32.xlu0 %v1908, 32
        %v1986 = vpop.permute.xlu0 %1985
        %1987 = vrot.lane.b32.xlu0 %v1911, 32
        %v1988 = vpop.permute.xlu0 %1987
        %1989 = vrot.lane.b32.xlu0 %v1913, 32
        %v1990 = vpop.permute.xlu0 %1989
        %1991 = vrot.lane.b32.xlu0 %v1916, 32
        %v1992 = vpop.permute.xlu0 %1991
        %1993 = vrot.lane.b32.xlu0 %v1918, 32
        %v1994 = vpop.permute.xlu0 %1993
        %1995 = vrot.lane.b32.xlu0 %v1921, 32
        %v1996 = vpop.permute.xlu0 %1995
        %1997 = vrot.lane.b32.xlu0 %v1923, 32
        %v1998 = vpop.permute.xlu0 %1997
        %1999 = vrot.lane.b32.xlu0 %v1926, 32
        %v2000 = vpop.permute.xlu0 %1999
        %2001 = vrot.lane.b32.xlu0 %v1928, 32
        %v2002 = vpop.permute.xlu0 %2001
        %2003 = vrot.lane.b32.xlu0 %v1931, 32
        %v2004 = vpop.permute.xlu0 %2003
        %2005 = vrot.lane.b32.xlu0 %v1933, 32
        %v2006 = vpop.permute.xlu0 %2005
        %2007 = vrot.lane.b32.xlu0 %v1936, 32
        %v2008 = vpop.permute.xlu0 %2007
        %2009 = vrot.lane.b32.xlu0 %v1938, 32
        %v2010 = vpop.permute.xlu0 %2009
        %2011 = vrot.lane.b32.xlu0 %v1941, 32
        %v2012 = vpop.permute.xlu0 %2011
        %2013 = vrot.lane.b32.xlu0 %v1943, 32
        %v2014 = vpop.permute.xlu0 %2013
        %2015 = vrot.lane.b32.xlu0 %v1946, 32
        %v2016 = vpop.permute.xlu0 %2015
        %2017 = vrot.lane.b32.xlu0 %v1948, 32
        %v2018 = vpop.permute.xlu0 %2017
        %2019 = vrot.lane.b32.xlu0 %v1951, 32
        %v2020 = vpop.permute.xlu0 %2019
        %2021 = vrot.lane.b32.xlu0 %v1953, 32
        %v2022 = vpop.permute.xlu0 %2021
        %2023 = vrot.lane.b32.xlu0 %v1956, 32
        %v2024 = vpop.permute.xlu0 %2023
        %2025 = vrot.lane.b32.xlu0 %v1958, 32
        %v2026 = vpop.permute.xlu0 %2025
        %2027 = vrot.lane.b32.xlu0 %v1961, 32
        %v2028 = vpop.permute.xlu0 %2027
        %2029 = vrot.lane.b32.xlu0 %v1963, 32
        %v2030 = vpop.permute.xlu0 %2029
        %2031 = vrot.lane.b32.xlu0 %v1966, 32
        %v2032 = vpop.permute.xlu0 %2031
        %2033 = vrot.lane.b32.xlu0 %v1968, 32
        %v2034 = vpop.permute.xlu0 %2033
        %2035 = vrot.lane.b32.xlu0 %v1971, 32
        %v2036 = vpop.permute.xlu0 %2035
        %2037 = vrot.lane.b32.xlu0 %v1973, 32
        %v2038 = vpop.permute.xlu0 %2037
        %2039 = vrot.lane.b32.xlu0 %v1976, 32
        %v2040 = vpop.permute.xlu0 %2039
        %2041 = vrot.lane.b32.xlu0 %v1978, 32
        %v2042 = vpop.permute.xlu0 %2041
        %v2075 = vrot.slane %v1760, 2
        %v2076 = vrot.slane %v1761, 2
        %v2077 = vsel %vm741, %v2075, %v2076
        %v2078 = vrot.slane %v1762, 2
        %v2079 = vsel %vm741, %v2076, %v2078
        %v2080 = vrot.slane %v1763, 2
        %v2081 = vrot.slane %v1764, 2
        %v2082 = vsel %vm741, %v2080, %v2081
        %v2083 = vrot.slane %v1765, 2
        %v2084 = vsel %vm741, %v2081, %v2083
        %v2085 = vrot.slane %v1766, 2
        %v2086 = vrot.slane %v1767, 2
        %v2087 = vsel %vm741, %v2085, %v2086
        %v2088 = vrot.slane %v1768, 2
        %v2089 = vsel %vm741, %v2086, %v2088
        %v2090 = vrot.slane %v1769, 2
        %v2091 = vrot.slane %v1770, 2
        %v2092 = vsel %vm741, %v2090, %v2091
        %v2093 = vrot.slane %v1771, 2
        %v2094 = vsel %vm741, %v2091, %v2093
        %v2095 = vrot.slane %v1772, 2
        %v2096 = vrot.slane %v1773, 2
        %v2097 = vsel %vm741, %v2095, %v2096
        %v2098 = vrot.slane %v1774, 2
        %v2099 = vsel %vm741, %v2096, %v2098
        %v2100 = vrot.slane %v1775, 2
        %v2101 = vrot.slane %v1776, 2
        %v2102 = vsel %vm741, %v2100, %v2101
        %v2103 = vrot.slane %v1777, 2
        %v2104 = vsel %vm741, %v2101, %v2103
        %v2105 = vrot.slane %v1778, 2
        %v2106 = vrot.slane %v1779, 2
        %v2107 = vsel %vm741, %v2105, %v2106
        %v2108 = vrot.slane %v1780, 2
        %v2109 = vsel %vm741, %v2106, %v2108
        %v2110 = vrot.slane %v1781, 2
        %v2111 = vrot.slane %v1782, 2
        %v2112 = vsel %vm741, %v2110, %v2111
        %v2113 = vrot.slane %v1783, 2
        %v2114 = vsel %vm741, %v2111, %v2113
        %v2115 = vrot.slane %v1784, 2
        %v2116 = vrot.slane %v1785, 2
        %v2117 = vsel %vm741, %v2115, %v2116
        %v2118 = vrot.slane %v1786, 2
        %v2119 = vsel %vm741, %v2116, %v2118
        %v2120 = vrot.slane %v1787, 2
        %v2121 = vrot.slane %v1788, 2
        %v2122 = vsel %vm741, %v2120, %v2121
        %v2123 = vrot.slane %v1789, 2
        %v2124 = vsel %vm741, %v2121, %v2123
        %v2125 = vrot.slane %v1790, 2
        %v2126 = vrot.slane %v1791, 2
        %v2127 = vsel %vm741, %v2125, %v2126
        %v2128 = vrot.slane %v1792, 2
        %v2129 = vsel %vm741, %v2126, %v2128
        %v2130 = vrot.slane %v1793, 2
        %v2131 = vrot.slane %v1794, 2
        %v2132 = vsel %vm741, %v2130, %v2131
        %v2133 = vrot.slane %v1795, 2
        %v2134 = vsel %vm741, %v2131, %v2133
        %v2135 = vrot.slane %v1796, 2
        %v2136 = vrot.slane %v1797, 2
        %v2137 = vsel %vm741, %v2135, %v2136
        %v2138 = vrot.slane %v1798, 2
        %v2139 = vsel %vm741, %v2136, %v2138
        %v2140 = vrot.slane %v1799, 2
        %v2141 = vrot.slane %v1800, 2
        %v2142 = vsel %vm741, %v2140, %v2141
        %v2143 = vrot.slane %v1801, 2
        %v2144 = vsel %vm741, %v2141, %v2143
        %v2145 = vrot.slane %v1802, 2
        %v2146 = vrot.slane %v1803, 2
        %v2147 = vsel %vm741, %v2145, %v2146
        %v2148 = vrot.slane %v1804, 2
        %v2149 = vsel %vm741, %v2146, %v2148
        %v2150 = vrot.slane %v1805, 2
        %v2151 = vrot.slane %v1806, 2
        %v2152 = vsel %vm741, %v2150, %v2151
        %v2153 = vrot.slane %v1807, 2
        %v2154 = vsel %vm741, %v2151, %v2153
        %2155 = vrot.lane.b32.xlu0 %v2077, 64
        %v2156 = vpop.permute.xlu0 %2155
        %2157 = vrot.lane.b32.xlu0 %v2079, 64
        %v2158 = vpop.permute.xlu0 %2157
        %2159 = vrot.lane.b32.xlu0 %v2082, 64
        %v2160 = vpop.permute.xlu0 %2159
        %2161 = vrot.lane.b32.xlu0 %v2084, 64
        %v2162 = vpop.permute.xlu0 %2161
        %2163 = vrot.lane.b32.xlu0 %v2087, 64
        %v2164 = vpop.permute.xlu0 %2163
        %2165 = vrot.lane.b32.xlu0 %v2089, 64
        %v2166 = vpop.permute.xlu0 %2165
        %2167 = vrot.lane.b32.xlu0 %v2092, 64
        %v2168 = vpop.permute.xlu0 %2167
        %2169 = vrot.lane.b32.xlu0 %v2094, 64
        %v2170 = vpop.permute.xlu0 %2169
        %2171 = vrot.lane.b32.xlu0 %v2097, 64
        %v2172 = vpop.permute.xlu0 %2171
        %2173 = vrot.lane.b32.xlu0 %v2099, 64
        %v2174 = vpop.permute.xlu0 %2173
        %2175 = vrot.lane.b32.xlu0 %v2102, 64
        %v2176 = vpop.permute.xlu0 %2175
        %2177 = vrot.lane.b32.xlu0 %v2104, 64
        %v2178 = vpop.permute.xlu0 %2177
        %2179 = vrot.lane.b32.xlu0 %v2107, 64
        %v2180 = vpop.permute.xlu0 %2179
        %2181 = vrot.lane.b32.xlu0 %v2109, 64
        %v2182 = vpop.permute.xlu0 %2181
        %2183 = vrot.lane.b32.xlu0 %v2112, 64
        %v2184 = vpop.permute.xlu0 %2183
        %2185 = vrot.lane.b32.xlu0 %v2114, 64
        %v2186 = vpop.permute.xlu0 %2185
        %2187 = vrot.lane.b32.xlu0 %v2117, 64
        %v2188 = vpop.permute.xlu0 %2187
        %2189 = vrot.lane.b32.xlu0 %v2119, 64
        %v2190 = vpop.permute.xlu0 %2189
        %2191 = vrot.lane.b32.xlu0 %v2122, 64
        %v2192 = vpop.permute.xlu0 %2191
        %2193 = vrot.lane.b32.xlu0 %v2124, 64
        %v2194 = vpop.permute.xlu0 %2193
        %2195 = vrot.lane.b32.xlu0 %v2127, 64
        %v2196 = vpop.permute.xlu0 %2195
        %2197 = vrot.lane.b32.xlu0 %v2129, 64
        %v2198 = vpop.permute.xlu0 %2197
        %2199 = vrot.lane.b32.xlu0 %v2132, 64
        %v2200 = vpop.permute.xlu0 %2199
        %2201 = vrot.lane.b32.xlu0 %v2134, 64
        %v2202 = vpop.permute.xlu0 %2201
        %2203 = vrot.lane.b32.xlu0 %v2137, 64
        %v2204 = vpop.permute.xlu0 %2203
        %2205 = vrot.lane.b32.xlu0 %v2139, 64
        %v2206 = vpop.permute.xlu0 %2205
        %2207 = vrot.lane.b32.xlu0 %v2142, 64
        %v2208 = vpop.permute.xlu0 %2207
        %2209 = vrot.lane.b32.xlu0 %v2144, 64
        %v2210 = vpop.permute.xlu0 %2209
        %2211 = vrot.lane.b32.xlu0 %v2147, 64
        %v2212 = vpop.permute.xlu0 %2211
        %2213 = vrot.lane.b32.xlu0 %v2149, 64
        %v2214 = vpop.permute.xlu0 %2213
        %2215 = vrot.lane.b32.xlu0 %v2152, 64
        %v2216 = vpop.permute.xlu0 %2215
        %2217 = vrot.lane.b32.xlu0 %v2154, 64
        %v2218 = vpop.permute.xlu0 %2217
        %v2251 = vsel %vm334, %v1760, %v1980
        %v2252 = vsel %vm334, %v1761, %v1982
        %v2253 = vsel %vm334, %v1763, %v1984
        %v2254 = vsel %vm334, %v1764, %v1986
        %v2255 = vsel %vm334, %v1766, %v1988
        %v2256 = vsel %vm334, %v1767, %v1990
        %v2257 = vsel %vm334, %v1769, %v1992
        %v2258 = vsel %vm334, %v1770, %v1994
        %v2259 = vsel %vm334, %v1772, %v1996
        %v2260 = vsel %vm334, %v1773, %v1998
        %v2261 = vsel %vm334, %v1775, %v2000
        %v2262 = vsel %vm334, %v1776, %v2002
        %v2263 = vsel %vm334, %v1778, %v2004
        %v2264 = vsel %vm334, %v1779, %v2006
        %v2265 = vsel %vm334, %v1781, %v2008
        %v2266 = vsel %vm334, %v1782, %v2010
        %v2267 = vsel %vm334, %v1784, %v2012
        %v2268 = vsel %vm334, %v1785, %v2014
        %v2269 = vsel %vm334, %v1787, %v2016
        %v2270 = vsel %vm334, %v1788, %v2018
        %v2271 = vsel %vm334, %v1790, %v2020
        %v2272 = vsel %vm334, %v1791, %v2022
        %v2273 = vsel %vm334, %v1793, %v2024
        %v2274 = vsel %vm334, %v1794, %v2026
        %v2275 = vsel %vm334, %v1796, %v2028
        %v2276 = vsel %vm334, %v1797, %v2030
        %v2277 = vsel %vm334, %v1799, %v2032
        %v2278 = vsel %vm334, %v1800, %v2034
        %v2279 = vsel %vm334, %v1802, %v2036
        %v2280 = vsel %vm334, %v1803, %v2038
        %v2281 = vsel %vm334, %v1805, %v2040
        %v2282 = vsel %vm334, %v1806, %v2042
        %vm2283 = vcmask 523264
        %v2284 = vsel %vm2283, %v2251, %v2156
        %v2285 = vsel %vm2283, %v2252, %v2158
        %v2286 = vsel %vm2283, %v2253, %v2160
        %v2287 = vsel %vm2283, %v2254, %v2162
        %v2288 = vsel %vm2283, %v2255, %v2164
        %v2289 = vsel %vm2283, %v2256, %v2166
        %v2290 = vsel %vm2283, %v2257, %v2168
        %v2291 = vsel %vm2283, %v2258, %v2170
        %v2292 = vsel %vm2283, %v2259, %v2172
        %v2293 = vsel %vm2283, %v2260, %v2174
        %v2294 = vsel %vm2283, %v2261, %v2176
        %v2295 = vsel %vm2283, %v2262, %v2178
        %v2296 = vsel %vm2283, %v2263, %v2180
        %v2297 = vsel %vm2283, %v2264, %v2182
        %v2298 = vsel %vm2283, %v2265, %v2184
        %v2299 = vsel %vm2283, %v2266, %v2186
        %v2300 = vsel %vm2283, %v2267, %v2188
        %v2301 = vsel %vm2283, %v2268, %v2190
        %v2302 = vsel %vm2283, %v2269, %v2192
        %v2303 = vsel %vm2283, %v2270, %v2194
        %v2304 = vsel %vm2283, %v2271, %v2196
        %v2305 = vsel %vm2283, %v2272, %v2198
        %v2306 = vsel %vm2283, %v2273, %v2200
        %v2307 = vsel %vm2283, %v2274, %v2202
        %v2308 = vsel %vm2283, %v2275, %v2204
        %v2309 = vsel %vm2283, %v2276, %v2206
        %v2310 = vsel %vm2283, %v2277, %v2208
        %v2311 = vsel %vm2283, %v2278, %v2210
        %v2312 = vsel %vm2283, %v2279, %v2212
        %v2313 = vsel %vm2283, %v2280, %v2214
        %v2314 = vsel %vm2283, %v2281, %v2216
        %v2315 = vsel %vm2283, %v2282, %v2218
        %v2316 = vpack.c.bf16 %v2285, %v2284
        %v2317 = vpack.c.bf16 %v2287, %v2286
        %v2318 = vpack.c.bf16 %v2289, %v2288
        %v2319 = vpack.c.bf16 %v2291, %v2290
        %v2320 = vpack.c.bf16 %v2293, %v2292
        %v2321 = vpack.c.bf16 %v2295, %v2294
        %v2322 = vpack.c.bf16 %v2297, %v2296
        %v2323 = vpack.c.bf16 %v2299, %v2298
        %v2324 = vpack.c.bf16 %v2301, %v2300
        %v2325 = vpack.c.bf16 %v2303, %v2302
        %v2326 = vpack.c.bf16 %v2305, %v2304
        %v2327 = vpack.c.bf16 %v2307, %v2306
        %v2328 = vpack.c.bf16 %v2309, %v2308
        %v2329 = vpack.c.bf16 %v2311, %v2310
        %v2330 = vpack.c.bf16 %v2313, %v2312
        %v2331 = vpack.c.bf16 %v2315, %v2314
        %v2335 = vrot.slane %v1808, 1
        %v2336 = vrot.slane %v1809, 1
        %v2337 = vsel %vm564, %v2335, %v2336
        %v2338 = vrot.slane %v1810, 1
        %v2339 = vsel %vm564, %v2336, %v2338
        %2340 = vrot.lane.b32.xlu0 %v2337, 32
        %v2341 = vpop.permute.xlu0 %2340
        %2342 = vrot.lane.b32.xlu0 %v2339, 32
        %v2343 = vpop.permute.xlu0 %2342
        %v2346 = vrot.slane %v1808, 2
        %v2347 = vrot.slane %v1809, 2
        %v2348 = vsel %vm741, %v2346, %v2347
        %v2349 = vrot.slane %v1810, 2
        %v2350 = vsel %vm741, %v2347, %v2349
        %2351 = vrot.lane.b32.xlu0 %v2348, 64
        %v2352 = vpop.permute.xlu0 %2351
        %2353 = vrot.lane.b32.xlu0 %v2350, 64
        %v2354 = vpop.permute.xlu0 %2353
        %v2357 = vsel %vm334, %v1808, %v2341
        %v2358 = vsel %vm334, %v1809, %v2343
        %v2359 = vsel %vm2283, %v2357, %v2352
        %v2360 = vsel %vm2283, %v2358, %v2354
        %v2361 = vpack.c.bf16 %v2360, %v2359
        %v2374 = vunpack.c.l.b16 %v1826
        %v2375 = vunpack.c.l.b16 %v1827
        %v2376 = vunpack.c.l.b16 %v1828
        %v2377 = vunpack.c.l.b16 %v1829
        %v2378 = vunpack.c.l.b16 %v1830
        %v2379 = vunpack.c.l.b16 %v1831
        %v2380 = vunpack.c.l.b16 %v1832
        %v2381 = vunpack.c.l.b16 %v1833
        %v2382 = vunpack.c.l.b16 %v1834
        %v2383 = vunpack.c.l.b16 %v1835
        %v2384 = vunpack.c.l.b16 %v1836
        %v2385 = vunpack.c.l.b16 %v1837
        %v2386 = vpack.c.b16 %v2375, %v2374
        %v2387 = vpack.c.b16 %v2377, %v2376
        %v2388 = vpack.c.b16 %v2379, %v2378
        %v2389 = vpack.c.b16 %v2381, %v2380
        %v2390 = vpack.c.b16 %v2383, %v2382
        %v2391 = vpack.c.b16 %v2385, %v2384
        %vm2398 = vcmask 785408
        %v2400 = vsel %vm2398, %v2317, 0
        %v2403 = vsel %vm2398, %v2318, 0
        %v2406 = vsel %vm2398, %v2319, 0
        %v2409 = vsel %vm2398, %v2320, 0
        %v2412 = vsel %vm2398, %v2321, 0
        %v2415 = vsel %vm2398, %v2322, 0
        %v2418 = vsel %vm2398, %v2323, 0
        %v2421 = vsel %vm2398, %v2324, 0
        %v2424 = vsel %vm2398, %v2325, 0
        %v2427 = vsel %vm2398, %v2326, 0
        %v2430 = vsel %vm2398, %v2327, 0
        %v2433 = vsel %vm2398, %v2328, 0
        %v2436 = vsel %vm2398, %v2329, 0
        %v2439 = vsel %vm2398, %v2330, 0
        %v2442 = vsel %vm2398, %v2331, 0
        %v2445 = vsel %vm2398, %v2361, 0
        %2447 = vmatprep.subr.bf16.mxu0 0
        %2448 = vmatpush1.bf16.msra.mxu0 %v2386
        %2449 = vmatprep.subr.bf16.mxu0 0
        %2450 = vmatpush1.bf16.msra.mxu0 %v2387
        %2451 = vmatprep.subr.bf16.mxu0 0
        %2452 = vmatpush1.bf16.msra.mxu0 %v2388
        %2453 = vmatprep.subr.bf16.mxu0 0
        %2454 = vmatpush1.bf16.msra.mxu0 %v2389
        %2455 = vmatprep.subr.bf16.mxu0 0
        %2456 = vmatpush1.bf16.msra.mxu0 %v2390
        %2457 = vmatprep.subr.bf16.mxu0 0
        %2458 = vmatpush1.bf16.msra.mxu0 %v2391
        %2459 = vmatprep.subr.bf16.mxu0 0
        %2460 = vmatpush1.bf16.msra.mxu0 0
        %2461 = vmatprep.subr.bf16.mxu0 0
        %2462 = vmatpush1.bf16.msra.mxu0 0
        %2463 = vmatprep.subr.bf16.mxu0 0
        %2464 = vmatpush1.bf16.msra.mxu0 0
        %2465 = vmatprep.subr.bf16.mxu0 0
        %2466 = vmatpush1.bf16.msra.mxu0 0
        %2467 = vmatprep.subr.bf16.mxu0 0
        %2468 = vmatpush1.bf16.msra.mxu0 0
        %2469 = vmatprep.subr.bf16.mxu0 0
        %2470 = vmatpush1.bf16.msra.mxu0 0
        %2471 = vmatprep.subr.bf16.mxu0 0
        %2472 = vmatpush1.bf16.msra.mxu0 0
        %2473 = vmatprep.subr.bf16.mxu0 0
        %2474 = vmatpush1.bf16.msra.mxu0 0
        %2475 = vmatprep.subr.bf16.mxu0 0
        %2476 = vmatpush1.bf16.msra.mxu0 0
        %2477 = vmatprep.subr.bf16.mxu0 0
        %2478 = vmatpush1.bf16.msra.mxu0 0
        %2479 = vmatprep.mubr.bf16.mxu0 0
        %2480 = vmatmul.mubr.bf16.gmra.mrb[0].mxu0 %v2400
        %v2481 = vpop.f32.mrb[0].mxu0
        %v2482 = vadd.f32 0.0, %v2481
        %v2483 = vpop.f32.mrb[0].mxu0
        %v2484 = vpop.f32.mrb[0].mxu0
        %v2485 = vadd.f32 0.0, %v2484
        %v2486 = vpop.f32.mrb[0].mxu0
        %2487 = vmatprep.mubr.bf16.mxu0 0
        %2488 = vmatmul.mubr.bf16.gmra.mrb[0].mxu0 %v2403
        %v2489 = vpop.f32.mrb[0].mxu0
        %v2490 = vadd.f32 0.0, %v2489
        %v2491 = vpop.f32.mrb[0].mxu0
        %v2492 = vpop.f32.mrb[0].mxu0
        %v2493 = vadd.f32 0.0, %v2492
        %v2494 = vpop.f32.mrb[0].mxu0
        %2495 = vmatprep.mubr.bf16.mxu0 0
        %2496 = vmatmul.mubr.bf16.gmra.mrb[0].mxu0 %v2406
        %v2497 = vpop.f32.mrb[0].mxu0
        %v2498 = vadd.f32 0.0, %v2497
        %v2499 = vpop.f32.mrb[0].mxu0
        %v2500 = vpop.f32.mrb[0].mxu0
        %v2501 = vadd.f32 0.0, %v2500
        %v2502 = vpop.f32.mrb[0].mxu0
        %2503 = vmatprep.mubr.bf16.mxu0 0
        %2504 = vmatmul.mubr.bf16.gmra.mrb[0].mxu0 %v2409
        %v2505 = vpop.f32.mrb[0].mxu0
        %v2506 = vadd.f32 0.0, %v2505
        %v2507 = vpop.f32.mrb[0].mxu0
        %v2508 = vpop.f32.mrb[0].mxu0
        %v2509 = vadd.f32 0.0, %v2508
        %v2510 = vpop.f32.mrb[0].mxu0
        %2511 = vmatprep.mubr.bf16.mxu0 0
        %2512 = vmatmul.mubr.bf16.gmra.mrb[0].mxu0 %v2412
        %v2513 = vpop.f32.mrb[0].mxu0
        %v2514 = vadd.f32 0.0, %v2513
        %v2515 = vpop.f32.mrb[0].mxu0
        %v2516 = vpop.f32.mrb[0].mxu0
        %v2517 = vadd.f32 0.0, %v2516
        %v2518 = vpop.f32.mrb[0].mxu0
        %2519 = vmatprep.mubr.bf16.mxu0 0
        %2520 = vmatmul.mubr.bf16.gmra.mrb[0].mxu0 %v2415
        %v2521 = vpop.f32.mrb[0].mxu0
        %v2522 = vadd.f32 0.0, %v2521
        %v2523 = vpop.f32.mrb[0].mxu0
        %v2524 = vpop.f32.mrb[0].mxu0
        %v2525 = vadd.f32 0.0, %v2524
        %v2526 = vpop.f32.mrb[0].mxu0
        %2527 = vmatprep.mubr.bf16.mxu0 0
        %2528 = vmatmul.mubr.bf16.gmra.mrb[0].mxu0 %v2418
        %v2529 = vpop.f32.mrb[0].mxu0
        %v2530 = vadd.f32 0.0, %v2529
        %v2531 = vpop.f32.mrb[0].mxu0
        %v2532 = vpop.f32.mrb[0].mxu0
        %v2533 = vadd.f32 0.0, %v2532
        %v2534 = vpop.f32.mrb[0].mxu0
        %2535 = vmatprep.mubr.bf16.mxu0 0
        %2536 = vmatmul.mubr.bf16.gmra.mrb[0].mxu0 %v2421
        %v2537 = vpop.f32.mrb[0].mxu0
        %v2538 = vadd.f32 0.0, %v2537
        %v2539 = vpop.f32.mrb[0].mxu0
        %v2540 = vpop.f32.mrb[0].mxu0
        %v2541 = vadd.f32 0.0, %v2540
        %v2542 = vpop.f32.mrb[0].mxu0
        %2543 = vmatprep.mubr.bf16.mxu0 0
        %2544 = vmatmul.mubr.bf16.gmra.mrb[0].mxu0 %v2424
        %v2545 = vpop.f32.mrb[0].mxu0
        %v2546 = vadd.f32 0.0, %v2545
        %v2547 = vpop.f32.mrb[0].mxu0
        %v2548 = vpop.f32.mrb[0].mxu0
        %v2549 = vadd.f32 0.0, %v2548
        %v2550 = vpop.f32.mrb[0].mxu0
        %2551 = vmatprep.mubr.bf16.mxu0 0
        %2552 = vmatmul.mubr.bf16.gmra.mrb[0].mxu0 %v2427
        %v2553 = vpop.f32.mrb[0].mxu0
        %v2554 = vadd.f32 0.0, %v2553
        %v2555 = vpop.f32.mrb[0].mxu0
        %v2556 = vpop.f32.mrb[0].mxu0
        %v2557 = vadd.f32 0.0, %v2556
        %v2558 = vpop.f32.mrb[0].mxu0
        %2559 = vmatprep.mubr.bf16.mxu0 0
        %2560 = vmatmul.mubr.bf16.gmra.mrb[0].mxu0 %v2430
        %v2561 = vpop.f32.mrb[0].mxu0
        %v2562 = vadd.f32 0.0, %v2561
        %v2563 = vpop.f32.mrb[0].mxu0
        %v2564 = vpop.f32.mrb[0].mxu0
        %v2565 = vadd.f32 0.0, %v2564
        %v2566 = vpop.f32.mrb[0].mxu0
        %2567 = vmatprep.mubr.bf16.mxu0 0
        %2568 = vmatmul.mubr.bf16.gmra.mrb[0].mxu0 %v2433
        %v2569 = vpop.f32.mrb[0].mxu0
        %v2570 = vadd.f32 0.0, %v2569
        %v2571 = vpop.f32.mrb[0].mxu0
        %v2572 = vpop.f32.mrb[0].mxu0
        %v2573 = vadd.f32 0.0, %v2572
        %v2574 = vpop.f32.mrb[0].mxu0
        %2575 = vmatprep.mubr.bf16.mxu0 0
        %2576 = vmatmul.mubr.bf16.gmra.mrb[0].mxu0 %v2436
        %v2577 = vpop.f32.mrb[0].mxu0
        %v2578 = vadd.f32 0.0, %v2577
        %v2579 = vpop.f32.mrb[0].mxu0
        %v2580 = vpop.f32.mrb[0].mxu0
        %v2581 = vadd.f32 0.0, %v2580
        %v2582 = vpop.f32.mrb[0].mxu0
        %2583 = vmatprep.mubr.bf16.mxu0 0
        %2584 = vmatmul.mubr.bf16.gmra.mrb[0].mxu0 %v2439
        %v2585 = vpop.f32.mrb[0].mxu0
        %v2586 = vadd.f32 0.0, %v2585
        %v2587 = vpop.f32.mrb[0].mxu0
        %v2588 = vpop.f32.mrb[0].mxu0
        %v2589 = vadd.f32 0.0, %v2588
        %v2590 = vpop.f32.mrb[0].mxu0
        %2591 = vmatprep.mubr.bf16.mxu0 0
        %2592 = vmatmul.mubr.bf16.gmra.mrb[0].mxu0 %v2442
        %v2593 = vpop.f32.mrb[0].mxu0
        %v2594 = vadd.f32 0.0, %v2593
        %v2595 = vpop.f32.mrb[0].mxu0
        %v2596 = vpop.f32.mrb[0].mxu0
        %v2597 = vadd.f32 0.0, %v2596
        %v2598 = vpop.f32.mrb[0].mxu0
        %2599 = vmatprep.mubr.bf16.mxu0 0
        %2600 = vmatmul.mubr.bf16.gmra.mrb[0].mxu0 %v2445
        %v2601 = vpop.f32.mrb[0].mxu0
        %v2602 = vadd.f32 0.0, %v2601
        %v2603 = vpop.f32.mrb[0].mxu0
        %v2604 = vpop.f32.mrb[0].mxu0
        %v2605 = vadd.f32 0.0, %v2604
        %v2606 = vpop.f32.mrb[0].mxu0
        %2607 = vdwg.mxu0
        %v2620 = vunpack.c.l.b16 %v1814
        %v2621 = vunpack.c.l.b16 %v1815
        %v2622 = vunpack.c.l.b16 %v1816
        %v2623 = vunpack.c.l.b16 %v1817
        %v2624 = vunpack.c.l.b16 %v1818
        %v2625 = vunpack.c.l.b16 %v1819
        %v2626 = vunpack.c.l.b16 %v1820
        %v2627 = vunpack.c.l.b16 %v1821
        %v2628 = vunpack.c.l.b16 %v1822
        %v2629 = vunpack.c.l.b16 %v1823
        %v2630 = vunpack.c.l.b16 %v1824
        %v2631 = vunpack.c.l.b16 %v1825
        %v2632 = vpack.c.b16 %v2621, %v2620
        %v2633 = vpack.c.b16 %v2623, %v2622
        %v2634 = vpack.c.b16 %v2625, %v2624
        %v2635 = vpack.c.b16 %v2627, %v2626
        %v2636 = vpack.c.b16 %v2629, %v2628
        %v2637 = vpack.c.b16 %v2631, %v2630
        %v2645 = vsel %vm2398, %v2316, 0
        %2647 = vmatprep.subr.bf16.mxu0 0
        %2648 = vmatpush1.bf16.msra.mxu0 %v2632
        %2649 = vmatprep.subr.bf16.mxu0 0
        %2650 = vmatpush1.bf16.msra.mxu0 %v2633
        %2651 = vmatprep.subr.bf16.mxu0 0
        %2652 = vmatpush1.bf16.msra.mxu0 %v2634
        %2653 = vmatprep.subr.bf16.mxu0 0
        %2654 = vmatpush1.bf16.msra.mxu0 %v2635
        %2655 = vmatprep.subr.bf16.mxu0 0
        %2656 = vmatpush1.bf16.msra.mxu0 %v2636
        %2657 = vmatprep.subr.bf16.mxu0 0
        %2658 = vmatpush1.bf16.msra.mxu0 %v2637
        %2659 = vmatprep.subr.bf16.mxu0 0
        %2660 = vmatpush1.bf16.msra.mxu0 0
        %2661 = vmatprep.subr.bf16.mxu0 0
        %2662 = vmatpush1.bf16.msra.mxu0 0
        %2663 = vmatprep.subr.bf16.mxu0 0
        %2664 = vmatpush1.bf16.msra.mxu0 0
        %2665 = vmatprep.subr.bf16.mxu0 0
        %2666 = vmatpush1.bf16.msra.mxu0 0
        %2667 = vmatprep.subr.bf16.mxu0 0
        %2668 = vmatpush1.bf16.msra.mxu0 0
        %2669 = vmatprep.subr.bf16.mxu0 0
        %2670 = vmatpush1.bf16.msra.mxu0 0
        %2671 = vmatprep.subr.bf16.mxu0 0
        %2672 = vmatpush1.bf16.msra.mxu0 0
        %2673 = vmatprep.subr.bf16.mxu0 0
        %2674 = vmatpush1.bf16.msra.mxu0 0
        %2675 = vmatprep.subr.bf16.mxu0 0
        %2676 = vmatpush1.bf16.msra.mxu0 0
        %2677 = vmatprep.subr.bf16.mxu0 0
        %2678 = vmatpush1.bf16.msra.mxu0 0
        %2679 = vmatprep.mubr.bf16.mxu0 0
        %2680 = vmatmul.mubr.bf16.gmra.mrb[0].mxu0 %v2645
        %v2681 = vpop.f32.mrb[0].mxu0
        %v2682 = vadd.f32 %v2482, %v2681
        %v2683 = vpop.f32.mrb[0].mxu0
        %v2684 = vpop.f32.mrb[0].mxu0
        %v2685 = vadd.f32 %v2485, %v2684
        %v2686 = vpop.f32.mrb[0].mxu0
        %2687 = vmatprep.mubr.bf16.mxu0 0
        %2688 = vmatmul.mubr.bf16.gmra.mrb[0].mxu0 %v2400
        %v2689 = vpop.f32.mrb[0].mxu0
        %v2690 = vadd.f32 %v2490, %v2689
        %v2691 = vpop.f32.mrb[0].mxu0
        %v2692 = vpop.f32.mrb[0].mxu0
        %v2693 = vadd.f32 %v2493, %v2692
        %v2694 = vpop.f32.mrb[0].mxu0
        %2695 = vmatprep.mubr.bf16.mxu0 0
        %2696 = vmatmul.mubr.bf16.gmra.mrb[0].mxu0 %v2403
        %v2697 = vpop.f32.mrb[0].mxu0
        %v2698 = vadd.f32 %v2498, %v2697
        %v2699 = vpop.f32.mrb[0].mxu0
        %v2700 = vpop.f32.mrb[0].mxu0
        %v2701 = vadd.f32 %v2501, %v2700
        %v2702 = vpop.f32.mrb[0].mxu0
        %2703 = vmatprep.mubr.bf16.mxu0 0
        %2704 = vmatmul.mubr.bf16.gmra.mrb[0].mxu0 %v2406
        %v2705 = vpop.f32.mrb[0].mxu0
        %v2706 = vadd.f32 %v2506, %v2705
        %v2707 = vpop.f32.mrb[0].mxu0
        %v2708 = vpop.f32.mrb[0].mxu0
        %v2709 = vadd.f32 %v2509, %v2708
        %v2710 = vpop.f32.mrb[0].mxu0
        %2711 = vmatprep.mubr.bf16.mxu0 0
        %2712 = vmatmul.mubr.bf16.gmra.mrb[0].mxu0 %v2409
        %v2713 = vpop.f32.mrb[0].mxu0
        %v2714 = vadd.f32 %v2514, %v2713
        %v2715 = vpop.f32.mrb[0].mxu0
        %v2716 = vpop.f32.mrb[0].mxu0
        %v2717 = vadd.f32 %v2517, %v2716
        %v2718 = vpop.f32.mrb[0].mxu0
        %2719 = vmatprep.mubr.bf16.mxu0 0
        %2720 = vmatmul.mubr.bf16.gmra.mrb[0].mxu0 %v2412
        %v2721 = vpop.f32.mrb[0].mxu0
        %v2722 = vadd.f32 %v2522, %v2721
        %v2723 = vpop.f32.mrb[0].mxu0
        %v2724 = vpop.f32.mrb[0].mxu0
        %v2725 = vadd.f32 %v2525, %v2724
        %v2726 = vpop.f32.mrb[0].mxu0
        %2727 = vmatprep.mubr.bf16.mxu0 0
        %2728 = vmatmul.mubr.bf16.gmra.mrb[0].mxu0 %v2415
        %v2729 = vpop.f32.mrb[0].mxu0
        %v2730 = vadd.f32 %v2530, %v2729
        %v2731 = vpop.f32.mrb[0].mxu0
        %v2732 = vpop.f32.mrb[0].mxu0
        %v2733 = vadd.f32 %v2533, %v2732
        %v2734 = vpop.f32.mrb[0].mxu0
        %2735 = vmatprep.mubr.bf16.mxu0 0
        %2736 = vmatmul.mubr.bf16.gmra.mrb[0].mxu0 %v2418
        %v2737 = vpop.f32.mrb[0].mxu0
        %v2738 = vadd.f32 %v2538, %v2737
        %v2739 = vpop.f32.mrb[0].mxu0
        %v2740 = vpop.f32.mrb[0].mxu0
        %v2741 = vadd.f32 %v2541, %v2740
        %v2742 = vpop.f32.mrb[0].mxu0
        %2743 = vmatprep.mubr.bf16.mxu0 0
        %2744 = vmatmul.mubr.bf16.gmra.mrb[0].mxu0 %v2421
        %v2745 = vpop.f32.mrb[0].mxu0
        %v2746 = vadd.f32 %v2546, %v2745
        %v2747 = vpop.f32.mrb[0].mxu0
        %v2748 = vpop.f32.mrb[0].mxu0
        %v2749 = vadd.f32 %v2549, %v2748
        %v2750 = vpop.f32.mrb[0].mxu0
        %2751 = vmatprep.mubr.bf16.mxu0 0
        %2752 = vmatmul.mubr.bf16.gmra.mrb[0].mxu0 %v2424
        %v2753 = vpop.f32.mrb[0].mxu0
        %v2754 = vadd.f32 %v2554, %v2753
        %v2755 = vpop.f32.mrb[0].mxu0
        %v2756 = vpop.f32.mrb[0].mxu0
        %v2757 = vadd.f32 %v2557, %v2756
        %v2758 = vpop.f32.mrb[0].mxu0
        %2759 = vmatprep.mubr.bf16.mxu0 0
        %2760 = vmatmul.mubr.bf16.gmra.mrb[0].mxu0 %v2427
        %v2761 = vpop.f32.mrb[0].mxu0
        %v2762 = vadd.f32 %v2562, %v2761
        %v2763 = vpop.f32.mrb[0].mxu0
        %v2764 = vpop.f32.mrb[0].mxu0
        %v2765 = vadd.f32 %v2565, %v2764
        %v2766 = vpop.f32.mrb[0].mxu0
        %2767 = vmatprep.mubr.bf16.mxu0 0
        %2768 = vmatmul.mubr.bf16.gmra.mrb[0].mxu0 %v2430
        %v2769 = vpop.f32.mrb[0].mxu0
        %v2770 = vadd.f32 %v2570, %v2769
        %v2771 = vpop.f32.mrb[0].mxu0
        %v2772 = vpop.f32.mrb[0].mxu0
        %v2773 = vadd.f32 %v2573, %v2772
        %v2774 = vpop.f32.mrb[0].mxu0
        %2775 = vmatprep.mubr.bf16.mxu0 0
        %2776 = vmatmul.mubr.bf16.gmra.mrb[0].mxu0 %v2433
        %v2777 = vpop.f32.mrb[0].mxu0
        %v2778 = vadd.f32 %v2578, %v2777
        %v2779 = vpop.f32.mrb[0].mxu0
        %v2780 = vpop.f32.mrb[0].mxu0
        %v2781 = vadd.f32 %v2581, %v2780
        %v2782 = vpop.f32.mrb[0].mxu0
        %2783 = vmatprep.mubr.bf16.mxu0 0
        %2784 = vmatmul.mubr.bf16.gmra.mrb[0].mxu0 %v2436
        %v2785 = vpop.f32.mrb[0].mxu0
        %v2786 = vadd.f32 %v2586, %v2785
        %v2787 = vpop.f32.mrb[0].mxu0
        %v2788 = vpop.f32.mrb[0].mxu0
        %v2789 = vadd.f32 %v2589, %v2788
        %v2790 = vpop.f32.mrb[0].mxu0
        %2791 = vmatprep.mubr.bf16.mxu0 0
        %2792 = vmatmul.mubr.bf16.gmra.mrb[0].mxu0 %v2439
        %v2793 = vpop.f32.mrb[0].mxu0
        %v2794 = vadd.f32 %v2594, %v2793
        %v2795 = vpop.f32.mrb[0].mxu0
        %v2796 = vpop.f32.mrb[0].mxu0
        %v2797 = vadd.f32 %v2597, %v2796
        %v2798 = vpop.f32.mrb[0].mxu0
        %2799 = vmatprep.mubr.bf16.mxu0 0
        %2800 = vmatmul.mubr.bf16.gmra.mrb[0].mxu0 %v2442
        %v2801 = vpop.f32.mrb[0].mxu0
        %v2802 = vadd.f32 %v2602, %v2801
        %v2803 = vpop.f32.mrb[0].mxu0
        %v2804 = vpop.f32.mrb[0].mxu0
        %v2805 = vadd.f32 %v2605, %v2804
        %v2806 = vpop.f32.mrb[0].mxu0
        %2807 = vdwg.mxu0
        %v2811 = vrot.slane %v1811, 1
        %v2812 = vrot.slane %v1812, 1
        %v2813 = vsel %vm564, %v2811, %v2812
        %v2814 = vrot.slane %v1813, 1
        %v2815 = vsel %vm564, %v2812, %v2814
        %2816 = vrot.lane.b32.xlu0 %v2813, 32
        %v2817 = vpop.permute.xlu0 %2816
        %2818 = vrot.lane.b32.xlu0 %v2815, 32
        %v2819 = vpop.permute.xlu0 %2818
        %v2822 = vrot.slane %v1811, 2
        %v2823 = vrot.slane %v1812, 2
        %v2824 = vsel %vm741, %v2822, %v2823
        %v2825 = vrot.slane %v1813, 2
        %v2826 = vsel %vm741, %v2823, %v2825
        %2827 = vrot.lane.b32.xlu0 %v2824, 64
        %v2828 = vpop.permute.xlu0 %2827
        %2829 = vrot.lane.b32.xlu0 %v2826, 64
        %v2830 = vpop.permute.xlu0 %2829
        %v2833 = vsel %vm334, %v1811, %v2817
        %v2834 = vsel %vm334, %v1812, %v2819
        %v2835 = vsel %vm2283, %v2833, %v2828
        %v2836 = vsel %vm2283, %v2834, %v2830
        %v2837 = vpack.c.bf16 %v2836, %v2835
        %v2850 = vunpack.c.l.b16 %v1838
        %v2851 = vunpack.c.l.b16 %v1839
        %v2852 = vunpack.c.l.b16 %v1840
        %v2853 = vunpack.c.l.b16 %v1841
        %v2854 = vunpack.c.l.b16 %v1842
        %v2855 = vunpack.c.l.b16 %v1843
        %v2856 = vunpack.c.l.b16 %v1844
        %v2857 = vunpack.c.l.b16 %v1845
        %v2858 = vunpack.c.l.b16 %v1846
        %v2859 = vunpack.c.l.b16 %v1847
        %v2860 = vunpack.c.l.b16 %v1848
        %v2861 = vunpack.c.l.b16 %v1849
        %v2862 = vpack.c.b16 %v2851, %v2850
        %v2863 = vpack.c.b16 %v2853, %v2852
        %v2864 = vpack.c.b16 %v2855, %v2854
        %v2865 = vpack.c.b16 %v2857, %v2856
        %v2866 = vpack.c.b16 %v2859, %v2858
        %v2867 = vpack.c.b16 %v2861, %v2860
        %v2875 = vsel %vm2398, %v2837, 0
        %2877 = vmatprep.subr.bf16.mxu0 0
        %2878 = vmatpush1.bf16.msra.mxu0 %v2862
        %2879 = vmatprep.subr.bf16.mxu0 0
        %2880 = vmatpush1.bf16.msra.mxu0 %v2863
        %2881 = vmatprep.subr.bf16.mxu0 0
        %2882 = vmatpush1.bf16.msra.mxu0 %v2864
        %2883 = vmatprep.subr.bf16.mxu0 0
        %2884 = vmatpush1.bf16.msra.mxu0 %v2865
        %2885 = vmatprep.subr.bf16.mxu0 0
        %2886 = vmatpush1.bf16.msra.mxu0 %v2866
        %2887 = vmatprep.subr.bf16.mxu0 0
        %2888 = vmatpush1.bf16.msra.mxu0 %v2867
        %2889 = vmatprep.subr.bf16.mxu0 0
        %2890 = vmatpush1.bf16.msra.mxu0 0
        %2891 = vmatprep.subr.bf16.mxu0 0
        %2892 = vmatpush1.bf16.msra.mxu0 0
        %2893 = vmatprep.subr.bf16.mxu0 0
        %2894 = vmatpush1.bf16.msra.mxu0 0
        %2895 = vmatprep.subr.bf16.mxu0 0
        %2896 = vmatpush1.bf16.msra.mxu0 0
        %2897 = vmatprep.subr.bf16.mxu0 0
        %2898 = vmatpush1.bf16.msra.mxu0 0
        %2899 = vmatprep.subr.bf16.mxu0 0
        %2900 = vmatpush1.bf16.msra.mxu0 0
        %2901 = vmatprep.subr.bf16.mxu0 0
        %2902 = vmatpush1.bf16.msra.mxu0 0
        %2903 = vmatprep.subr.bf16.mxu0 0
        %2904 = vmatpush1.bf16.msra.mxu0 0
        %2905 = vmatprep.subr.bf16.mxu0 0
        %2906 = vmatpush1.bf16.msra.mxu0 0
        %2907 = vmatprep.subr.bf16.mxu0 0
        %2908 = vmatpush1.bf16.msra.mxu0 0
        %2909 = vmatprep.mubr.bf16.mxu0 0
        %2910 = vmatmul.mubr.bf16.gmra.mrb[0].mxu0 %v2403
        %v2911 = vpop.f32.mrb[0].mxu0
        %v2912 = vadd.f32 0.0, %v2911
        %v2913 = vpop.f32.mrb[0].mxu0
        %v2914 = vpop.f32.mrb[0].mxu0
        %v2915 = vadd.f32 0.0, %v2914
        %v2916 = vpop.f32.mrb[0].mxu0
        %2917 = vmatprep.mubr.bf16.mxu0 0
        %2918 = vmatmul.mubr.bf16.gmra.mrb[0].mxu0 %v2406
        %v2919 = vpop.f32.mrb[0].mxu0
        %v2920 = vadd.f32 0.0, %v2919
        %v2921 = vpop.f32.mrb[0].mxu0
        %v2922 = vpop.f32.mrb[0].mxu0
        %v2923 = vadd.f32 0.0, %v2922
        %v2924 = vpop.f32.mrb[0].mxu0
        %2925 = vmatprep.mubr.bf16.mxu0 0
        %2926 = vmatmul.mubr.bf16.gmra.mrb[0].mxu0 %v2409
        %v2927 = vpop.f32.mrb[0].mxu0
        %v2928 = vadd.f32 0.0, %v2927
        %v2929 = vpop.f32.mrb[0].mxu0
        %v2930 = vpop.f32.mrb[0].mxu0
        %v2931 = vadd.f32 0.0, %v2930
        %v2932 = vpop.f32.mrb[0].mxu0
        %2933 = vmatprep.mubr.bf16.mxu0 0
        %2934 = vmatmul.mubr.bf16.gmra.mrb[0].mxu0 %v2412
        %v2935 = vpop.f32.mrb[0].mxu0
        %v2936 = vadd.f32 0.0, %v2935
        %v2937 = vpop.f32.mrb[0].mxu0
        %v2938 = vpop.f32.mrb[0].mxu0
        %v2939 = vadd.f32 0.0, %v2938
        %v2940 = vpop.f32.mrb[0].mxu0
        %2941 = vmatprep.mubr.bf16.mxu0 0
        %2942 = vmatmul.mubr.bf16.gmra.mrb[0].mxu0 %v2415
        %v2943 = vpop.f32.mrb[0].mxu0
        %v2944 = vadd.f32 0.0, %v2943
        %v2945 = vpop.f32.mrb[0].mxu0
        %v2946 = vpop.f32.mrb[0].mxu0
        %v2947 = vadd.f32 0.0, %v2946
        %v2948 = vpop.f32.mrb[0].mxu0
        %2949 = vmatprep.mubr.bf16.mxu0 0
        %2950 = vmatmul.mubr.bf16.gmra.mrb[0].mxu0 %v2418
        %v2951 = vpop.f32.mrb[0].mxu0
        %v2952 = vadd.f32 0.0, %v2951
        %v2953 = vpop.f32.mrb[0].mxu0
        %v2954 = vpop.f32.mrb[0].mxu0
        %v2955 = vadd.f32 0.0, %v2954
        %v2956 = vpop.f32.mrb[0].mxu0
        %2957 = vmatprep.mubr.bf16.mxu0 0
        %2958 = vmatmul.mubr.bf16.gmra.mrb[0].mxu0 %v2421
        %v2959 = vpop.f32.mrb[0].mxu0
        %v2960 = vadd.f32 0.0, %v2959
        %v2961 = vpop.f32.mrb[0].mxu0
        %v2962 = vpop.f32.mrb[0].mxu0
        %v2963 = vadd.f32 0.0, %v2962
        %v2964 = vpop.f32.mrb[0].mxu0
        %2965 = vmatprep.mubr.bf16.mxu0 0
        %2966 = vmatmul.mubr.bf16.gmra.mrb[0].mxu0 %v2424
        %v2967 = vpop.f32.mrb[0].mxu0
        %v2968 = vadd.f32 0.0, %v2967
        %v2969 = vpop.f32.mrb[0].mxu0
        %v2970 = vpop.f32.mrb[0].mxu0
        %v2971 = vadd.f32 0.0, %v2970
        %v2972 = vpop.f32.mrb[0].mxu0
        %2973 = vmatprep.mubr.bf16.mxu0 0
        %2974 = vmatmul.mubr.bf16.gmra.mrb[0].mxu0 %v2427
        %v2975 = vpop.f32.mrb[0].mxu0
        %v2976 = vadd.f32 0.0, %v2975
        %v2977 = vpop.f32.mrb[0].mxu0
        %v2978 = vpop.f32.mrb[0].mxu0
        %v2979 = vadd.f32 0.0, %v2978
        %v2980 = vpop.f32.mrb[0].mxu0
        %2981 = vmatprep.mubr.bf16.mxu0 0
        %2982 = vmatmul.mubr.bf16.gmra.mrb[0].mxu0 %v2430
        %v2983 = vpop.f32.mrb[0].mxu0
        %v2984 = vadd.f32 0.0, %v2983
        %v2985 = vpop.f32.mrb[0].mxu0
        %v2986 = vpop.f32.mrb[0].mxu0
        %v2987 = vadd.f32 0.0, %v2986
        %v2988 = vpop.f32.mrb[0].mxu0
        %2989 = vmatprep.mubr.bf16.mxu0 0
        %2990 = vmatmul.mubr.bf16.gmra.mrb[0].mxu0 %v2433
        %v2991 = vpop.f32.mrb[0].mxu0
        %v2992 = vadd.f32 0.0, %v2991
        %v2993 = vpop.f32.mrb[0].mxu0
        %v2994 = vpop.f32.mrb[0].mxu0
        %v2995 = vadd.f32 0.0, %v2994
        %v2996 = vpop.f32.mrb[0].mxu0
        %2997 = vmatprep.mubr.bf16.mxu0 0
        %2998 = vmatmul.mubr.bf16.gmra.mrb[0].mxu0 %v2436
        %v2999 = vpop.f32.mrb[0].mxu0
        %v3000 = vadd.f32 0.0, %v2999
        %v3001 = vpop.f32.mrb[0].mxu0
        %v3002 = vpop.f32.mrb[0].mxu0
        %v3003 = vadd.f32 0.0, %v3002
        %v3004 = vpop.f32.mrb[0].mxu0
        %3005 = vmatprep.mubr.bf16.mxu0 0
        %3006 = vmatmul.mubr.bf16.gmra.mrb[0].mxu0 %v2439
        %v3007 = vpop.f32.mrb[0].mxu0
        %v3008 = vadd.f32 0.0, %v3007
        %v3009 = vpop.f32.mrb[0].mxu0
        %v3010 = vpop.f32.mrb[0].mxu0
        %v3011 = vadd.f32 0.0, %v3010
        %v3012 = vpop.f32.mrb[0].mxu0
        %3013 = vmatprep.mubr.bf16.mxu0 0
        %3014 = vmatmul.mubr.bf16.gmra.mrb[0].mxu0 %v2442
        %v3015 = vpop.f32.mrb[0].mxu0
        %v3016 = vadd.f32 0.0, %v3015
        %v3017 = vpop.f32.mrb[0].mxu0
        %v3018 = vpop.f32.mrb[0].mxu0
        %v3019 = vadd.f32 0.0, %v3018
        %v3020 = vpop.f32.mrb[0].mxu0
        %3021 = vmatprep.mubr.bf16.mxu0 0
        %3022 = vmatmul.mubr.bf16.gmra.mrb[0].mxu0 %v2445
        %v3023 = vpop.f32.mrb[0].mxu0
        %v3024 = vadd.f32 0.0, %v3023
        %v3025 = vpop.f32.mrb[0].mxu0
        %v3026 = vpop.f32.mrb[0].mxu0
        %v3027 = vadd.f32 0.0, %v3026
        %v3028 = vpop.f32.mrb[0].mxu0
        %3029 = vmatprep.mubr.bf16.mxu0 0
        %3030 = vmatmul.mubr.bf16.gmra.mrb[0].mxu0 %v2875
        %v3031 = vpop.f32.mrb[0].mxu0
        %v3032 = vadd.f32 0.0, %v3031
        %v3033 = vpop.f32.mrb[0].mxu0
        %v3034 = vpop.f32.mrb[0].mxu0
        %v3035 = vadd.f32 0.0, %v3034
        %v3036 = vpop.f32.mrb[0].mxu0
        %3037 = vdwg.mxu0
        %v3038 = vadd.f32 %v2682, %v2912
        %v3039 = vadd.f32 %v2685, %v2915
        %v3040 = vadd.f32 %v2690, %v2920
        %v3041 = vadd.f32 %v2693, %v2923
        %v3042 = vadd.f32 %v2698, %v2928
        %v3043 = vadd.f32 %v2701, %v2931
        %v3044 = vadd.f32 %v2706, %v2936
        %v3045 = vadd.f32 %v2709, %v2939
        %v3046 = vadd.f32 %v2714, %v2944
        %v3047 = vadd.f32 %v2717, %v2947
        %v3048 = vadd.f32 %v2722, %v2952
        %v3049 = vadd.f32 %v2725, %v2955
        %v3050 = vadd.f32 %v2730, %v2960
        %v3051 = vadd.f32 %v2733, %v2963
        %v3052 = vadd.f32 %v2738, %v2968
        %v3053 = vadd.f32 %v2741, %v2971
        %v3054 = vadd.f32 %v2746, %v2976
        %v3055 = vadd.f32 %v2749, %v2979
        %v3056 = vadd.f32 %v2754, %v2984
        %v3057 = vadd.f32 %v2757, %v2987
        %v3058 = vadd.f32 %v2762, %v2992
        %v3059 = vadd.f32 %v2765, %v2995
        %v3060 = vadd.f32 %v2770, %v3000
        %v3061 = vadd.f32 %v2773, %v3003
        %v3062 = vadd.f32 %v2778, %v3008
        %v3063 = vadd.f32 %v2781, %v3011
        %v3064 = vadd.f32 %v2786, %v3016
        %v3065 = vadd.f32 %v2789, %v3019
        %v3066 = vadd.f32 %v2794, %v3024
        %v3067 = vadd.f32 %v2797, %v3027
        %v3068 = vadd.f32 %v2802, %v3032
        %v3069 = vadd.f32 %v2805, %v3035
        %v3071 = vlaneseq
        %v3072 = vshrl.u32 %v3071, 7
        %v3073 = vsub.s32 0, %v3072
        %v3074 = vrot.slane %v1850, %v3073
        %v3076 = vadd.f32 %v3038, %v3074
        %v3077 = vadd.f32 %v3039, %v3074
        %v3078 = vadd.f32 %v3040, %v3074
        %v3079 = vadd.f32 %v3041, %v3074
        %v3080 = vadd.f32 %v3042, %v3074
        %v3081 = vadd.f32 %v3043, %v3074
        %v3082 = vadd.f32 %v3044, %v3074
        %v3083 = vadd.f32 %v3045, %v3074
        %v3084 = vadd.f32 %v3046, %v3074
        %v3085 = vadd.f32 %v3047, %v3074
        %v3086 = vadd.f32 %v3048, %v3074
        %v3087 = vadd.f32 %v3049, %v3074
        %v3088 = vadd.f32 %v3050, %v3074
        %v3089 = vadd.f32 %v3051, %v3074
        %v3090 = vadd.f32 %v3052, %v3074
        %v3091 = vadd.f32 %v3053, %v3074
        %v3092 = vadd.f32 %v3054, %v3074
        %v3093 = vadd.f32 %v3055, %v3074
        %v3094 = vadd.f32 %v3056, %v3074
        %v3095 = vadd.f32 %v3057, %v3074
        %v3096 = vadd.f32 %v3058, %v3074
        %v3097 = vadd.f32 %v3059, %v3074
        %v3098 = vadd.f32 %v3060, %v3074
        %v3099 = vadd.f32 %v3061, %v3074
        %v3100 = vadd.f32 %v3062, %v3074
        %v3101 = vadd.f32 %v3063, %v3074
        %v3102 = vadd.f32 %v3064, %v3074
        %v3103 = vadd.f32 %v3065, %v3074
        %v3104 = vadd.f32 %v3066, %v3074
        %v3105 = vadd.f32 %v3067, %v3074
        %v3106 = vadd.f32 %v3068, %v3074
        %v3107 = vadd.f32 %v3069, %v3074
        %v3108 = vmax.f32 %v3076, 0.0
        %v3109 = vmax.f32 %v3077, 0.0
        %v3110 = vmax.f32 %v3078, 0.0
        %v3111 = vmax.f32 %v3079, 0.0
        %v3112 = vmax.f32 %v3080, 0.0
        %v3113 = vmax.f32 %v3081, 0.0
        %v3114 = vmax.f32 %v3082, 0.0
        %v3115 = vmax.f32 %v3083, 0.0
        %v3116 = vmax.f32 %v3084, 0.0
        %v3117 = vmax.f32 %v3085, 0.0
        %v3118 = vmax.f32 %v3086, 0.0
        %v3119 = vmax.f32 %v3087, 0.0
        %v3120 = vmax.f32 %v3088, 0.0
        %v3121 = vmax.f32 %v3089, 0.0
        %v3122 = vmax.f32 %v3090, 0.0
        %v3123 = vmax.f32 %v3091, 0.0
        %v3124 = vmax.f32 %v3092, 0.0
        %v3125 = vmax.f32 %v3093, 0.0
        %v3126 = vmax.f32 %v3094, 0.0
        %v3127 = vmax.f32 %v3095, 0.0
        %v3128 = vmax.f32 %v3096, 0.0
        %v3129 = vmax.f32 %v3097, 0.0
        %v3130 = vmax.f32 %v3098, 0.0
        %v3131 = vmax.f32 %v3099, 0.0
        %v3132 = vmax.f32 %v3100, 0.0
        %v3133 = vmax.f32 %v3101, 0.0
        %v3134 = vmax.f32 %v3102, 0.0
        %v3135 = vmax.f32 %v3103, 0.0
        %v3136 = vmax.f32 %v3104, 0.0
        %v3137 = vmax.f32 %v3105, 0.0
        %v3138 = vmax.f32 %v3106, 0.0
        %v3139 = vmax.f32 %v3107, 0.0
        %3140 = vst.msk [vmem:[%s1727 + $0x1] sm:$0xff] %vm334, %v3108
        %3141 = vst.msk [vmem:[%s1727 + $0x9] sm:$0xff] %vm334, %v3109
        %3142 = vst.msk [vmem:[%s1727 + $0x19] sm:$0xff] %vm334, %v3110
        %3143 = vst.msk [vmem:[%s1727 + $0x21] sm:$0xff] %vm334, %v3111
        %3144 = vst.msk [vmem:[%s1727 + $0x31] sm:$0xff] %vm334, %v3112
        %3145 = vst.msk [vmem:[%s1727 + $0x39] sm:$0xff] %vm334, %v3113
        %3146 = vst.msk [vmem:[%s1727 + $0x49] sm:$0xff] %vm334, %v3114
        %3147 = vst.msk [vmem:[%s1727 + $0x51] sm:$0xff] %vm334, %v3115
        %3148 = vst.msk [vmem:[%s1727 + $0x61] sm:$0xff] %vm334, %v3116
        %3149 = vst.msk [vmem:[%s1727 + $0x69] sm:$0xff] %vm334, %v3117
        %3150 = vst.msk [vmem:[%s1727 + $0x79] sm:$0xff] %vm334, %v3118
        %3151 = vst.msk [vmem:[%s1727 + $0x81] sm:$0xff] %vm334, %v3119
        %3152 = vst.msk [vmem:[%s1727 + $0x91] sm:$0xff] %vm334, %v3120
        %3153 = vst.msk [vmem:[%s1727 + $0x99] sm:$0xff] %vm334, %v3121
        %3154 = vst.msk [vmem:[%s1727 + $0xa9] sm:$0xff] %vm334, %v3122
        %3155 = vst.msk [vmem:[%s1727 + $0xb1] sm:$0xff] %vm334, %v3123
        %3156 = vst.msk [vmem:[%s1727 + $0xc1] sm:$0xff] %vm334, %v3124
        %3157 = vst.msk [vmem:[%s1727 + $0xc9] sm:$0xff] %vm334, %v3125
        %3158 = vst.msk [vmem:[%s1727 + $0xd9] sm:$0xff] %vm334, %v3126
        %3159 = vst.msk [vmem:[%s1727 + $0xe1] sm:$0xff] %vm334, %v3127
        %3160 = vst.msk [vmem:[%s1727 + $0xf1] sm:$0xff] %vm334, %v3128
        %3161 = vst.msk [vmem:[%s1727 + $0xf9] sm:$0xff] %vm334, %v3129
        %3162 = vst.msk [vmem:[%s1727 + $0x109] sm:$0xff] %vm334, %v3130
        %3163 = vst.msk [vmem:[%s1727 + $0x111] sm:$0xff] %vm334, %v3131
        %3164 = vst.msk [vmem:[%s1727 + $0x121] sm:$0xff] %vm334, %v3132
        %3165 = vst.msk [vmem:[%s1727 + $0x129] sm:$0xff] %vm334, %v3133
        %3166 = vst.msk [vmem:[%s1727 + $0x139] sm:$0xff] %vm334, %v3134
        %3167 = vst.msk [vmem:[%s1727 + $0x141] sm:$0xff] %vm334, %v3135
        %3168 = vst.msk [vmem:[%s1727 + $0x151] sm:$0xff] %vm334, %v3136
        %3169 = vst.msk [vmem:[%s1727 + $0x159] sm:$0xff] %vm334, %v3137
        %3170 = vst.msk [vmem:[%s1727 + $0x169] sm:$0xff] %vm334, %v3138
        %3171 = vst.msk [vmem:[%s1727 + $0x171] sm:$0xff] %vm334, %v3139
        %v3172 = vld [vmem:[#allocation3] sm:$0xff]
        %v3173 = vld [vmem:[#allocation3 + $0x8] sm:$0xff]
        %v3174 = vld [vmem:[#allocation3 + $0x10] sm:$0x3]
        %v3175 = vld [vmem:[#allocation3 + $0x18] sm:$0xff]
        %v3176 = vld [vmem:[#allocation3 + $0x20] sm:$0xff]
        %v3177 = vld [vmem:[#allocation3 + $0x28] sm:$0x3]
        %v3178 = vld [vmem:[#allocation3 + $0x30] sm:$0xff]
        %v3179 = vld [vmem:[#allocation3 + $0x38] sm:$0xff]
        %v3180 = vld [vmem:[#allocation3 + $0x40] sm:$0x3]
        %v3181 = vld [vmem:[#allocation3 + $0x48] sm:$0xff]
        %v3182 = vld [vmem:[#allocation3 + $0x50] sm:$0xff]
        %v3183 = vld [vmem:[#allocation3 + $0x58] sm:$0x3]
        %v3184 = vld [vmem:[#allocation3 + $0x60] sm:$0xff]
        %v3185 = vld [vmem:[#allocation3 + $0x68] sm:$0xff]
        %v3186 = vld [vmem:[#allocation3 + $0x70] sm:$0x3]
        %v3187 = vld [vmem:[#allocation3 + $0x78] sm:$0xff]
        %v3188 = vld [vmem:[#allocation3 + $0x80] sm:$0xff]
        %v3189 = vld [vmem:[#allocation3 + $0x88] sm:$0x3]
        %v3190 = vld [vmem:[#allocation3 + $0x90] sm:$0xff]
        %v3191 = vld [vmem:[#allocation3 + $0x98] sm:$0xff]
        %v3192 = vld [vmem:[#allocation3 + $0xa0] sm:$0x3]
        %v3193 = vld [vmem:[#allocation3 + $0xa8] sm:$0xff]
        %v3194 = vld [vmem:[#allocation3 + $0xb0] sm:$0xff]
        %v3195 = vld [vmem:[#allocation3 + $0xb8] sm:$0x3]
        %v3196 = vld [vmem:[#allocation3 + $0xc0] sm:$0xff]
        %v3197 = vld [vmem:[#allocation3 + $0xc8] sm:$0xff]
        %v3198 = vld [vmem:[#allocation3 + $0xd0] sm:$0x3]
        %v3199 = vld [vmem:[#allocation3 + $0xd8] sm:$0xff]
        %v3200 = vld [vmem:[#allocation3 + $0xe0] sm:$0xff]
        %v3201 = vld [vmem:[#allocation3 + $0xe8] sm:$0x3]
        %v3202 = vld [vmem:[#allocation3 + $0xf0] sm:$0xff]
        %v3203 = vld [vmem:[#allocation3 + $0xf8] sm:$0xff]
        %v3204 = vld [vmem:[#allocation3 + $0x100] sm:$0x3]
        %v3205 = vld [vmem:[#allocation3 + $0x108] sm:$0xff]
        %v3206 = vld [vmem:[#allocation3 + $0x110] sm:$0xff]
        %v3207 = vld [vmem:[#allocation3 + $0x118] sm:$0x3]
        %v3208 = vld [vmem:[#allocation3 + $0x120] sm:$0xff]
        %v3209 = vld [vmem:[#allocation3 + $0x128] sm:$0xff]
        %v3210 = vld [vmem:[#allocation3 + $0x130] sm:$0x3]
        %v3211 = vld [vmem:[#allocation3 + $0x138] sm:$0xff]
        %v3212 = vld [vmem:[#allocation3 + $0x140] sm:$0xff]
        %v3213 = vld [vmem:[#allocation3 + $0x148] sm:$0x3]
        %v3214 = vld [vmem:[#allocation3 + $0x150] sm:$0xff]
        %v3215 = vld [vmem:[#allocation3 + $0x158] sm:$0xff]
        %v3216 = vld [vmem:[#allocation3 + $0x160] sm:$0x3]
        %v3217 = vld [vmem:[#allocation3 + $0x168] sm:$0xff]
        %v3218 = vld [vmem:[#allocation3 + $0x170] sm:$0xff]
        %v3219 = vld [vmem:[#allocation3 + $0x178] sm:$0x3]
        %v3220 = vld [vmem:[#allocation3 + $0x180] sm:$0xff]
        %v3221 = vld [vmem:[#allocation3 + $0x188] sm:$0xff]
        %v3222 = vld [vmem:[#allocation3 + $0x190] sm:$0x3]
        %v3223 = vld [vmem:[#allocation3 + $0x198] sm:$0xff]
        %v3224 = vld [vmem:[#allocation3 + $0x1a0] sm:$0xff]
        %v3225 = vld [vmem:[#allocation3 + $0x1a8] sm:$0x3]
        %s3226 = scalar_lea.vmem %s3, 144
        %v3227 = vld [vmem:[%s3226] sm:$0xf]
        %v3228 = vld [vmem:[%s3226 + $0x4] sm:$0xf]
        %v3229 = vld [vmem:[%s3226 + $0x8] sm:$0xf]
        %v3230 = vld [vmem:[%s3226 + $0xc] sm:$0xf]
        %v3231 = vld [vmem:[%s3226 + $0x10] sm:$0xf]
        %v3232 = vld [vmem:[%s3226 + $0x14] sm:$0xf]
        %v3233 = vld [vmem:[%s3226 + $0x18] sm:$0xf]
        %v3234 = vld [vmem:[%s3226 + $0x1c] sm:$0xf]
        %v3235 = vld [vmem:[%s3226 + $0x20] sm:$0xf]
        %v3236 = vld [vmem:[%s3226 + $0x24] sm:$0xf]
        %v3237 = vld [vmem:[%s3226 + $0x28] sm:$0xf]
        %v3238 = vld [vmem:[%s3226 + $0x2c] sm:$0xf]
        %v3239 = vld [vmem:[%s3226 + $0x30] sm:$0xf]
        %v3240 = vld [vmem:[%s3226 + $0x34] sm:$0xf]
        %v3241 = vld [vmem:[%s3226 + $0x38] sm:$0xf]
        %v3242 = vld [vmem:[%s3226 + $0x3c] sm:$0xf]
        %v3243 = vld [vmem:[%s3226 + $0x40] sm:$0xf]
        %v3244 = vld [vmem:[%s3226 + $0x44] sm:$0xf]
        %v3245 = vld [vmem:[%s3226 + $0x48] sm:$0xf]
        %v3246 = vld [vmem:[%s3226 + $0x4c] sm:$0xf]
        %v3247 = vld [vmem:[%s3226 + $0x50] sm:$0xf]
        %v3248 = vld [vmem:[%s3226 + $0x54] sm:$0xf]
        %v3249 = vld [vmem:[%s3226 + $0x58] sm:$0xf]
        %v3250 = vld [vmem:[%s3226 + $0x5c] sm:$0xf]
        %v3251 = vld [vmem:[%s3226 + $0x60] sm:$0xf]
        %v3252 = vld [vmem:[%s3226 + $0x64] sm:$0xf]
        %v3253 = vld [vmem:[%s3226 + $0x68] sm:$0xf]
        %v3254 = vld [vmem:[%s3226 + $0x6c] sm:$0xf]
        %v3255 = vld [vmem:[%s3226 + $0x70] sm:$0xf]
        %v3256 = vld [vmem:[%s3226 + $0x74] sm:$0xf]
        %v3257 = vld [vmem:[%s3226 + $0x78] sm:$0xf]
        %v3258 = vld [vmem:[%s3226 + $0x7c] sm:$0xf]
        %v3259 = vld [vmem:[%s3226 + $0x80] sm:$0xf]
        %v3260 = vld [vmem:[%s3226 + $0x84] sm:$0xf]
        %v3261 = vld [vmem:[%s3226 + $0x88] sm:$0xf]
        %v3262 = vld [vmem:[%s3226 + $0x8c] sm:$0xf]
        %s3263 = scalar_lea.vmem %s4, 1
        %v3264 = vld [vmem:[%s3263] sm:$0x1]
        %v3313 = vrot.slane %v3172, 1
        %v3314 = vrot.slane %v3173, 1
        %v3315 = vsel %vm564, %v3313, %v3314
        %v3316 = vrot.slane %v3174, 1
        %v3317 = vsel %vm564, %v3314, %v3316
        %v3318 = vrot.slane %v3175, 1
        %v3319 = vrot.slane %v3176, 1
        %v3320 = vsel %vm564, %v3318, %v3319
        %v3321 = vrot.slane %v3177, 1
        %v3322 = vsel %vm564, %v3319, %v3321
        %v3323 = vrot.slane %v3178, 1
        %v3324 = vrot.slane %v3179, 1
        %v3325 = vsel %vm564, %v3323, %v3324
        %v3326 = vrot.slane %v3180, 1
        %v3327 = vsel %vm564, %v3324, %v3326
        %v3328 = vrot.slane %v3181, 1
        %v3329 = vrot.slane %v3182, 1
        %v3330 = vsel %vm564, %v3328, %v3329
        %v3331 = vrot.slane %v3183, 1
        %v3332 = vsel %vm564, %v3329, %v3331
        %v3333 = vrot.slane %v3184, 1
        %v3334 = vrot.slane %v3185, 1
        %v3335 = vsel %vm564, %v3333, %v3334
        %v3336 = vrot.slane %v3186, 1
        %v3337 = vsel %vm564, %v3334, %v3336
        %v3338 = vrot.slane %v3187, 1
        %v3339 = vrot.slane %v3188, 1
        %v3340 = vsel %vm564, %v3338, %v3339
        %v3341 = vrot.slane %v3189, 1
        %v3342 = vsel %vm564, %v3339, %v3341
        %v3343 = vrot.slane %v3190, 1
        %v3344 = vrot.slane %v3191, 1
        %v3345 = vsel %vm564, %v3343, %v3344
        %v3346 = vrot.slane %v3192, 1
        %v3347 = vsel %vm564, %v3344, %v3346
        %v3348 = vrot.slane %v3193, 1
        %v3349 = vrot.slane %v3194, 1
        %v3350 = vsel %vm564, %v3348, %v3349
        %v3351 = vrot.slane %v3195, 1
        %v3352 = vsel %vm564, %v3349, %v3351
        %v3353 = vrot.slane %v3196, 1
        %v3354 = vrot.slane %v3197, 1
        %v3355 = vsel %vm564, %v3353, %v3354
        %v3356 = vrot.slane %v3198, 1
        %v3357 = vsel %vm564, %v3354, %v3356
        %v3358 = vrot.slane %v3199, 1
        %v3359 = vrot.slane %v3200, 1
        %v3360 = vsel %vm564, %v3358, %v3359
        %v3361 = vrot.slane %v3201, 1
        %v3362 = vsel %vm564, %v3359, %v3361
        %v3363 = vrot.slane %v3202, 1
        %v3364 = vrot.slane %v3203, 1
        %v3365 = vsel %vm564, %v3363, %v3364
        %v3366 = vrot.slane %v3204, 1
        %v3367 = vsel %vm564, %v3364, %v3366
        %v3368 = vrot.slane %v3205, 1
        %v3369 = vrot.slane %v3206, 1
        %v3370 = vsel %vm564, %v3368, %v3369
        %v3371 = vrot.slane %v3207, 1
        %v3372 = vsel %vm564, %v3369, %v3371
        %v3373 = vrot.slane %v3208, 1
        %v3374 = vrot.slane %v3209, 1
        %v3375 = vsel %vm564, %v3373, %v3374
        %v3376 = vrot.slane %v3210, 1
        %v3377 = vsel %vm564, %v3374, %v3376
        %v3378 = vrot.slane %v3211, 1
        %v3379 = vrot.slane %v3212, 1
        %v3380 = vsel %vm564, %v3378, %v3379
        %v3381 = vrot.slane %v3213, 1
        %v3382 = vsel %vm564, %v3379, %v3381
        %v3383 = vrot.slane %v3214, 1
        %v3384 = vrot.slane %v3215, 1
        %v3385 = vsel %vm564, %v3383, %v3384
        %v3386 = vrot.slane %v3216, 1
        %v3387 = vsel %vm564, %v3384, %v3386
        %v3388 = vrot.slane %v3217, 1
        %v3389 = vrot.slane %v3218, 1
        %v3390 = vsel %vm564, %v3388, %v3389
        %v3391 = vrot.slane %v3219, 1
        %v3392 = vsel %vm564, %v3389, %v3391
        %3393 = vrot.lane.b32.xlu0 %v3315, 32
        %v3394 = vpop.permute.xlu0 %3393
        %3395 = vrot.lane.b32.xlu0 %v3317, 32
        %v3396 = vpop.permute.xlu0 %3395
        %3397 = vrot.lane.b32.xlu0 %v3320, 32
        %v3398 = vpop.permute.xlu0 %3397
        %3399 = vrot.lane.b32.xlu0 %v3322, 32
        %v3400 = vpop.permute.xlu0 %3399
        %3401 = vrot.lane.b32.xlu0 %v3325, 32
        %v3402 = vpop.permute.xlu0 %3401
        %3403 = vrot.lane.b32.xlu0 %v3327, 32
        %v3404 = vpop.permute.xlu0 %3403
        %3405 = vrot.lane.b32.xlu0 %v3330, 32
        %v3406 = vpop.permute.xlu0 %3405
        %3407 = vrot.lane.b32.xlu0 %v3332, 32
        %v3408 = vpop.permute.xlu0 %3407
        %3409 = vrot.lane.b32.xlu0 %v3335, 32
        %v3410 = vpop.permute.xlu0 %3409
        %3411 = vrot.lane.b32.xlu0 %v3337, 32
        %v3412 = vpop.permute.xlu0 %3411
        %3413 = vrot.lane.b32.xlu0 %v3340, 32
        %v3414 = vpop.permute.xlu0 %3413
        %3415 = vrot.lane.b32.xlu0 %v3342, 32
        %v3416 = vpop.permute.xlu0 %3415
        %3417 = vrot.lane.b32.xlu0 %v3345, 32
        %v3418 = vpop.permute.xlu0 %3417
        %3419 = vrot.lane.b32.xlu0 %v3347, 32
        %v3420 = vpop.permute.xlu0 %3419
        %3421 = vrot.lane.b32.xlu0 %v3350, 32
        %v3422 = vpop.permute.xlu0 %3421
        %3423 = vrot.lane.b32.xlu0 %v3352, 32
        %v3424 = vpop.permute.xlu0 %3423
        %3425 = vrot.lane.b32.xlu0 %v3355, 32
        %v3426 = vpop.permute.xlu0 %3425
        %3427 = vrot.lane.b32.xlu0 %v3357, 32
        %v3428 = vpop.permute.xlu0 %3427
        %3429 = vrot.lane.b32.xlu0 %v3360, 32
        %v3430 = vpop.permute.xlu0 %3429
        %3431 = vrot.lane.b32.xlu0 %v3362, 32
        %v3432 = vpop.permute.xlu0 %3431
        %3433 = vrot.lane.b32.xlu0 %v3365, 32
        %v3434 = vpop.permute.xlu0 %3433
        %3435 = vrot.lane.b32.xlu0 %v3367, 32
        %v3436 = vpop.permute.xlu0 %3435
        %3437 = vrot.lane.b32.xlu0 %v3370, 32
        %v3438 = vpop.permute.xlu0 %3437
        %3439 = vrot.lane.b32.xlu0 %v3372, 32
        %v3440 = vpop.permute.xlu0 %3439
        %3441 = vrot.lane.b32.xlu0 %v3375, 32
        %v3442 = vpop.permute.xlu0 %3441
        %3443 = vrot.lane.b32.xlu0 %v3377, 32
        %v3444 = vpop.permute.xlu0 %3443
        %3445 = vrot.lane.b32.xlu0 %v3380, 32
        %v3446 = vpop.permute.xlu0 %3445
        %3447 = vrot.lane.b32.xlu0 %v3382, 32
        %v3448 = vpop.permute.xlu0 %3447
        %3449 = vrot.lane.b32.xlu0 %v3385, 32
        %v3450 = vpop.permute.xlu0 %3449
        %3451 = vrot.lane.b32.xlu0 %v3387, 32
        %v3452 = vpop.permute.xlu0 %3451
        %3453 = vrot.lane.b32.xlu0 %v3390, 32
        %v3454 = vpop.permute.xlu0 %3453
        %3455 = vrot.lane.b32.xlu0 %v3392, 32
        %v3456 = vpop.permute.xlu0 %3455
        %v3489 = vrot.slane %v3172, 2
        %v3490 = vrot.slane %v3173, 2
        %v3491 = vsel %vm741, %v3489, %v3490
        %v3492 = vrot.slane %v3174, 2
        %v3493 = vsel %vm741, %v3490, %v3492
        %v3494 = vrot.slane %v3175, 2
        %v3495 = vrot.slane %v3176, 2
        %v3496 = vsel %vm741, %v3494, %v3495
        %v3497 = vrot.slane %v3177, 2
        %v3498 = vsel %vm741, %v3495, %v3497
        %v3499 = vrot.slane %v3178, 2
        %v3500 = vrot.slane %v3179, 2
        %v3501 = vsel %vm741, %v3499, %v3500
        %v3502 = vrot.slane %v3180, 2
        %v3503 = vsel %vm741, %v3500, %v3502
        %v3504 = vrot.slane %v3181, 2
        %v3505 = vrot.slane %v3182, 2
        %v3506 = vsel %vm741, %v3504, %v3505
        %v3507 = vrot.slane %v3183, 2
        %v3508 = vsel %vm741, %v3505, %v3507
        %v3509 = vrot.slane %v3184, 2
        %v3510 = vrot.slane %v3185, 2
        %v3511 = vsel %vm741, %v3509, %v3510
        %v3512 = vrot.slane %v3186, 2
        %v3513 = vsel %vm741, %v3510, %v3512
        %v3514 = vrot.slane %v3187, 2
        %v3515 = vrot.slane %v3188, 2
        %v3516 = vsel %vm741, %v3514, %v3515
        %v3517 = vrot.slane %v3189, 2
        %v3518 = vsel %vm741, %v3515, %v3517
        %v3519 = vrot.slane %v3190, 2
        %v3520 = vrot.slane %v3191, 2
        %v3521 = vsel %vm741, %v3519, %v3520
        %v3522 = vrot.slane %v3192, 2
        %v3523 = vsel %vm741, %v3520, %v3522
        %v3524 = vrot.slane %v3193, 2
        %v3525 = vrot.slane %v3194, 2
        %v3526 = vsel %vm741, %v3524, %v3525
        %v3527 = vrot.slane %v3195, 2
        %v3528 = vsel %vm741, %v3525, %v3527
        %v3529 = vrot.slane %v3196, 2
        %v3530 = vrot.slane %v3197, 2
        %v3531 = vsel %vm741, %v3529, %v3530
        %v3532 = vrot.slane %v3198, 2
        %v3533 = vsel %vm741, %v3530, %v3532
        %v3534 = vrot.slane %v3199, 2
        %v3535 = vrot.slane %v3200, 2
        %v3536 = vsel %vm741, %v3534, %v3535
        %v3537 = vrot.slane %v3201, 2
        %v3538 = vsel %vm741, %v3535, %v3537
        %v3539 = vrot.slane %v3202, 2
        %v3540 = vrot.slane %v3203, 2
        %v3541 = vsel %vm741, %v3539, %v3540
        %v3542 = vrot.slane %v3204, 2
        %v3543 = vsel %vm741, %v3540, %v3542
        %v3544 = vrot.slane %v3205, 2
        %v3545 = vrot.slane %v3206, 2
        %v3546 = vsel %vm741, %v3544, %v3545
        %v3547 = vrot.slane %v3207, 2
        %v3548 = vsel %vm741, %v3545, %v3547
        %v3549 = vrot.slane %v3208, 2
        %v3550 = vrot.slane %v3209, 2
        %v3551 = vsel %vm741, %v3549, %v3550
        %v3552 = vrot.slane %v3210, 2
        %v3553 = vsel %vm741, %v3550, %v3552
        %v3554 = vrot.slane %v3211, 2
        %v3555 = vrot.slane %v3212, 2
        %v3556 = vsel %vm741, %v3554, %v3555
        %v3557 = vrot.slane %v3213, 2
        %v3558 = vsel %vm741, %v3555, %v3557
        %v3559 = vrot.slane %v3214, 2
        %v3560 = vrot.slane %v3215, 2
        %v3561 = vsel %vm741, %v3559, %v3560
        %v3562 = vrot.slane %v3216, 2
        %v3563 = vsel %vm741, %v3560, %v3562
        %v3564 = vrot.slane %v3217, 2
        %v3565 = vrot.slane %v3218, 2
        %v3566 = vsel %vm741, %v3564, %v3565
        %v3567 = vrot.slane %v3219, 2
        %v3568 = vsel %vm741, %v3565, %v3567
        %3569 = vrot.lane.b32.xlu0 %v3491, 64
        %v3570 = vpop.permute.xlu0 %3569
        %3571 = vrot.lane.b32.xlu0 %v3493, 64
        %v3572 = vpop.permute.xlu0 %3571
        %3573 = vrot.lane.b32.xlu0 %v3496, 64
        %v3574 = vpop.permute.xlu0 %3573
        %3575 = vrot.lane.b32.xlu0 %v3498, 64
        %v3576 = vpop.permute.xlu0 %3575
        %3577 = vrot.lane.b32.xlu0 %v3501, 64
        %v3578 = vpop.permute.xlu0 %3577
        %3579 = vrot.lane.b32.xlu0 %v3503, 64
        %v3580 = vpop.permute.xlu0 %3579
        %3581 = vrot.lane.b32.xlu0 %v3506, 64
        %v3582 = vpop.permute.xlu0 %3581
        %3583 = vrot.lane.b32.xlu0 %v3508, 64
        %v3584 = vpop.permute.xlu0 %3583
        %3585 = vrot.lane.b32.xlu0 %v3511, 64
        %v3586 = vpop.permute.xlu0 %3585
        %3587 = vrot.lane.b32.xlu0 %v3513, 64
        %v3588 = vpop.permute.xlu0 %3587
        %3589 = vrot.lane.b32.xlu0 %v3516, 64
        %v3590 = vpop.permute.xlu0 %3589
        %3591 = vrot.lane.b32.xlu0 %v3518, 64
        %v3592 = vpop.permute.xlu0 %3591
        %3593 = vrot.lane.b32.xlu0 %v3521, 64
        %v3594 = vpop.permute.xlu0 %3593
        %3595 = vrot.lane.b32.xlu0 %v3523, 64
        %v3596 = vpop.permute.xlu0 %3595
        %3597 = vrot.lane.b32.xlu0 %v3526, 64
        %v3598 = vpop.permute.xlu0 %3597
        %3599 = vrot.lane.b32.xlu0 %v3528, 64
        %v3600 = vpop.permute.xlu0 %3599
        %3601 = vrot.lane.b32.xlu0 %v3531, 64
        %v3602 = vpop.permute.xlu0 %3601
        %3603 = vrot.lane.b32.xlu0 %v3533, 64
        %v3604 = vpop.permute.xlu0 %3603
        %3605 = vrot.lane.b32.xlu0 %v3536, 64
        %v3606 = vpop.permute.xlu0 %3605
        %3607 = vrot.lane.b32.xlu0 %v3538, 64
        %v3608 = vpop.permute.xlu0 %3607
        %3609 = vrot.lane.b32.xlu0 %v3541, 64
        %v3610 = vpop.permute.xlu0 %3609
        %3611 = vrot.lane.b32.xlu0 %v3543, 64
        %v3612 = vpop.permute.xlu0 %3611
        %3613 = vrot.lane.b32.xlu0 %v3546, 64
        %v3614 = vpop.permute.xlu0 %3613
        %3615 = vrot.lane.b32.xlu0 %v3548, 64
        %v3616 = vpop.permute.xlu0 %3615
        %3617 = vrot.lane.b32.xlu0 %v3551, 64
        %v3618 = vpop.permute.xlu0 %3617
        %3619 = vrot.lane.b32.xlu0 %v3553, 64
        %v3620 = vpop.permute.xlu0 %3619
        %3621 = vrot.lane.b32.xlu0 %v3556, 64
        %v3622 = vpop.permute.xlu0 %3621
        %3623 = vrot.lane.b32.xlu0 %v3558, 64
        %v3624 = vpop.permute.xlu0 %3623
        %3625 = vrot.lane.b32.xlu0 %v3561, 64
        %v3626 = vpop.permute.xlu0 %3625
        %3627 = vrot.lane.b32.xlu0 %v3563, 64
        %v3628 = vpop.permute.xlu0 %3627
        %3629 = vrot.lane.b32.xlu0 %v3566, 64
        %v3630 = vpop.permute.xlu0 %3629
        %3631 = vrot.lane.b32.xlu0 %v3568, 64
        %v3632 = vpop.permute.xlu0 %3631
        %v3665 = vsel %vm334, %v3172, %v3394
        %v3666 = vsel %vm334, %v3173, %v3396
        %v3667 = vsel %vm334, %v3175, %v3398
        %v3668 = vsel %vm334, %v3176, %v3400
        %v3669 = vsel %vm334, %v3178, %v3402
        %v3670 = vsel %vm334, %v3179, %v3404
        %v3671 = vsel %vm334, %v3181, %v3406
        %v3672 = vsel %vm334, %v3182, %v3408
        %v3673 = vsel %vm334, %v3184, %v3410
        %v3674 = vsel %vm334, %v3185, %v3412
        %v3675 = vsel %vm334, %v3187, %v3414
        %v3676 = vsel %vm334, %v3188, %v3416
        %v3677 = vsel %vm334, %v3190, %v3418
        %v3678 = vsel %vm334, %v3191, %v3420
        %v3679 = vsel %vm334, %v3193, %v3422
        %v3680 = vsel %vm334, %v3194, %v3424
        %v3681 = vsel %vm334, %v3196, %v3426
        %v3682 = vsel %vm334, %v3197, %v3428
        %v3683 = vsel %vm334, %v3199, %v3430
        %v3684 = vsel %vm334, %v3200, %v3432
        %v3685 = vsel %vm334, %v3202, %v3434
        %v3686 = vsel %vm334, %v3203, %v3436
        %v3687 = vsel %vm334, %v3205, %v3438
        %v3688 = vsel %vm334, %v3206, %v3440
        %v3689 = vsel %vm334, %v3208, %v3442
        %v3690 = vsel %vm334, %v3209, %v3444
        %v3691 = vsel %vm334, %v3211, %v3446
        %v3692 = vsel %vm334, %v3212, %v3448
        %v3693 = vsel %vm334, %v3214, %v3450
        %v3694 = vsel %vm334, %v3215, %v3452
        %v3695 = vsel %vm334, %v3217, %v3454
        %v3696 = vsel %vm334, %v3218, %v3456
        %v3697 = vsel %vm2283, %v3665, %v3570
        %v3698 = vsel %vm2283, %v3666, %v3572
        %v3699 = vsel %vm2283, %v3667, %v3574
        %v3700 = vsel %vm2283, %v3668, %v3576
        %v3701 = vsel %vm2283, %v3669, %v3578
        %v3702 = vsel %vm2283, %v3670, %v3580
        %v3703 = vsel %vm2283, %v3671, %v3582
        %v3704 = vsel %vm2283, %v3672, %v3584
        %v3705 = vsel %vm2283, %v3673, %v3586
        %v3706 = vsel %vm2283, %v3674, %v3588
        %v3707 = vsel %vm2283, %v3675, %v3590
        %v3708 = vsel %vm2283, %v3676, %v3592
        %v3709 = vsel %vm2283, %v3677, %v3594
        %v3710 = vsel %vm2283, %v3678, %v3596
        %v3711 = vsel %vm2283, %v3679, %v3598
        %v3712 = vsel %vm2283, %v3680, %v3600
        %v3713 = vsel %vm2283, %v3681, %v3602
        %v3714 = vsel %vm2283, %v3682, %v3604
        %v3715 = vsel %vm2283, %v3683, %v3606
        %v3716 = vsel %vm2283, %v3684, %v3608
        %v3717 = vsel %vm2283, %v3685, %v3610
        %v3718 = vsel %vm2283, %v3686, %v3612
        %v3719 = vsel %vm2283, %v3687, %v3614
        %v3720 = vsel %vm2283, %v3688, %v3616
        %v3721 = vsel %vm2283, %v3689, %v3618
        %v3722 = vsel %vm2283, %v3690, %v3620
        %v3723 = vsel %vm2283, %v3691, %v3622
        %v3724 = vsel %vm2283, %v3692, %v3624
        %v3725 = vsel %vm2283, %v3693, %v3626
        %v3726 = vsel %vm2283, %v3694, %v3628
        %v3727 = vsel %vm2283, %v3695, %v3630
        %v3728 = vsel %vm2283, %v3696, %v3632
        %v3729 = vpack.c.bf16 %v3698, %v3697
        %v3730 = vpack.c.bf16 %v3700, %v3699
        %v3731 = vpack.c.bf16 %v3702, %v3701
        %v3732 = vpack.c.bf16 %v3704, %v3703
        %v3733 = vpack.c.bf16 %v3706, %v3705
        %v3734 = vpack.c.bf16 %v3708, %v3707
        %v3735 = vpack.c.bf16 %v3710, %v3709
        %v3736 = vpack.c.bf16 %v3712, %v3711
        %v3737 = vpack.c.bf16 %v3714, %v3713
        %v3738 = vpack.c.bf16 %v3716, %v3715
        %v3739 = vpack.c.bf16 %v3718, %v3717
        %v3740 = vpack.c.bf16 %v3720, %v3719
        %v3741 = vpack.c.bf16 %v3722, %v3721
        %v3742 = vpack.c.bf16 %v3724, %v3723
        %v3743 = vpack.c.bf16 %v3726, %v3725
        %v3744 = vpack.c.bf16 %v3728, %v3727
        %v3748 = vrot.slane %v3220, 1
        %v3749 = vrot.slane %v3221, 1
        %v3750 = vsel %vm564, %v3748, %v3749
        %v3751 = vrot.slane %v3222, 1
        %v3752 = vsel %vm564, %v3749, %v3751
        %3753 = vrot.lane.b32.xlu0 %v3750, 32
        %v3754 = vpop.permute.xlu0 %3753
        %3755 = vrot.lane.b32.xlu0 %v3752, 32
        %v3756 = vpop.permute.xlu0 %3755
        %v3759 = vrot.slane %v3220, 2
        %v3760 = vrot.slane %v3221, 2
        %v3761 = vsel %vm741, %v3759, %v3760
        %v3762 = vrot.slane %v3222, 2
        %v3763 = vsel %vm741, %v3760, %v3762
        %3764 = vrot.lane.b32.xlu0 %v3761, 64
        %v3765 = vpop.permute.xlu0 %3764
        %3766 = vrot.lane.b32.xlu0 %v3763, 64
        %v3767 = vpop.permute.xlu0 %3766
        %v3770 = vsel %vm334, %v3220, %v3754
        %v3771 = vsel %vm334, %v3221, %v3756
        %v3772 = vsel %vm2283, %v3770, %v3765
        %v3773 = vsel %vm2283, %v3771, %v3767
        %v3774 = vpack.c.bf16 %v3773, %v3772
        %v3787 = vunpack.c.l.b16 %v3239
        %v3788 = vunpack.c.l.b16 %v3240
        %v3789 = vunpack.c.l.b16 %v3241
        %v3790 = vunpack.c.l.b16 %v3242
        %v3791 = vunpack.c.l.b16 %v3243
        %v3792 = vunpack.c.l.b16 %v3244
        %v3793 = vunpack.c.l.b16 %v3245
        %v3794 = vunpack.c.l.b16 %v3246
        %v3795 = vunpack.c.l.b16 %v3247
        %v3796 = vunpack.c.l.b16 %v3248
        %v3797 = vunpack.c.l.b16 %v3249
        %v3798 = vunpack.c.l.b16 %v3250
        %v3799 = vpack.c.b16 %v3788, %v3787
        %v3800 = vpack.c.b16 %v3790, %v3789
        %v3801 = vpack.c.b16 %v3792, %v3791
        %v3802 = vpack.c.b16 %v3794, %v3793
        %v3803 = vpack.c.b16 %v3796, %v3795
        %v3804 = vpack.c.b16 %v3798, %v3797
        %v3812 = vsel %vm2398, %v3730, 0
        %v3815 = vsel %vm2398, %v3731, 0
        %v3818 = vsel %vm2398, %v3732, 0
        %v3821 = vsel %vm2398, %v3733, 0
        %v3824 = vsel %vm2398, %v3734, 0
        %v3827 = vsel %vm2398, %v3735, 0
        %v3830 = vsel %vm2398, %v3736, 0
        %v3833 = vsel %vm2398, %v3737, 0
        %v3836 = vsel %vm2398, %v3738, 0
        %v3839 = vsel %vm2398, %v3739, 0
        %v3842 = vsel %vm2398, %v3740, 0
        %v3845 = vsel %vm2398, %v3741, 0
        %v3848 = vsel %vm2398, %v3742, 0
        %v3851 = vsel %vm2398, %v3743, 0
        %v3854 = vsel %vm2398, %v3744, 0
        %v3857 = vsel %vm2398, %v3774, 0
        %3859 = vmatprep.subr.bf16.mxu0 0
        %3860 = vmatpush1.bf16.msra.mxu0 %v3799
        %3861 = vmatprep.subr.bf16.mxu0 0
        %3862 = vmatpush1.bf16.msra.mxu0 %v3800
        %3863 = vmatprep.subr.bf16.mxu0 0
        %3864 = vmatpush1.bf16.msra.mxu0 %v3801
        %3865 = vmatprep.subr.bf16.mxu0 0
        %3866 = vmatpush1.bf16.msra.mxu0 %v3802
        %3867 = vmatprep.subr.bf16.mxu0 0
        %3868 = vmatpush1.bf16.msra.mxu0 %v3803
        %3869 = vmatprep.subr.bf16.mxu0 0
        %3870 = vmatpush1.bf16.msra.mxu0 %v3804
        %3871 = vmatprep.subr.bf16.mxu0 0
        %3872 = vmatpush1.bf16.msra.mxu0 0
        %3873 = vmatprep.subr.bf16.mxu0 0
        %3874 = vmatpush1.bf16.msra.mxu0 0
        %3875 = vmatprep.subr.bf16.mxu0 0
        %3876 = vmatpush1.bf16.msra.mxu0 0
        %3877 = vmatprep.subr.bf16.mxu0 0
        %3878 = vmatpush1.bf16.msra.mxu0 0
        %3879 = vmatprep.subr.bf16.mxu0 0
        %3880 = vmatpush1.bf16.msra.mxu0 0
        %3881 = vmatprep.subr.bf16.mxu0 0
        %3882 = vmatpush1.bf16.msra.mxu0 0
        %3883 = vmatprep.subr.bf16.mxu0 0
        %3884 = vmatpush1.bf16.msra.mxu0 0
        %3885 = vmatprep.subr.bf16.mxu0 0
        %3886 = vmatpush1.bf16.msra.mxu0 0
        %3887 = vmatprep.subr.bf16.mxu0 0
        %3888 = vmatpush1.bf16.msra.mxu0 0
        %3889 = vmatprep.subr.bf16.mxu0 0
        %3890 = vmatpush1.bf16.msra.mxu0 0
        %3891 = vmatprep.mubr.bf16.mxu0 0
        %3892 = vmatmul.mubr.bf16.gmra.mrb[0].mxu0 %v3812
        %v3893 = vpop.f32.mrb[0].mxu0
        %v3894 = vadd.f32 0.0, %v3893
        %v3895 = vpop.f32.mrb[0].mxu0
        %v3896 = vpop.f32.mrb[0].mxu0
        %v3897 = vadd.f32 0.0, %v3896
        %v3898 = vpop.f32.mrb[0].mxu0
        %3899 = vmatprep.mubr.bf16.mxu0 0
        %3900 = vmatmul.mubr.bf16.gmra.mrb[0].mxu0 %v3815
        %v3901 = vpop.f32.mrb[0].mxu0
        %v3902 = vadd.f32 0.0, %v3901
        %v3903 = vpop.f32.mrb[0].mxu0
        %v3904 = vpop.f32.mrb[0].mxu0
        %v3905 = vadd.f32 0.0, %v3904
        %v3906 = vpop.f32.mrb[0].mxu0
        %3907 = vmatprep.mubr.bf16.mxu0 0
        %3908 = vmatmul.mubr.bf16.gmra.mrb[0].mxu0 %v3818
        %v3909 = vpop.f32.mrb[0].mxu0
        %v3910 = vadd.f32 0.0, %v3909
        %v3911 = vpop.f32.mrb[0].mxu0
        %v3912 = vpop.f32.mrb[0].mxu0
        %v3913 = vadd.f32 0.0, %v3912
        %v3914 = vpop.f32.mrb[0].mxu0
        %3915 = vmatprep.mubr.bf16.mxu0 0
        %3916 = vmatmul.mubr.bf16.gmra.mrb[0].mxu0 %v3821
        %v3917 = vpop.f32.mrb[0].mxu0
        %v3918 = vadd.f32 0.0, %v3917
        %v3919 = vpop.f32.mrb[0].mxu0
        %v3920 = vpop.f32.mrb[0].mxu0
        %v3921 = vadd.f32 0.0, %v3920
        %v3922 = vpop.f32.mrb[0].mxu0
        %3923 = vmatprep.mubr.bf16.mxu0 0
        %3924 = vmatmul.mubr.bf16.gmra.mrb[0].mxu0 %v3824
        %v3925 = vpop.f32.mrb[0].mxu0
        %v3926 = vadd.f32 0.0, %v3925
        %v3927 = vpop.f32.mrb[0].mxu0
        %v3928 = vpop.f32.mrb[0].mxu0
        %v3929 = vadd.f32 0.0, %v3928
        %v3930 = vpop.f32.mrb[0].mxu0
        %3931 = vmatprep.mubr.bf16.mxu0 0
        %3932 = vmatmul.mubr.bf16.gmra.mrb[0].mxu0 %v3827
        %v3933 = vpop.f32.mrb[0].mxu0
        %v3934 = vadd.f32 0.0, %v3933
        %v3935 = vpop.f32.mrb[0].mxu0
        %v3936 = vpop.f32.mrb[0].mxu0
        %v3937 = vadd.f32 0.0, %v3936
        %v3938 = vpop.f32.mrb[0].mxu0
        %3939 = vmatprep.mubr.bf16.mxu0 0
        %3940 = vmatmul.mubr.bf16.gmra.mrb[0].mxu0 %v3830
        %v3941 = vpop.f32.mrb[0].mxu0
        %v3942 = vadd.f32 0.0, %v3941
        %v3943 = vpop.f32.mrb[0].mxu0
        %v3944 = vpop.f32.mrb[0].mxu0
        %v3945 = vadd.f32 0.0, %v3944
        %v3946 = vpop.f32.mrb[0].mxu0
        %3947 = vmatprep.mubr.bf16.mxu0 0
        %3948 = vmatmul.mubr.bf16.gmra.mrb[0].mxu0 %v3833
        %v3949 = vpop.f32.mrb[0].mxu0
        %v3950 = vadd.f32 0.0, %v3949
        %v3951 = vpop.f32.mrb[0].mxu0
        %v3952 = vpop.f32.mrb[0].mxu0
        %v3953 = vadd.f32 0.0, %v3952
        %v3954 = vpop.f32.mrb[0].mxu0
        %3955 = vmatprep.mubr.bf16.mxu0 0
        %3956 = vmatmul.mubr.bf16.gmra.mrb[0].mxu0 %v3836
        %v3957 = vpop.f32.mrb[0].mxu0
        %v3958 = vadd.f32 0.0, %v3957
        %v3959 = vpop.f32.mrb[0].mxu0
        %v3960 = vpop.f32.mrb[0].mxu0
        %v3961 = vadd.f32 0.0, %v3960
        %v3962 = vpop.f32.mrb[0].mxu0
        %3963 = vmatprep.mubr.bf16.mxu0 0
        %3964 = vmatmul.mubr.bf16.gmra.mrb[0].mxu0 %v3839
        %v3965 = vpop.f32.mrb[0].mxu0
        %v3966 = vadd.f32 0.0, %v3965
        %v3967 = vpop.f32.mrb[0].mxu0
        %v3968 = vpop.f32.mrb[0].mxu0
        %v3969 = vadd.f32 0.0, %v3968
        %v3970 = vpop.f32.mrb[0].mxu0
        %3971 = vmatprep.mubr.bf16.mxu0 0
        %3972 = vmatmul.mubr.bf16.gmra.mrb[0].mxu0 %v3842
        %v3973 = vpop.f32.mrb[0].mxu0
        %v3974 = vadd.f32 0.0, %v3973
        %v3975 = vpop.f32.mrb[0].mxu0
        %v3976 = vpop.f32.mrb[0].mxu0
        %v3977 = vadd.f32 0.0, %v3976
        %v3978 = vpop.f32.mrb[0].mxu0
        %3979 = vmatprep.mubr.bf16.mxu0 0
        %3980 = vmatmul.mubr.bf16.gmra.mrb[0].mxu0 %v3845
        %v3981 = vpop.f32.mrb[0].mxu0
        %v3982 = vadd.f32 0.0, %v3981
        %v3983 = vpop.f32.mrb[0].mxu0
        %v3984 = vpop.f32.mrb[0].mxu0
        %v3985 = vadd.f32 0.0, %v3984
        %v3986 = vpop.f32.mrb[0].mxu0
        %3987 = vmatprep.mubr.bf16.mxu0 0
        %3988 = vmatmul.mubr.bf16.gmra.mrb[0].mxu0 %v3848
        %v3989 = vpop.f32.mrb[0].mxu0
        %v3990 = vadd.f32 0.0, %v3989
        %v3991 = vpop.f32.mrb[0].mxu0
        %v3992 = vpop.f32.mrb[0].mxu0
        %v3993 = vadd.f32 0.0, %v3992
        %v3994 = vpop.f32.mrb[0].mxu0
        %3995 = vmatprep.mubr.bf16.mxu0 0
        %3996 = vmatmul.mubr.bf16.gmra.mrb[0].mxu0 %v3851
        %v3997 = vpop.f32.mrb[0].mxu0
        %v3998 = vadd.f32 0.0, %v3997
        %v3999 = vpop.f32.mrb[0].mxu0
        %v4000 = vpop.f32.mrb[0].mxu0
        %v4001 = vadd.f32 0.0, %v4000
        %v4002 = vpop.f32.mrb[0].mxu0
        %4003 = vmatprep.mubr.bf16.mxu0 0
        %4004 = vmatmul.mubr.bf16.gmra.mrb[0].mxu0 %v3854
        %v4005 = vpop.f32.mrb[0].mxu0
        %v4006 = vadd.f32 0.0, %v4005
        %v4007 = vpop.f32.mrb[0].mxu0
        %v4008 = vpop.f32.mrb[0].mxu0
        %v4009 = vadd.f32 0.0, %v4008
        %v4010 = vpop.f32.mrb[0].mxu0
        %4011 = vmatprep.mubr.bf16.mxu0 0
        %4012 = vmatmul.mubr.bf16.gmra.mrb[0].mxu0 %v3857
        %v4013 = vpop.f32.mrb[0].mxu0
        %v4014 = vadd.f32 0.0, %v4013
        %v4015 = vpop.f32.mrb[0].mxu0
        %v4016 = vpop.f32.mrb[0].mxu0
        %v4017 = vadd.f32 0.0, %v4016
        %v4018 = vpop.f32.mrb[0].mxu0
        %4019 = vdwg.mxu0
        %v4032 = vunpack.c.l.b16 %v3227
        %v4033 = vunpack.c.l.b16 %v3228
        %v4034 = vunpack.c.l.b16 %v3229
        %v4035 = vunpack.c.l.b16 %v3230
        %v4036 = vunpack.c.l.b16 %v3231
        %v4037 = vunpack.c.l.b16 %v3232
        %v4038 = vunpack.c.l.b16 %v3233
        %v4039 = vunpack.c.l.b16 %v3234
        %v4040 = vunpack.c.l.b16 %v3235
        %v4041 = vunpack.c.l.b16 %v3236
        %v4042 = vunpack.c.l.b16 %v3237
        %v4043 = vunpack.c.l.b16 %v3238
        %v4044 = vpack.c.b16 %v4033, %v4032
        %v4045 = vpack.c.b16 %v4035, %v4034
        %v4046 = vpack.c.b16 %v4037, %v4036
        %v4047 = vpack.c.b16 %v4039, %v4038
        %v4048 = vpack.c.b16 %v4041, %v4040
        %v4049 = vpack.c.b16 %v4043, %v4042
        %v4057 = vsel %vm2398, %v3729, 0
        %4059 = vmatprep.subr.bf16.mxu0 0
        %4060 = vmatpush1.bf16.msra.mxu0 %v4044
        %4061 = vmatprep.subr.bf16.mxu0 0
        %4062 = vmatpush1.bf16.msra.mxu0 %v4045
        %4063 = vmatprep.subr.bf16.mxu0 0
        %4064 = vmatpush1.bf16.msra.mxu0 %v4046
        %4065 = vmatprep.subr.bf16.mxu0 0
        %4066 = vmatpush1.bf16.msra.mxu0 %v4047
        %4067 = vmatprep.subr.bf16.mxu0 0
        %4068 = vmatpush1.bf16.msra.mxu0 %v4048
        %4069 = vmatprep.subr.bf16.mxu0 0
        %4070 = vmatpush1.bf16.msra.mxu0 %v4049
        %4071 = vmatprep.subr.bf16.mxu0 0
        %4072 = vmatpush1.bf16.msra.mxu0 0
        %4073 = vmatprep.subr.bf16.mxu0 0
        %4074 = vmatpush1.bf16.msra.mxu0 0
        %4075 = vmatprep.subr.bf16.mxu0 0
        %4076 = vmatpush1.bf16.msra.mxu0 0
        %4077 = vmatprep.subr.bf16.mxu0 0
        %4078 = vmatpush1.bf16.msra.mxu0 0
        %4079 = vmatprep.subr.bf16.mxu0 0
        %4080 = vmatpush1.bf16.msra.mxu0 0
        %4081 = vmatprep.subr.bf16.mxu0 0
        %4082 = vmatpush1.bf16.msra.mxu0 0
        %4083 = vmatprep.subr.bf16.mxu0 0
        %4084 = vmatpush1.bf16.msra.mxu0 0
        %4085 = vmatprep.subr.bf16.mxu0 0
        %4086 = vmatpush1.bf16.msra.mxu0 0
        %4087 = vmatprep.subr.bf16.mxu0 0
        %4088 = vmatpush1.bf16.msra.mxu0 0
        %4089 = vmatprep.subr.bf16.mxu0 0
        %4090 = vmatpush1.bf16.msra.mxu0 0
        %4091 = vmatprep.mubr.bf16.mxu0 0
        %4092 = vmatmul.mubr.bf16.gmra.mrb[0].mxu0 %v4057
        %v4093 = vpop.f32.mrb[0].mxu0
        %v4094 = vadd.f32 %v3894, %v4093
        %v4095 = vpop.f32.mrb[0].mxu0
        %v4096 = vpop.f32.mrb[0].mxu0
        %v4097 = vadd.f32 %v3897, %v4096
        %v4098 = vpop.f32.mrb[0].mxu0
        %4099 = vmatprep.mubr.bf16.mxu0 0
        %4100 = vmatmul.mubr.bf16.gmra.mrb[0].mxu0 %v3812
        %v4101 = vpop.f32.mrb[0].mxu0
        %v4102 = vadd.f32 %v3902, %v4101
        %v4103 = vpop.f32.mrb[0].mxu0
        %v4104 = vpop.f32.mrb[0].mxu0
        %v4105 = vadd.f32 %v3905, %v4104
        %v4106 = vpop.f32.mrb[0].mxu0
        %4107 = vmatprep.mubr.bf16.mxu0 0
        %4108 = vmatmul.mubr.bf16.gmra.mrb[0].mxu0 %v3815
        %v4109 = vpop.f32.mrb[0].mxu0
        %v4110 = vadd.f32 %v3910, %v4109
        %v4111 = vpop.f32.mrb[0].mxu0
        %v4112 = vpop.f32.mrb[0].mxu0
        %v4113 = vadd.f32 %v3913, %v4112
        %v4114 = vpop.f32.mrb[0].mxu0
        %4115 = vmatprep.mubr.bf16.mxu0 0
        %4116 = vmatmul.mubr.bf16.gmra.mrb[0].mxu0 %v3818
        %v4117 = vpop.f32.mrb[0].mxu0
        %v4118 = vadd.f32 %v3918, %v4117
        %v4119 = vpop.f32.mrb[0].mxu0
        %v4120 = vpop.f32.mrb[0].mxu0
        %v4121 = vadd.f32 %v3921, %v4120
        %v4122 = vpop.f32.mrb[0].mxu0
        %4123 = vmatprep.mubr.bf16.mxu0 0
        %4124 = vmatmul.mubr.bf16.gmra.mrb[0].mxu0 %v3821
        %v4125 = vpop.f32.mrb[0].mxu0
        %v4126 = vadd.f32 %v3926, %v4125
        %v4127 = vpop.f32.mrb[0].mxu0
        %v4128 = vpop.f32.mrb[0].mxu0
        %v4129 = vadd.f32 %v3929, %v4128
        %v4130 = vpop.f32.mrb[0].mxu0
        %4131 = vmatprep.mubr.bf16.mxu0 0
        %4132 = vmatmul.mubr.bf16.gmra.mrb[0].mxu0 %v3824
        %v4133 = vpop.f32.mrb[0].mxu0
        %v4134 = vadd.f32 %v3934, %v4133
        %v4135 = vpop.f32.mrb[0].mxu0
        %v4136 = vpop.f32.mrb[0].mxu0
        %v4137 = vadd.f32 %v3937, %v4136
        %v4138 = vpop.f32.mrb[0].mxu0
        %4139 = vmatprep.mubr.bf16.mxu0 0
        %4140 = vmatmul.mubr.bf16.gmra.mrb[0].mxu0 %v3827
        %v4141 = vpop.f32.mrb[0].mxu0
        %v4142 = vadd.f32 %v3942, %v4141
        %v4143 = vpop.f32.mrb[0].mxu0
        %v4144 = vpop.f32.mrb[0].mxu0
        %v4145 = vadd.f32 %v3945, %v4144
        %v4146 = vpop.f32.mrb[0].mxu0
        %4147 = vmatprep.mubr.bf16.mxu0 0
        %4148 = vmatmul.mubr.bf16.gmra.mrb[0].mxu0 %v3830
        %v4149 = vpop.f32.mrb[0].mxu0
        %v4150 = vadd.f32 %v3950, %v4149
        %v4151 = vpop.f32.mrb[0].mxu0
        %v4152 = vpop.f32.mrb[0].mxu0
        %v4153 = vadd.f32 %v3953, %v4152
        %v4154 = vpop.f32.mrb[0].mxu0
        %4155 = vmatprep.mubr.bf16.mxu0 0
        %4156 = vmatmul.mubr.bf16.gmra.mrb[0].mxu0 %v3833
        %v4157 = vpop.f32.mrb[0].mxu0
        %v4158 = vadd.f32 %v3958, %v4157
        %v4159 = vpop.f32.mrb[0].mxu0
        %v4160 = vpop.f32.mrb[0].mxu0
        %v4161 = vadd.f32 %v3961, %v4160
        %v4162 = vpop.f32.mrb[0].mxu0
        %4163 = vmatprep.mubr.bf16.mxu0 0
        %4164 = vmatmul.mubr.bf16.gmra.mrb[0].mxu0 %v3836
        %v4165 = vpop.f32.mrb[0].mxu0
        %v4166 = vadd.f32 %v3966, %v4165
        %v4167 = vpop.f32.mrb[0].mxu0
        %v4168 = vpop.f32.mrb[0].mxu0
        %v4169 = vadd.f32 %v3969, %v4168
        %v4170 = vpop.f32.mrb[0].mxu0
        %4171 = vmatprep.mubr.bf16.mxu0 0
        %4172 = vmatmul.mubr.bf16.gmra.mrb[0].mxu0 %v3839
        %v4173 = vpop.f32.mrb[0].mxu0
        %v4174 = vadd.f32 %v3974, %v4173
        %v4175 = vpop.f32.mrb[0].mxu0
        %v4176 = vpop.f32.mrb[0].mxu0
        %v4177 = vadd.f32 %v3977, %v4176
        %v4178 = vpop.f32.mrb[0].mxu0
        %4179 = vmatprep.mubr.bf16.mxu0 0
        %4180 = vmatmul.mubr.bf16.gmra.mrb[0].mxu0 %v3842
        %v4181 = vpop.f32.mrb[0].mxu0
        %v4182 = vadd.f32 %v3982, %v4181
        %v4183 = vpop.f32.mrb[0].mxu0
        %v4184 = vpop.f32.mrb[0].mxu0
        %v4185 = vadd.f32 %v3985, %v4184
        %v4186 = vpop.f32.mrb[0].mxu0
        %4187 = vmatprep.mubr.bf16.mxu0 0
        %4188 = vmatmul.mubr.bf16.gmra.mrb[0].mxu0 %v3845
        %v4189 = vpop.f32.mrb[0].mxu0
        %v4190 = vadd.f32 %v3990, %v4189
        %v4191 = vpop.f32.mrb[0].mxu0
        %v4192 = vpop.f32.mrb[0].mxu0
        %v4193 = vadd.f32 %v3993, %v4192
        %v4194 = vpop.f32.mrb[0].mxu0
        %4195 = vmatprep.mubr.bf16.mxu0 0
        %4196 = vmatmul.mubr.bf16.gmra.mrb[0].mxu0 %v3848
        %v4197 = vpop.f32.mrb[0].mxu0
        %v4198 = vadd.f32 %v3998, %v4197
        %v4199 = vpop.f32.mrb[0].mxu0
        %v4200 = vpop.f32.mrb[0].mxu0
        %v4201 = vadd.f32 %v4001, %v4200
        %v4202 = vpop.f32.mrb[0].mxu0
        %4203 = vmatprep.mubr.bf16.mxu0 0
        %4204 = vmatmul.mubr.bf16.gmra.mrb[0].mxu0 %v3851
        %v4205 = vpop.f32.mrb[0].mxu0
        %v4206 = vadd.f32 %v4006, %v4205
        %v4207 = vpop.f32.mrb[0].mxu0
        %v4208 = vpop.f32.mrb[0].mxu0
        %v4209 = vadd.f32 %v4009, %v4208
        %v4210 = vpop.f32.mrb[0].mxu0
        %4211 = vmatprep.mubr.bf16.mxu0 0
        %4212 = vmatmul.mubr.bf16.gmra.mrb[0].mxu0 %v3854
        %v4213 = vpop.f32.mrb[0].mxu0
        %v4214 = vadd.f32 %v4014, %v4213
        %v4215 = vpop.f32.mrb[0].mxu0
        %v4216 = vpop.f32.mrb[0].mxu0
        %v4217 = vadd.f32 %v4017, %v4216
        %v4218 = vpop.f32.mrb[0].mxu0
        %4219 = vdwg.mxu0
        %v4223 = vrot.slane %v3223, 1
        %v4224 = vrot.slane %v3224, 1
        %v4225 = vsel %vm564, %v4223, %v4224
        %v4226 = vrot.slane %v3225, 1
        %v4227 = vsel %vm564, %v4224, %v4226
        %4228 = vrot.lane.b32.xlu0 %v4225, 32
        %v4229 = vpop.permute.xlu0 %4228
        %4230 = vrot.lane.b32.xlu0 %v4227, 32
        %v4231 = vpop.permute.xlu0 %4230
        %v4234 = vrot.slane %v3223, 2
        %v4235 = vrot.slane %v3224, 2
        %v4236 = vsel %vm741, %v4234, %v4235
        %v4237 = vrot.slane %v3225, 2
        %v4238 = vsel %vm741, %v4235, %v4237
        %4239 = vrot.lane.b32.xlu0 %v4236, 64
        %v4240 = vpop.permute.xlu0 %4239
        %4241 = vrot.lane.b32.xlu0 %v4238, 64
        %v4242 = vpop.permute.xlu0 %4241
        %v4245 = vsel %vm334, %v3223, %v4229
        %v4246 = vsel %vm334, %v3224, %v4231
        %v4247 = vsel %vm2283, %v4245, %v4240
        %v4248 = vsel %vm2283, %v4246, %v4242
        %v4249 = vpack.c.bf16 %v4248, %v4247
        %v4262 = vunpack.c.l.b16 %v3251
        %v4263 = vunpack.c.l.b16 %v3252
        %v4264 = vunpack.c.l.b16 %v3253
        %v4265 = vunpack.c.l.b16 %v3254
        %v4266 = vunpack.c.l.b16 %v3255
        %v4267 = vunpack.c.l.b16 %v3256
        %v4268 = vunpack.c.l.b16 %v3257
        %v4269 = vunpack.c.l.b16 %v3258
        %v4270 = vunpack.c.l.b16 %v3259
        %v4271 = vunpack.c.l.b16 %v3260
        %v4272 = vunpack.c.l.b16 %v3261
        %v4273 = vunpack.c.l.b16 %v3262
        %v4274 = vpack.c.b16 %v4263, %v4262
        %v4275 = vpack.c.b16 %v4265, %v4264
        %v4276 = vpack.c.b16 %v4267, %v4266
        %v4277 = vpack.c.b16 %v4269, %v4268
        %v4278 = vpack.c.b16 %v4271, %v4270
        %v4279 = vpack.c.b16 %v4273, %v4272
        %v4287 = vsel %vm2398, %v4249, 0
        %4289 = vmatprep.subr.bf16.mxu0 0
        %4290 = vmatpush1.bf16.msra.mxu0 %v4274
        %4291 = vmatprep.subr.bf16.mxu0 0
        %4292 = vmatpush1.bf16.msra.mxu0 %v4275
        %4293 = vmatprep.subr.bf16.mxu0 0
        %4294 = vmatpush1.bf16.msra.mxu0 %v4276
        %4295 = vmatprep.subr.bf16.mxu0 0
        %4296 = vmatpush1.bf16.msra.mxu0 %v4277
        %4297 = vmatprep.subr.bf16.mxu0 0
        %4298 = vmatpush1.bf16.msra.mxu0 %v4278
        %4299 = vmatprep.subr.bf16.mxu0 0
        %4300 = vmatpush1.bf16.msra.mxu0 %v4279
        %4301 = vmatprep.subr.bf16.mxu0 0
        %4302 = vmatpush1.bf16.msra.mxu0 0
        %4303 = vmatprep.subr.bf16.mxu0 0
        %4304 = vmatpush1.bf16.msra.mxu0 0
        %4305 = vmatprep.subr.bf16.mxu0 0
        %4306 = vmatpush1.bf16.msra.mxu0 0
        %4307 = vmatprep.subr.bf16.mxu0 0
        %4308 = vmatpush1.bf16.msra.mxu0 0
        %4309 = vmatprep.subr.bf16.mxu0 0
        %4310 = vmatpush1.bf16.msra.mxu0 0
        %4311 = vmatprep.subr.bf16.mxu0 0
        %4312 = vmatpush1.bf16.msra.mxu0 0
        %4313 = vmatprep.subr.bf16.mxu0 0
        %4314 = vmatpush1.bf16.msra.mxu0 0
        %4315 = vmatprep.subr.bf16.mxu0 0
        %4316 = vmatpush1.bf16.msra.mxu0 0
        %4317 = vmatprep.subr.bf16.mxu0 0
        %4318 = vmatpush1.bf16.msra.mxu0 0
        %4319 = vmatprep.subr.bf16.mxu0 0
        %4320 = vmatpush1.bf16.msra.mxu0 0
        %4321 = vmatprep.mubr.bf16.mxu0 0
        %4322 = vmatmul.mubr.bf16.gmra.mrb[0].mxu0 %v3815
        %v4323 = vpop.f32.mrb[0].mxu0
        %v4324 = vadd.f32 0.0, %v4323
        %v4325 = vpop.f32.mrb[0].mxu0
        %v4326 = vpop.f32.mrb[0].mxu0
        %v4327 = vadd.f32 0.0, %v4326
        %v4328 = vpop.f32.mrb[0].mxu0
        %4329 = vmatprep.mubr.bf16.mxu0 0
        %4330 = vmatmul.mubr.bf16.gmra.mrb[0].mxu0 %v3818
        %v4331 = vpop.f32.mrb[0].mxu0
        %v4332 = vadd.f32 0.0, %v4331
        %v4333 = vpop.f32.mrb[0].mxu0
        %v4334 = vpop.f32.mrb[0].mxu0
        %v4335 = vadd.f32 0.0, %v4334
        %v4336 = vpop.f32.mrb[0].mxu0
        %4337 = vmatprep.mubr.bf16.mxu0 0
        %4338 = vmatmul.mubr.bf16.gmra.mrb[0].mxu0 %v3821
        %v4339 = vpop.f32.mrb[0].mxu0
        %v4340 = vadd.f32 0.0, %v4339
        %v4341 = vpop.f32.mrb[0].mxu0
        %v4342 = vpop.f32.mrb[0].mxu0
        %v4343 = vadd.f32 0.0, %v4342
        %v4344 = vpop.f32.mrb[0].mxu0
        %4345 = vmatprep.mubr.bf16.mxu0 0
        %4346 = vmatmul.mubr.bf16.gmra.mrb[0].mxu0 %v3824
        %v4347 = vpop.f32.mrb[0].mxu0
        %v4348 = vadd.f32 0.0, %v4347
        %v4349 = vpop.f32.mrb[0].mxu0
        %v4350 = vpop.f32.mrb[0].mxu0
        %v4351 = vadd.f32 0.0, %v4350
        %v4352 = vpop.f32.mrb[0].mxu0
        %4353 = vmatprep.mubr.bf16.mxu0 0
        %4354 = vmatmul.mubr.bf16.gmra.mrb[0].mxu0 %v3827
        %v4355 = vpop.f32.mrb[0].mxu0
        %v4356 = vadd.f32 0.0, %v4355
        %v4357 = vpop.f32.mrb[0].mxu0
        %v4358 = vpop.f32.mrb[0].mxu0
        %v4359 = vadd.f32 0.0, %v4358
        %v4360 = vpop.f32.mrb[0].mxu0
        %4361 = vmatprep.mubr.bf16.mxu0 0
        %4362 = vmatmul.mubr.bf16.gmra.mrb[0].mxu0 %v3830
        %v4363 = vpop.f32.mrb[0].mxu0
        %v4364 = vadd.f32 0.0, %v4363
        %v4365 = vpop.f32.mrb[0].mxu0
        %v4366 = vpop.f32.mrb[0].mxu0
        %v4367 = vadd.f32 0.0, %v4366
        %v4368 = vpop.f32.mrb[0].mxu0
        %4369 = vmatprep.mubr.bf16.mxu0 0
        %4370 = vmatmul.mubr.bf16.gmra.mrb[0].mxu0 %v3833
        %v4371 = vpop.f32.mrb[0].mxu0
        %v4372 = vadd.f32 0.0, %v4371
        %v4373 = vpop.f32.mrb[0].mxu0
        %v4374 = vpop.f32.mrb[0].mxu0
        %v4375 = vadd.f32 0.0, %v4374
        %v4376 = vpop.f32.mrb[0].mxu0
        %4377 = vmatprep.mubr.bf16.mxu0 0
        %4378 = vmatmul.mubr.bf16.gmra.mrb[0].mxu0 %v3836
        %v4379 = vpop.f32.mrb[0].mxu0
        %v4380 = vadd.f32 0.0, %v4379
        %v4381 = vpop.f32.mrb[0].mxu0
        %v4382 = vpop.f32.mrb[0].mxu0
        %v4383 = vadd.f32 0.0, %v4382
        %v4384 = vpop.f32.mrb[0].mxu0
        %4385 = vmatprep.mubr.bf16.mxu0 0
        %4386 = vmatmul.mubr.bf16.gmra.mrb[0].mxu0 %v3839
        %v4387 = vpop.f32.mrb[0].mxu0
        %v4388 = vadd.f32 0.0, %v4387
        %v4389 = vpop.f32.mrb[0].mxu0
        %v4390 = vpop.f32.mrb[0].mxu0
        %v4391 = vadd.f32 0.0, %v4390
        %v4392 = vpop.f32.mrb[0].mxu0
        %4393 = vmatprep.mubr.bf16.mxu0 0
        %4394 = vmatmul.mubr.bf16.gmra.mrb[0].mxu0 %v3842
        %v4395 = vpop.f32.mrb[0].mxu0
        %v4396 = vadd.f32 0.0, %v4395
        %v4397 = vpop.f32.mrb[0].mxu0
        %v4398 = vpop.f32.mrb[0].mxu0
        %v4399 = vadd.f32 0.0, %v4398
        %v4400 = vpop.f32.mrb[0].mxu0
        %4401 = vmatprep.mubr.bf16.mxu0 0
        %4402 = vmatmul.mubr.bf16.gmra.mrb[0].mxu0 %v3845
        %v4403 = vpop.f32.mrb[0].mxu0
        %v4404 = vadd.f32 0.0, %v4403
        %v4405 = vpop.f32.mrb[0].mxu0
        %v4406 = vpop.f32.mrb[0].mxu0
        %v4407 = vadd.f32 0.0, %v4406
        %v4408 = vpop.f32.mrb[0].mxu0
        %4409 = vmatprep.mubr.bf16.mxu0 0
        %4410 = vmatmul.mubr.bf16.gmra.mrb[0].mxu0 %v3848
        %v4411 = vpop.f32.mrb[0].mxu0
        %v4412 = vadd.f32 0.0, %v4411
        %v4413 = vpop.f32.mrb[0].mxu0
        %v4414 = vpop.f32.mrb[0].mxu0
        %v4415 = vadd.f32 0.0, %v4414
        %v4416 = vpop.f32.mrb[0].mxu0
        %4417 = vmatprep.mubr.bf16.mxu0 0
        %4418 = vmatmul.mubr.bf16.gmra.mrb[0].mxu0 %v3851
        %v4419 = vpop.f32.mrb[0].mxu0
        %v4420 = vadd.f32 0.0, %v4419
        %v4421 = vpop.f32.mrb[0].mxu0
        %v4422 = vpop.f32.mrb[0].mxu0
        %v4423 = vadd.f32 0.0, %v4422
        %v4424 = vpop.f32.mrb[0].mxu0
        %4425 = vmatprep.mubr.bf16.mxu0 0
        %4426 = vmatmul.mubr.bf16.gmra.mrb[0].mxu0 %v3854
        %v4427 = vpop.f32.mrb[0].mxu0
        %v4428 = vadd.f32 0.0, %v4427
        %v4429 = vpop.f32.mrb[0].mxu0
        %v4430 = vpop.f32.mrb[0].mxu0
        %v4431 = vadd.f32 0.0, %v4430
        %v4432 = vpop.f32.mrb[0].mxu0
        %4433 = vmatprep.mubr.bf16.mxu0 0
        %4434 = vmatmul.mubr.bf16.gmra.mrb[0].mxu0 %v3857
        %v4435 = vpop.f32.mrb[0].mxu0
        %v4436 = vadd.f32 0.0, %v4435
        %v4437 = vpop.f32.mrb[0].mxu0
        %v4438 = vpop.f32.mrb[0].mxu0
        %v4439 = vadd.f32 0.0, %v4438
        %v4440 = vpop.f32.mrb[0].mxu0
        %4441 = vmatprep.mubr.bf16.mxu0 0
        %4442 = vmatmul.mubr.bf16.gmra.mrb[0].mxu0 %v4287
        %v4443 = vpop.f32.mrb[0].mxu0
        %v4444 = vadd.f32 0.0, %v4443
        %v4445 = vpop.f32.mrb[0].mxu0
        %v4446 = vpop.f32.mrb[0].mxu0
        %v4447 = vadd.f32 0.0, %v4446
        %v4448 = vpop.f32.mrb[0].mxu0
        %4449 = vdwg.mxu0
        %v4450 = vadd.f32 %v4094, %v4324
        %v4451 = vadd.f32 %v4097, %v4327
        %v4452 = vadd.f32 %v4102, %v4332
        %v4453 = vadd.f32 %v4105, %v4335
        %v4454 = vadd.f32 %v4110, %v4340
        %v4455 = vadd.f32 %v4113, %v4343
        %v4456 = vadd.f32 %v4118, %v4348
        %v4457 = vadd.f32 %v4121, %v4351
        %v4458 = vadd.f32 %v4126, %v4356
        %v4459 = vadd.f32 %v4129, %v4359
        %v4460 = vadd.f32 %v4134, %v4364
        %v4461 = vadd.f32 %v4137, %v4367
        %v4462 = vadd.f32 %v4142, %v4372
        %v4463 = vadd.f32 %v4145, %v4375
        %v4464 = vadd.f32 %v4150, %v4380
        %v4465 = vadd.f32 %v4153, %v4383
        %v4466 = vadd.f32 %v4158, %v4388
        %v4467 = vadd.f32 %v4161, %v4391
        %v4468 = vadd.f32 %v4166, %v4396
        %v4469 = vadd.f32 %v4169, %v4399
        %v4470 = vadd.f32 %v4174, %v4404
        %v4471 = vadd.f32 %v4177, %v4407
        %v4472 = vadd.f32 %v4182, %v4412
        %v4473 = vadd.f32 %v4185, %v4415
        %v4474 = vadd.f32 %v4190, %v4420
        %v4475 = vadd.f32 %v4193, %v4423
        %v4476 = vadd.f32 %v4198, %v4428
        %v4477 = vadd.f32 %v4201, %v4431
        %v4478 = vadd.f32 %v4206, %v4436
        %v4479 = vadd.f32 %v4209, %v4439
        %v4480 = vadd.f32 %v4214, %v4444
        %v4481 = vadd.f32 %v4217, %v4447
        %v4483 = vlaneseq
        %v4484 = vshrl.u32 %v4483, 7
        %v4485 = vsub.s32 0, %v4484
        %v4486 = vrot.slane %v3264, %v4485
        %v4488 = vadd.f32 %v4450, %v4486
        %v4489 = vadd.f32 %v4451, %v4486
        %v4490 = vadd.f32 %v4452, %v4486
        %v4491 = vadd.f32 %v4453, %v4486
        %v4492 = vadd.f32 %v4454, %v4486
        %v4493 = vadd.f32 %v4455, %v4486
        %v4494 = vadd.f32 %v4456, %v4486
        %v4495 = vadd.f32 %v4457, %v4486
        %v4496 = vadd.f32 %v4458, %v4486
        %v4497 = vadd.f32 %v4459, %v4486
        %v4498 = vadd.f32 %v4460, %v4486
        %v4499 = vadd.f32 %v4461, %v4486
        %v4500 = vadd.f32 %v4462, %v4486
        %v4501 = vadd.f32 %v4463, %v4486
        %v4502 = vadd.f32 %v4464, %v4486
        %v4503 = vadd.f32 %v4465, %v4486
        %v4504 = vadd.f32 %v4466, %v4486
        %v4505 = vadd.f32 %v4467, %v4486
        %v4506 = vadd.f32 %v4468, %v4486
        %v4507 = vadd.f32 %v4469, %v4486
        %v4508 = vadd.f32 %v4470, %v4486
        %v4509 = vadd.f32 %v4471, %v4486
        %v4510 = vadd.f32 %v4472, %v4486
        %v4511 = vadd.f32 %v4473, %v4486
        %v4512 = vadd.f32 %v4474, %v4486
        %v4513 = vadd.f32 %v4475, %v4486
        %v4514 = vadd.f32 %v4476, %v4486
        %v4515 = vadd.f32 %v4477, %v4486
        %v4516 = vadd.f32 %v4478, %v4486
        %v4517 = vadd.f32 %v4479, %v4486
        %v4518 = vadd.f32 %v4480, %v4486
        %v4519 = vadd.f32 %v4481, %v4486
        %v4520 = vadd.f32 %v4488, %v1695
        %v4521 = vadd.f32 %v4489, %v1696
        %v4522 = vadd.f32 %v4490, %v1697
        %v4523 = vadd.f32 %v4491, %v1698
        %v4524 = vadd.f32 %v4492, %v1699
        %v4525 = vadd.f32 %v4493, %v1700
        %v4526 = vadd.f32 %v4494, %v1701
        %v4527 = vadd.f32 %v4495, %v1702
        %v4528 = vadd.f32 %v4496, %v1703
        %v4529 = vadd.f32 %v4497, %v1704
        %v4530 = vadd.f32 %v4498, %v1705
        %v4531 = vadd.f32 %v4499, %v1706
        %v4532 = vadd.f32 %v4500, %v1707
        %v4533 = vadd.f32 %v4501, %v1708
        %v4534 = vadd.f32 %v4502, %v1709
        %v4535 = vadd.f32 %v4503, %v1710
        %v4536 = vadd.f32 %v4504, %v1711
        %v4537 = vadd.f32 %v4505, %v1712
        %v4538 = vadd.f32 %v4506, %v1713
        %v4539 = vadd.f32 %v4507, %v1714
        %v4540 = vadd.f32 %v4508, %v1715
        %v4541 = vadd.f32 %v4509, %v1716
        %v4542 = vadd.f32 %v4510, %v1717
        %v4543 = vadd.f32 %v4511, %v1718
        %v4544 = vadd.f32 %v4512, %v1719
        %v4545 = vadd.f32 %v4513, %v1720
        %v4546 = vadd.f32 %v4514, %v1721
        %v4547 = vadd.f32 %v4515, %v1722
        %v4548 = vadd.f32 %v4516, %v1723
        %v4549 = vadd.f32 %v4517, %v1724
        %v4550 = vadd.f32 %v4518, %v1725
        %v4551 = vadd.f32 %v4519, %v1726
        %4552 = vst.msk [vmem:[%s1727 + $0x1] sm:$0xff] %vm334, %v4520
        %4553 = vst.msk [vmem:[%s1727 + $0x9] sm:$0xff] %vm334, %v4521
        %4554 = vst.msk [vmem:[%s1727 + $0x19] sm:$0xff] %vm334, %v4522
        %4555 = vst.msk [vmem:[%s1727 + $0x21] sm:$0xff] %vm334, %v4523
        %4556 = vst.msk [vmem:[%s1727 + $0x31] sm:$0xff] %vm334, %v4524
        %4557 = vst.msk [vmem:[%s1727 + $0x39] sm:$0xff] %vm334, %v4525
        %4558 = vst.msk [vmem:[%s1727 + $0x49] sm:$0xff] %vm334, %v4526
        %4559 = vst.msk [vmem:[%s1727 + $0x51] sm:$0xff] %vm334, %v4527
        %4560 = vst.msk [vmem:[%s1727 + $0x61] sm:$0xff] %vm334, %v4528
        %4561 = vst.msk [vmem:[%s1727 + $0x69] sm:$0xff] %vm334, %v4529
        %4562 = vst.msk [vmem:[%s1727 + $0x79] sm:$0xff] %vm334, %v4530
        %4563 = vst.msk [vmem:[%s1727 + $0x81] sm:$0xff] %vm334, %v4531
        %4564 = vst.msk [vmem:[%s1727 + $0x91] sm:$0xff] %vm334, %v4532
        %4565 = vst.msk [vmem:[%s1727 + $0x99] sm:$0xff] %vm334, %v4533
        %4566 = vst.msk [vmem:[%s1727 + $0xa9] sm:$0xff] %vm334, %v4534
        %4567 = vst.msk [vmem:[%s1727 + $0xb1] sm:$0xff] %vm334, %v4535
        %4568 = vst.msk [vmem:[%s1727 + $0xc1] sm:$0xff] %vm334, %v4536
        %4569 = vst.msk [vmem:[%s1727 + $0xc9] sm:$0xff] %vm334, %v4537
        %4570 = vst.msk [vmem:[%s1727 + $0xd9] sm:$0xff] %vm334, %v4538
        %4571 = vst.msk [vmem:[%s1727 + $0xe1] sm:$0xff] %vm334, %v4539
        %4572 = vst.msk [vmem:[%s1727 + $0xf1] sm:$0xff] %vm334, %v4540
        %4573 = vst.msk [vmem:[%s1727 + $0xf9] sm:$0xff] %vm334, %v4541
        %4574 = vst.msk [vmem:[%s1727 + $0x109] sm:$0xff] %vm334, %v4542
        %4575 = vst.msk [vmem:[%s1727 + $0x111] sm:$0xff] %vm334, %v4543
        %4576 = vst.msk [vmem:[%s1727 + $0x121] sm:$0xff] %vm334, %v4544
        %4577 = vst.msk [vmem:[%s1727 + $0x129] sm:$0xff] %vm334, %v4545
        %4578 = vst.msk [vmem:[%s1727 + $0x139] sm:$0xff] %vm334, %v4546
        %4579 = vst.msk [vmem:[%s1727 + $0x141] sm:$0xff] %vm334, %v4547
        %4580 = vst.msk [vmem:[%s1727 + $0x151] sm:$0xff] %vm334, %v4548
        %4581 = vst.msk [vmem:[%s1727 + $0x159] sm:$0xff] %vm334, %v4549
        %4582 = vst.msk [vmem:[%s1727 + $0x169] sm:$0xff] %vm334, %v4550
        %4583 = vst.msk [vmem:[%s1727 + $0x171] sm:$0xff] %vm334, %v4551
        %v4584 = vld [vmem:[#allocation3] sm:$0xff]
        %v4585 = vld [vmem:[#allocation3 + $0x8] sm:$0xff]
        %v4586 = vld [vmem:[#allocation3 + $0x10] sm:$0x3]
        %v4587 = vld [vmem:[#allocation3 + $0x18] sm:$0xff]
        %v4588 = vld [vmem:[#allocation3 + $0x20] sm:$0xff]
        %v4589 = vld [vmem:[#allocation3 + $0x28] sm:$0x3]
        %v4590 = vld [vmem:[#allocation3 + $0x30] sm:$0xff]
        %v4591 = vld [vmem:[#allocation3 + $0x38] sm:$0xff]
        %v4592 = vld [vmem:[#allocation3 + $0x40] sm:$0x3]
        %v4593 = vld [vmem:[#allocation3 + $0x48] sm:$0xff]
        %v4594 = vld [vmem:[#allocation3 + $0x50] sm:$0xff]
        %v4595 = vld [vmem:[#allocation3 + $0x58] sm:$0x3]
        %v4596 = vld [vmem:[#allocation3 + $0x60] sm:$0xff]
        %v4597 = vld [vmem:[#allocation3 + $0x68] sm:$0xff]
        %v4598 = vld [vmem:[#allocation3 + $0x70] sm:$0x3]
        %v4599 = vld [vmem:[#allocation3 + $0x78] sm:$0xff]
        %v4600 = vld [vmem:[#allocation3 + $0x80] sm:$0xff]
        %v4601 = vld [vmem:[#allocation3 + $0x88] sm:$0x3]
        %v4602 = vld [vmem:[#allocation3 + $0x90] sm:$0xff]
        %v4603 = vld [vmem:[#allocation3 + $0x98] sm:$0xff]
        %v4604 = vld [vmem:[#allocation3 + $0xa0] sm:$0x3]
        %v4605 = vld [vmem:[#allocation3 + $0xa8] sm:$0xff]
        %v4606 = vld [vmem:[#allocation3 + $0xb0] sm:$0xff]
        %v4607 = vld [vmem:[#allocation3 + $0xb8] sm:$0x3]
        %v4608 = vld [vmem:[#allocation3 + $0xc0] sm:$0xff]
        %v4609 = vld [vmem:[#allocation3 + $0xc8] sm:$0xff]
        %v4610 = vld [vmem:[#allocation3 + $0xd0] sm:$0x3]
        %v4611 = vld [vmem:[#allocation3 + $0xd8] sm:$0xff]
        %v4612 = vld [vmem:[#allocation3 + $0xe0] sm:$0xff]
        %v4613 = vld [vmem:[#allocation3 + $0xe8] sm:$0x3]
        %v4614 = vld [vmem:[#allocation3 + $0xf0] sm:$0xff]
        %v4615 = vld [vmem:[#allocation3 + $0xf8] sm:$0xff]
        %v4616 = vld [vmem:[#allocation3 + $0x100] sm:$0x3]
        %v4617 = vld [vmem:[#allocation3 + $0x108] sm:$0xff]
        %v4618 = vld [vmem:[#allocation3 + $0x110] sm:$0xff]
        %v4619 = vld [vmem:[#allocation3 + $0x118] sm:$0x3]
        %v4620 = vld [vmem:[#allocation3 + $0x120] sm:$0xff]
        %v4621 = vld [vmem:[#allocation3 + $0x128] sm:$0xff]
        %v4622 = vld [vmem:[#allocation3 + $0x130] sm:$0x3]
        %v4623 = vld [vmem:[#allocation3 + $0x138] sm:$0xff]
        %v4624 = vld [vmem:[#allocation3 + $0x140] sm:$0xff]
        %v4625 = vld [vmem:[#allocation3 + $0x148] sm:$0x3]
        %v4626 = vld [vmem:[#allocation3 + $0x150] sm:$0xff]
        %v4627 = vld [vmem:[#allocation3 + $0x158] sm:$0xff]
        %v4628 = vld [vmem:[#allocation3 + $0x160] sm:$0x3]
        %v4629 = vld [vmem:[#allocation3 + $0x168] sm:$0xff]
        %v4630 = vld [vmem:[#allocation3 + $0x170] sm:$0xff]
        %v4631 = vld [vmem:[#allocation3 + $0x178] sm:$0x3]
        %v4632 = vld [vmem:[#allocation3 + $0x180] sm:$0xff]
        %v4633 = vld [vmem:[#allocation3 + $0x188] sm:$0xff]
        %v4634 = vld [vmem:[#allocation3 + $0x190] sm:$0x3]
        %v4635 = vld [vmem:[#allocation3 + $0x198] sm:$0xff]
        %v4636 = vld [vmem:[#allocation3 + $0x1a0] sm:$0xff]
        %v4637 = vld [vmem:[#allocation3 + $0x1a8] sm:$0x3]
        %s4638 = scalar_lea.vmem %s3, 288
        %v4639 = vld [vmem:[%s4638] sm:$0xf]
        %v4640 = vld [vmem:[%s4638 + $0x4] sm:$0xf]
        %v4641 = vld [vmem:[%s4638 + $0x8] sm:$0xf]
        %v4642 = vld [vmem:[%s4638 + $0xc] sm:$0xf]
        %v4643 = vld [vmem:[%s4638 + $0x10] sm:$0xf]
        %v4644 = vld [vmem:[%s4638 + $0x14] sm:$0xf]
        %v4645 = vld [vmem:[%s4638 + $0x18] sm:$0xf]
        %v4646 = vld [vmem:[%s4638 + $0x1c] sm:$0xf]
        %v4647 = vld [vmem:[%s4638 + $0x20] sm:$0xf]
        %v4648 = vld [vmem:[%s4638 + $0x24] sm:$0xf]
        %v4649 = vld [vmem:[%s4638 + $0x28] sm:$0xf]
        %v4650 = vld [vmem:[%s4638 + $0x2c] sm:$0xf]
        %v4651 = vld [vmem:[%s4638 + $0x30] sm:$0xf]
        %v4652 = vld [vmem:[%s4638 + $0x34] sm:$0xf]
        %v4653 = vld [vmem:[%s4638 + $0x38] sm:$0xf]
        %v4654 = vld [vmem:[%s4638 + $0x3c] sm:$0xf]
        %v4655 = vld [vmem:[%s4638 + $0x40] sm:$0xf]
        %v4656 = vld [vmem:[%s4638 + $0x44] sm:$0xf]
        %v4657 = vld [vmem:[%s4638 + $0x48] sm:$0xf]
        %v4658 = vld [vmem:[%s4638 + $0x4c] sm:$0xf]
        %v4659 = vld [vmem:[%s4638 + $0x50] sm:$0xf]
        %v4660 = vld [vmem:[%s4638 + $0x54] sm:$0xf]
        %v4661 = vld [vmem:[%s4638 + $0x58] sm:$0xf]
        %v4662 = vld [vmem:[%s4638 + $0x5c] sm:$0xf]
        %v4663 = vld [vmem:[%s4638 + $0x60] sm:$0xf]
        %v4664 = vld [vmem:[%s4638 + $0x64] sm:$0xf]
        %v4665 = vld [vmem:[%s4638 + $0x68] sm:$0xf]
        %v4666 = vld [vmem:[%s4638 + $0x6c] sm:$0xf]
        %v4667 = vld [vmem:[%s4638 + $0x70] sm:$0xf]
        %v4668 = vld [vmem:[%s4638 + $0x74] sm:$0xf]
        %v4669 = vld [vmem:[%s4638 + $0x78] sm:$0xf]
        %v4670 = vld [vmem:[%s4638 + $0x7c] sm:$0xf]
        %v4671 = vld [vmem:[%s4638 + $0x80] sm:$0xf]
        %v4672 = vld [vmem:[%s4638 + $0x84] sm:$0xf]
        %v4673 = vld [vmem:[%s4638 + $0x88] sm:$0xf]
        %v4674 = vld [vmem:[%s4638 + $0x8c] sm:$0xf]
        %s4675 = scalar_lea.vmem %s4, 2
        %v4676 = vld [vmem:[%s4675] sm:$0x1]
        %v4725 = vrot.slane %v4584, 1
        %v4726 = vrot.slane %v4585, 1
        %v4727 = vsel %vm564, %v4725, %v4726
        %v4728 = vrot.slane %v4586, 1
        %v4729 = vsel %vm564, %v4726, %v4728
        %v4730 = vrot.slane %v4587, 1
        %v4731 = vrot.slane %v4588, 1
        %v4732 = vsel %vm564, %v4730, %v4731
        %v4733 = vrot.slane %v4589, 1
        %v4734 = vsel %vm564, %v4731, %v4733
        %v4735 = vrot.slane %v4590, 1
        %v4736 = vrot.slane %v4591, 1
        %v4737 = vsel %vm564, %v4735, %v4736
        %v4738 = vrot.slane %v4592, 1
        %v4739 = vsel %vm564, %v4736, %v4738
        %v4740 = vrot.slane %v4593, 1
        %v4741 = vrot.slane %v4594, 1
        %v4742 = vsel %vm564, %v4740, %v4741
        %v4743 = vrot.slane %v4595, 1
        %v4744 = vsel %vm564, %v4741, %v4743
        %v4745 = vrot.slane %v4596, 1
        %v4746 = vrot.slane %v4597, 1
        %v4747 = vsel %vm564, %v4745, %v4746
        %v4748 = vrot.slane %v4598, 1
        %v4749 = vsel %vm564, %v4746, %v4748
        %v4750 = vrot.slane %v4599, 1
        %v4751 = vrot.slane %v4600, 1
        %v4752 = vsel %vm564, %v4750, %v4751
        %v4753 = vrot.slane %v4601, 1
        %v4754 = vsel %vm564, %v4751, %v4753
        %v4755 = vrot.slane %v4602, 1
        %v4756 = vrot.slane %v4603, 1
        %v4757 = vsel %vm564, %v4755, %v4756
        %v4758 = vrot.slane %v4604, 1
        %v4759 = vsel %vm564, %v4756, %v4758
        %v4760 = vrot.slane %v4605, 1
        %v4761 = vrot.slane %v4606, 1
        %v4762 = vsel %vm564, %v4760, %v4761
        %v4763 = vrot.slane %v4607, 1
        %v4764 = vsel %vm564, %v4761, %v4763
        %v4765 = vrot.slane %v4608, 1
        %v4766 = vrot.slane %v4609, 1
        %v4767 = vsel %vm564, %v4765, %v4766
        %v4768 = vrot.slane %v4610, 1
        %v4769 = vsel %vm564, %v4766, %v4768
        %v4770 = vrot.slane %v4611, 1
        %v4771 = vrot.slane %v4612, 1
        %v4772 = vsel %vm564, %v4770, %v4771
        %v4773 = vrot.slane %v4613, 1
        %v4774 = vsel %vm564, %v4771, %v4773
        %v4775 = vrot.slane %v4614, 1
        %v4776 = vrot.slane %v4615, 1
        %v4777 = vsel %vm564, %v4775, %v4776
        %v4778 = vrot.slane %v4616, 1
        %v4779 = vsel %vm564, %v4776, %v4778
        %v4780 = vrot.slane %v4617, 1
        %v4781 = vrot.slane %v4618, 1
        %v4782 = vsel %vm564, %v4780, %v4781
        %v4783 = vrot.slane %v4619, 1
        %v4784 = vsel %vm564, %v4781, %v4783
        %v4785 = vrot.slane %v4620, 1
        %v4786 = vrot.slane %v4621, 1
        %v4787 = vsel %vm564, %v4785, %v4786
        %v4788 = vrot.slane %v4622, 1
        %v4789 = vsel %vm564, %v4786, %v4788
        %v4790 = vrot.slane %v4623, 1
        %v4791 = vrot.slane %v4624, 1
        %v4792 = vsel %vm564, %v4790, %v4791
        %v4793 = vrot.slane %v4625, 1
        %v4794 = vsel %vm564, %v4791, %v4793
        %v4795 = vrot.slane %v4626, 1
        %v4796 = vrot.slane %v4627, 1
        %v4797 = vsel %vm564, %v4795, %v4796
        %v4798 = vrot.slane %v4628, 1
        %v4799 = vsel %vm564, %v4796, %v4798
        %v4800 = vrot.slane %v4629, 1
        %v4801 = vrot.slane %v4630, 1
        %v4802 = vsel %vm564, %v4800, %v4801
        %v4803 = vrot.slane %v4631, 1
        %v4804 = vsel %vm564, %v4801, %v4803
        %4805 = vrot.lane.b32.xlu0 %v4727, 32
        %v4806 = vpop.permute.xlu0 %4805
        %4807 = vrot.lane.b32.xlu0 %v4729, 32
        %v4808 = vpop.permute.xlu0 %4807
        %4809 = vrot.lane.b32.xlu0 %v4732, 32
        %v4810 = vpop.permute.xlu0 %4809
        %4811 = vrot.lane.b32.xlu0 %v4734, 32
        %v4812 = vpop.permute.xlu0 %4811
        %4813 = vrot.lane.b32.xlu0 %v4737, 32
        %v4814 = vpop.permute.xlu0 %4813
        %4815 = vrot.lane.b32.xlu0 %v4739, 32
        %v4816 = vpop.permute.xlu0 %4815
        %4817 = vrot.lane.b32.xlu0 %v4742, 32
        %v4818 = vpop.permute.xlu0 %4817
        %4819 = vrot.lane.b32.xlu0 %v4744, 32
        %v4820 = vpop.permute.xlu0 %4819
        %4821 = vrot.lane.b32.xlu0 %v4747, 32
        %v4822 = vpop.permute.xlu0 %4821
        %4823 = vrot.lane.b32.xlu0 %v4749, 32
        %v4824 = vpop.permute.xlu0 %4823
        %4825 = vrot.lane.b32.xlu0 %v4752, 32
        %v4826 = vpop.permute.xlu0 %4825
        %4827 = vrot.lane.b32.xlu0 %v4754, 32
        %v4828 = vpop.permute.xlu0 %4827
        %4829 = vrot.lane.b32.xlu0 %v4757, 32
        %v4830 = vpop.permute.xlu0 %4829
        %4831 = vrot.lane.b32.xlu0 %v4759, 32
        %v4832 = vpop.permute.xlu0 %4831
        %4833 = vrot.lane.b32.xlu0 %v4762, 32
        %v4834 = vpop.permute.xlu0 %4833
        %4835 = vrot.lane.b32.xlu0 %v4764, 32
        %v4836 = vpop.permute.xlu0 %4835
        %4837 = vrot.lane.b32.xlu0 %v4767, 32
        %v4838 = vpop.permute.xlu0 %4837
        %4839 = vrot.lane.b32.xlu0 %v4769, 32
        %v4840 = vpop.permute.xlu0 %4839
        %4841 = vrot.lane.b32.xlu0 %v4772, 32
        %v4842 = vpop.permute.xlu0 %4841
        %4843 = vrot.lane.b32.xlu0 %v4774, 32
        %v4844 = vpop.permute.xlu0 %4843
        %4845 = vrot.lane.b32.xlu0 %v4777, 32
        %v4846 = vpop.permute.xlu0 %4845
        %4847 = vrot.lane.b32.xlu0 %v4779, 32
        %v4848 = vpop.permute.xlu0 %4847
        %4849 = vrot.lane.b32.xlu0 %v4782, 32
        %v4850 = vpop.permute.xlu0 %4849
        %4851 = vrot.lane.b32.xlu0 %v4784, 32
        %v4852 = vpop.permute.xlu0 %4851
        %4853 = vrot.lane.b32.xlu0 %v4787, 32
        %v4854 = vpop.permute.xlu0 %4853
        %4855 = vrot.lane.b32.xlu0 %v4789, 32
        %v4856 = vpop.permute.xlu0 %4855
        %4857 = vrot.lane.b32.xlu0 %v4792, 32
        %v4858 = vpop.permute.xlu0 %4857
        %4859 = vrot.lane.b32.xlu0 %v4794, 32
        %v4860 = vpop.permute.xlu0 %4859
        %4861 = vrot.lane.b32.xlu0 %v4797, 32
        %v4862 = vpop.permute.xlu0 %4861
        %4863 = vrot.lane.b32.xlu0 %v4799, 32
        %v4864 = vpop.permute.xlu0 %4863
        %4865 = vrot.lane.b32.xlu0 %v4802, 32
        %v4866 = vpop.permute.xlu0 %4865
        %4867 = vrot.lane.b32.xlu0 %v4804, 32
        %v4868 = vpop.permute.xlu0 %4867
        %v4901 = vrot.slane %v4584, 2
        %v4902 = vrot.slane %v4585, 2
        %v4903 = vsel %vm741, %v4901, %v4902
        %v4904 = vrot.slane %v4586, 2
        %v4905 = vsel %vm741, %v4902, %v4904
        %v4906 = vrot.slane %v4587, 2
        %v4907 = vrot.slane %v4588, 2
        %v4908 = vsel %vm741, %v4906, %v4907
        %v4909 = vrot.slane %v4589, 2
        %v4910 = vsel %vm741, %v4907, %v4909
        %v4911 = vrot.slane %v4590, 2
        %v4912 = vrot.slane %v4591, 2
        %v4913 = vsel %vm741, %v4911, %v4912
        %v4914 = vrot.slane %v4592, 2
        %v4915 = vsel %vm741, %v4912, %v4914
        %v4916 = vrot.slane %v4593, 2
        %v4917 = vrot.slane %v4594, 2
        %v4918 = vsel %vm741, %v4916, %v4917
        %v4919 = vrot.slane %v4595, 2
        %v4920 = vsel %vm741, %v4917, %v4919
        %v4921 = vrot.slane %v4596, 2
        %v4922 = vrot.slane %v4597, 2
        %v4923 = vsel %vm741, %v4921, %v4922
        %v4924 = vrot.slane %v4598, 2
        %v4925 = vsel %vm741, %v4922, %v4924
        %v4926 = vrot.slane %v4599, 2
        %v4927 = vrot.slane %v4600, 2
        %v4928 = vsel %vm741, %v4926, %v4927
        %v4929 = vrot.slane %v4601, 2
        %v4930 = vsel %vm741, %v4927, %v4929
        %v4931 = vrot.slane %v4602, 2
        %v4932 = vrot.slane %v4603, 2
        %v4933 = vsel %vm741, %v4931, %v4932
        %v4934 = vrot.slane %v4604, 2
        %v4935 = vsel %vm741, %v4932, %v4934
        %v4936 = vrot.slane %v4605, 2
        %v4937 = vrot.slane %v4606, 2
        %v4938 = vsel %vm741, %v4936, %v4937
        %v4939 = vrot.slane %v4607, 2
        %v4940 = vsel %vm741, %v4937, %v4939
        %v4941 = vrot.slane %v4608, 2
        %v4942 = vrot.slane %v4609, 2
        %v4943 = vsel %vm741, %v4941, %v4942
        %v4944 = vrot.slane %v4610, 2
        %v4945 = vsel %vm741, %v4942, %v4944
        %v4946 = vrot.slane %v4611, 2
        %v4947 = vrot.slane %v4612, 2
        %v4948 = vsel %vm741, %v4946, %v4947
        %v4949 = vrot.slane %v4613, 2
        %v4950 = vsel %vm741, %v4947, %v4949
        %v4951 = vrot.slane %v4614, 2
        %v4952 = vrot.slane %v4615, 2
        %v4953 = vsel %vm741, %v4951, %v4952
        %v4954 = vrot.slane %v4616, 2
        %v4955 = vsel %vm741, %v4952, %v4954
        %v4956 = vrot.slane %v4617, 2
        %v4957 = vrot.slane %v4618, 2
        %v4958 = vsel %vm741, %v4956, %v4957
        %v4959 = vrot.slane %v4619, 2
        %v4960 = vsel %vm741, %v4957, %v4959
        %v4961 = vrot.slane %v4620, 2
        %v4962 = vrot.slane %v4621, 2
        %v4963 = vsel %vm741, %v4961, %v4962
        %v4964 = vrot.slane %v4622, 2
        %v4965 = vsel %vm741, %v4962, %v4964
        %v4966 = vrot.slane %v4623, 2
        %v4967 = vrot.slane %v4624, 2
        %v4968 = vsel %vm741, %v4966, %v4967
        %v4969 = vrot.slane %v4625, 2
        %v4970 = vsel %vm741, %v4967, %v4969
        %v4971 = vrot.slane %v4626, 2
        %v4972 = vrot.slane %v4627, 2
        %v4973 = vsel %vm741, %v4971, %v4972
        %v4974 = vrot.slane %v4628, 2
        %v4975 = vsel %vm741, %v4972, %v4974
        %v4976 = vrot.slane %v4629, 2
        %v4977 = vrot.slane %v4630, 2
        %v4978 = vsel %vm741, %v4976, %v4977
        %v4979 = vrot.slane %v4631, 2
        %v4980 = vsel %vm741, %v4977, %v4979
        %4981 = vrot.lane.b32.xlu0 %v4903, 64
        %v4982 = vpop.permute.xlu0 %4981
        %4983 = vrot.lane.b32.xlu0 %v4905, 64
        %v4984 = vpop.permute.xlu0 %4983
        %4985 = vrot.lane.b32.xlu0 %v4908, 64
        %v4986 = vpop.permute.xlu0 %4985
        %4987 = vrot.lane.b32.xlu0 %v4910, 64
        %v4988 = vpop.permute.xlu0 %4987
        %4989 = vrot.lane.b32.xlu0 %v4913, 64
        %v4990 = vpop.permute.xlu0 %4989
        %4991 = vrot.lane.b32.xlu0 %v4915, 64
        %v4992 = vpop.permute.xlu0 %4991
        %4993 = vrot.lane.b32.xlu0 %v4918, 64
        %v4994 = vpop.permute.xlu0 %4993
        %4995 = vrot.lane.b32.xlu0 %v4920, 64
        %v4996 = vpop.permute.xlu0 %4995
        %4997 = vrot.lane.b32.xlu0 %v4923, 64
        %v4998 = vpop.permute.xlu0 %4997
        %4999 = vrot.lane.b32.xlu0 %v4925, 64
        %v5000 = vpop.permute.xlu0 %4999
        %5001 = vrot.lane.b32.xlu0 %v4928, 64
        %v5002 = vpop.permute.xlu0 %5001
        %5003 = vrot.lane.b32.xlu0 %v4930, 64
        %v5004 = vpop.permute.xlu0 %5003
        %5005 = vrot.lane.b32.xlu0 %v4933, 64
        %v5006 = vpop.permute.xlu0 %5005
        %5007 = vrot.lane.b32.xlu0 %v4935, 64
        %v5008 = vpop.permute.xlu0 %5007
        %5009 = vrot.lane.b32.xlu0 %v4938, 64
        %v5010 = vpop.permute.xlu0 %5009
        %5011 = vrot.lane.b32.xlu0 %v4940, 64
        %v5012 = vpop.permute.xlu0 %5011
        %5013 = vrot.lane.b32.xlu0 %v4943, 64
        %v5014 = vpop.permute.xlu0 %5013
        %5015 = vrot.lane.b32.xlu0 %v4945, 64
        %v5016 = vpop.permute.xlu0 %5015
        %5017 = vrot.lane.b32.xlu0 %v4948, 64
        %v5018 = vpop.permute.xlu0 %5017
        %5019 = vrot.lane.b32.xlu0 %v4950, 64
        %v5020 = vpop.permute.xlu0 %5019
        %5021 = vrot.lane.b32.xlu0 %v4953, 64
        %v5022 = vpop.permute.xlu0 %5021
        %5023 = vrot.lane.b32.xlu0 %v4955, 64
        %v5024 = vpop.permute.xlu0 %5023
        %5025 = vrot.lane.b32.xlu0 %v4958, 64
        %v5026 = vpop.permute.xlu0 %5025
        %5027 = vrot.lane.b32.xlu0 %v4960, 64
        %v5028 = vpop.permute.xlu0 %5027
        %5029 = vrot.lane.b32.xlu0 %v4963, 64
        %v5030 = vpop.permute.xlu0 %5029
        %5031 = vrot.lane.b32.xlu0 %v4965, 64
        %v5032 = vpop.permute.xlu0 %5031
        %5033 = vrot.lane.b32.xlu0 %v4968, 64
        %v5034 = vpop.permute.xlu0 %5033
        %5035 = vrot.lane.b32.xlu0 %v4970, 64
        %v5036 = vpop.permute.xlu0 %5035
        %5037 = vrot.lane.b32.xlu0 %v4973, 64
        %v5038 = vpop.permute.xlu0 %5037
        %5039 = vrot.lane.b32.xlu0 %v4975, 64
        %v5040 = vpop.permute.xlu0 %5039
        %5041 = vrot.lane.b32.xlu0 %v4978, 64
        %v5042 = vpop.permute.xlu0 %5041
        %5043 = vrot.lane.b32.xlu0 %v4980, 64
        %v5044 = vpop.permute.xlu0 %5043
        %v5077 = vsel %vm334, %v4584, %v4806
        %v5078 = vsel %vm334, %v4585, %v4808
        %v5079 = vsel %vm334, %v4587, %v4810
        %v5080 = vsel %vm334, %v4588, %v4812
        %v5081 = vsel %vm334, %v4590, %v4814
        %v5082 = vsel %vm334, %v4591, %v4816
        %v5083 = vsel %vm334, %v4593, %v4818
        %v5084 = vsel %vm334, %v4594, %v4820
        %v5085 = vsel %vm334, %v4596, %v4822
        %v5086 = vsel %vm334, %v4597, %v4824
        %v5087 = vsel %vm334, %v4599, %v4826
        %v5088 = vsel %vm334, %v4600, %v4828
        %v5089 = vsel %vm334, %v4602, %v4830
        %v5090 = vsel %vm334, %v4603, %v4832
        %v5091 = vsel %vm334, %v4605, %v4834
        %v5092 = vsel %vm334, %v4606, %v4836
        %v5093 = vsel %vm334, %v4608, %v4838
        %v5094 = vsel %vm334, %v4609, %v4840
        %v5095 = vsel %vm334, %v4611, %v4842
        %v5096 = vsel %vm334, %v4612, %v4844
        %v5097 = vsel %vm334, %v4614, %v4846
        %v5098 = vsel %vm334, %v4615, %v4848
        %v5099 = vsel %vm334, %v4617, %v4850
        %v5100 = vsel %vm334, %v4618, %v4852
        %v5101 = vsel %vm334, %v4620, %v4854
        %v5102 = vsel %vm334, %v4621, %v4856
        %v5103 = vsel %vm334, %v4623, %v4858
        %v5104 = vsel %vm334, %v4624, %v4860
        %v5105 = vsel %vm334, %v4626, %v4862
        %v5106 = vsel %vm334, %v4627, %v4864
        %v5107 = vsel %vm334, %v4629, %v4866
        %v5108 = vsel %vm334, %v4630, %v4868
        %v5109 = vsel %vm2283, %v5077, %v4982
        %v5110 = vsel %vm2283, %v5078, %v4984
        %v5111 = vsel %vm2283, %v5079, %v4986
        %v5112 = vsel %vm2283, %v5080, %v4988
        %v5113 = vsel %vm2283, %v5081, %v4990
        %v5114 = vsel %vm2283, %v5082, %v4992
        %v5115 = vsel %vm2283, %v5083, %v4994
        %v5116 = vsel %vm2283, %v5084, %v4996
        %v5117 = vsel %vm2283, %v5085, %v4998
        %v5118 = vsel %vm2283, %v5086, %v5000
        %v5119 = vsel %vm2283, %v5087, %v5002
        %v5120 = vsel %vm2283, %v5088, %v5004
        %v5121 = vsel %vm2283, %v5089, %v5006
        %v5122 = vsel %vm2283, %v5090, %v5008
        %v5123 = vsel %vm2283, %v5091, %v5010
        %v5124 = vsel %vm2283, %v5092, %v5012
        %v5125 = vsel %vm2283, %v5093, %v5014
        %v5126 = vsel %vm2283, %v5094, %v5016
        %v5127 = vsel %vm2283, %v5095, %v5018
        %v5128 = vsel %vm2283, %v5096, %v5020
        %v5129 = vsel %vm2283, %v5097, %v5022
        %v5130 = vsel %vm2283, %v5098, %v5024
        %v5131 = vsel %vm2283, %v5099, %v5026
        %v5132 = vsel %vm2283, %v5100, %v5028
        %v5133 = vsel %vm2283, %v5101, %v5030
        %v5134 = vsel %vm2283, %v5102, %v5032
        %v5135 = vsel %vm2283, %v5103, %v5034
        %v5136 = vsel %vm2283, %v5104, %v5036
        %v5137 = vsel %vm2283, %v5105, %v5038
        %v5138 = vsel %vm2283, %v5106, %v5040
        %v5139 = vsel %vm2283, %v5107, %v5042
        %v5140 = vsel %vm2283, %v5108, %v5044
        %v5141 = vpack.c.bf16 %v5110, %v5109
        %v5142 = vpack.c.bf16 %v5112, %v5111
        %v5143 = vpack.c.bf16 %v5114, %v5113
        %v5144 = vpack.c.bf16 %v5116, %v5115
        %v5145 = vpack.c.bf16 %v5118, %v5117
        %v5146 = vpack.c.bf16 %v5120, %v5119
        %v5147 = vpack.c.bf16 %v5122, %v5121
        %v5148 = vpack.c.bf16 %v5124, %v5123
        %v5149 = vpack.c.bf16 %v5126, %v5125
        %v5150 = vpack.c.bf16 %v5128, %v5127
        %v5151 = vpack.c.bf16 %v5130, %v5129
        %v5152 = vpack.c.bf16 %v5132, %v5131
        %v5153 = vpack.c.bf16 %v5134, %v5133
        %v5154 = vpack.c.bf16 %v5136, %v5135
        %v5155 = vpack.c.bf16 %v5138, %v5137
        %v5156 = vpack.c.bf16 %v5140, %v5139
        %v5160 = vrot.slane %v4632, 1
        %v5161 = vrot.slane %v4633, 1
        %v5162 = vsel %vm564, %v5160, %v5161
        %v5163 = vrot.slane %v4634, 1
        %v5164 = vsel %vm564, %v5161, %v5163
        %5165 = vrot.lane.b32.xlu0 %v5162, 32
        %v5166 = vpop.permute.xlu0 %5165
        %5167 = vrot.lane.b32.xlu0 %v5164, 32
        %v5168 = vpop.permute.xlu0 %5167
        %v5171 = vrot.slane %v4632, 2
        %v5172 = vrot.slane %v4633, 2
        %v5173 = vsel %vm741, %v5171, %v5172
        %v5174 = vrot.slane %v4634, 2
        %v5175 = vsel %vm741, %v5172, %v5174
        %5176 = vrot.lane.b32.xlu0 %v5173, 64
        %v5177 = vpop.permute.xlu0 %5176
        %5178 = vrot.lane.b32.xlu0 %v5175, 64
        %v5179 = vpop.permute.xlu0 %5178
        %v5182 = vsel %vm334, %v4632, %v5166
        %v5183 = vsel %vm334, %v4633, %v5168
        %v5184 = vsel %vm2283, %v5182, %v5177
        %v5185 = vsel %vm2283, %v5183, %v5179
        %v5186 = vpack.c.bf16 %v5185, %v5184
        %v5199 = vunpack.c.l.b16 %v4651
        %v5200 = vunpack.c.l.b16 %v4652
        %v5201 = vunpack.c.l.b16 %v4653
        %v5202 = vunpack.c.l.b16 %v4654
        %v5203 = vunpack.c.l.b16 %v4655
        %v5204 = vunpack.c.l.b16 %v4656
        %v5205 = vunpack.c.l.b16 %v4657
        %v5206 = vunpack.c.l.b16 %v4658
        %v5207 = vunpack.c.l.b16 %v4659
        %v5208 = vunpack.c.l.b16 %v4660
        %v5209 = vunpack.c.l.b16 %v4661
        %v5210 = vunpack.c.l.b16 %v4662
        %v5211 = vpack.c.b16 %v5200, %v5199
        %v5212 = vpack.c.b16 %v5202, %v5201
        %v5213 = vpack.c.b16 %v5204, %v5203
        %v5214 = vpack.c.b16 %v5206, %v5205
        %v5215 = vpack.c.b16 %v5208, %v5207
        %v5216 = vpack.c.b16 %v5210, %v5209
        %v5224 = vsel %vm2398, %v5142, 0
        %v5227 = vsel %vm2398, %v5143, 0
        %v5230 = vsel %vm2398, %v5144, 0
        %v5233 = vsel %vm2398, %v5145, 0
        %v5236 = vsel %vm2398, %v5146, 0
        %v5239 = vsel %vm2398, %v5147, 0
        %v5242 = vsel %vm2398, %v5148, 0
        %v5245 = vsel %vm2398, %v5149, 0
        %v5248 = vsel %vm2398, %v5150, 0
        %v5251 = vsel %vm2398, %v5151, 0
        %v5254 = vsel %vm2398, %v5152, 0
        %v5257 = vsel %vm2398, %v5153, 0
        %v5260 = vsel %vm2398, %v5154, 0
        %v5263 = vsel %vm2398, %v5155, 0
        %v5266 = vsel %vm2398, %v5156, 0
        %v5269 = vsel %vm2398, %v5186, 0
        %5271 = vmatprep.subr.bf16.mxu0 0
        %5272 = vmatpush1.bf16.msra.mxu0 %v5211
        %5273 = vmatprep.subr.bf16.mxu0 0
        %5274 = vmatpush1.bf16.msra.mxu0 %v5212
        %5275 = vmatprep.subr.bf16.mxu0 0
        %5276 = vmatpush1.bf16.msra.mxu0 %v5213
        %5277 = vmatprep.subr.bf16.mxu0 0
        %5278 = vmatpush1.bf16.msra.mxu0 %v5214
        %5279 = vmatprep.subr.bf16.mxu0 0
        %5280 = vmatpush1.bf16.msra.mxu0 %v5215
        %5281 = vmatprep.subr.bf16.mxu0 0
        %5282 = vmatpush1.bf16.msra.mxu0 %v5216
        %5283 = vmatprep.subr.bf16.mxu0 0
        %5284 = vmatpush1.bf16.msra.mxu0 0
        %5285 = vmatprep.subr.bf16.mxu0 0
        %5286 = vmatpush1.bf16.msra.mxu0 0
        %5287 = vmatprep.subr.bf16.mxu0 0
        %5288 = vmatpush1.bf16.msra.mxu0 0
        %5289 = vmatprep.subr.bf16.mxu0 0
        %5290 = vmatpush1.bf16.msra.mxu0 0
        %5291 = vmatprep.subr.bf16.mxu0 0
        %5292 = vmatpush1.bf16.msra.mxu0 0
        %5293 = vmatprep.subr.bf16.mxu0 0
        %5294 = vmatpush1.bf16.msra.mxu0 0
        %5295 = vmatprep.subr.bf16.mxu0 0
        %5296 = vmatpush1.bf16.msra.mxu0 0
        %5297 = vmatprep.subr.bf16.mxu0 0
        %5298 = vmatpush1.bf16.msra.mxu0 0
        %5299 = vmatprep.subr.bf16.mxu0 0
        %5300 = vmatpush1.bf16.msra.mxu0 0
        %5301 = vmatprep.subr.bf16.mxu0 0
        %5302 = vmatpush1.bf16.msra.mxu0 0
        %5303 = vmatprep.mubr.bf16.mxu0 0
        %5304 = vmatmul.mubr.bf16.gmra.mrb[0].mxu0 %v5224
        %v5305 = vpop.f32.mrb[0].mxu0
        %v5306 = vadd.f32 0.0, %v5305
        %v5307 = vpop.f32.mrb[0].mxu0
        %v5308 = vpop.f32.mrb[0].mxu0
        %v5309 = vadd.f32 0.0, %v5308
        %v5310 = vpop.f32.mrb[0].mxu0
        %5311 = vmatprep.mubr.bf16.mxu0 0
        %5312 = vmatmul.mubr.bf16.gmra.mrb[0].mxu0 %v5227
        %v5313 = vpop.f32.mrb[0].mxu0
        %v5314 = vadd.f32 0.0, %v5313
        %v5315 = vpop.f32.mrb[0].mxu0
        %v5316 = vpop.f32.mrb[0].mxu0
        %v5317 = vadd.f32 0.0, %v5316
        %v5318 = vpop.f32.mrb[0].mxu0
        %5319 = vmatprep.mubr.bf16.mxu0 0
        %5320 = vmatmul.mubr.bf16.gmra.mrb[0].mxu0 %v5230
        %v5321 = vpop.f32.mrb[0].mxu0
        %v5322 = vadd.f32 0.0, %v5321
        %v5323 = vpop.f32.mrb[0].mxu0
        %v5324 = vpop.f32.mrb[0].mxu0
        %v5325 = vadd.f32 0.0, %v5324
        %v5326 = vpop.f32.mrb[0].mxu0
        %5327 = vmatprep.mubr.bf16.mxu0 0
        %5328 = vmatmul.mubr.bf16.gmra.mrb[0].mxu0 %v5233
        %v5329 = vpop.f32.mrb[0].mxu0
        %v5330 = vadd.f32 0.0, %v5329
        %v5331 = vpop.f32.mrb[0].mxu0
        %v5332 = vpop.f32.mrb[0].mxu0
        %v5333 = vadd.f32 0.0, %v5332
        %v5334 = vpop.f32.mrb[0].mxu0
        %5335 = vmatprep.mubr.bf16.mxu0 0
        %5336 = vmatmul.mubr.bf16.gmra.mrb[0].mxu0 %v5236
        %v5337 = vpop.f32.mrb[0].mxu0
        %v5338 = vadd.f32 0.0, %v5337
        %v5339 = vpop.f32.mrb[0].mxu0
        %v5340 = vpop.f32.mrb[0].mxu0
        %v5341 = vadd.f32 0.0, %v5340
        %v5342 = vpop.f32.mrb[0].mxu0
        %5343 = vmatprep.mubr.bf16.mxu0 0
        %5344 = vmatmul.mubr.bf16.gmra.mrb[0].mxu0 %v5239
        %v5345 = vpop.f32.mrb[0].mxu0
        %v5346 = vadd.f32 0.0, %v5345
        %v5347 = vpop.f32.mrb[0].mxu0
        %v5348 = vpop.f32.mrb[0].mxu0
        %v5349 = vadd.f32 0.0, %v5348
        %v5350 = vpop.f32.mrb[0].mxu0
        %5351 = vmatprep.mubr.bf16.mxu0 0
        %5352 = vmatmul.mubr.bf16.gmra.mrb[0].mxu0 %v5242
        %v5353 = vpop.f32.mrb[0].mxu0
        %v5354 = vadd.f32 0.0, %v5353
        %v5355 = vpop.f32.mrb[0].mxu0
        %v5356 = vpop.f32.mrb[0].mxu0
        %v5357 = vadd.f32 0.0, %v5356
        %v5358 = vpop.f32.mrb[0].mxu0
        %5359 = vmatprep.mubr.bf16.mxu0 0
        %5360 = vmatmul.mubr.bf16.gmra.mrb[0].mxu0 %v5245
        %v5361 = vpop.f32.mrb[0].mxu0
        %v5362 = vadd.f32 0.0, %v5361
        %v5363 = vpop.f32.mrb[0].mxu0
        %v5364 = vpop.f32.mrb[0].mxu0
        %v5365 = vadd.f32 0.0, %v5364
        %v5366 = vpop.f32.mrb[0].mxu0
        %5367 = vmatprep.mubr.bf16.mxu0 0
        %5368 = vmatmul.mubr.bf16.gmra.mrb[0].mxu0 %v5248
        %v5369 = vpop.f32.mrb[0].mxu0
        %v5370 = vadd.f32 0.0, %v5369
        %v5371 = vpop.f32.mrb[0].mxu0
        %v5372 = vpop.f32.mrb[0].mxu0
        %v5373 = vadd.f32 0.0, %v5372
        %v5374 = vpop.f32.mrb[0].mxu0
        %5375 = vmatprep.mubr.bf16.mxu0 0
        %5376 = vmatmul.mubr.bf16.gmra.mrb[0].mxu0 %v5251
        %v5377 = vpop.f32.mrb[0].mxu0
        %v5378 = vadd.f32 0.0, %v5377
        %v5379 = vpop.f32.mrb[0].mxu0
        %v5380 = vpop.f32.mrb[0].mxu0
        %v5381 = vadd.f32 0.0, %v5380
        %v5382 = vpop.f32.mrb[0].mxu0
        %5383 = vmatprep.mubr.bf16.mxu0 0
        %5384 = vmatmul.mubr.bf16.gmra.mrb[0].mxu0 %v5254
        %v5385 = vpop.f32.mrb[0].mxu0
        %v5386 = vadd.f32 0.0, %v5385
        %v5387 = vpop.f32.mrb[0].mxu0
        %v5388 = vpop.f32.mrb[0].mxu0
        %v5389 = vadd.f32 0.0, %v5388
        %v5390 = vpop.f32.mrb[0].mxu0
        %5391 = vmatprep.mubr.bf16.mxu0 0
        %5392 = vmatmul.mubr.bf16.gmra.mrb[0].mxu0 %v5257
        %v5393 = vpop.f32.mrb[0].mxu0
        %v5394 = vadd.f32 0.0, %v5393
        %v5395 = vpop.f32.mrb[0].mxu0
        %v5396 = vpop.f32.mrb[0].mxu0
        %v5397 = vadd.f32 0.0, %v5396
        %v5398 = vpop.f32.mrb[0].mxu0
        %5399 = vmatprep.mubr.bf16.mxu0 0
        %5400 = vmatmul.mubr.bf16.gmra.mrb[0].mxu0 %v5260
        %v5401 = vpop.f32.mrb[0].mxu0
        %v5402 = vadd.f32 0.0, %v5401
        %v5403 = vpop.f32.mrb[0].mxu0
        %v5404 = vpop.f32.mrb[0].mxu0
        %v5405 = vadd.f32 0.0, %v5404
        %v5406 = vpop.f32.mrb[0].mxu0
        %5407 = vmatprep.mubr.bf16.mxu0 0
        %5408 = vmatmul.mubr.bf16.gmra.mrb[0].mxu0 %v5263
        %v5409 = vpop.f32.mrb[0].mxu0
        %v5410 = vadd.f32 0.0, %v5409
        %v5411 = vpop.f32.mrb[0].mxu0
        %v5412 = vpop.f32.mrb[0].mxu0
        %v5413 = vadd.f32 0.0, %v5412
        %v5414 = vpop.f32.mrb[0].mxu0
        %5415 = vmatprep.mubr.bf16.mxu0 0
        %5416 = vmatmul.mubr.bf16.gmra.mrb[0].mxu0 %v5266
        %v5417 = vpop.f32.mrb[0].mxu0
        %v5418 = vadd.f32 0.0, %v5417
        %v5419 = vpop.f32.mrb[0].mxu0
        %v5420 = vpop.f32.mrb[0].mxu0
        %v5421 = vadd.f32 0.0, %v5420
        %v5422 = vpop.f32.mrb[0].mxu0
        %5423 = vmatprep.mubr.bf16.mxu0 0
        %5424 = vmatmul.mubr.bf16.gmra.mrb[0].mxu0 %v5269
        %v5425 = vpop.f32.mrb[0].mxu0
        %v5426 = vadd.f32 0.0, %v5425
        %v5427 = vpop.f32.mrb[0].mxu0
        %v5428 = vpop.f32.mrb[0].mxu0
        %v5429 = vadd.f32 0.0, %v5428
        %v5430 = vpop.f32.mrb[0].mxu0
        %5431 = vdwg.mxu0
        %v5444 = vunpack.c.l.b16 %v4639
        %v5445 = vunpack.c.l.b16 %v4640
        %v5446 = vunpack.c.l.b16 %v4641
        %v5447 = vunpack.c.l.b16 %v4642
        %v5448 = vunpack.c.l.b16 %v4643
        %v5449 = vunpack.c.l.b16 %v4644
        %v5450 = vunpack.c.l.b16 %v4645
        %v5451 = vunpack.c.l.b16 %v4646
        %v5452 = vunpack.c.l.b16 %v4647
        %v5453 = vunpack.c.l.b16 %v4648
        %v5454 = vunpack.c.l.b16 %v4649
        %v5455 = vunpack.c.l.b16 %v4650
        %v5456 = vpack.c.b16 %v5445, %v5444
        %v5457 = vpack.c.b16 %v5447, %v5446
        %v5458 = vpack.c.b16 %v5449, %v5448
        %v5459 = vpack.c.b16 %v5451, %v5450
        %v5460 = vpack.c.b16 %v5453, %v5452
        %v5461 = vpack.c.b16 %v5455, %v5454
        %v5469 = vsel %vm2398, %v5141, 0
        %5471 = vmatprep.subr.bf16.mxu0 0
        %5472 = vmatpush1.bf16.msra.mxu0 %v5456
        %5473 = vmatprep.subr.bf16.mxu0 0
        %5474 = vmatpush1.bf16.msra.mxu0 %v5457
        %5475 = vmatprep.subr.bf16.mxu0 0
        %5476 = vmatpush1.bf16.msra.mxu0 %v5458
        %5477 = vmatprep.subr.bf16.mxu0 0
        %5478 = vmatpush1.bf16.msra.mxu0 %v5459
        %5479 = vmatprep.subr.bf16.mxu0 0
        %5480 = vmatpush1.bf16.msra.mxu0 %v5460
        %5481 = vmatprep.subr.bf16.mxu0 0
        %5482 = vmatpush1.bf16.msra.mxu0 %v5461
        %5483 = vmatprep.subr.bf16.mxu0 0
        %5484 = vmatpush1.bf16.msra.mxu0 0
        %5485 = vmatprep.subr.bf16.mxu0 0
        %5486 = vmatpush1.bf16.msra.mxu0 0
        %5487 = vmatprep.subr.bf16.mxu0 0
        %5488 = vmatpush1.bf16.msra.mxu0 0
        %5489 = vmatprep.subr.bf16.mxu0 0
        %5490 = vmatpush1.bf16.msra.mxu0 0
        %5491 = vmatprep.subr.bf16.mxu0 0
        %5492 = vmatpush1.bf16.msra.mxu0 0
        %5493 = vmatprep.subr.bf16.mxu0 0
        %5494 = vmatpush1.bf16.msra.mxu0 0
        %5495 = vmatprep.subr.bf16.mxu0 0
        %5496 = vmatpush1.bf16.msra.mxu0 0
        %5497 = vmatprep.subr.bf16.mxu0 0
        %5498 = vmatpush1.bf16.msra.mxu0 0
        %5499 = vmatprep.subr.bf16.mxu0 0
        %5500 = vmatpush1.bf16.msra.mxu0 0
        %5501 = vmatprep.subr.bf16.mxu0 0
        %5502 = vmatpush1.bf16.msra.mxu0 0
        %5503 = vmatprep.mubr.bf16.mxu0 0
        %5504 = vmatmul.mubr.bf16.gmra.mrb[0].mxu0 %v5469
        %v5505 = vpop.f32.mrb[0].mxu0
        %v5506 = vadd.f32 %v5306, %v5505
        %v5507 = vpop.f32.mrb[0].mxu0
        %v5508 = vpop.f32.mrb[0].mxu0
        %v5509 = vadd.f32 %v5309, %v5508
        %v5510 = vpop.f32.mrb[0].mxu0
        %5511 = vmatprep.mubr.bf16.mxu0 0
        %5512 = vmatmul.mubr.bf16.gmra.mrb[0].mxu0 %v5224
        %v5513 = vpop.f32.mrb[0].mxu0
        %v5514 = vadd.f32 %v5314, %v5513
        %v5515 = vpop.f32.mrb[0].mxu0
        %v5516 = vpop.f32.mrb[0].mxu0
        %v5517 = vadd.f32 %v5317, %v5516
        %v5518 = vpop.f32.mrb[0].mxu0
        %5519 = vmatprep.mubr.bf16.mxu0 0
        %5520 = vmatmul.mubr.bf16.gmra.mrb[0].mxu0 %v5227
        %v5521 = vpop.f32.mrb[0].mxu0
        %v5522 = vadd.f32 %v5322, %v5521
        %v5523 = vpop.f32.mrb[0].mxu0
        %v5524 = vpop.f32.mrb[0].mxu0
        %v5525 = vadd.f32 %v5325, %v5524
        %v5526 = vpop.f32.mrb[0].mxu0
        %5527 = vmatprep.mubr.bf16.mxu0 0
        %5528 = vmatmul.mubr.bf16.gmra.mrb[0].mxu0 %v5230
        %v5529 = vpop.f32.mrb[0].mxu0
        %v5530 = vadd.f32 %v5330, %v5529
        %v5531 = vpop.f32.mrb[0].mxu0
        %v5532 = vpop.f32.mrb[0].mxu0
        %v5533 = vadd.f32 %v5333, %v5532
        %v5534 = vpop.f32.mrb[0].mxu0
        %5535 = vmatprep.mubr.bf16.mxu0 0
        %5536 = vmatmul.mubr.bf16.gmra.mrb[0].mxu0 %v5233
        %v5537 = vpop.f32.mrb[0].mxu0
        %v5538 = vadd.f32 %v5338, %v5537
        %v5539 = vpop.f32.mrb[0].mxu0
        %v5540 = vpop.f32.mrb[0].mxu0
        %v5541 = vadd.f32 %v5341, %v5540
        %v5542 = vpop.f32.mrb[0].mxu0
        %5543 = vmatprep.mubr.bf16.mxu0 0
        %5544 = vmatmul.mubr.bf16.gmra.mrb[0].mxu0 %v5236
        %v5545 = vpop.f32.mrb[0].mxu0
        %v5546 = vadd.f32 %v5346, %v5545
        %v5547 = vpop.f32.mrb[0].mxu0
        %v5548 = vpop.f32.mrb[0].mxu0
        %v5549 = vadd.f32 %v5349, %v5548
        %v5550 = vpop.f32.mrb[0].mxu0
        %5551 = vmatprep.mubr.bf16.mxu0 0
        %5552 = vmatmul.mubr.bf16.gmra.mrb[0].mxu0 %v5239
        %v5553 = vpop.f32.mrb[0].mxu0
        %v5554 = vadd.f32 %v5354, %v5553
        %v5555 = vpop.f32.mrb[0].mxu0
        %v5556 = vpop.f32.mrb[0].mxu0
        %v5557 = vadd.f32 %v5357, %v5556
        %v5558 = vpop.f32.mrb[0].mxu0
        %5559 = vmatprep.mubr.bf16.mxu0 0
        %5560 = vmatmul.mubr.bf16.gmra.mrb[0].mxu0 %v5242
        %v5561 = vpop.f32.mrb[0].mxu0
        %v5562 = vadd.f32 %v5362, %v5561
        %v5563 = vpop.f32.mrb[0].mxu0
        %v5564 = vpop.f32.mrb[0].mxu0
        %v5565 = vadd.f32 %v5365, %v5564
        %v5566 = vpop.f32.mrb[0].mxu0
        %5567 = vmatprep.mubr.bf16.mxu0 0
        %5568 = vmatmul.mubr.bf16.gmra.mrb[0].mxu0 %v5245
        %v5569 = vpop.f32.mrb[0].mxu0
        %v5570 = vadd.f32 %v5370, %v5569
        %v5571 = vpop.f32.mrb[0].mxu0
        %v5572 = vpop.f32.mrb[0].mxu0
        %v5573 = vadd.f32 %v5373, %v5572
        %v5574 = vpop.f32.mrb[0].mxu0
        %5575 = vmatprep.mubr.bf16.mxu0 0
        %5576 = vmatmul.mubr.bf16.gmra.mrb[0].mxu0 %v5248
        %v5577 = vpop.f32.mrb[0].mxu0
        %v5578 = vadd.f32 %v5378, %v5577
        %v5579 = vpop.f32.mrb[0].mxu0
        %v5580 = vpop.f32.mrb[0].mxu0
        %v5581 = vadd.f32 %v5381, %v5580
        %v5582 = vpop.f32.mrb[0].mxu0
        %5583 = vmatprep.mubr.bf16.mxu0 0
        %5584 = vmatmul.mubr.bf16.gmra.mrb[0].mxu0 %v5251
        %v5585 = vpop.f32.mrb[0].mxu0
        %v5586 = vadd.f32 %v5386, %v5585
        %v5587 = vpop.f32.mrb[0].mxu0
        %v5588 = vpop.f32.mrb[0].mxu0
        %v5589 = vadd.f32 %v5389, %v5588
        %v5590 = vpop.f32.mrb[0].mxu0
        %5591 = vmatprep.mubr.bf16.mxu0 0
        %5592 = vmatmul.mubr.bf16.gmra.mrb[0].mxu0 %v5254
        %v5593 = vpop.f32.mrb[0].mxu0
        %v5594 = vadd.f32 %v5394, %v5593
        %v5595 = vpop.f32.mrb[0].mxu0
        %v5596 = vpop.f32.mrb[0].mxu0
        %v5597 = vadd.f32 %v5397, %v5596
        %v5598 = vpop.f32.mrb[0].mxu0
        %5599 = vmatprep.mubr.bf16.mxu0 0
        %5600 = vmatmul.mubr.bf16.gmra.mrb[0].mxu0 %v5257
        %v5601 = vpop.f32.mrb[0].mxu0
        %v5602 = vadd.f32 %v5402, %v5601
        %v5603 = vpop.f32.mrb[0].mxu0
        %v5604 = vpop.f32.mrb[0].mxu0
        %v5605 = vadd.f32 %v5405, %v5604
        %v5606 = vpop.f32.mrb[0].mxu0
        %5607 = vmatprep.mubr.bf16.mxu0 0
        %5608 = vmatmul.mubr.bf16.gmra.mrb[0].mxu0 %v5260
        %v5609 = vpop.f32.mrb[0].mxu0
        %v5610 = vadd.f32 %v5410, %v5609
        %v5611 = vpop.f32.mrb[0].mxu0
        %v5612 = vpop.f32.mrb[0].mxu0
        %v5613 = vadd.f32 %v5413, %v5612
        %v5614 = vpop.f32.mrb[0].mxu0
        %5615 = vmatprep.mubr.bf16.mxu0 0
        %5616 = vmatmul.mubr.bf16.gmra.mrb[0].mxu0 %v5263
        %v5617 = vpop.f32.mrb[0].mxu0
        %v5618 = vadd.f32 %v5418, %v5617
        %v5619 = vpop.f32.mrb[0].mxu0
        %v5620 = vpop.f32.mrb[0].mxu0
        %v5621 = vadd.f32 %v5421, %v5620
        %v5622 = vpop.f32.mrb[0].mxu0
        %5623 = vmatprep.mubr.bf16.mxu0 0
        %5624 = vmatmul.mubr.bf16.gmra.mrb[0].mxu0 %v5266
        %v5625 = vpop.f32.mrb[0].mxu0
        %v5626 = vadd.f32 %v5426, %v5625
        %v5627 = vpop.f32.mrb[0].mxu0
        %v5628 = vpop.f32.mrb[0].mxu0
        %v5629 = vadd.f32 %v5429, %v5628
        %v5630 = vpop.f32.mrb[0].mxu0
        %5631 = vdwg.mxu0
        %v5635 = vrot.slane %v4635, 1
        %v5636 = vrot.slane %v4636, 1
        %v5637 = vsel %vm564, %v5635, %v5636
        %v5638 = vrot.slane %v4637, 1
        %v5639 = vsel %vm564, %v5636, %v5638
        %5640 = vrot.lane.b32.xlu0 %v5637, 32
        %v5641 = vpop.permute.xlu0 %5640
        %5642 = vrot.lane.b32.xlu0 %v5639, 32
        %v5643 = vpop.permute.xlu0 %5642
        %v5646 = vrot.slane %v4635, 2
        %v5647 = vrot.slane %v4636, 2
        %v5648 = vsel %vm741, %v5646, %v5647
        %v5649 = vrot.slane %v4637, 2
        %v5650 = vsel %vm741, %v5647, %v5649
        %5651 = vrot.lane.b32.xlu0 %v5648, 64
        %v5652 = vpop.permute.xlu0 %5651
        %5653 = vrot.lane.b32.xlu0 %v5650, 64
        %v5654 = vpop.permute.xlu0 %5653
        %v5657 = vsel %vm334, %v4635, %v5641
        %v5658 = vsel %vm334, %v4636, %v5643
        %v5659 = vsel %vm2283, %v5657, %v5652
        %v5660 = vsel %vm2283, %v5658, %v5654
        %v5661 = vpack.c.bf16 %v5660, %v5659
        %v5674 = vunpack.c.l.b16 %v4663
        %v5675 = vunpack.c.l.b16 %v4664
        %v5676 = vunpack.c.l.b16 %v4665
        %v5677 = vunpack.c.l.b16 %v4666
        %v5678 = vunpack.c.l.b16 %v4667
        %v5679 = vunpack.c.l.b16 %v4668
        %v5680 = vunpack.c.l.b16 %v4669
        %v5681 = vunpack.c.l.b16 %v4670
        %v5682 = vunpack.c.l.b16 %v4671
        %v5683 = vunpack.c.l.b16 %v4672
        %v5684 = vunpack.c.l.b16 %v4673
        %v5685 = vunpack.c.l.b16 %v4674
        %v5686 = vpack.c.b16 %v5675, %v5674
        %v5687 = vpack.c.b16 %v5677, %v5676
        %v5688 = vpack.c.b16 %v5679, %v5678
        %v5689 = vpack.c.b16 %v5681, %v5680
        %v5690 = vpack.c.b16 %v5683, %v5682
        %v5691 = vpack.c.b16 %v5685, %v5684
        %v5699 = vsel %vm2398, %v5661, 0
        %5701 = vmatprep.subr.bf16.mxu0 0
        %5702 = vmatpush1.bf16.msra.mxu0 %v5686
        %5703 = vmatprep.subr.bf16.mxu0 0
        %5704 = vmatpush1.bf16.msra.mxu0 %v5687
        %5705 = vmatprep.subr.bf16.mxu0 0
        %5706 = vmatpush1.bf16.msra.mxu0 %v5688
        %5707 = vmatprep.subr.bf16.mxu0 0
        %5708 = vmatpush1.bf16.msra.mxu0 %v5689
        %5709 = vmatprep.subr.bf16.mxu0 0
        %5710 = vmatpush1.bf16.msra.mxu0 %v5690
        %5711 = vmatprep.subr.bf16.mxu0 0
        %5712 = vmatpush1.bf16.msra.mxu0 %v5691
        %5713 = vmatprep.subr.bf16.mxu0 0
        %5714 = vmatpush1.bf16.msra.mxu0 0
        %5715 = vmatprep.subr.bf16.mxu0 0
        %5716 = vmatpush1.bf16.msra.mxu0 0
        %5717 = vmatprep.subr.bf16.mxu0 0
        %5718 = vmatpush1.bf16.msra.mxu0 0
        %5719 = vmatprep.subr.bf16.mxu0 0
        %5720 = vmatpush1.bf16.msra.mxu0 0
        %5721 = vmatprep.subr.bf16.mxu0 0
        %5722 = vmatpush1.bf16.msra.mxu0 0
        %5723 = vmatprep.subr.bf16.mxu0 0
        %5724 = vmatpush1.bf16.msra.mxu0 0
        %5725 = vmatprep.subr.bf16.mxu0 0
        %5726 = vmatpush1.bf16.msra.mxu0 0
        %5727 = vmatprep.subr.bf16.mxu0 0
        %5728 = vmatpush1.bf16.msra.mxu0 0
        %5729 = vmatprep.subr.bf16.mxu0 0
        %5730 = vmatpush1.bf16.msra.mxu0 0
        %5731 = vmatprep.subr.bf16.mxu0 0
        %5732 = vmatpush1.bf16.msra.mxu0 0
        %5733 = vmatprep.mubr.bf16.mxu0 0
        %5734 = vmatmul.mubr.bf16.gmra.mrb[0].mxu0 %v5227
        %v5735 = vpop.f32.mrb[0].mxu0
        %v5736 = vadd.f32 0.0, %v5735
        %v5737 = vpop.f32.mrb[0].mxu0
        %v5738 = vpop.f32.mrb[0].mxu0
        %v5739 = vadd.f32 0.0, %v5738
        %v5740 = vpop.f32.mrb[0].mxu0
        %5741 = vmatprep.mubr.bf16.mxu0 0
        %5742 = vmatmul.mubr.bf16.gmra.mrb[0].mxu0 %v5230
        %v5743 = vpop.f32.mrb[0].mxu0
        %v5744 = vadd.f32 0.0, %v5743
        %v5745 = vpop.f32.mrb[0].mxu0
        %v5746 = vpop.f32.mrb[0].mxu0
        %v5747 = vadd.f32 0.0, %v5746
        %v5748 = vpop.f32.mrb[0].mxu0
        %5749 = vmatprep.mubr.bf16.mxu0 0
        %5750 = vmatmul.mubr.bf16.gmra.mrb[0].mxu0 %v5233
        %v5751 = vpop.f32.mrb[0].mxu0
        %v5752 = vadd.f32 0.0, %v5751
        %v5753 = vpop.f32.mrb[0].mxu0
        %v5754 = vpop.f32.mrb[0].mxu0
        %v5755 = vadd.f32 0.0, %v5754
        %v5756 = vpop.f32.mrb[0].mxu0
        %5757 = vmatprep.mubr.bf16.mxu0 0
        %5758 = vmatmul.mubr.bf16.gmra.mrb[0].mxu0 %v5236
        %v5759 = vpop.f32.mrb[0].mxu0
        %v5760 = vadd.f32 0.0, %v5759
        %v5761 = vpop.f32.mrb[0].mxu0
        %v5762 = vpop.f32.mrb[0].mxu0
        %v5763 = vadd.f32 0.0, %v5762
        %v5764 = vpop.f32.mrb[0].mxu0
        %5765 = vmatprep.mubr.bf16.mxu0 0
        %5766 = vmatmul.mubr.bf16.gmra.mrb[0].mxu0 %v5239
        %v5767 = vpop.f32.mrb[0].mxu0
        %v5768 = vadd.f32 0.0, %v5767
        %v5769 = vpop.f32.mrb[0].mxu0
        %v5770 = vpop.f32.mrb[0].mxu0
        %v5771 = vadd.f32 0.0, %v5770
        %v5772 = vpop.f32.mrb[0].mxu0
        %5773 = vmatprep.mubr.bf16.mxu0 0
        %5774 = vmatmul.mubr.bf16.gmra.mrb[0].mxu0 %v5242
        %v5775 = vpop.f32.mrb[0].mxu0
        %v5776 = vadd.f32 0.0, %v5775
        %v5777 = vpop.f32.mrb[0].mxu0
        %v5778 = vpop.f32.mrb[0].mxu0
        %v5779 = vadd.f32 0.0, %v5778
        %v5780 = vpop.f32.mrb[0].mxu0
        %5781 = vmatprep.mubr.bf16.mxu0 0
        %5782 = vmatmul.mubr.bf16.gmra.mrb[0].mxu0 %v5245
        %v5783 = vpop.f32.mrb[0].mxu0
        %v5784 = vadd.f32 0.0, %v5783
        %v5785 = vpop.f32.mrb[0].mxu0
        %v5786 = vpop.f32.mrb[0].mxu0
        %v5787 = vadd.f32 0.0, %v5786
        %v5788 = vpop.f32.mrb[0].mxu0
        %5789 = vmatprep.mubr.bf16.mxu0 0
        %5790 = vmatmul.mubr.bf16.gmra.mrb[0].mxu0 %v5248
        %v5791 = vpop.f32.mrb[0].mxu0
        %v5792 = vadd.f32 0.0, %v5791
        %v5793 = vpop.f32.mrb[0].mxu0
        %v5794 = vpop.f32.mrb[0].mxu0
        %v5795 = vadd.f32 0.0, %v5794
        %v5796 = vpop.f32.mrb[0].mxu0
        %5797 = vmatprep.mubr.bf16.mxu0 0
        %5798 = vmatmul.mubr.bf16.gmra.mrb[0].mxu0 %v5251
        %v5799 = vpop.f32.mrb[0].mxu0
        %v5800 = vadd.f32 0.0, %v5799
        %v5801 = vpop.f32.mrb[0].mxu0
        %v5802 = vpop.f32.mrb[0].mxu0
        %v5803 = vadd.f32 0.0, %v5802
        %v5804 = vpop.f32.mrb[0].mxu0
        %5805 = vmatprep.mubr.bf16.mxu0 0
        %5806 = vmatmul.mubr.bf16.gmra.mrb[0].mxu0 %v5254
        %v5807 = vpop.f32.mrb[0].mxu0
        %v5808 = vadd.f32 0.0, %v5807
        %v5809 = vpop.f32.mrb[0].mxu0
        %v5810 = vpop.f32.mrb[0].mxu0
        %v5811 = vadd.f32 0.0, %v5810
        %v5812 = vpop.f32.mrb[0].mxu0
        %5813 = vmatprep.mubr.bf16.mxu0 0
        %5814 = vmatmul.mubr.bf16.gmra.mrb[0].mxu0 %v5257
        %v5815 = vpop.f32.mrb[0].mxu0
        %v5816 = vadd.f32 0.0, %v5815
        %v5817 = vpop.f32.mrb[0].mxu0
        %v5818 = vpop.f32.mrb[0].mxu0
        %v5819 = vadd.f32 0.0, %v5818
        %v5820 = vpop.f32.mrb[0].mxu0
        %5821 = vmatprep.mubr.bf16.mxu0 0
        %5822 = vmatmul.mubr.bf16.gmra.mrb[0].mxu0 %v5260
        %v5823 = vpop.f32.mrb[0].mxu0
        %v5824 = vadd.f32 0.0, %v5823
        %v5825 = vpop.f32.mrb[0].mxu0
        %v5826 = vpop.f32.mrb[0].mxu0
        %v5827 = vadd.f32 0.0, %v5826
        %v5828 = vpop.f32.mrb[0].mxu0
        %5829 = vmatprep.mubr.bf16.mxu0 0
        %5830 = vmatmul.mubr.bf16.gmra.mrb[0].mxu0 %v5263
        %v5831 = vpop.f32.mrb[0].mxu0
        %v5832 = vadd.f32 0.0, %v5831
        %v5833 = vpop.f32.mrb[0].mxu0
        %v5834 = vpop.f32.mrb[0].mxu0
        %v5835 = vadd.f32 0.0, %v5834
        %v5836 = vpop.f32.mrb[0].mxu0
        %5837 = vmatprep.mubr.bf16.mxu0 0
        %5838 = vmatmul.mubr.bf16.gmra.mrb[0].mxu0 %v5266
        %v5839 = vpop.f32.mrb[0].mxu0
        %v5840 = vadd.f32 0.0, %v5839
        %v5841 = vpop.f32.mrb[0].mxu0
        %v5842 = vpop.f32.mrb[0].mxu0
        %v5843 = vadd.f32 0.0, %v5842
        %v5844 = vpop.f32.mrb[0].mxu0
        %5845 = vmatprep.mubr.bf16.mxu0 0
        %5846 = vmatmul.mubr.bf16.gmra.mrb[0].mxu0 %v5269
        %v5847 = vpop.f32.mrb[0].mxu0
        %v5848 = vadd.f32 0.0, %v5847
        %v5849 = vpop.f32.mrb[0].mxu0
        %v5850 = vpop.f32.mrb[0].mxu0
        %v5851 = vadd.f32 0.0, %v5850
        %v5852 = vpop.f32.mrb[0].mxu0
        %5853 = vmatprep.mubr.bf16.mxu0 0
        %5854 = vmatmul.mubr.bf16.gmra.mrb[0].mxu0 %v5699
        %v5855 = vpop.f32.mrb[0].mxu0
        %v5856 = vadd.f32 0.0, %v5855
        %v5857 = vpop.f32.mrb[0].mxu0
        %v5858 = vpop.f32.mrb[0].mxu0
        %v5859 = vadd.f32 0.0, %v5858
        %v5860 = vpop.f32.mrb[0].mxu0
        %5861 = vdwg.mxu0
        %v5862 = vadd.f32 %v5506, %v5736
        %v5863 = vadd.f32 %v5509, %v5739
        %v5864 = vadd.f32 %v5514, %v5744
        %v5865 = vadd.f32 %v5517, %v5747
        %v5866 = vadd.f32 %v5522, %v5752
        %v5867 = vadd.f32 %v5525, %v5755
        %v5868 = vadd.f32 %v5530, %v5760
        %v5869 = vadd.f32 %v5533, %v5763
        %v5870 = vadd.f32 %v5538, %v5768
        %v5871 = vadd.f32 %v5541, %v5771
        %v5872 = vadd.f32 %v5546, %v5776
        %v5873 = vadd.f32 %v5549, %v5779
        %v5874 = vadd.f32 %v5554, %v5784
        %v5875 = vadd.f32 %v5557, %v5787
        %v5876 = vadd.f32 %v5562, %v5792
        %v5877 = vadd.f32 %v5565, %v5795
        %v5878 = vadd.f32 %v5570, %v5800
        %v5879 = vadd.f32 %v5573, %v5803
        %v5880 = vadd.f32 %v5578, %v5808
        %v5881 = vadd.f32 %v5581, %v5811
        %v5882 = vadd.f32 %v5586, %v5816
        %v5883 = vadd.f32 %v5589, %v5819
        %v5884 = vadd.f32 %v5594, %v5824
        %v5885 = vadd.f32 %v5597, %v5827
        %v5886 = vadd.f32 %v5602, %v5832
        %v5887 = vadd.f32 %v5605, %v5835
        %v5888 = vadd.f32 %v5610, %v5840
        %v5889 = vadd.f32 %v5613, %v5843
        %v5890 = vadd.f32 %v5618, %v5848
        %v5891 = vadd.f32 %v5621, %v5851
        %v5892 = vadd.f32 %v5626, %v5856
        %v5893 = vadd.f32 %v5629, %v5859
        %v5895 = vlaneseq
        %v5896 = vshrl.u32 %v5895, 7
        %v5897 = vsub.s32 0, %v5896
        %v5898 = vrot.slane %v4676, %v5897
        %v5900 = vadd.f32 %v5862, %v5898
        %v5901 = vadd.f32 %v5863, %v5898
        %v5902 = vadd.f32 %v5864, %v5898
        %v5903 = vadd.f32 %v5865, %v5898
        %v5904 = vadd.f32 %v5866, %v5898
        %v5905 = vadd.f32 %v5867, %v5898
        %v5906 = vadd.f32 %v5868, %v5898
        %v5907 = vadd.f32 %v5869, %v5898
        %v5908 = vadd.f32 %v5870, %v5898
        %v5909 = vadd.f32 %v5871, %v5898
        %v5910 = vadd.f32 %v5872, %v5898
        %v5911 = vadd.f32 %v5873, %v5898
        %v5912 = vadd.f32 %v5874, %v5898
        %v5913 = vadd.f32 %v5875, %v5898
        %v5914 = vadd.f32 %v5876, %v5898
        %v5915 = vadd.f32 %v5877, %v5898
        %v5916 = vadd.f32 %v5878, %v5898
        %v5917 = vadd.f32 %v5879, %v5898
        %v5918 = vadd.f32 %v5880, %v5898
        %v5919 = vadd.f32 %v5881, %v5898
        %v5920 = vadd.f32 %v5882, %v5898
        %v5921 = vadd.f32 %v5883, %v5898
        %v5922 = vadd.f32 %v5884, %v5898
        %v5923 = vadd.f32 %v5885, %v5898
        %v5924 = vadd.f32 %v5886, %v5898
        %v5925 = vadd.f32 %v5887, %v5898
        %v5926 = vadd.f32 %v5888, %v5898
        %v5927 = vadd.f32 %v5889, %v5898
        %v5928 = vadd.f32 %v5890, %v5898
        %v5929 = vadd.f32 %v5891, %v5898
        %v5930 = vadd.f32 %v5892, %v5898
        %v5931 = vadd.f32 %v5893, %v5898
        %v5932 = vmax.f32 %v5900, 0.0
        %v5933 = vmax.f32 %v5901, 0.0
        %v5934 = vmax.f32 %v5902, 0.0
        %v5935 = vmax.f32 %v5903, 0.0
        %v5936 = vmax.f32 %v5904, 0.0
        %v5937 = vmax.f32 %v5905, 0.0
        %v5938 = vmax.f32 %v5906, 0.0
        %v5939 = vmax.f32 %v5907, 0.0
        %v5940 = vmax.f32 %v5908, 0.0
        %v5941 = vmax.f32 %v5909, 0.0
        %v5942 = vmax.f32 %v5910, 0.0
        %v5943 = vmax.f32 %v5911, 0.0
        %v5944 = vmax.f32 %v5912, 0.0
        %v5945 = vmax.f32 %v5913, 0.0
        %v5946 = vmax.f32 %v5914, 0.0
        %v5947 = vmax.f32 %v5915, 0.0
        %v5948 = vmax.f32 %v5916, 0.0
        %v5949 = vmax.f32 %v5917, 0.0
        %v5950 = vmax.f32 %v5918, 0.0
        %v5951 = vmax.f32 %v5919, 0.0
        %v5952 = vmax.f32 %v5920, 0.0
        %v5953 = vmax.f32 %v5921, 0.0
        %v5954 = vmax.f32 %v5922, 0.0
        %v5955 = vmax.f32 %v5923, 0.0
        %v5956 = vmax.f32 %v5924, 0.0
        %v5957 = vmax.f32 %v5925, 0.0
        %v5958 = vmax.f32 %v5926, 0.0
        %v5959 = vmax.f32 %v5927, 0.0
        %v5960 = vmax.f32 %v5928, 0.0
        %v5961 = vmax.f32 %v5929, 0.0
        %v5962 = vmax.f32 %v5930, 0.0
        %v5963 = vmax.f32 %v5931, 0.0
        %5964 = vst.msk [vmem:[%s1727 + $0x1] sm:$0xff] %vm334, %v5932
        %5965 = vst.msk [vmem:[%s1727 + $0x9] sm:$0xff] %vm334, %v5933
        %5966 = vst.msk [vmem:[%s1727 + $0x19] sm:$0xff] %vm334, %v5934
        %5967 = vst.msk [vmem:[%s1727 + $0x21] sm:$0xff] %vm334, %v5935
        %5968 = vst.msk [vmem:[%s1727 + $0x31] sm:$0xff] %vm334, %v5936
        %5969 = vst.msk [vmem:[%s1727 + $0x39] sm:$0xff] %vm334, %v5937
        %5970 = vst.msk [vmem:[%s1727 + $0x49] sm:$0xff] %vm334, %v5938
        %5971 = vst.msk [vmem:[%s1727 + $0x51] sm:$0xff] %vm334, %v5939
        %5972 = vst.msk [vmem:[%s1727 + $0x61] sm:$0xff] %vm334, %v5940
        %5973 = vst.msk [vmem:[%s1727 + $0x69] sm:$0xff] %vm334, %v5941
        %5974 = vst.msk [vmem:[%s1727 + $0x79] sm:$0xff] %vm334, %v5942
        %5975 = vst.msk [vmem:[%s1727 + $0x81] sm:$0xff] %vm334, %v5943
        %5976 = vst.msk [vmem:[%s1727 + $0x91] sm:$0xff] %vm334, %v5944
        %5977 = vst.msk [vmem:[%s1727 + $0x99] sm:$0xff] %vm334, %v5945
        %5978 = vst.msk [vmem:[%s1727 + $0xa9] sm:$0xff] %vm334, %v5946
        %5979 = vst.msk [vmem:[%s1727 + $0xb1] sm:$0xff] %vm334, %v5947
        %5980 = vst.msk [vmem:[%s1727 + $0xc1] sm:$0xff] %vm334, %v5948
        %5981 = vst.msk [vmem:[%s1727 + $0xc9] sm:$0xff] %vm334, %v5949
        %5982 = vst.msk [vmem:[%s1727 + $0xd9] sm:$0xff] %vm334, %v5950
        %5983 = vst.msk [vmem:[%s1727 + $0xe1] sm:$0xff] %vm334, %v5951
        %5984 = vst.msk [vmem:[%s1727 + $0xf1] sm:$0xff] %vm334, %v5952
        %5985 = vst.msk [vmem:[%s1727 + $0xf9] sm:$0xff] %vm334, %v5953
        %5986 = vst.msk [vmem:[%s1727 + $0x109] sm:$0xff] %vm334, %v5954
        %5987 = vst.msk [vmem:[%s1727 + $0x111] sm:$0xff] %vm334, %v5955
        %5988 = vst.msk [vmem:[%s1727 + $0x121] sm:$0xff] %vm334, %v5956
        %5989 = vst.msk [vmem:[%s1727 + $0x129] sm:$0xff] %vm334, %v5957
        %5990 = vst.msk [vmem:[%s1727 + $0x139] sm:$0xff] %vm334, %v5958
        %5991 = vst.msk [vmem:[%s1727 + $0x141] sm:$0xff] %vm334, %v5959
        %5992 = vst.msk [vmem:[%s1727 + $0x151] sm:$0xff] %vm334, %v5960
        %5993 = vst.msk [vmem:[%s1727 + $0x159] sm:$0xff] %vm334, %v5961
        %5994 = vst.msk [vmem:[%s1727 + $0x169] sm:$0xff] %vm334, %v5962
        %5995 = vst.msk [vmem:[%s1727 + $0x171] sm:$0xff] %vm334, %v5963
        %v5996 = vld [vmem:[#allocation3] sm:$0xff]
        %v5997 = vld [vmem:[#allocation3 + $0x8] sm:$0xff]
        %v5998 = vld [vmem:[#allocation3 + $0x10] sm:$0x3]
        %v5999 = vld [vmem:[#allocation3 + $0x18] sm:$0xff]
        %v6000 = vld [vmem:[#allocation3 + $0x20] sm:$0xff]
        %v6001 = vld [vmem:[#allocation3 + $0x28] sm:$0x3]
        %v6002 = vld [vmem:[#allocation3 + $0x30] sm:$0xff]
        %v6003 = vld [vmem:[#allocation3 + $0x38] sm:$0xff]
        %v6004 = vld [vmem:[#allocation3 + $0x40] sm:$0x3]
        %v6005 = vld [vmem:[#allocation3 + $0x48] sm:$0xff]
        %v6006 = vld [vmem:[#allocation3 + $0x50] sm:$0xff]
        %v6007 = vld [vmem:[#allocation3 + $0x58] sm:$0x3]
        %v6008 = vld [vmem:[#allocation3 + $0x60] sm:$0xff]
        %v6009 = vld [vmem:[#allocation3 + $0x68] sm:$0xff]
        %v6010 = vld [vmem:[#allocation3 + $0x70] sm:$0x3]
        %v6011 = vld [vmem:[#allocation3 + $0x78] sm:$0xff]
        %v6012 = vld [vmem:[#allocation3 + $0x80] sm:$0xff]
        %v6013 = vld [vmem:[#allocation3 + $0x88] sm:$0x3]
        %v6014 = vld [vmem:[#allocation3 + $0x90] sm:$0xff]
        %v6015 = vld [vmem:[#allocation3 + $0x98] sm:$0xff]
        %v6016 = vld [vmem:[#allocation3 + $0xa0] sm:$0x3]
        %v6017 = vld [vmem:[#allocation3 + $0xa8] sm:$0xff]
        %v6018 = vld [vmem:[#allocation3 + $0xb0] sm:$0xff]
        %v6019 = vld [vmem:[#allocation3 + $0xb8] sm:$0x3]
        %v6020 = vld [vmem:[#allocation3 + $0xc0] sm:$0xff]
        %v6021 = vld [vmem:[#allocation3 + $0xc8] sm:$0xff]
        %v6022 = vld [vmem:[#allocation3 + $0xd0] sm:$0x3]
        %v6023 = vld [vmem:[#allocation3 + $0xd8] sm:$0xff]
        %v6024 = vld [vmem:[#allocation3 + $0xe0] sm:$0xff]
        %v6025 = vld [vmem:[#allocation3 + $0xe8] sm:$0x3]
        %v6026 = vld [vmem:[#allocation3 + $0xf0] sm:$0xff]
        %v6027 = vld [vmem:[#allocation3 + $0xf8] sm:$0xff]
        %v6028 = vld [vmem:[#allocation3 + $0x100] sm:$0x3]
        %v6029 = vld [vmem:[#allocation3 + $0x108] sm:$0xff]
        %v6030 = vld [vmem:[#allocation3 + $0x110] sm:$0xff]
        %v6031 = vld [vmem:[#allocation3 + $0x118] sm:$0x3]
        %v6032 = vld [vmem:[#allocation3 + $0x120] sm:$0xff]
        %v6033 = vld [vmem:[#allocation3 + $0x128] sm:$0xff]
        %v6034 = vld [vmem:[#allocation3 + $0x130] sm:$0x3]
        %v6035 = vld [vmem:[#allocation3 + $0x138] sm:$0xff]
        %v6036 = vld [vmem:[#allocation3 + $0x140] sm:$0xff]
        %v6037 = vld [vmem:[#allocation3 + $0x148] sm:$0x3]
        %v6038 = vld [vmem:[#allocation3 + $0x150] sm:$0xff]
        %v6039 = vld [vmem:[#allocation3 + $0x158] sm:$0xff]
        %v6040 = vld [vmem:[#allocation3 + $0x160] sm:$0x3]
        %v6041 = vld [vmem:[#allocation3 + $0x168] sm:$0xff]
        %v6042 = vld [vmem:[#allocation3 + $0x170] sm:$0xff]
        %v6043 = vld [vmem:[#allocation3 + $0x178] sm:$0x3]
        %v6044 = vld [vmem:[#allocation3 + $0x180] sm:$0xff]
        %v6045 = vld [vmem:[#allocation3 + $0x188] sm:$0xff]
        %v6046 = vld [vmem:[#allocation3 + $0x190] sm:$0x3]
        %v6047 = vld [vmem:[#allocation3 + $0x198] sm:$0xff]
        %v6048 = vld [vmem:[#allocation3 + $0x1a0] sm:$0xff]
        %v6049 = vld [vmem:[#allocation3 + $0x1a8] sm:$0x3]
        %s6050 = scalar_lea.vmem %s3, 432
        %v6051 = vld [vmem:[%s6050] sm:$0xf]
        %v6052 = vld [vmem:[%s6050 + $0x4] sm:$0xf]
        %v6053 = vld [vmem:[%s6050 + $0x8] sm:$0xf]
        %v6054 = vld [vmem:[%s6050 + $0xc] sm:$0xf]
        %v6055 = vld [vmem:[%s6050 + $0x10] sm:$0xf]
        %v6056 = vld [vmem:[%s6050 + $0x14] sm:$0xf]
        %v6057 = vld [vmem:[%s6050 + $0x18] sm:$0xf]
        %v6058 = vld [vmem:[%s6050 + $0x1c] sm:$0xf]
        %v6059 = vld [vmem:[%s6050 + $0x20] sm:$0xf]
        %v6060 = vld [vmem:[%s6050 + $0x24] sm:$0xf]
        %v6061 = vld [vmem:[%s6050 + $0x28] sm:$0xf]
        %v6062 = vld [vmem:[%s6050 + $0x2c] sm:$0xf]
        %v6063 = vld [vmem:[%s6050 + $0x30] sm:$0xf]
        %v6064 = vld [vmem:[%s6050 + $0x34] sm:$0xf]
        %v6065 = vld [vmem:[%s6050 + $0x38] sm:$0xf]
        %v6066 = vld [vmem:[%s6050 + $0x3c] sm:$0xf]
        %v6067 = vld [vmem:[%s6050 + $0x40] sm:$0xf]
        %v6068 = vld [vmem:[%s6050 + $0x44] sm:$0xf]
        %v6069 = vld [vmem:[%s6050 + $0x48] sm:$0xf]
        %v6070 = vld [vmem:[%s6050 + $0x4c] sm:$0xf]
        %v6071 = vld [vmem:[%s6050 + $0x50] sm:$0xf]
        %v6072 = vld [vmem:[%s6050 + $0x54] sm:$0xf]
        %v6073 = vld [vmem:[%s6050 + $0x58] sm:$0xf]
        %v6074 = vld [vmem:[%s6050 + $0x5c] sm:$0xf]
        %v6075 = vld [vmem:[%s6050 + $0x60] sm:$0xf]
        %v6076 = vld [vmem:[%s6050 + $0x64] sm:$0xf]
        %v6077 = vld [vmem:[%s6050 + $0x68] sm:$0xf]
        %v6078 = vld [vmem:[%s6050 + $0x6c] sm:$0xf]
        %v6079 = vld [vmem:[%s6050 + $0x70] sm:$0xf]
        %v6080 = vld [vmem:[%s6050 + $0x74] sm:$0xf]
        %v6081 = vld [vmem:[%s6050 + $0x78] sm:$0xf]
        %v6082 = vld [vmem:[%s6050 + $0x7c] sm:$0xf]
        %v6083 = vld [vmem:[%s6050 + $0x80] sm:$0xf]
        %v6084 = vld [vmem:[%s6050 + $0x84] sm:$0xf]
        %v6085 = vld [vmem:[%s6050 + $0x88] sm:$0xf]
        %v6086 = vld [vmem:[%s6050 + $0x8c] sm:$0xf]
        %s6087 = scalar_lea.vmem %s4, 3
        %v6088 = vld [vmem:[%s6087] sm:$0x1]
        %v6137 = vrot.slane %v5996, 1
        %v6138 = vrot.slane %v5997, 1
        %v6139 = vsel %vm564, %v6137, %v6138
        %v6140 = vrot.slane %v5998, 1
        %v6141 = vsel %vm564, %v6138, %v6140
        %v6142 = vrot.slane %v5999, 1
        %v6143 = vrot.slane %v6000, 1
        %v6144 = vsel %vm564, %v6142, %v6143
        %v6145 = vrot.slane %v6001, 1
        %v6146 = vsel %vm564, %v6143, %v6145
        %v6147 = vrot.slane %v6002, 1
        %v6148 = vrot.slane %v6003, 1
        %v6149 = vsel %vm564, %v6147, %v6148
        %v6150 = vrot.slane %v6004, 1
        %v6151 = vsel %vm564, %v6148, %v6150
        %v6152 = vrot.slane %v6005, 1
        %v6153 = vrot.slane %v6006, 1
        %v6154 = vsel %vm564, %v6152, %v6153
        %v6155 = vrot.slane %v6007, 1
        %v6156 = vsel %vm564, %v6153, %v6155
        %v6157 = vrot.slane %v6008, 1
        %v6158 = vrot.slane %v6009, 1
        %v6159 = vsel %vm564, %v6157, %v6158
        %v6160 = vrot.slane %v6010, 1
        %v6161 = vsel %vm564, %v6158, %v6160
        %v6162 = vrot.slane %v6011, 1
        %v6163 = vrot.slane %v6012, 1
        %v6164 = vsel %vm564, %v6162, %v6163
        %v6165 = vrot.slane %v6013, 1
        %v6166 = vsel %vm564, %v6163, %v6165
        %v6167 = vrot.slane %v6014, 1
        %v6168 = vrot.slane %v6015, 1
        %v6169 = vsel %vm564, %v6167, %v6168
        %v6170 = vrot.slane %v6016, 1
        %v6171 = vsel %vm564, %v6168, %v6170
        %v6172 = vrot.slane %v6017, 1
        %v6173 = vrot.slane %v6018, 1
        %v6174 = vsel %vm564, %v6172, %v6173
        %v6175 = vrot.slane %v6019, 1
        %v6176 = vsel %vm564, %v6173, %v6175
        %v6177 = vrot.slane %v6020, 1
        %v6178 = vrot.slane %v6021, 1
        %v6179 = vsel %vm564, %v6177, %v6178
        %v6180 = vrot.slane %v6022, 1
        %v6181 = vsel %vm564, %v6178, %v6180
        %v6182 = vrot.slane %v6023, 1
        %v6183 = vrot.slane %v6024, 1
        %v6184 = vsel %vm564, %v6182, %v6183
        %v6185 = vrot.slane %v6025, 1
        %v6186 = vsel %vm564, %v6183, %v6185
        %v6187 = vrot.slane %v6026, 1
        %v6188 = vrot.slane %v6027, 1
        %v6189 = vsel %vm564, %v6187, %v6188
        %v6190 = vrot.slane %v6028, 1
        %v6191 = vsel %vm564, %v6188, %v6190
        %v6192 = vrot.slane %v6029, 1
        %v6193 = vrot.slane %v6030, 1
        %v6194 = vsel %vm564, %v6192, %v6193
        %v6195 = vrot.slane %v6031, 1
        %v6196 = vsel %vm564, %v6193, %v6195
        %v6197 = vrot.slane %v6032, 1
        %v6198 = vrot.slane %v6033, 1
        %v6199 = vsel %vm564, %v6197, %v6198
        %v6200 = vrot.slane %v6034, 1
        %v6201 = vsel %vm564, %v6198, %v6200
        %v6202 = vrot.slane %v6035, 1
        %v6203 = vrot.slane %v6036, 1
        %v6204 = vsel %vm564, %v6202, %v6203
        %v6205 = vrot.slane %v6037, 1
        %v6206 = vsel %vm564, %v6203, %v6205
        %v6207 = vrot.slane %v6038, 1
        %v6208 = vrot.slane %v6039, 1
        %v6209 = vsel %vm564, %v6207, %v6208
        %v6210 = vrot.slane %v6040, 1
        %v6211 = vsel %vm564, %v6208, %v6210
        %v6212 = vrot.slane %v6041, 1
        %v6213 = vrot.slane %v6042, 1
        %v6214 = vsel %vm564, %v6212, %v6213
        %v6215 = vrot.slane %v6043, 1
        %v6216 = vsel %vm564, %v6213, %v6215
        %6217 = vrot.lane.b32.xlu0 %v6139, 32
        %v6218 = vpop.permute.xlu0 %6217
        %6219 = vrot.lane.b32.xlu0 %v6141, 32
        %v6220 = vpop.permute.xlu0 %6219
        %6221 = vrot.lane.b32.xlu0 %v6144, 32
        %v6222 = vpop.permute.xlu0 %6221
        %6223 = vrot.lane.b32.xlu0 %v6146, 32
        %v6224 = vpop.permute.xlu0 %6223
        %6225 = vrot.lane.b32.xlu0 %v6149, 32
        %v6226 = vpop.permute.xlu0 %6225
        %6227 = vrot.lane.b32.xlu0 %v6151, 32
        %v6228 = vpop.permute.xlu0 %6227
        %6229 = vrot.lane.b32.xlu0 %v6154, 32
        %v6230 = vpop.permute.xlu0 %6229
        %6231 = vrot.lane.b32.xlu0 %v6156, 32
        %v6232 = vpop.permute.xlu0 %6231
        %6233 = vrot.lane.b32.xlu0 %v6159, 32
        %v6234 = vpop.permute.xlu0 %6233
        %6235 = vrot.lane.b32.xlu0 %v6161, 32
        %v6236 = vpop.permute.xlu0 %6235
        %6237 = vrot.lane.b32.xlu0 %v6164, 32
        %v6238 = vpop.permute.xlu0 %6237
        %6239 = vrot.lane.b32.xlu0 %v6166, 32
        %v6240 = vpop.permute.xlu0 %6239
        %6241 = vrot.lane.b32.xlu0 %v6169, 32
        %v6242 = vpop.permute.xlu0 %6241
        %6243 = vrot.lane.b32.xlu0 %v6171, 32
        %v6244 = vpop.permute.xlu0 %6243
        %6245 = vrot.lane.b32.xlu0 %v6174, 32
        %v6246 = vpop.permute.xlu0 %6245
        %6247 = vrot.lane.b32.xlu0 %v6176, 32
        %v6248 = vpop.permute.xlu0 %6247
        %6249 = vrot.lane.b32.xlu0 %v6179, 32
        %v6250 = vpop.permute.xlu0 %6249
        %6251 = vrot.lane.b32.xlu0 %v6181, 32
        %v6252 = vpop.permute.xlu0 %6251
        %6253 = vrot.lane.b32.xlu0 %v6184, 32
        %v6254 = vpop.permute.xlu0 %6253
        %6255 = vrot.lane.b32.xlu0 %v6186, 32
        %v6256 = vpop.permute.xlu0 %6255
        %6257 = vrot.lane.b32.xlu0 %v6189, 32
        %v6258 = vpop.permute.xlu0 %6257
        %6259 = vrot.lane.b32.xlu0 %v6191, 32
        %v6260 = vpop.permute.xlu0 %6259
        %6261 = vrot.lane.b32.xlu0 %v6194, 32
        %v6262 = vpop.permute.xlu0 %6261
        %6263 = vrot.lane.b32.xlu0 %v6196, 32
        %v6264 = vpop.permute.xlu0 %6263
        %6265 = vrot.lane.b32.xlu0 %v6199, 32
        %v6266 = vpop.permute.xlu0 %6265
        %6267 = vrot.lane.b32.xlu0 %v6201, 32
        %v6268 = vpop.permute.xlu0 %6267
        %6269 = vrot.lane.b32.xlu0 %v6204, 32
        %v6270 = vpop.permute.xlu0 %6269
        %6271 = vrot.lane.b32.xlu0 %v6206, 32
        %v6272 = vpop.permute.xlu0 %6271
        %6273 = vrot.lane.b32.xlu0 %v6209, 32
        %v6274 = vpop.permute.xlu0 %6273
        %6275 = vrot.lane.b32.xlu0 %v6211, 32
        %v6276 = vpop.permute.xlu0 %6275
        %6277 = vrot.lane.b32.xlu0 %v6214, 32
        %v6278 = vpop.permute.xlu0 %6277
        %6279 = vrot.lane.b32.xlu0 %v6216, 32
        %v6280 = vpop.permute.xlu0 %6279
        %v6313 = vrot.slane %v5996, 2
        %v6314 = vrot.slane %v5997, 2
        %v6315 = vsel %vm741, %v6313, %v6314
        %v6316 = vrot.slane %v5998, 2
        %v6317 = vsel %vm741, %v6314, %v6316
        %v6318 = vrot.slane %v5999, 2
        %v6319 = vrot.slane %v6000, 2
        %v6320 = vsel %vm741, %v6318, %v6319
        %v6321 = vrot.slane %v6001, 2
        %v6322 = vsel %vm741, %v6319, %v6321
        %v6323 = vrot.slane %v6002, 2
        %v6324 = vrot.slane %v6003, 2
        %v6325 = vsel %vm741, %v6323, %v6324
        %v6326 = vrot.slane %v6004, 2
        %v6327 = vsel %vm741, %v6324, %v6326
        %v6328 = vrot.slane %v6005, 2
        %v6329 = vrot.slane %v6006, 2
        %v6330 = vsel %vm741, %v6328, %v6329
        %v6331 = vrot.slane %v6007, 2
        %v6332 = vsel %vm741, %v6329, %v6331
        %v6333 = vrot.slane %v6008, 2
        %v6334 = vrot.slane %v6009, 2
        %v6335 = vsel %vm741, %v6333, %v6334
        %v6336 = vrot.slane %v6010, 2
        %v6337 = vsel %vm741, %v6334, %v6336
        %v6338 = vrot.slane %v6011, 2
        %v6339 = vrot.slane %v6012, 2
        %v6340 = vsel %vm741, %v6338, %v6339
        %v6341 = vrot.slane %v6013, 2
        %v6342 = vsel %vm741, %v6339, %v6341
        %v6343 = vrot.slane %v6014, 2
        %v6344 = vrot.slane %v6015, 2
        %v6345 = vsel %vm741, %v6343, %v6344
        %v6346 = vrot.slane %v6016, 2
        %v6347 = vsel %vm741, %v6344, %v6346
        %v6348 = vrot.slane %v6017, 2
        %v6349 = vrot.slane %v6018, 2
        %v6350 = vsel %vm741, %v6348, %v6349
        %v6351 = vrot.slane %v6019, 2
        %v6352 = vsel %vm741, %v6349, %v6351
        %v6353 = vrot.slane %v6020, 2
        %v6354 = vrot.slane %v6021, 2
        %v6355 = vsel %vm741, %v6353, %v6354
        %v6356 = vrot.slane %v6022, 2
        %v6357 = vsel %vm741, %v6354, %v6356
        %v6358 = vrot.slane %v6023, 2
        %v6359 = vrot.slane %v6024, 2
        %v6360 = vsel %vm741, %v6358, %v6359
        %v6361 = vrot.slane %v6025, 2
        %v6362 = vsel %vm741, %v6359, %v6361
        %v6363 = vrot.slane %v6026, 2
        %v6364 = vrot.slane %v6027, 2
        %v6365 = vsel %vm741, %v6363, %v6364
        %v6366 = vrot.slane %v6028, 2
        %v6367 = vsel %vm741, %v6364, %v6366
        %v6368 = vrot.slane %v6029, 2
        %v6369 = vrot.slane %v6030, 2
        %v6370 = vsel %vm741, %v6368, %v6369
        %v6371 = vrot.slane %v6031, 2
        %v6372 = vsel %vm741, %v6369, %v6371
        %v6373 = vrot.slane %v6032, 2
        %v6374 = vrot.slane %v6033, 2
        %v6375 = vsel %vm741, %v6373, %v6374
        %v6376 = vrot.slane %v6034, 2
        %v6377 = vsel %vm741, %v6374, %v6376
        %v6378 = vrot.slane %v6035, 2
        %v6379 = vrot.slane %v6036, 2
        %v6380 = vsel %vm741, %v6378, %v6379
        %v6381 = vrot.slane %v6037, 2
        %v6382 = vsel %vm741, %v6379, %v6381
        %v6383 = vrot.slane %v6038, 2
        %v6384 = vrot.slane %v6039, 2
        %v6385 = vsel %vm741, %v6383, %v6384
        %v6386 = vrot.slane %v6040, 2
        %v6387 = vsel %vm741, %v6384, %v6386
        %v6388 = vrot.slane %v6041, 2
        %v6389 = vrot.slane %v6042, 2
        %v6390 = vsel %vm741, %v6388, %v6389
        %v6391 = vrot.slane %v6043, 2
        %v6392 = vsel %vm741, %v6389, %v6391
        %6393 = vrot.lane.b32.xlu0 %v6315, 64
        %v6394 = vpop.permute.xlu0 %6393
        %6395 = vrot.lane.b32.xlu0 %v6317, 64
        %v6396 = vpop.permute.xlu0 %6395
        %6397 = vrot.lane.b32.xlu0 %v6320, 64
        %v6398 = vpop.permute.xlu0 %6397
        %6399 = vrot.lane.b32.xlu0 %v6322, 64
        %v6400 = vpop.permute.xlu0 %6399
        %6401 = vrot.lane.b32.xlu0 %v6325, 64
        %v6402 = vpop.permute.xlu0 %6401
        %6403 = vrot.lane.b32.xlu0 %v6327, 64
        %v6404 = vpop.permute.xlu0 %6403
        %6405 = vrot.lane.b32.xlu0 %v6330, 64
        %v6406 = vpop.permute.xlu0 %6405
        %6407 = vrot.lane.b32.xlu0 %v6332, 64
        %v6408 = vpop.permute.xlu0 %6407
        %6409 = vrot.lane.b32.xlu0 %v6335, 64
        %v6410 = vpop.permute.xlu0 %6409
        %6411 = vrot.lane.b32.xlu0 %v6337, 64
        %v6412 = vpop.permute.xlu0 %6411
        %6413 = vrot.lane.b32.xlu0 %v6340, 64
        %v6414 = vpop.permute.xlu0 %6413
        %6415 = vrot.lane.b32.xlu0 %v6342, 64
        %v6416 = vpop.permute.xlu0 %6415
        %6417 = vrot.lane.b32.xlu0 %v6345, 64
        %v6418 = vpop.permute.xlu0 %6417
        %6419 = vrot.lane.b32.xlu0 %v6347, 64
        %v6420 = vpop.permute.xlu0 %6419
        %6421 = vrot.lane.b32.xlu0 %v6350, 64
        %v6422 = vpop.permute.xlu0 %6421
        %6423 = vrot.lane.b32.xlu0 %v6352, 64
        %v6424 = vpop.permute.xlu0 %6423
        %6425 = vrot.lane.b32.xlu0 %v6355, 64
        %v6426 = vpop.permute.xlu0 %6425
        %6427 = vrot.lane.b32.xlu0 %v6357, 64
        %v6428 = vpop.permute.xlu0 %6427
        %6429 = vrot.lane.b32.xlu0 %v6360, 64
        %v6430 = vpop.permute.xlu0 %6429
        %6431 = vrot.lane.b32.xlu0 %v6362, 64
        %v6432 = vpop.permute.xlu0 %6431
        %6433 = vrot.lane.b32.xlu0 %v6365, 64
        %v6434 = vpop.permute.xlu0 %6433
        %6435 = vrot.lane.b32.xlu0 %v6367, 64
        %v6436 = vpop.permute.xlu0 %6435
        %6437 = vrot.lane.b32.xlu0 %v6370, 64
        %v6438 = vpop.permute.xlu0 %6437
        %6439 = vrot.lane.b32.xlu0 %v6372, 64
        %v6440 = vpop.permute.xlu0 %6439
        %6441 = vrot.lane.b32.xlu0 %v6375, 64
        %v6442 = vpop.permute.xlu0 %6441
        %6443 = vrot.lane.b32.xlu0 %v6377, 64
        %v6444 = vpop.permute.xlu0 %6443
        %6445 = vrot.lane.b32.xlu0 %v6380, 64
        %v6446 = vpop.permute.xlu0 %6445
        %6447 = vrot.lane.b32.xlu0 %v6382, 64
        %v6448 = vpop.permute.xlu0 %6447
        %6449 = vrot.lane.b32.xlu0 %v6385, 64
        %v6450 = vpop.permute.xlu0 %6449
        %6451 = vrot.lane.b32.xlu0 %v6387, 64
        %v6452 = vpop.permute.xlu0 %6451
        %6453 = vrot.lane.b32.xlu0 %v6390, 64
        %v6454 = vpop.permute.xlu0 %6453
        %6455 = vrot.lane.b32.xlu0 %v6392, 64
        %v6456 = vpop.permute.xlu0 %6455
        %v6489 = vsel %vm334, %v5996, %v6218
        %v6490 = vsel %vm334, %v5997, %v6220
        %v6491 = vsel %vm334, %v5999, %v6222
        %v6492 = vsel %vm334, %v6000, %v6224
        %v6493 = vsel %vm334, %v6002, %v6226
        %v6494 = vsel %vm334, %v6003, %v6228
        %v6495 = vsel %vm334, %v6005, %v6230
        %v6496 = vsel %vm334, %v6006, %v6232
        %v6497 = vsel %vm334, %v6008, %v6234
        %v6498 = vsel %vm334, %v6009, %v6236
        %v6499 = vsel %vm334, %v6011, %v6238
        %v6500 = vsel %vm334, %v6012, %v6240
        %v6501 = vsel %vm334, %v6014, %v6242
        %v6502 = vsel %vm334, %v6015, %v6244
        %v6503 = vsel %vm334, %v6017, %v6246
        %v6504 = vsel %vm334, %v6018, %v6248
        %v6505 = vsel %vm334, %v6020, %v6250
        %v6506 = vsel %vm334, %v6021, %v6252
        %v6507 = vsel %vm334, %v6023, %v6254
        %v6508 = vsel %vm334, %v6024, %v6256
        %v6509 = vsel %vm334, %v6026, %v6258
        %v6510 = vsel %vm334, %v6027, %v6260
        %v6511 = vsel %vm334, %v6029, %v6262
        %v6512 = vsel %vm334, %v6030, %v6264
        %v6513 = vsel %vm334, %v6032, %v6266
        %v6514 = vsel %vm334, %v6033, %v6268
        %v6515 = vsel %vm334, %v6035, %v6270
        %v6516 = vsel %vm334, %v6036, %v6272
        %v6517 = vsel %vm334, %v6038, %v6274
        %v6518 = vsel %vm334, %v6039, %v6276
        %v6519 = vsel %vm334, %v6041, %v6278
        %v6520 = vsel %vm334, %v6042, %v6280
        %v6521 = vsel %vm2283, %v6489, %v6394
        %v6522 = vsel %vm2283, %v6490, %v6396
        %v6523 = vsel %vm2283, %v6491, %v6398
        %v6524 = vsel %vm2283, %v6492, %v6400
        %v6525 = vsel %vm2283, %v6493, %v6402
        %v6526 = vsel %vm2283, %v6494, %v6404
        %v6527 = vsel %vm2283, %v6495, %v6406
        %v6528 = vsel %vm2283, %v6496, %v6408
        %v6529 = vsel %vm2283, %v6497, %v6410
        %v6530 = vsel %vm2283, %v6498, %v6412
        %v6531 = vsel %vm2283, %v6499, %v6414
        %v6532 = vsel %vm2283, %v6500, %v6416
        %v6533 = vsel %vm2283, %v6501, %v6418
        %v6534 = vsel %vm2283, %v6502, %v6420
        %v6535 = vsel %vm2283, %v6503, %v6422
        %v6536 = vsel %vm2283, %v6504, %v6424
        %v6537 = vsel %vm2283, %v6505, %v6426
        %v6538 = vsel %vm2283, %v6506, %v6428
        %v6539 = vsel %vm2283, %v6507, %v6430
        %v6540 = vsel %vm2283, %v6508, %v6432
        %v6541 = vsel %vm2283, %v6509, %v6434
        %v6542 = vsel %vm2283, %v6510, %v6436
        %v6543 = vsel %vm2283, %v6511, %v6438
        %v6544 = vsel %vm2283, %v6512, %v6440
        %v6545 = vsel %vm2283, %v6513, %v6442
        %v6546 = vsel %vm2283, %v6514, %v6444
        %v6547 = vsel %vm2283, %v6515, %v6446
        %v6548 = vsel %vm2283, %v6516, %v6448
        %v6549 = vsel %vm2283, %v6517, %v6450
        %v6550 = vsel %vm2283, %v6518, %v6452
        %v6551 = vsel %vm2283, %v6519, %v6454
        %v6552 = vsel %vm2283, %v6520, %v6456
        %v6553 = vpack.c.bf16 %v6522, %v6521
        %v6554 = vpack.c.bf16 %v6524, %v6523
        %v6555 = vpack.c.bf16 %v6526, %v6525
        %v6556 = vpack.c.bf16 %v6528, %v6527
        %v6557 = vpack.c.bf16 %v6530, %v6529
        %v6558 = vpack.c.bf16 %v6532, %v6531
        %v6559 = vpack.c.bf16 %v6534, %v6533
        %v6560 = vpack.c.bf16 %v6536, %v6535
        %v6561 = vpack.c.bf16 %v6538, %v6537
        %v6562 = vpack.c.bf16 %v6540, %v6539
        %v6563 = vpack.c.bf16 %v6542, %v6541
        %v6564 = vpack.c.bf16 %v6544, %v6543
        %v6565 = vpack.c.bf16 %v6546, %v6545
        %v6566 = vpack.c.bf16 %v6548, %v6547
        %v6567 = vpack.c.bf16 %v6550, %v6549
        %v6568 = vpack.c.bf16 %v6552, %v6551
        %v6572 = vrot.slane %v6044, 1
        %v6573 = vrot.slane %v6045, 1
        %v6574 = vsel %vm564, %v6572, %v6573
        %v6575 = vrot.slane %v6046, 1
        %v6576 = vsel %vm564, %v6573, %v6575
        %6577 = vrot.lane.b32.xlu0 %v6574, 32
        %v6578 = vpop.permute.xlu0 %6577
        %6579 = vrot.lane.b32.xlu0 %v6576, 32
        %v6580 = vpop.permute.xlu0 %6579
        %v6583 = vrot.slane %v6044, 2
        %v6584 = vrot.slane %v6045, 2
        %v6585 = vsel %vm741, %v6583, %v6584
        %v6586 = vrot.slane %v6046, 2
        %v6587 = vsel %vm741, %v6584, %v6586
        %6588 = vrot.lane.b32.xlu0 %v6585, 64
        %v6589 = vpop.permute.xlu0 %6588
        %6590 = vrot.lane.b32.xlu0 %v6587, 64
        %v6591 = vpop.permute.xlu0 %6590
        %v6594 = vsel %vm334, %v6044, %v6578
        %v6595 = vsel %vm334, %v6045, %v6580
        %v6596 = vsel %vm2283, %v6594, %v6589
        %v6597 = vsel %vm2283, %v6595, %v6591
        %v6598 = vpack.c.bf16 %v6597, %v6596
        %v6611 = vunpack.c.l.b16 %v6063
        %v6612 = vunpack.c.l.b16 %v6064
        %v6613 = vunpack.c.l.b16 %v6065
        %v6614 = vunpack.c.l.b16 %v6066
        %v6615 = vunpack.c.l.b16 %v6067
        %v6616 = vunpack.c.l.b16 %v6068
        %v6617 = vunpack.c.l.b16 %v6069
        %v6618 = vunpack.c.l.b16 %v6070
        %v6619 = vunpack.c.l.b16 %v6071
        %v6620 = vunpack.c.l.b16 %v6072
        %v6621 = vunpack.c.l.b16 %v6073
        %v6622 = vunpack.c.l.b16 %v6074
        %v6623 = vpack.c.b16 %v6612, %v6611
        %v6624 = vpack.c.b16 %v6614, %v6613
        %v6625 = vpack.c.b16 %v6616, %v6615
        %v6626 = vpack.c.b16 %v6618, %v6617
        %v6627 = vpack.c.b16 %v6620, %v6619
        %v6628 = vpack.c.b16 %v6622, %v6621
        %v6636 = vsel %vm2398, %v6554, 0
        %v6639 = vsel %vm2398, %v6555, 0
        %v6642 = vsel %vm2398, %v6556, 0
        %v6645 = vsel %vm2398, %v6557, 0
        %v6648 = vsel %vm2398, %v6558, 0
        %v6651 = vsel %vm2398, %v6559, 0
        %v6654 = vsel %vm2398, %v6560, 0
        %v6657 = vsel %vm2398, %v6561, 0
        %v6660 = vsel %vm2398, %v6562, 0
        %v6663 = vsel %vm2398, %v6563, 0
        %v6666 = vsel %vm2398, %v6564, 0
        %v6669 = vsel %vm2398, %v6565, 0
        %v6672 = vsel %vm2398, %v6566, 0
        %v6675 = vsel %vm2398, %v6567, 0
        %v6678 = vsel %vm2398, %v6568, 0
        %v6681 = vsel %vm2398, %v6598, 0
        %6683 = vmatprep.subr.bf16.mxu0 0
        %6684 = vmatpush1.bf16.msra.mxu0 %v6623
        %6685 = vmatprep.subr.bf16.mxu0 0
        %6686 = vmatpush1.bf16.msra.mxu0 %v6624
        %6687 = vmatprep.subr.bf16.mxu0 0
        %6688 = vmatpush1.bf16.msra.mxu0 %v6625
        %6689 = vmatprep.subr.bf16.mxu0 0
        %6690 = vmatpush1.bf16.msra.mxu0 %v6626
        %6691 = vmatprep.subr.bf16.mxu0 0
        %6692 = vmatpush1.bf16.msra.mxu0 %v6627
        %6693 = vmatprep.subr.bf16.mxu0 0
        %6694 = vmatpush1.bf16.msra.mxu0 %v6628
        %6695 = vmatprep.subr.bf16.mxu0 0
        %6696 = vmatpush1.bf16.msra.mxu0 0
        %6697 = vmatprep.subr.bf16.mxu0 0
        %6698 = vmatpush1.bf16.msra.mxu0 0
        %6699 = vmatprep.subr.bf16.mxu0 0
        %6700 = vmatpush1.bf16.msra.mxu0 0
        %6701 = vmatprep.subr.bf16.mxu0 0
        %6702 = vmatpush1.bf16.msra.mxu0 0
        %6703 = vmatprep.subr.bf16.mxu0 0
        %6704 = vmatpush1.bf16.msra.mxu0 0
        %6705 = vmatprep.subr.bf16.mxu0 0
        %6706 = vmatpush1.bf16.msra.mxu0 0
        %6707 = vmatprep.subr.bf16.mxu0 0
        %6708 = vmatpush1.bf16.msra.mxu0 0
        %6709 = vmatprep.subr.bf16.mxu0 0
        %6710 = vmatpush1.bf16.msra.mxu0 0
        %6711 = vmatprep.subr.bf16.mxu0 0
        %6712 = vmatpush1.bf16.msra.mxu0 0
        %6713 = vmatprep.subr.bf16.mxu0 0
        %6714 = vmatpush1.bf16.msra.mxu0 0
        %6715 = vmatprep.mubr.bf16.mxu0 0
        %6716 = vmatmul.mubr.bf16.gmra.mrb[0].mxu0 %v6636
        %v6717 = vpop.f32.mrb[0].mxu0
        %v6718 = vadd.f32 0.0, %v6717
        %v6719 = vpop.f32.mrb[0].mxu0
        %v6720 = vpop.f32.mrb[0].mxu0
        %v6721 = vadd.f32 0.0, %v6720
        %v6722 = vpop.f32.mrb[0].mxu0
        %6723 = vmatprep.mubr.bf16.mxu0 0
        %6724 = vmatmul.mubr.bf16.gmra.mrb[0].mxu0 %v6639
        %v6725 = vpop.f32.mrb[0].mxu0
        %v6726 = vadd.f32 0.0, %v6725
        %v6727 = vpop.f32.mrb[0].mxu0
        %v6728 = vpop.f32.mrb[0].mxu0
        %v6729 = vadd.f32 0.0, %v6728
        %v6730 = vpop.f32.mrb[0].mxu0
        %6731 = vmatprep.mubr.bf16.mxu0 0
        %6732 = vmatmul.mubr.bf16.gmra.mrb[0].mxu0 %v6642
        %v6733 = vpop.f32.mrb[0].mxu0
        %v6734 = vadd.f32 0.0, %v6733
        %v6735 = vpop.f32.mrb[0].mxu0
        %v6736 = vpop.f32.mrb[0].mxu0
        %v6737 = vadd.f32 0.0, %v6736
        %v6738 = vpop.f32.mrb[0].mxu0
        %6739 = vmatprep.mubr.bf16.mxu0 0
        %6740 = vmatmul.mubr.bf16.gmra.mrb[0].mxu0 %v6645
        %v6741 = vpop.f32.mrb[0].mxu0
        %v6742 = vadd.f32 0.0, %v6741
        %v6743 = vpop.f32.mrb[0].mxu0
        %v6744 = vpop.f32.mrb[0].mxu0
        %v6745 = vadd.f32 0.0, %v6744
        %v6746 = vpop.f32.mrb[0].mxu0
        %6747 = vmatprep.mubr.bf16.mxu0 0
        %6748 = vmatmul.mubr.bf16.gmra.mrb[0].mxu0 %v6648
        %v6749 = vpop.f32.mrb[0].mxu0
        %v6750 = vadd.f32 0.0, %v6749
        %v6751 = vpop.f32.mrb[0].mxu0
        %v6752 = vpop.f32.mrb[0].mxu0
        %v6753 = vadd.f32 0.0, %v6752
        %v6754 = vpop.f32.mrb[0].mxu0
        %6755 = vmatprep.mubr.bf16.mxu0 0
        %6756 = vmatmul.mubr.bf16.gmra.mrb[0].mxu0 %v6651
        %v6757 = vpop.f32.mrb[0].mxu0
        %v6758 = vadd.f32 0.0, %v6757
        %v6759 = vpop.f32.mrb[0].mxu0
        %v6760 = vpop.f32.mrb[0].mxu0
        %v6761 = vadd.f32 0.0, %v6760
        %v6762 = vpop.f32.mrb[0].mxu0
        %6763 = vmatprep.mubr.bf16.mxu0 0
        %6764 = vmatmul.mubr.bf16.gmra.mrb[0].mxu0 %v6654
        %v6765 = vpop.f32.mrb[0].mxu0
        %v6766 = vadd.f32 0.0, %v6765
        %v6767 = vpop.f32.mrb[0].mxu0
        %v6768 = vpop.f32.mrb[0].mxu0
        %v6769 = vadd.f32 0.0, %v6768
        %v6770 = vpop.f32.mrb[0].mxu0
        %6771 = vmatprep.mubr.bf16.mxu0 0
        %6772 = vmatmul.mubr.bf16.gmra.mrb[0].mxu0 %v6657
        %v6773 = vpop.f32.mrb[0].mxu0
        %v6774 = vadd.f32 0.0, %v6773
        %v6775 = vpop.f32.mrb[0].mxu0
        %v6776 = vpop.f32.mrb[0].mxu0
        %v6777 = vadd.f32 0.0, %v6776
        %v6778 = vpop.f32.mrb[0].mxu0
        %6779 = vmatprep.mubr.bf16.mxu0 0
        %6780 = vmatmul.mubr.bf16.gmra.mrb[0].mxu0 %v6660
        %v6781 = vpop.f32.mrb[0].mxu0
        %v6782 = vadd.f32 0.0, %v6781
        %v6783 = vpop.f32.mrb[0].mxu0
        %v6784 = vpop.f32.mrb[0].mxu0
        %v6785 = vadd.f32 0.0, %v6784
        %v6786 = vpop.f32.mrb[0].mxu0
        %6787 = vmatprep.mubr.bf16.mxu0 0
        %6788 = vmatmul.mubr.bf16.gmra.mrb[0].mxu0 %v6663
        %v6789 = vpop.f32.mrb[0].mxu0
        %v6790 = vadd.f32 0.0, %v6789
        %v6791 = vpop.f32.mrb[0].mxu0
        %v6792 = vpop.f32.mrb[0].mxu0
        %v6793 = vadd.f32 0.0, %v6792
        %v6794 = vpop.f32.mrb[0].mxu0
        %6795 = vmatprep.mubr.bf16.mxu0 0
        %6796 = vmatmul.mubr.bf16.gmra.mrb[0].mxu0 %v6666
        %v6797 = vpop.f32.mrb[0].mxu0
        %v6798 = vadd.f32 0.0, %v6797
        %v6799 = vpop.f32.mrb[0].mxu0
        %v6800 = vpop.f32.mrb[0].mxu0
        %v6801 = vadd.f32 0.0, %v6800
        %v6802 = vpop.f32.mrb[0].mxu0
        %6803 = vmatprep.mubr.bf16.mxu0 0
        %6804 = vmatmul.mubr.bf16.gmra.mrb[0].mxu0 %v6669
        %v6805 = vpop.f32.mrb[0].mxu0
        %v6806 = vadd.f32 0.0, %v6805
        %v6807 = vpop.f32.mrb[0].mxu0
        %v6808 = vpop.f32.mrb[0].mxu0
        %v6809 = vadd.f32 0.0, %v6808
        %v6810 = vpop.f32.mrb[0].mxu0
        %6811 = vmatprep.mubr.bf16.mxu0 0
        %6812 = vmatmul.mubr.bf16.gmra.mrb[0].mxu0 %v6672
        %v6813 = vpop.f32.mrb[0].mxu0
        %v6814 = vadd.f32 0.0, %v6813
        %v6815 = vpop.f32.mrb[0].mxu0
        %v6816 = vpop.f32.mrb[0].mxu0
        %v6817 = vadd.f32 0.0, %v6816
        %v6818 = vpop.f32.mrb[0].mxu0
        %6819 = vmatprep.mubr.bf16.mxu0 0
        %6820 = vmatmul.mubr.bf16.gmra.mrb[0].mxu0 %v6675
        %v6821 = vpop.f32.mrb[0].mxu0
        %v6822 = vadd.f32 0.0, %v6821
        %v6823 = vpop.f32.mrb[0].mxu0
        %v6824 = vpop.f32.mrb[0].mxu0
        %v6825 = vadd.f32 0.0, %v6824
        %v6826 = vpop.f32.mrb[0].mxu0
        %6827 = vmatprep.mubr.bf16.mxu0 0
        %6828 = vmatmul.mubr.bf16.gmra.mrb[0].mxu0 %v6678
        %v6829 = vpop.f32.mrb[0].mxu0
        %v6830 = vadd.f32 0.0, %v6829
        %v6831 = vpop.f32.mrb[0].mxu0
        %v6832 = vpop.f32.mrb[0].mxu0
        %v6833 = vadd.f32 0.0, %v6832
        %v6834 = vpop.f32.mrb[0].mxu0
        %6835 = vmatprep.mubr.bf16.mxu0 0
        %6836 = vmatmul.mubr.bf16.gmra.mrb[0].mxu0 %v6681
        %v6837 = vpop.f32.mrb[0].mxu0
        %v6838 = vadd.f32 0.0, %v6837
        %v6839 = vpop.f32.mrb[0].mxu0
        %v6840 = vpop.f32.mrb[0].mxu0
        %v6841 = vadd.f32 0.0, %v6840
        %v6842 = vpop.f32.mrb[0].mxu0
        %6843 = vdwg.mxu0
        %v6856 = vunpack.c.l.b16 %v6051
        %v6857 = vunpack.c.l.b16 %v6052
        %v6858 = vunpack.c.l.b16 %v6053
        %v6859 = vunpack.c.l.b16 %v6054
        %v6860 = vunpack.c.l.b16 %v6055
        %v6861 = vunpack.c.l.b16 %v6056
        %v6862 = vunpack.c.l.b16 %v6057
        %v6863 = vunpack.c.l.b16 %v6058
        %v6864 = vunpack.c.l.b16 %v6059
        %v6865 = vunpack.c.l.b16 %v6060
        %v6866 = vunpack.c.l.b16 %v6061
        %v6867 = vunpack.c.l.b16 %v6062
        %v6868 = vpack.c.b16 %v6857, %v6856
        %v6869 = vpack.c.b16 %v6859, %v6858
        %v6870 = vpack.c.b16 %v6861, %v6860
        %v6871 = vpack.c.b16 %v6863, %v6862
        %v6872 = vpack.c.b16 %v6865, %v6864
        %v6873 = vpack.c.b16 %v6867, %v6866
        %v6881 = vsel %vm2398, %v6553, 0
        %6883 = vmatprep.subr.bf16.mxu0 0
        %6884 = vmatpush1.bf16.msra.mxu0 %v6868
        %6885 = vmatprep.subr.bf16.mxu0 0
        %6886 = vmatpush1.bf16.msra.mxu0 %v6869
        %6887 = vmatprep.subr.bf16.mxu0 0
        %6888 = vmatpush1.bf16.msra.mxu0 %v6870
        %6889 = vmatprep.subr.bf16.mxu0 0
        %6890 = vmatpush1.bf16.msra.mxu0 %v6871
        %6891 = vmatprep.subr.bf16.mxu0 0
        %6892 = vmatpush1.bf16.msra.mxu0 %v6872
        %6893 = vmatprep.subr.bf16.mxu0 0
        %6894 = vmatpush1.bf16.msra.mxu0 %v6873
        %6895 = vmatprep.subr.bf16.mxu0 0
        %6896 = vmatpush1.bf16.msra.mxu0 0
        %6897 = vmatprep.subr.bf16.mxu0 0
        %6898 = vmatpush1.bf16.msra.mxu0 0
        %6899 = vmatprep.subr.bf16.mxu0 0
        %6900 = vmatpush1.bf16.msra.mxu0 0
        %6901 = vmatprep.subr.bf16.mxu0 0
        %6902 = vmatpush1.bf16.msra.mxu0 0
        %6903 = vmatprep.subr.bf16.mxu0 0
        %6904 = vmatpush1.bf16.msra.mxu0 0
        %6905 = vmatprep.subr.bf16.mxu0 0
        %6906 = vmatpush1.bf16.msra.mxu0 0
        %6907 = vmatprep.subr.bf16.mxu0 0
        %6908 = vmatpush1.bf16.msra.mxu0 0
        %6909 = vmatprep.subr.bf16.mxu0 0
        %6910 = vmatpush1.bf16.msra.mxu0 0
        %6911 = vmatprep.subr.bf16.mxu0 0
        %6912 = vmatpush1.bf16.msra.mxu0 0
        %6913 = vmatprep.subr.bf16.mxu0 0
        %6914 = vmatpush1.bf16.msra.mxu0 0
        %6915 = vmatprep.mubr.bf16.mxu0 0
        %6916 = vmatmul.mubr.bf16.gmra.mrb[0].mxu0 %v6881
        %v6917 = vpop.f32.mrb[0].mxu0
        %v6918 = vadd.f32 %v6718, %v6917
        %v6919 = vpop.f32.mrb[0].mxu0
        %v6920 = vpop.f32.mrb[0].mxu0
        %v6921 = vadd.f32 %v6721, %v6920
        %v6922 = vpop.f32.mrb[0].mxu0
        %6923 = vmatprep.mubr.bf16.mxu0 0
        %6924 = vmatmul.mubr.bf16.gmra.mrb[0].mxu0 %v6636
        %v6925 = vpop.f32.mrb[0].mxu0
        %v6926 = vadd.f32 %v6726, %v6925
        %v6927 = vpop.f32.mrb[0].mxu0
        %v6928 = vpop.f32.mrb[0].mxu0
        %v6929 = vadd.f32 %v6729, %v6928
        %v6930 = vpop.f32.mrb[0].mxu0
        %6931 = vmatprep.mubr.bf16.mxu0 0
        %6932 = vmatmul.mubr.bf16.gmra.mrb[0].mxu0 %v6639
        %v6933 = vpop.f32.mrb[0].mxu0
        %v6934 = vadd.f32 %v6734, %v6933
        %v6935 = vpop.f32.mrb[0].mxu0
        %v6936 = vpop.f32.mrb[0].mxu0
        %v6937 = vadd.f32 %v6737, %v6936
        %v6938 = vpop.f32.mrb[0].mxu0
        %6939 = vmatprep.mubr.bf16.mxu0 0
        %6940 = vmatmul.mubr.bf16.gmra.mrb[0].mxu0 %v6642
        %v6941 = vpop.f32.mrb[0].mxu0
        %v6942 = vadd.f32 %v6742, %v6941
        %v6943 = vpop.f32.mrb[0].mxu0
        %v6944 = vpop.f32.mrb[0].mxu0
        %v6945 = vadd.f32 %v6745, %v6944
        %v6946 = vpop.f32.mrb[0].mxu0
        %6947 = vmatprep.mubr.bf16.mxu0 0
        %6948 = vmatmul.mubr.bf16.gmra.mrb[0].mxu0 %v6645
        %v6949 = vpop.f32.mrb[0].mxu0
        %v6950 = vadd.f32 %v6750, %v6949
        %v6951 = vpop.f32.mrb[0].mxu0
        %v6952 = vpop.f32.mrb[0].mxu0
        %v6953 = vadd.f32 %v6753, %v6952
        %v6954 = vpop.f32.mrb[0].mxu0
        %6955 = vmatprep.mubr.bf16.mxu0 0
        %6956 = vmatmul.mubr.bf16.gmra.mrb[0].mxu0 %v6648
        %v6957 = vpop.f32.mrb[0].mxu0
        %v6958 = vadd.f32 %v6758, %v6957
        %v6959 = vpop.f32.mrb[0].mxu0
        %v6960 = vpop.f32.mrb[0].mxu0
        %v6961 = vadd.f32 %v6761, %v6960
        %v6962 = vpop.f32.mrb[0].mxu0
        %6963 = vmatprep.mubr.bf16.mxu0 0
        %6964 = vmatmul.mubr.bf16.gmra.mrb[0].mxu0 %v6651
        %v6965 = vpop.f32.mrb[0].mxu0
        %v6966 = vadd.f32 %v6766, %v6965
        %v6967 = vpop.f32.mrb[0].mxu0
        %v6968 = vpop.f32.mrb[0].mxu0
        %v6969 = vadd.f32 %v6769, %v6968
        %v6970 = vpop.f32.mrb[0].mxu0
        %6971 = vmatprep.mubr.bf16.mxu0 0
        %6972 = vmatmul.mubr.bf16.gmra.mrb[0].mxu0 %v6654
        %v6973 = vpop.f32.mrb[0].mxu0
        %v6974 = vadd.f32 %v6774, %v6973
        %v6975 = vpop.f32.mrb[0].mxu0
        %v6976 = vpop.f32.mrb[0].mxu0
        %v6977 = vadd.f32 %v6777, %v6976
        %v6978 = vpop.f32.mrb[0].mxu0
        %6979 = vmatprep.mubr.bf16.mxu0 0
        %6980 = vmatmul.mubr.bf16.gmra.mrb[0].mxu0 %v6657
        %v6981 = vpop.f32.mrb[0].mxu0
        %v6982 = vadd.f32 %v6782, %v6981
        %v6983 = vpop.f32.mrb[0].mxu0
        %v6984 = vpop.f32.mrb[0].mxu0
        %v6985 = vadd.f32 %v6785, %v6984
        %v6986 = vpop.f32.mrb[0].mxu0
        %6987 = vmatprep.mubr.bf16.mxu0 0
        %6988 = vmatmul.mubr.bf16.gmra.mrb[0].mxu0 %v6660
        %v6989 = vpop.f32.mrb[0].mxu0
        %v6990 = vadd.f32 %v6790, %v6989
        %v6991 = vpop.f32.mrb[0].mxu0
        %v6992 = vpop.f32.mrb[0].mxu0
        %v6993 = vadd.f32 %v6793, %v6992
        %v6994 = vpop.f32.mrb[0].mxu0
        %6995 = vmatprep.mubr.bf16.mxu0 0
        %6996 = vmatmul.mubr.bf16.gmra.mrb[0].mxu0 %v6663
        %v6997 = vpop.f32.mrb[0].mxu0
        %v6998 = vadd.f32 %v6798, %v6997
        %v6999 = vpop.f32.mrb[0].mxu0
        %v7000 = vpop.f32.mrb[0].mxu0
        %v7001 = vadd.f32 %v6801, %v7000
        %v7002 = vpop.f32.mrb[0].mxu0
        %7003 = vmatprep.mubr.bf16.mxu0 0
        %7004 = vmatmul.mubr.bf16.gmra.mrb[0].mxu0 %v6666
        %v7005 = vpop.f32.mrb[0].mxu0
        %v7006 = vadd.f32 %v6806, %v7005
        %v7007 = vpop.f32.mrb[0].mxu0
        %v7008 = vpop.f32.mrb[0].mxu0
        %v7009 = vadd.f32 %v6809, %v7008
        %v7010 = vpop.f32.mrb[0].mxu0
        %7011 = vmatprep.mubr.bf16.mxu0 0
        %7012 = vmatmul.mubr.bf16.gmra.mrb[0].mxu0 %v6669
        %v7013 = vpop.f32.mrb[0].mxu0
        %v7014 = vadd.f32 %v6814, %v7013
        %v7015 = vpop.f32.mrb[0].mxu0
        %v7016 = vpop.f32.mrb[0].mxu0
        %v7017 = vadd.f32 %v6817, %v7016
        %v7018 = vpop.f32.mrb[0].mxu0
        %7019 = vmatprep.mubr.bf16.mxu0 0
        %7020 = vmatmul.mubr.bf16.gmra.mrb[0].mxu0 %v6672
        %v7021 = vpop.f32.mrb[0].mxu0
        %v7022 = vadd.f32 %v6822, %v7021
        %v7023 = vpop.f32.mrb[0].mxu0
        %v7024 = vpop.f32.mrb[0].mxu0
        %v7025 = vadd.f32 %v6825, %v7024
        %v7026 = vpop.f32.mrb[0].mxu0
        %7027 = vmatprep.mubr.bf16.mxu0 0
        %7028 = vmatmul.mubr.bf16.gmra.mrb[0].mxu0 %v6675
        %v7029 = vpop.f32.mrb[0].mxu0
        %v7030 = vadd.f32 %v6830, %v7029
        %v7031 = vpop.f32.mrb[0].mxu0
        %v7032 = vpop.f32.mrb[0].mxu0
        %v7033 = vadd.f32 %v6833, %v7032
        %v7034 = vpop.f32.mrb[0].mxu0
        %7035 = vmatprep.mubr.bf16.mxu0 0
        %7036 = vmatmul.mubr.bf16.gmra.mrb[0].mxu0 %v6678
        %v7037 = vpop.f32.mrb[0].mxu0
        %v7038 = vadd.f32 %v6838, %v7037
        %v7039 = vpop.f32.mrb[0].mxu0
        %v7040 = vpop.f32.mrb[0].mxu0
        %v7041 = vadd.f32 %v6841, %v7040
        %v7042 = vpop.f32.mrb[0].mxu0
        %7043 = vdwg.mxu0
        %v7047 = vrot.slane %v6047, 1
        %v7048 = vrot.slane %v6048, 1
        %v7049 = vsel %vm564, %v7047, %v7048
        %v7050 = vrot.slane %v6049, 1
        %v7051 = vsel %vm564, %v7048, %v7050
        %7052 = vrot.lane.b32.xlu0 %v7049, 32
        %v7053 = vpop.permute.xlu0 %7052
        %7054 = vrot.lane.b32.xlu0 %v7051, 32
        %v7055 = vpop.permute.xlu0 %7054
        %v7058 = vrot.slane %v6047, 2
        %v7059 = vrot.slane %v6048, 2
        %v7060 = vsel %vm741, %v7058, %v7059
        %v7061 = vrot.slane %v6049, 2
        %v7062 = vsel %vm741, %v7059, %v7061
        %7063 = vrot.lane.b32.xlu0 %v7060, 64
        %v7064 = vpop.permute.xlu0 %7063
        %7065 = vrot.lane.b32.xlu0 %v7062, 64
        %v7066 = vpop.permute.xlu0 %7065
        %v7069 = vsel %vm334, %v6047, %v7053
        %v7070 = vsel %vm334, %v6048, %v7055
        %v7071 = vsel %vm2283, %v7069, %v7064
        %v7072 = vsel %vm2283, %v7070, %v7066
        %v7073 = vpack.c.bf16 %v7072, %v7071
        %v7086 = vunpack.c.l.b16 %v6075
        %v7087 = vunpack.c.l.b16 %v6076
        %v7088 = vunpack.c.l.b16 %v6077
        %v7089 = vunpack.c.l.b16 %v6078
        %v7090 = vunpack.c.l.b16 %v6079
        %v7091 = vunpack.c.l.b16 %v6080
        %v7092 = vunpack.c.l.b16 %v6081
        %v7093 = vunpack.c.l.b16 %v6082
        %v7094 = vunpack.c.l.b16 %v6083
        %v7095 = vunpack.c.l.b16 %v6084
        %v7096 = vunpack.c.l.b16 %v6085
        %v7097 = vunpack.c.l.b16 %v6086
        %v7098 = vpack.c.b16 %v7087, %v7086
        %v7099 = vpack.c.b16 %v7089, %v7088
        %v7100 = vpack.c.b16 %v7091, %v7090
        %v7101 = vpack.c.b16 %v7093, %v7092
        %v7102 = vpack.c.b16 %v7095, %v7094
        %v7103 = vpack.c.b16 %v7097, %v7096
        %v7111 = vsel %vm2398, %v7073, 0
        %7113 = vmatprep.subr.bf16.mxu0 0
        %7114 = vmatpush1.bf16.msra.mxu0 %v7098
        %7115 = vmatprep.subr.bf16.mxu0 0
        %7116 = vmatpush1.bf16.msra.mxu0 %v7099
        %7117 = vmatprep.subr.bf16.mxu0 0
        %7118 = vmatpush1.bf16.msra.mxu0 %v7100
        %7119 = vmatprep.subr.bf16.mxu0 0
        %7120 = vmatpush1.bf16.msra.mxu0 %v7101
        %7121 = vmatprep.subr.bf16.mxu0 0
        %7122 = vmatpush1.bf16.msra.mxu0 %v7102
        %7123 = vmatprep.subr.bf16.mxu0 0
        %7124 = vmatpush1.bf16.msra.mxu0 %v7103
        %7125 = vmatprep.subr.bf16.mxu0 0
        %7126 = vmatpush1.bf16.msra.mxu0 0
        %7127 = vmatprep.subr.bf16.mxu0 0
        %7128 = vmatpush1.bf16.msra.mxu0 0
        %7129 = vmatprep.subr.bf16.mxu0 0
        %7130 = vmatpush1.bf16.msra.mxu0 0
        %7131 = vmatprep.subr.bf16.mxu0 0
        %7132 = vmatpush1.bf16.msra.mxu0 0
        %7133 = vmatprep.subr.bf16.mxu0 0
        %7134 = vmatpush1.bf16.msra.mxu0 0
        %7135 = vmatprep.subr.bf16.mxu0 0
        %7136 = vmatpush1.bf16.msra.mxu0 0
        %7137 = vmatprep.subr.bf16.mxu0 0
        %7138 = vmatpush1.bf16.msra.mxu0 0
        %7139 = vmatprep.subr.bf16.mxu0 0
        %7140 = vmatpush1.bf16.msra.mxu0 0
        %7141 = vmatprep.subr.bf16.mxu0 0
        %7142 = vmatpush1.bf16.msra.mxu0 0
        %7143 = vmatprep.subr.bf16.mxu0 0
        %7144 = vmatpush1.bf16.msra.mxu0 0
        %7145 = vmatprep.mubr.bf16.mxu0 0
        %7146 = vmatmul.mubr.bf16.gmra.mrb[0].mxu0 %v6639
        %v7147 = vpop.f32.mrb[0].mxu0
        %v7148 = vadd.f32 0.0, %v7147
        %v7149 = vpop.f32.mrb[0].mxu0
        %v7150 = vpop.f32.mrb[0].mxu0
        %v7151 = vadd.f32 0.0, %v7150
        %v7152 = vpop.f32.mrb[0].mxu0
        %7153 = vmatprep.mubr.bf16.mxu0 0
        %7154 = vmatmul.mubr.bf16.gmra.mrb[0].mxu0 %v6642
        %v7155 = vpop.f32.mrb[0].mxu0
        %v7156 = vadd.f32 0.0, %v7155
        %v7157 = vpop.f32.mrb[0].mxu0
        %v7158 = vpop.f32.mrb[0].mxu0
        %v7159 = vadd.f32 0.0, %v7158
        %v7160 = vpop.f32.mrb[0].mxu0
        %7161 = vmatprep.mubr.bf16.mxu0 0
        %7162 = vmatmul.mubr.bf16.gmra.mrb[0].mxu0 %v6645
        %v7163 = vpop.f32.mrb[0].mxu0
        %v7164 = vadd.f32 0.0, %v7163
        %v7165 = vpop.f32.mrb[0].mxu0
        %v7166 = vpop.f32.mrb[0].mxu0
        %v7167 = vadd.f32 0.0, %v7166
        %v7168 = vpop.f32.mrb[0].mxu0
        %7169 = vmatprep.mubr.bf16.mxu0 0
        %7170 = vmatmul.mubr.bf16.gmra.mrb[0].mxu0 %v6648
        %v7171 = vpop.f32.mrb[0].mxu0
        %v7172 = vadd.f32 0.0, %v7171
        %v7173 = vpop.f32.mrb[0].mxu0
        %v7174 = vpop.f32.mrb[0].mxu0
        %v7175 = vadd.f32 0.0, %v7174
        %v7176 = vpop.f32.mrb[0].mxu0
        %7177 = vmatprep.mubr.bf16.mxu0 0
        %7178 = vmatmul.mubr.bf16.gmra.mrb[0].mxu0 %v6651
        %v7179 = vpop.f32.mrb[0].mxu0
        %v7180 = vadd.f32 0.0, %v7179
        %v7181 = vpop.f32.mrb[0].mxu0
        %v7182 = vpop.f32.mrb[0].mxu0
        %v7183 = vadd.f32 0.0, %v7182
        %v7184 = vpop.f32.mrb[0].mxu0
        %7185 = vmatprep.mubr.bf16.mxu0 0
        %7186 = vmatmul.mubr.bf16.gmra.mrb[0].mxu0 %v6654
        %v7187 = vpop.f32.mrb[0].mxu0
        %v7188 = vadd.f32 0.0, %v7187
        %v7189 = vpop.f32.mrb[0].mxu0
        %v7190 = vpop.f32.mrb[0].mxu0
        %v7191 = vadd.f32 0.0, %v7190
        %v7192 = vpop.f32.mrb[0].mxu0
        %7193 = vmatprep.mubr.bf16.mxu0 0
        %7194 = vmatmul.mubr.bf16.gmra.mrb[0].mxu0 %v6657
        %v7195 = vpop.f32.mrb[0].mxu0
        %v7196 = vadd.f32 0.0, %v7195
        %v7197 = vpop.f32.mrb[0].mxu0
        %v7198 = vpop.f32.mrb[0].mxu0
        %v7199 = vadd.f32 0.0, %v7198
        %v7200 = vpop.f32.mrb[0].mxu0
        %7201 = vmatprep.mubr.bf16.mxu0 0
        %7202 = vmatmul.mubr.bf16.gmra.mrb[0].mxu0 %v6660
        %v7203 = vpop.f32.mrb[0].mxu0
        %v7204 = vadd.f32 0.0, %v7203
        %v7205 = vpop.f32.mrb[0].mxu0
        %v7206 = vpop.f32.mrb[0].mxu0
        %v7207 = vadd.f32 0.0, %v7206
        %v7208 = vpop.f32.mrb[0].mxu0
        %7209 = vmatprep.mubr.bf16.mxu0 0
        %7210 = vmatmul.mubr.bf16.gmra.mrb[0].mxu0 %v6663
        %v7211 = vpop.f32.mrb[0].mxu0
        %v7212 = vadd.f32 0.0, %v7211
        %v7213 = vpop.f32.mrb[0].mxu0
        %v7214 = vpop.f32.mrb[0].mxu0
        %v7215 = vadd.f32 0.0, %v7214
        %v7216 = vpop.f32.mrb[0].mxu0
        %7217 = vmatprep.mubr.bf16.mxu0 0
        %7218 = vmatmul.mubr.bf16.gmra.mrb[0].mxu0 %v6666
        %v7219 = vpop.f32.mrb[0].mxu0
        %v7220 = vadd.f32 0.0, %v7219
        %v7221 = vpop.f32.mrb[0].mxu0
        %v7222 = vpop.f32.mrb[0].mxu0
        %v7223 = vadd.f32 0.0, %v7222
        %v7224 = vpop.f32.mrb[0].mxu0
        %7225 = vmatprep.mubr.bf16.mxu0 0
        %7226 = vmatmul.mubr.bf16.gmra.mrb[0].mxu0 %v6669
        %v7227 = vpop.f32.mrb[0].mxu0
        %v7228 = vadd.f32 0.0, %v7227
        %v7229 = vpop.f32.mrb[0].mxu0
        %v7230 = vpop.f32.mrb[0].mxu0
        %v7231 = vadd.f32 0.0, %v7230
        %v7232 = vpop.f32.mrb[0].mxu0
        %7233 = vmatprep.mubr.bf16.mxu0 0
        %7234 = vmatmul.mubr.bf16.gmra.mrb[0].mxu0 %v6672
        %v7235 = vpop.f32.mrb[0].mxu0
        %v7236 = vadd.f32 0.0, %v7235
        %v7237 = vpop.f32.mrb[0].mxu0
        %v7238 = vpop.f32.mrb[0].mxu0
        %v7239 = vadd.f32 0.0, %v7238
        %v7240 = vpop.f32.mrb[0].mxu0
        %7241 = vmatprep.mubr.bf16.mxu0 0
        %7242 = vmatmul.mubr.bf16.gmra.mrb[0].mxu0 %v6675
        %v7243 = vpop.f32.mrb[0].mxu0
        %v7244 = vadd.f32 0.0, %v7243
        %v7245 = vpop.f32.mrb[0].mxu0
        %v7246 = vpop.f32.mrb[0].mxu0
        %v7247 = vadd.f32 0.0, %v7246
        %v7248 = vpop.f32.mrb[0].mxu0
        %7249 = vmatprep.mubr.bf16.mxu0 0
        %7250 = vmatmul.mubr.bf16.gmra.mrb[0].mxu0 %v6678
        %v7251 = vpop.f32.mrb[0].mxu0
        %v7252 = vadd.f32 0.0, %v7251
        %v7253 = vpop.f32.mrb[0].mxu0
        %v7254 = vpop.f32.mrb[0].mxu0
        %v7255 = vadd.f32 0.0, %v7254
        %v7256 = vpop.f32.mrb[0].mxu0
        %7257 = vmatprep.mubr.bf16.mxu0 0
        %7258 = vmatmul.mubr.bf16.gmra.mrb[0].mxu0 %v6681
        %v7259 = vpop.f32.mrb[0].mxu0
        %v7260 = vadd.f32 0.0, %v7259
        %v7261 = vpop.f32.mrb[0].mxu0
        %v7262 = vpop.f32.mrb[0].mxu0
        %v7263 = vadd.f32 0.0, %v7262
        %v7264 = vpop.f32.mrb[0].mxu0
        %7265 = vmatprep.mubr.bf16.mxu0 0
        %7266 = vmatmul.mubr.bf16.gmra.mrb[0].mxu0 %v7111
        %v7267 = vpop.f32.mrb[0].mxu0
        %v7268 = vadd.f32 0.0, %v7267
        %v7269 = vpop.f32.mrb[0].mxu0
        %v7270 = vpop.f32.mrb[0].mxu0
        %v7271 = vadd.f32 0.0, %v7270
        %v7272 = vpop.f32.mrb[0].mxu0
        %7273 = vdwg.mxu0
        %v7274 = vadd.f32 %v6918, %v7148
        %v7275 = vadd.f32 %v6921, %v7151
        %v7276 = vadd.f32 %v6926, %v7156
        %v7277 = vadd.f32 %v6929, %v7159
        %v7278 = vadd.f32 %v6934, %v7164
        %v7279 = vadd.f32 %v6937, %v7167
        %v7280 = vadd.f32 %v6942, %v7172
        %v7281 = vadd.f32 %v6945, %v7175
        %v7282 = vadd.f32 %v6950, %v7180
        %v7283 = vadd.f32 %v6953, %v7183
        %v7284 = vadd.f32 %v6958, %v7188
        %v7285 = vadd.f32 %v6961, %v7191
        %v7286 = vadd.f32 %v6966, %v7196
        %v7287 = vadd.f32 %v6969, %v7199
        %v7288 = vadd.f32 %v6974, %v7204
        %v7289 = vadd.f32 %v6977, %v7207
        %v7290 = vadd.f32 %v6982, %v7212
        %v7291 = vadd.f32 %v6985, %v7215
        %v7292 = vadd.f32 %v6990, %v7220
        %v7293 = vadd.f32 %v6993, %v7223
        %v7294 = vadd.f32 %v6998, %v7228
        %v7295 = vadd.f32 %v7001, %v7231
        %v7296 = vadd.f32 %v7006, %v7236
        %v7297 = vadd.f32 %v7009, %v7239
        %v7298 = vadd.f32 %v7014, %v7244
        %v7299 = vadd.f32 %v7017, %v7247
        %v7300 = vadd.f32 %v7022, %v7252
        %v7301 = vadd.f32 %v7025, %v7255
        %v7302 = vadd.f32 %v7030, %v7260
        %v7303 = vadd.f32 %v7033, %v7263
        %v7304 = vadd.f32 %v7038, %v7268
        %v7305 = vadd.f32 %v7041, %v7271
        %v7307 = vlaneseq
        %v7308 = vshrl.u32 %v7307, 7
        %v7309 = vsub.s32 0, %v7308
        %v7310 = vrot.slane %v6088, %v7309
        %v7312 = vadd.f32 %v7274, %v7310
        %v7313 = vadd.f32 %v7275, %v7310
        %v7314 = vadd.f32 %v7276, %v7310
        %v7315 = vadd.f32 %v7277, %v7310
        %v7316 = vadd.f32 %v7278, %v7310
        %v7317 = vadd.f32 %v7279, %v7310
        %v7318 = vadd.f32 %v7280, %v7310
        %v7319 = vadd.f32 %v7281, %v7310
        %v7320 = vadd.f32 %v7282, %v7310
        %v7321 = vadd.f32 %v7283, %v7310
        %v7322 = vadd.f32 %v7284, %v7310
        %v7323 = vadd.f32 %v7285, %v7310
        %v7324 = vadd.f32 %v7286, %v7310
        %v7325 = vadd.f32 %v7287, %v7310
        %v7326 = vadd.f32 %v7288, %v7310
        %v7327 = vadd.f32 %v7289, %v7310
        %v7328 = vadd.f32 %v7290, %v7310
        %v7329 = vadd.f32 %v7291, %v7310
        %v7330 = vadd.f32 %v7292, %v7310
        %v7331 = vadd.f32 %v7293, %v7310
        %v7332 = vadd.f32 %v7294, %v7310
        %v7333 = vadd.f32 %v7295, %v7310
        %v7334 = vadd.f32 %v7296, %v7310
        %v7335 = vadd.f32 %v7297, %v7310
        %v7336 = vadd.f32 %v7298, %v7310
        %v7337 = vadd.f32 %v7299, %v7310
        %v7338 = vadd.f32 %v7300, %v7310
        %v7339 = vadd.f32 %v7301, %v7310
        %v7340 = vadd.f32 %v7302, %v7310
        %v7341 = vadd.f32 %v7303, %v7310
        %v7342 = vadd.f32 %v7304, %v7310
        %v7343 = vadd.f32 %v7305, %v7310
        %v7344 = vadd.f32 %v7312, %v4520
        %v7345 = vadd.f32 %v7313, %v4521
        %v7346 = vadd.f32 %v7314, %v4522
        %v7347 = vadd.f32 %v7315, %v4523
        %v7348 = vadd.f32 %v7316, %v4524
        %v7349 = vadd.f32 %v7317, %v4525
        %v7350 = vadd.f32 %v7318, %v4526
        %v7351 = vadd.f32 %v7319, %v4527
        %v7352 = vadd.f32 %v7320, %v4528
        %v7353 = vadd.f32 %v7321, %v4529
        %v7354 = vadd.f32 %v7322, %v4530
        %v7355 = vadd.f32 %v7323, %v4531
        %v7356 = vadd.f32 %v7324, %v4532
        %v7357 = vadd.f32 %v7325, %v4533
        %v7358 = vadd.f32 %v7326, %v4534
        %v7359 = vadd.f32 %v7327, %v4535
        %v7360 = vadd.f32 %v7328, %v4536
        %v7361 = vadd.f32 %v7329, %v4537
        %v7362 = vadd.f32 %v7330, %v4538
        %v7363 = vadd.f32 %v7331, %v4539
        %v7364 = vadd.f32 %v7332, %v4540
        %v7365 = vadd.f32 %v7333, %v4541
        %v7366 = vadd.f32 %v7334, %v4542
        %v7367 = vadd.f32 %v7335, %v4543
        %v7368 = vadd.f32 %v7336, %v4544
        %v7369 = vadd.f32 %v7337, %v4545
        %v7370 = vadd.f32 %v7338, %v4546
        %v7371 = vadd.f32 %v7339, %v4547
        %v7372 = vadd.f32 %v7340, %v4548
        %v7373 = vadd.f32 %v7341, %v4549
        %v7374 = vadd.f32 %v7342, %v4550
        %v7375 = vadd.f32 %v7343, %v4551
        %7376 = vst.msk [vmem:[%s1727 + $0x1] sm:$0xff] %vm334, %v7344
        %7377 = vst.msk [vmem:[%s1727 + $0x9] sm:$0xff] %vm334, %v7345
        %7378 = vst.msk [vmem:[%s1727 + $0x19] sm:$0xff] %vm334, %v7346
        %7379 = vst.msk [vmem:[%s1727 + $0x21] sm:$0xff] %vm334, %v7347
        %7380 = vst.msk [vmem:[%s1727 + $0x31] sm:$0xff] %vm334, %v7348
        %7381 = vst.msk [vmem:[%s1727 + $0x39] sm:$0xff] %vm334, %v7349
        %7382 = vst.msk [vmem:[%s1727 + $0x49] sm:$0xff] %vm334, %v7350
        %7383 = vst.msk [vmem:[%s1727 + $0x51] sm:$0xff] %vm334, %v7351
        %7384 = vst.msk [vmem:[%s1727 + $0x61] sm:$0xff] %vm334, %v7352
        %7385 = vst.msk [vmem:[%s1727 + $0x69] sm:$0xff] %vm334, %v7353
        %7386 = vst.msk [vmem:[%s1727 + $0x79] sm:$0xff] %vm334, %v7354
        %7387 = vst.msk [vmem:[%s1727 + $0x81] sm:$0xff] %vm334, %v7355
        %7388 = vst.msk [vmem:[%s1727 + $0x91] sm:$0xff] %vm334, %v7356
        %7389 = vst.msk [vmem:[%s1727 + $0x99] sm:$0xff] %vm334, %v7357
        %7390 = vst.msk [vmem:[%s1727 + $0xa9] sm:$0xff] %vm334, %v7358
        %7391 = vst.msk [vmem:[%s1727 + $0xb1] sm:$0xff] %vm334, %v7359
        %7392 = vst.msk [vmem:[%s1727 + $0xc1] sm:$0xff] %vm334, %v7360
        %7393 = vst.msk [vmem:[%s1727 + $0xc9] sm:$0xff] %vm334, %v7361
        %7394 = vst.msk [vmem:[%s1727 + $0xd9] sm:$0xff] %vm334, %v7362
        %7395 = vst.msk [vmem:[%s1727 + $0xe1] sm:$0xff] %vm334, %v7363
        %7396 = vst.msk [vmem:[%s1727 + $0xf1] sm:$0xff] %vm334, %v7364
        %7397 = vst.msk [vmem:[%s1727 + $0xf9] sm:$0xff] %vm334, %v7365
        %7398 = vst.msk [vmem:[%s1727 + $0x109] sm:$0xff] %vm334, %v7366
        %7399 = vst.msk [vmem:[%s1727 + $0x111] sm:$0xff] %vm334, %v7367
        %7400 = vst.msk [vmem:[%s1727 + $0x121] sm:$0xff] %vm334, %v7368
        %7401 = vst.msk [vmem:[%s1727 + $0x129] sm:$0xff] %vm334, %v7369
        %7402 = vst.msk [vmem:[%s1727 + $0x139] sm:$0xff] %vm334, %v7370
        %7403 = vst.msk [vmem:[%s1727 + $0x141] sm:$0xff] %vm334, %v7371
        %7404 = vst.msk [vmem:[%s1727 + $0x151] sm:$0xff] %vm334, %v7372
        %7405 = vst.msk [vmem:[%s1727 + $0x159] sm:$0xff] %vm334, %v7373
        %7406 = vst.msk [vmem:[%s1727 + $0x169] sm:$0xff] %vm334, %v7374
        %7407 = vst.msk [vmem:[%s1727 + $0x171] sm:$0xff] %vm334, %v7375
        %v7408 = vld [vmem:[#allocation3] sm:$0xff]
        %v7409 = vld [vmem:[#allocation3 + $0x8] sm:$0xff]
        %v7410 = vld [vmem:[#allocation3 + $0x10] sm:$0x3]
        %v7411 = vld [vmem:[#allocation3 + $0x18] sm:$0xff]
        %v7412 = vld [vmem:[#allocation3 + $0x20] sm:$0xff]
        %v7413 = vld [vmem:[#allocation3 + $0x28] sm:$0x3]
        %v7414 = vld [vmem:[#allocation3 + $0x30] sm:$0xff]
        %v7415 = vld [vmem:[#allocation3 + $0x38] sm:$0xff]
        %v7416 = vld [vmem:[#allocation3 + $0x40] sm:$0x3]
        %v7417 = vld [vmem:[#allocation3 + $0x48] sm:$0xff]
        %v7418 = vld [vmem:[#allocation3 + $0x50] sm:$0xff]
        %v7419 = vld [vmem:[#allocation3 + $0x58] sm:$0x3]
        %v7420 = vld [vmem:[#allocation3 + $0x60] sm:$0xff]
        %v7421 = vld [vmem:[#allocation3 + $0x68] sm:$0xff]
        %v7422 = vld [vmem:[#allocation3 + $0x70] sm:$0x3]
        %v7423 = vld [vmem:[#allocation3 + $0x78] sm:$0xff]
        %v7424 = vld [vmem:[#allocation3 + $0x80] sm:$0xff]
        %v7425 = vld [vmem:[#allocation3 + $0x88] sm:$0x3]
        %v7426 = vld [vmem:[#allocation3 + $0x90] sm:$0xff]
        %v7427 = vld [vmem:[#allocation3 + $0x98] sm:$0xff]
        %v7428 = vld [vmem:[#allocation3 + $0xa0] sm:$0x3]
        %v7429 = vld [vmem:[#allocation3 + $0xa8] sm:$0xff]
        %v7430 = vld [vmem:[#allocation3 + $0xb0] sm:$0xff]
        %v7431 = vld [vmem:[#allocation3 + $0xb8] sm:$0x3]
        %v7432 = vld [vmem:[#allocation3 + $0xc0] sm:$0xff]
        %v7433 = vld [vmem:[#allocation3 + $0xc8] sm:$0xff]
        %v7434 = vld [vmem:[#allocation3 + $0xd0] sm:$0x3]
        %v7435 = vld [vmem:[#allocation3 + $0xd8] sm:$0xff]
        %v7436 = vld [vmem:[#allocation3 + $0xe0] sm:$0xff]
        %v7437 = vld [vmem:[#allocation3 + $0xe8] sm:$0x3]
        %v7438 = vld [vmem:[#allocation3 + $0xf0] sm:$0xff]
        %v7439 = vld [vmem:[#allocation3 + $0xf8] sm:$0xff]
        %v7440 = vld [vmem:[#allocation3 + $0x100] sm:$0x3]
        %v7441 = vld [vmem:[#allocation3 + $0x108] sm:$0xff]
        %v7442 = vld [vmem:[#allocation3 + $0x110] sm:$0xff]
        %v7443 = vld [vmem:[#allocation3 + $0x118] sm:$0x3]
        %v7444 = vld [vmem:[#allocation3 + $0x120] sm:$0xff]
        %v7445 = vld [vmem:[#allocation3 + $0x128] sm:$0xff]
        %v7446 = vld [vmem:[#allocation3 + $0x130] sm:$0x3]
        %v7447 = vld [vmem:[#allocation3 + $0x138] sm:$0xff]
        %v7448 = vld [vmem:[#allocation3 + $0x140] sm:$0xff]
        %v7449 = vld [vmem:[#allocation3 + $0x148] sm:$0x3]
        %v7450 = vld [vmem:[#allocation3 + $0x150] sm:$0xff]
        %v7451 = vld [vmem:[#allocation3 + $0x158] sm:$0xff]
        %v7452 = vld [vmem:[#allocation3 + $0x160] sm:$0x3]
        %v7453 = vld [vmem:[#allocation3 + $0x168] sm:$0xff]
        %v7454 = vld [vmem:[#allocation3 + $0x170] sm:$0xff]
        %v7455 = vld [vmem:[#allocation3 + $0x178] sm:$0x3]
        %v7456 = vld [vmem:[#allocation3 + $0x180] sm:$0xff]
        %v7457 = vld [vmem:[#allocation3 + $0x188] sm:$0xff]
        %v7458 = vld [vmem:[#allocation3 + $0x190] sm:$0x3]
        %v7459 = vld [vmem:[#allocation3 + $0x198] sm:$0xff]
        %v7460 = vld [vmem:[#allocation3 + $0x1a0] sm:$0xff]
        %v7461 = vld [vmem:[#allocation3 + $0x1a8] sm:$0x3]
        %v7462 = vld [vmem:[%s5] sm:$0xf]
        %v7463 = vld [vmem:[%s5 + $0x4] sm:$0xf]
        %v7464 = vld [vmem:[%s5 + $0x8] sm:$0xf]
        %v7465 = vld [vmem:[%s5 + $0xc] sm:$0xf]
        %v7466 = vld [vmem:[%s5 + $0x10] sm:$0xf]
        %v7467 = vld [vmem:[%s5 + $0x14] sm:$0xf]
        %v7468 = vld [vmem:[%s5 + $0x18] sm:$0xf]
        %v7469 = vld [vmem:[%s5 + $0x1c] sm:$0xf]
        %v7470 = vld [vmem:[%s5 + $0x20] sm:$0xf]
        %v7471 = vld [vmem:[%s5 + $0x24] sm:$0xf]
        %v7472 = vld [vmem:[%s5 + $0x28] sm:$0xf]
        %v7473 = vld [vmem:[%s5 + $0x2c] sm:$0xf]
        %v7474 = vld [vmem:[%s5 + $0x30] sm:$0xf]
        %v7475 = vld [vmem:[%s5 + $0x34] sm:$0xf]
        %v7476 = vld [vmem:[%s5 + $0x38] sm:$0xf]
        %v7477 = vld [vmem:[%s5 + $0x3c] sm:$0xf]
        %v7478 = vld [vmem:[%s5 + $0x40] sm:$0xf]
        %v7479 = vld [vmem:[%s5 + $0x44] sm:$0xf]
        %v7480 = vld [vmem:[%s5 + $0x48] sm:$0xf]
        %v7481 = vld [vmem:[%s5 + $0x4c] sm:$0xf]
        %v7482 = vld [vmem:[%s5 + $0x50] sm:$0xf]
        %v7483 = vld [vmem:[%s5 + $0x54] sm:$0xf]
        %v7484 = vld [vmem:[%s5 + $0x58] sm:$0xf]
        %v7485 = vld [vmem:[%s5 + $0x5c] sm:$0xf]
        %v7486 = vld [vmem:[%s5 + $0x60] sm:$0xf]
        %v7487 = vld [vmem:[%s5 + $0x64] sm:$0xf]
        %v7488 = vld [vmem:[%s5 + $0x68] sm:$0xf]
        %v7489 = vld [vmem:[%s5 + $0x6c] sm:$0xf]
        %v7490 = vld [vmem:[%s5 + $0x70] sm:$0xf]
        %v7491 = vld [vmem:[%s5 + $0x74] sm:$0xf]
        %v7492 = vld [vmem:[%s5 + $0x78] sm:$0xf]
        %v7493 = vld [vmem:[%s5 + $0x7c] sm:$0xf]
        %v7494 = vld [vmem:[%s5 + $0x80] sm:$0xf]
        %v7495 = vld [vmem:[%s5 + $0x84] sm:$0xf]
        %v7496 = vld [vmem:[%s5 + $0x88] sm:$0xf]
        %v7497 = vld [vmem:[%s5 + $0x8c] sm:$0xf]
        %v7498 = vld [vmem:[%s6] sm:$0x1]
        %v7547 = vrot.slane %v7408, 1
        %v7548 = vrot.slane %v7409, 1
        %v7549 = vsel %vm564, %v7547, %v7548
        %v7550 = vrot.slane %v7410, 1
        %v7551 = vsel %vm564, %v7548, %v7550
        %v7552 = vrot.slane %v7411, 1
        %v7553 = vrot.slane %v7412, 1
        %v7554 = vsel %vm564, %v7552, %v7553
        %v7555 = vrot.slane %v7413, 1
        %v7556 = vsel %vm564, %v7553, %v7555
        %v7557 = vrot.slane %v7414, 1
        %v7558 = vrot.slane %v7415, 1
        %v7559 = vsel %vm564, %v7557, %v7558
        %v7560 = vrot.slane %v7416, 1
        %v7561 = vsel %vm564, %v7558, %v7560
        %v7562 = vrot.slane %v7417, 1
        %v7563 = vrot.slane %v7418, 1
        %v7564 = vsel %vm564, %v7562, %v7563
        %v7565 = vrot.slane %v7419, 1
        %v7566 = vsel %vm564, %v7563, %v7565
        %v7567 = vrot.slane %v7420, 1
        %v7568 = vrot.slane %v7421, 1
        %v7569 = vsel %vm564, %v7567, %v7568
        %v7570 = vrot.slane %v7422, 1
        %v7571 = vsel %vm564, %v7568, %v7570
        %v7572 = vrot.slane %v7423, 1
        %v7573 = vrot.slane %v7424, 1
        %v7574 = vsel %vm564, %v7572, %v7573
        %v7575 = vrot.slane %v7425, 1
        %v7576 = vsel %vm564, %v7573, %v7575
        %v7577 = vrot.slane %v7426, 1
        %v7578 = vrot.slane %v7427, 1
        %v7579 = vsel %vm564, %v7577, %v7578
        %v7580 = vrot.slane %v7428, 1
        %v7581 = vsel %vm564, %v7578, %v7580
        %v7582 = vrot.slane %v7429, 1
        %v7583 = vrot.slane %v7430, 1
        %v7584 = vsel %vm564, %v7582, %v7583
        %v7585 = vrot.slane %v7431, 1
        %v7586 = vsel %vm564, %v7583, %v7585
        %v7587 = vrot.slane %v7432, 1
        %v7588 = vrot.slane %v7433, 1
        %v7589 = vsel %vm564, %v7587, %v7588
        %v7590 = vrot.slane %v7434, 1
        %v7591 = vsel %vm564, %v7588, %v7590
        %v7592 = vrot.slane %v7435, 1
        %v7593 = vrot.slane %v7436, 1
        %v7594 = vsel %vm564, %v7592, %v7593
        %v7595 = vrot.slane %v7437, 1
        %v7596 = vsel %vm564, %v7593, %v7595
        %v7597 = vrot.slane %v7438, 1
        %v7598 = vrot.slane %v7439, 1
        %v7599 = vsel %vm564, %v7597, %v7598
        %v7600 = vrot.slane %v7440, 1
        %v7601 = vsel %vm564, %v7598, %v7600
        %v7602 = vrot.slane %v7441, 1
        %v7603 = vrot.slane %v7442, 1
        %v7604 = vsel %vm564, %v7602, %v7603
        %v7605 = vrot.slane %v7443, 1
        %v7606 = vsel %vm564, %v7603, %v7605
        %v7607 = vrot.slane %v7444, 1
        %v7608 = vrot.slane %v7445, 1
        %v7609 = vsel %vm564, %v7607, %v7608
        %v7610 = vrot.slane %v7446, 1
        %v7611 = vsel %vm564, %v7608, %v7610
        %v7612 = vrot.slane %v7447, 1
        %v7613 = vrot.slane %v7448, 1
        %v7614 = vsel %vm564, %v7612, %v7613
        %v7615 = vrot.slane %v7449, 1
        %v7616 = vsel %vm564, %v7613, %v7615
        %v7617 = vrot.slane %v7450, 1
        %v7618 = vrot.slane %v7451, 1
        %v7619 = vsel %vm564, %v7617, %v7618
        %v7620 = vrot.slane %v7452, 1
        %v7621 = vsel %vm564, %v7618, %v7620
        %v7622 = vrot.slane %v7453, 1
        %v7623 = vrot.slane %v7454, 1
        %v7624 = vsel %vm564, %v7622, %v7623
        %v7625 = vrot.slane %v7455, 1
        %v7626 = vsel %vm564, %v7623, %v7625
        %7627 = vrot.lane.b32.xlu0 %v7549, 32
        %v7628 = vpop.permute.xlu0 %7627
        %7629 = vrot.lane.b32.xlu0 %v7551, 32
        %v7630 = vpop.permute.xlu0 %7629
        %7631 = vrot.lane.b32.xlu0 %v7554, 32
        %v7632 = vpop.permute.xlu0 %7631
        %7633 = vrot.lane.b32.xlu0 %v7556, 32
        %v7634 = vpop.permute.xlu0 %7633
        %7635 = vrot.lane.b32.xlu0 %v7559, 32
        %v7636 = vpop.permute.xlu0 %7635
        %7637 = vrot.lane.b32.xlu0 %v7561, 32
        %v7638 = vpop.permute.xlu0 %7637
        %7639 = vrot.lane.b32.xlu0 %v7564, 32
        %v7640 = vpop.permute.xlu0 %7639
        %7641 = vrot.lane.b32.xlu0 %v7566, 32
        %v7642 = vpop.permute.xlu0 %7641
        %7643 = vrot.lane.b32.xlu0 %v7569, 32
        %v7644 = vpop.permute.xlu0 %7643
        %7645 = vrot.lane.b32.xlu0 %v7571, 32
        %v7646 = vpop.permute.xlu0 %7645
        %7647 = vrot.lane.b32.xlu0 %v7574, 32
        %v7648 = vpop.permute.xlu0 %7647
        %7649 = vrot.lane.b32.xlu0 %v7576, 32
        %v7650 = vpop.permute.xlu0 %7649
        %7651 = vrot.lane.b32.xlu0 %v7579, 32
        %v7652 = vpop.permute.xlu0 %7651
        %7653 = vrot.lane.b32.xlu0 %v7581, 32
        %v7654 = vpop.permute.xlu0 %7653
        %7655 = vrot.lane.b32.xlu0 %v7584, 32
        %v7656 = vpop.permute.xlu0 %7655
        %7657 = vrot.lane.b32.xlu0 %v7586, 32
        %v7658 = vpop.permute.xlu0 %7657
        %7659 = vrot.lane.b32.xlu0 %v7589, 32
        %v7660 = vpop.permute.xlu0 %7659
        %7661 = vrot.lane.b32.xlu0 %v7591, 32
        %v7662 = vpop.permute.xlu0 %7661
        %7663 = vrot.lane.b32.xlu0 %v7594, 32
        %v7664 = vpop.permute.xlu0 %7663
        %7665 = vrot.lane.b32.xlu0 %v7596, 32
        %v7666 = vpop.permute.xlu0 %7665
        %7667 = vrot.lane.b32.xlu0 %v7599, 32
        %v7668 = vpop.permute.xlu0 %7667
        %7669 = vrot.lane.b32.xlu0 %v7601, 32
        %v7670 = vpop.permute.xlu0 %7669
        %7671 = vrot.lane.b32.xlu0 %v7604, 32
        %v7672 = vpop.permute.xlu0 %7671
        %7673 = vrot.lane.b32.xlu0 %v7606, 32
        %v7674 = vpop.permute.xlu0 %7673
        %7675 = vrot.lane.b32.xlu0 %v7609, 32
        %v7676 = vpop.permute.xlu0 %7675
        %7677 = vrot.lane.b32.xlu0 %v7611, 32
        %v7678 = vpop.permute.xlu0 %7677
        %7679 = vrot.lane.b32.xlu0 %v7614, 32
        %v7680 = vpop.permute.xlu0 %7679
        %7681 = vrot.lane.b32.xlu0 %v7616, 32
        %v7682 = vpop.permute.xlu0 %7681
        %7683 = vrot.lane.b32.xlu0 %v7619, 32
        %v7684 = vpop.permute.xlu0 %7683
        %7685 = vrot.lane.b32.xlu0 %v7621, 32
        %v7686 = vpop.permute.xlu0 %7685
        %7687 = vrot.lane.b32.xlu0 %v7624, 32
        %v7688 = vpop.permute.xlu0 %7687
        %7689 = vrot.lane.b32.xlu0 %v7626, 32
        %v7690 = vpop.permute.xlu0 %7689
        %v7723 = vrot.slane %v7408, 2
        %v7724 = vrot.slane %v7409, 2
        %v7725 = vsel %vm741, %v7723, %v7724
        %v7726 = vrot.slane %v7410, 2
        %v7727 = vsel %vm741, %v7724, %v7726
        %v7728 = vrot.slane %v7411, 2
        %v7729 = vrot.slane %v7412, 2
        %v7730 = vsel %vm741, %v7728, %v7729
        %v7731 = vrot.slane %v7413, 2
        %v7732 = vsel %vm741, %v7729, %v7731
        %v7733 = vrot.slane %v7414, 2
        %v7734 = vrot.slane %v7415, 2
        %v7735 = vsel %vm741, %v7733, %v7734
        %v7736 = vrot.slane %v7416, 2
        %v7737 = vsel %vm741, %v7734, %v7736
        %v7738 = vrot.slane %v7417, 2
        %v7739 = vrot.slane %v7418, 2
        %v7740 = vsel %vm741, %v7738, %v7739
        %v7741 = vrot.slane %v7419, 2
        %v7742 = vsel %vm741, %v7739, %v7741
        %v7743 = vrot.slane %v7420, 2
        %v7744 = vrot.slane %v7421, 2
        %v7745 = vsel %vm741, %v7743, %v7744
        %v7746 = vrot.slane %v7422, 2
        %v7747 = vsel %vm741, %v7744, %v7746
        %v7748 = vrot.slane %v7423, 2
        %v7749 = vrot.slane %v7424, 2
        %v7750 = vsel %vm741, %v7748, %v7749
        %v7751 = vrot.slane %v7425, 2
        %v7752 = vsel %vm741, %v7749, %v7751
        %v7753 = vrot.slane %v7426, 2
        %v7754 = vrot.slane %v7427, 2
        %v7755 = vsel %vm741, %v7753, %v7754
        %v7756 = vrot.slane %v7428, 2
        %v7757 = vsel %vm741, %v7754, %v7756
        %v7758 = vrot.slane %v7429, 2
        %v7759 = vrot.slane %v7430, 2
        %v7760 = vsel %vm741, %v7758, %v7759
        %v7761 = vrot.slane %v7431, 2
        %v7762 = vsel %vm741, %v7759, %v7761
        %v7763 = vrot.slane %v7432, 2
        %v7764 = vrot.slane %v7433, 2
        %v7765 = vsel %vm741, %v7763, %v7764
        %v7766 = vrot.slane %v7434, 2
        %v7767 = vsel %vm741, %v7764, %v7766
        %v7768 = vrot.slane %v7435, 2
        %v7769 = vrot.slane %v7436, 2
        %v7770 = vsel %vm741, %v7768, %v7769
        %v7771 = vrot.slane %v7437, 2
        %v7772 = vsel %vm741, %v7769, %v7771
        %v7773 = vrot.slane %v7438, 2
        %v7774 = vrot.slane %v7439, 2
        %v7775 = vsel %vm741, %v7773, %v7774
        %v7776 = vrot.slane %v7440, 2
        %v7777 = vsel %vm741, %v7774, %v7776
        %v7778 = vrot.slane %v7441, 2
        %v7779 = vrot.slane %v7442, 2
        %v7780 = vsel %vm741, %v7778, %v7779
        %v7781 = vrot.slane %v7443, 2
        %v7782 = vsel %vm741, %v7779, %v7781
        %v7783 = vrot.slane %v7444, 2
        %v7784 = vrot.slane %v7445, 2
        %v7785 = vsel %vm741, %v7783, %v7784
        %v7786 = vrot.slane %v7446, 2
        %v7787 = vsel %vm741, %v7784, %v7786
        %v7788 = vrot.slane %v7447, 2
        %v7789 = vrot.slane %v7448, 2
        %v7790 = vsel %vm741, %v7788, %v7789
        %v7791 = vrot.slane %v7449, 2
        %v7792 = vsel %vm741, %v7789, %v7791
        %v7793 = vrot.slane %v7450, 2
        %v7794 = vrot.slane %v7451, 2
        %v7795 = vsel %vm741, %v7793, %v7794
        %v7796 = vrot.slane %v7452, 2
        %v7797 = vsel %vm741, %v7794, %v7796
        %v7798 = vrot.slane %v7453, 2
        %v7799 = vrot.slane %v7454, 2
        %v7800 = vsel %vm741, %v7798, %v7799
        %v7801 = vrot.slane %v7455, 2
        %v7802 = vsel %vm741, %v7799, %v7801
        %7803 = vrot.lane.b32.xlu0 %v7725, 64
        %v7804 = vpop.permute.xlu0 %7803
        %7805 = vrot.lane.b32.xlu0 %v7727, 64
        %v7806 = vpop.permute.xlu0 %7805
        %7807 = vrot.lane.b32.xlu0 %v7730, 64
        %v7808 = vpop.permute.xlu0 %7807
        %7809 = vrot.lane.b32.xlu0 %v7732, 64
        %v7810 = vpop.permute.xlu0 %7809
        %7811 = vrot.lane.b32.xlu0 %v7735, 64
        %v7812 = vpop.permute.xlu0 %7811
        %7813 = vrot.lane.b32.xlu0 %v7737, 64
        %v7814 = vpop.permute.xlu0 %7813
        %7815 = vrot.lane.b32.xlu0 %v7740, 64
        %v7816 = vpop.permute.xlu0 %7815
        %7817 = vrot.lane.b32.xlu0 %v7742, 64
        %v7818 = vpop.permute.xlu0 %7817
        %7819 = vrot.lane.b32.xlu0 %v7745, 64
        %v7820 = vpop.permute.xlu0 %7819
        %7821 = vrot.lane.b32.xlu0 %v7747, 64
        %v7822 = vpop.permute.xlu0 %7821
        %7823 = vrot.lane.b32.xlu0 %v7750, 64
        %v7824 = vpop.permute.xlu0 %7823
        %7825 = vrot.lane.b32.xlu0 %v7752, 64
        %v7826 = vpop.permute.xlu0 %7825
        %7827 = vrot.lane.b32.xlu0 %v7755, 64
        %v7828 = vpop.permute.xlu0 %7827
        %7829 = vrot.lane.b32.xlu0 %v7757, 64
        %v7830 = vpop.permute.xlu0 %7829
        %7831 = vrot.lane.b32.xlu0 %v7760, 64
        %v7832 = vpop.permute.xlu0 %7831
        %7833 = vrot.lane.b32.xlu0 %v7762, 64
        %v7834 = vpop.permute.xlu0 %7833
        %7835 = vrot.lane.b32.xlu0 %v7765, 64
        %v7836 = vpop.permute.xlu0 %7835
        %7837 = vrot.lane.b32.xlu0 %v7767, 64
        %v7838 = vpop.permute.xlu0 %7837
        %7839 = vrot.lane.b32.xlu0 %v7770, 64
        %v7840 = vpop.permute.xlu0 %7839
        %7841 = vrot.lane.b32.xlu0 %v7772, 64
        %v7842 = vpop.permute.xlu0 %7841
        %7843 = vrot.lane.b32.xlu0 %v7775, 64
        %v7844 = vpop.permute.xlu0 %7843
        %7845 = vrot.lane.b32.xlu0 %v7777, 64
        %v7846 = vpop.permute.xlu0 %7845
        %7847 = vrot.lane.b32.xlu0 %v7780, 64
        %v7848 = vpop.permute.xlu0 %7847
        %7849 = vrot.lane.b32.xlu0 %v7782, 64
        %v7850 = vpop.permute.xlu0 %7849
        %7851 = vrot.lane.b32.xlu0 %v7785, 64
        %v7852 = vpop.permute.xlu0 %7851
        %7853 = vrot.lane.b32.xlu0 %v7787, 64
        %v7854 = vpop.permute.xlu0 %7853
        %7855 = vrot.lane.b32.xlu0 %v7790, 64
        %v7856 = vpop.permute.xlu0 %7855
        %7857 = vrot.lane.b32.xlu0 %v7792, 64
        %v7858 = vpop.permute.xlu0 %7857
        %7859 = vrot.lane.b32.xlu0 %v7795, 64
        %v7860 = vpop.permute.xlu0 %7859
        %7861 = vrot.lane.b32.xlu0 %v7797, 64
        %v7862 = vpop.permute.xlu0 %7861
        %7863 = vrot.lane.b32.xlu0 %v7800, 64
        %v7864 = vpop.permute.xlu0 %7863
        %7865 = vrot.lane.b32.xlu0 %v7802, 64
        %v7866 = vpop.permute.xlu0 %7865
        %v7899 = vsel %vm334, %v7408, %v7628
        %v7900 = vsel %vm334, %v7409, %v7630
        %v7901 = vsel %vm334, %v7411, %v7632
        %v7902 = vsel %vm334, %v7412, %v7634
        %v7903 = vsel %vm334, %v7414, %v7636
        %v7904 = vsel %vm334, %v7415, %v7638
        %v7905 = vsel %vm334, %v7417, %v7640
        %v7906 = vsel %vm334, %v7418, %v7642
        %v7907 = vsel %vm334, %v7420, %v7644
        %v7908 = vsel %vm334, %v7421, %v7646
        %v7909 = vsel %vm334, %v7423, %v7648
        %v7910 = vsel %vm334, %v7424, %v7650
        %v7911 = vsel %vm334, %v7426, %v7652
        %v7912 = vsel %vm334, %v7427, %v7654
        %v7913 = vsel %vm334, %v7429, %v7656
        %v7914 = vsel %vm334, %v7430, %v7658
        %v7915 = vsel %vm334, %v7432, %v7660
        %v7916 = vsel %vm334, %v7433, %v7662
        %v7917 = vsel %vm334, %v7435, %v7664
        %v7918 = vsel %vm334, %v7436, %v7666
        %v7919 = vsel %vm334, %v7438, %v7668
        %v7920 = vsel %vm334, %v7439, %v7670
        %v7921 = vsel %vm334, %v7441, %v7672
        %v7922 = vsel %vm334, %v7442, %v7674
        %v7923 = vsel %vm334, %v7444, %v7676
        %v7924 = vsel %vm334, %v7445, %v7678
        %v7925 = vsel %vm334, %v7447, %v7680
        %v7926 = vsel %vm334, %v7448, %v7682
        %v7927 = vsel %vm334, %v7450, %v7684
        %v7928 = vsel %vm334, %v7451, %v7686
        %v7929 = vsel %vm334, %v7453, %v7688
        %v7930 = vsel %vm334, %v7454, %v7690
        %v7931 = vsel %vm2283, %v7899, %v7804
        %v7932 = vsel %vm2283, %v7900, %v7806
        %v7933 = vsel %vm2283, %v7901, %v7808
        %v7934 = vsel %vm2283, %v7902, %v7810
        %v7935 = vsel %vm2283, %v7903, %v7812
        %v7936 = vsel %vm2283, %v7904, %v7814
        %v7937 = vsel %vm2283, %v7905, %v7816
        %v7938 = vsel %vm2283, %v7906, %v7818
        %v7939 = vsel %vm2283, %v7907, %v7820
        %v7940 = vsel %vm2283, %v7908, %v7822
        %v7941 = vsel %vm2283, %v7909, %v7824
        %v7942 = vsel %vm2283, %v7910, %v7826
        %v7943 = vsel %vm2283, %v7911, %v7828
        %v7944 = vsel %vm2283, %v7912, %v7830
        %v7945 = vsel %vm2283, %v7913, %v7832
        %v7946 = vsel %vm2283, %v7914, %v7834
        %v7947 = vsel %vm2283, %v7915, %v7836
        %v7948 = vsel %vm2283, %v7916, %v7838
        %v7949 = vsel %vm2283, %v7917, %v7840
        %v7950 = vsel %vm2283, %v7918, %v7842
        %v7951 = vsel %vm2283, %v7919, %v7844
        %v7952 = vsel %vm2283, %v7920, %v7846
        %v7953 = vsel %vm2283, %v7921, %v7848
        %v7954 = vsel %vm2283, %v7922, %v7850
        %v7955 = vsel %vm2283, %v7923, %v7852
        %v7956 = vsel %vm2283, %v7924, %v7854
        %v7957 = vsel %vm2283, %v7925, %v7856
        %v7958 = vsel %vm2283, %v7926, %v7858
        %v7959 = vsel %vm2283, %v7927, %v7860
        %v7960 = vsel %vm2283, %v7928, %v7862
        %v7961 = vsel %vm2283, %v7929, %v7864
        %v7962 = vsel %vm2283, %v7930, %v7866
        %v7963 = vpack.c.bf16 %v7932, %v7931
        %v7964 = vpack.c.bf16 %v7934, %v7933
        %v7965 = vpack.c.bf16 %v7936, %v7935
        %v7966 = vpack.c.bf16 %v7938, %v7937
        %v7967 = vpack.c.bf16 %v7940, %v7939
        %v7968 = vpack.c.bf16 %v7942, %v7941
        %v7969 = vpack.c.bf16 %v7944, %v7943
        %v7970 = vpack.c.bf16 %v7946, %v7945
        %v7971 = vpack.c.bf16 %v7948, %v7947
        %v7972 = vpack.c.bf16 %v7950, %v7949
        %v7973 = vpack.c.bf16 %v7952, %v7951
        %v7974 = vpack.c.bf16 %v7954, %v7953
        %v7975 = vpack.c.bf16 %v7956, %v7955
        %v7976 = vpack.c.bf16 %v7958, %v7957
        %v7977 = vpack.c.bf16 %v7960, %v7959
        %v7978 = vpack.c.bf16 %v7962, %v7961
        %v7982 = vrot.slane %v7456, 1
        %v7983 = vrot.slane %v7457, 1
        %v7984 = vsel %vm564, %v7982, %v7983
        %v7985 = vrot.slane %v7458, 1
        %v7986 = vsel %vm564, %v7983, %v7985
        %7987 = vrot.lane.b32.xlu0 %v7984, 32
        %v7988 = vpop.permute.xlu0 %7987
        %7989 = vrot.lane.b32.xlu0 %v7986, 32
        %v7990 = vpop.permute.xlu0 %7989
        %v7993 = vrot.slane %v7456, 2
        %v7994 = vrot.slane %v7457, 2
        %v7995 = vsel %vm741, %v7993, %v7994
        %v7996 = vrot.slane %v7458, 2
        %v7997 = vsel %vm741, %v7994, %v7996
        %7998 = vrot.lane.b32.xlu0 %v7995, 64
        %v7999 = vpop.permute.xlu0 %7998
        %8000 = vrot.lane.b32.xlu0 %v7997, 64
        %v8001 = vpop.permute.xlu0 %8000
        %v8004 = vsel %vm334, %v7456, %v7988
        %v8005 = vsel %vm334, %v7457, %v7990
        %v8006 = vsel %vm2283, %v8004, %v7999
        %v8007 = vsel %vm2283, %v8005, %v8001
        %v8008 = vpack.c.bf16 %v8007, %v8006
        %v8021 = vunpack.c.l.b16 %v7474
        %v8022 = vunpack.c.l.b16 %v7475
        %v8023 = vunpack.c.l.b16 %v7476
        %v8024 = vunpack.c.l.b16 %v7477
        %v8025 = vunpack.c.l.b16 %v7478
        %v8026 = vunpack.c.l.b16 %v7479
        %v8027 = vunpack.c.l.b16 %v7480
        %v8028 = vunpack.c.l.b16 %v7481
        %v8029 = vunpack.c.l.b16 %v7482
        %v8030 = vunpack.c.l.b16 %v7483
        %v8031 = vunpack.c.l.b16 %v7484
        %v8032 = vunpack.c.l.b16 %v7485
        %v8033 = vpack.c.b16 %v8022, %v8021
        %v8034 = vpack.c.b16 %v8024, %v8023
        %v8035 = vpack.c.b16 %v8026, %v8025
        %v8036 = vpack.c.b16 %v8028, %v8027
        %v8037 = vpack.c.b16 %v8030, %v8029
        %v8038 = vpack.c.b16 %v8032, %v8031
        %v8046 = vsel %vm2398, %v7964, 0
        %v8049 = vsel %vm2398, %v7965, 0
        %v8052 = vsel %vm2398, %v7966, 0
        %v8055 = vsel %vm2398, %v7967, 0
        %v8058 = vsel %vm2398, %v7968, 0
        %v8061 = vsel %vm2398, %v7969, 0
        %v8064 = vsel %vm2398, %v7970, 0
        %v8067 = vsel %vm2398, %v7971, 0
        %v8070 = vsel %vm2398, %v7972, 0
        %v8073 = vsel %vm2398, %v7973, 0
        %v8076 = vsel %vm2398, %v7974, 0
        %v8079 = vsel %vm2398, %v7975, 0
        %v8082 = vsel %vm2398, %v7976, 0
        %v8085 = vsel %vm2398, %v7977, 0
        %v8088 = vsel %vm2398, %v7978, 0
        %v8091 = vsel %vm2398, %v8008, 0
        %8093 = vmatprep.subr.bf16.mxu0 0
        %8094 = vmatpush1.bf16.msra.mxu0 %v8033
        %8095 = vmatprep.subr.bf16.mxu0 0
        %8096 = vmatpush1.bf16.msra.mxu0 %v8034
        %8097 = vmatprep.subr.bf16.mxu0 0
        %8098 = vmatpush1.bf16.msra.mxu0 %v8035
        %8099 = vmatprep.subr.bf16.mxu0 0
        %8100 = vmatpush1.bf16.msra.mxu0 %v8036
        %8101 = vmatprep.subr.bf16.mxu0 0
        %8102 = vmatpush1.bf16.msra.mxu0 %v8037
        %8103 = vmatprep.subr.bf16.mxu0 0
        %8104 = vmatpush1.bf16.msra.mxu0 %v8038
        %8105 = vmatprep.subr.bf16.mxu0 0
        %8106 = vmatpush1.bf16.msra.mxu0 0
        %8107 = vmatprep.subr.bf16.mxu0 0
        %8108 = vmatpush1.bf16.msra.mxu0 0
        %8109 = vmatprep.subr.bf16.mxu0 0
        %8110 = vmatpush1.bf16.msra.mxu0 0
        %8111 = vmatprep.subr.bf16.mxu0 0
        %8112 = vmatpush1.bf16.msra.mxu0 0
        %8113 = vmatprep.subr.bf16.mxu0 0
        %8114 = vmatpush1.bf16.msra.mxu0 0
        %8115 = vmatprep.subr.bf16.mxu0 0
        %8116 = vmatpush1.bf16.msra.mxu0 0
        %8117 = vmatprep.subr.bf16.mxu0 0
        %8118 = vmatpush1.bf16.msra.mxu0 0
        %8119 = vmatprep.subr.bf16.mxu0 0
        %8120 = vmatpush1.bf16.msra.mxu0 0
        %8121 = vmatprep.subr.bf16.mxu0 0
        %8122 = vmatpush1.bf16.msra.mxu0 0
        %8123 = vmatprep.subr.bf16.mxu0 0
        %8124 = vmatpush1.bf16.msra.mxu0 0
        %8125 = vmatprep.mubr.bf16.mxu0 0
        %8126 = vmatmul.mubr.bf16.gmra.mrb[0].mxu0 %v8046
        %v8127 = vpop.f32.mrb[0].mxu0
        %v8128 = vadd.f32 0.0, %v8127
        %v8129 = vpop.f32.mrb[0].mxu0
        %v8130 = vpop.f32.mrb[0].mxu0
        %v8131 = vadd.f32 0.0, %v8130
        %v8132 = vpop.f32.mrb[0].mxu0
        %8133 = vmatprep.mubr.bf16.mxu0 0
        %8134 = vmatmul.mubr.bf16.gmra.mrb[0].mxu0 %v8049
        %v8135 = vpop.f32.mrb[0].mxu0
        %v8136 = vadd.f32 0.0, %v8135
        %v8137 = vpop.f32.mrb[0].mxu0
        %v8138 = vpop.f32.mrb[0].mxu0
        %v8139 = vadd.f32 0.0, %v8138
        %v8140 = vpop.f32.mrb[0].mxu0
        %8141 = vmatprep.mubr.bf16.mxu0 0
        %8142 = vmatmul.mubr.bf16.gmra.mrb[0].mxu0 %v8052
        %v8143 = vpop.f32.mrb[0].mxu0
        %v8144 = vadd.f32 0.0, %v8143
        %v8145 = vpop.f32.mrb[0].mxu0
        %v8146 = vpop.f32.mrb[0].mxu0
        %v8147 = vadd.f32 0.0, %v8146
        %v8148 = vpop.f32.mrb[0].mxu0
        %8149 = vmatprep.mubr.bf16.mxu0 0
        %8150 = vmatmul.mubr.bf16.gmra.mrb[0].mxu0 %v8055
        %v8151 = vpop.f32.mrb[0].mxu0
        %v8152 = vadd.f32 0.0, %v8151
        %v8153 = vpop.f32.mrb[0].mxu0
        %v8154 = vpop.f32.mrb[0].mxu0
        %v8155 = vadd.f32 0.0, %v8154
        %v8156 = vpop.f32.mrb[0].mxu0
        %8157 = vmatprep.mubr.bf16.mxu0 0
        %8158 = vmatmul.mubr.bf16.gmra.mrb[0].mxu0 %v8058
        %v8159 = vpop.f32.mrb[0].mxu0
        %v8160 = vadd.f32 0.0, %v8159
        %v8161 = vpop.f32.mrb[0].mxu0
        %v8162 = vpop.f32.mrb[0].mxu0
        %v8163 = vadd.f32 0.0, %v8162
        %v8164 = vpop.f32.mrb[0].mxu0
        %8165 = vmatprep.mubr.bf16.mxu0 0
        %8166 = vmatmul.mubr.bf16.gmra.mrb[0].mxu0 %v8061
        %v8167 = vpop.f32.mrb[0].mxu0
        %v8168 = vadd.f32 0.0, %v8167
        %v8169 = vpop.f32.mrb[0].mxu0
        %v8170 = vpop.f32.mrb[0].mxu0
        %v8171 = vadd.f32 0.0, %v8170
        %v8172 = vpop.f32.mrb[0].mxu0
        %8173 = vmatprep.mubr.bf16.mxu0 0
        %8174 = vmatmul.mubr.bf16.gmra.mrb[0].mxu0 %v8064
        %v8175 = vpop.f32.mrb[0].mxu0
        %v8176 = vadd.f32 0.0, %v8175
        %v8177 = vpop.f32.mrb[0].mxu0
        %v8178 = vpop.f32.mrb[0].mxu0
        %v8179 = vadd.f32 0.0, %v8178
        %v8180 = vpop.f32.mrb[0].mxu0
        %8181 = vmatprep.mubr.bf16.mxu0 0
        %8182 = vmatmul.mubr.bf16.gmra.mrb[0].mxu0 %v8067
        %v8183 = vpop.f32.mrb[0].mxu0
        %v8184 = vadd.f32 0.0, %v8183
        %v8185 = vpop.f32.mrb[0].mxu0
        %v8186 = vpop.f32.mrb[0].mxu0
        %v8187 = vadd.f32 0.0, %v8186
        %v8188 = vpop.f32.mrb[0].mxu0
        %8189 = vmatprep.mubr.bf16.mxu0 0
        %8190 = vmatmul.mubr.bf16.gmra.mrb[0].mxu0 %v8070
        %v8191 = vpop.f32.mrb[0].mxu0
        %v8192 = vadd.f32 0.0, %v8191
        %v8193 = vpop.f32.mrb[0].mxu0
        %v8194 = vpop.f32.mrb[0].mxu0
        %v8195 = vadd.f32 0.0, %v8194
        %v8196 = vpop.f32.mrb[0].mxu0
        %8197 = vmatprep.mubr.bf16.mxu0 0
        %8198 = vmatmul.mubr.bf16.gmra.mrb[0].mxu0 %v8073
        %v8199 = vpop.f32.mrb[0].mxu0
        %v8200 = vadd.f32 0.0, %v8199
        %v8201 = vpop.f32.mrb[0].mxu0
        %v8202 = vpop.f32.mrb[0].mxu0
        %v8203 = vadd.f32 0.0, %v8202
        %v8204 = vpop.f32.mrb[0].mxu0
        %8205 = vmatprep.mubr.bf16.mxu0 0
        %8206 = vmatmul.mubr.bf16.gmra.mrb[0].mxu0 %v8076
        %v8207 = vpop.f32.mrb[0].mxu0
        %v8208 = vadd.f32 0.0, %v8207
        %v8209 = vpop.f32.mrb[0].mxu0
        %v8210 = vpop.f32.mrb[0].mxu0
        %v8211 = vadd.f32 0.0, %v8210
        %v8212 = vpop.f32.mrb[0].mxu0
        %8213 = vmatprep.mubr.bf16.mxu0 0
        %8214 = vmatmul.mubr.bf16.gmra.mrb[0].mxu0 %v8079
        %v8215 = vpop.f32.mrb[0].mxu0
        %v8216 = vadd.f32 0.0, %v8215
        %v8217 = vpop.f32.mrb[0].mxu0
        %v8218 = vpop.f32.mrb[0].mxu0
        %v8219 = vadd.f32 0.0, %v8218
        %v8220 = vpop.f32.mrb[0].mxu0
        %8221 = vmatprep.mubr.bf16.mxu0 0
        %8222 = vmatmul.mubr.bf16.gmra.mrb[0].mxu0 %v8082
        %v8223 = vpop.f32.mrb[0].mxu0
        %v8224 = vadd.f32 0.0, %v8223
        %v8225 = vpop.f32.mrb[0].mxu0
        %v8226 = vpop.f32.mrb[0].mxu0
        %v8227 = vadd.f32 0.0, %v8226
        %v8228 = vpop.f32.mrb[0].mxu0
        %8229 = vmatprep.mubr.bf16.mxu0 0
        %8230 = vmatmul.mubr.bf16.gmra.mrb[0].mxu0 %v8085
        %v8231 = vpop.f32.mrb[0].mxu0
        %v8232 = vadd.f32 0.0, %v8231
        %v8233 = vpop.f32.mrb[0].mxu0
        %v8234 = vpop.f32.mrb[0].mxu0
        %v8235 = vadd.f32 0.0, %v8234
        %v8236 = vpop.f32.mrb[0].mxu0
        %8237 = vmatprep.mubr.bf16.mxu0 0
        %8238 = vmatmul.mubr.bf16.gmra.mrb[0].mxu0 %v8088
        %v8239 = vpop.f32.mrb[0].mxu0
        %v8240 = vadd.f32 0.0, %v8239
        %v8241 = vpop.f32.mrb[0].mxu0
        %v8242 = vpop.f32.mrb[0].mxu0
        %v8243 = vadd.f32 0.0, %v8242
        %v8244 = vpop.f32.mrb[0].mxu0
        %8245 = vmatprep.mubr.bf16.mxu0 0
        %8246 = vmatmul.mubr.bf16.gmra.mrb[0].mxu0 %v8091
        %v8247 = vpop.f32.mrb[0].mxu0
        %v8248 = vadd.f32 0.0, %v8247
        %v8249 = vpop.f32.mrb[0].mxu0
        %v8250 = vpop.f32.mrb[0].mxu0
        %v8251 = vadd.f32 0.0, %v8250
        %v8252 = vpop.f32.mrb[0].mxu0
        %8253 = vdwg.mxu0
        %v8266 = vunpack.c.l.b16 %v7462
        %v8267 = vunpack.c.l.b16 %v7463
        %v8268 = vunpack.c.l.b16 %v7464
        %v8269 = vunpack.c.l.b16 %v7465
        %v8270 = vunpack.c.l.b16 %v7466
        %v8271 = vunpack.c.l.b16 %v7467
        %v8272 = vunpack.c.l.b16 %v7468
        %v8273 = vunpack.c.l.b16 %v7469
        %v8274 = vunpack.c.l.b16 %v7470
        %v8275 = vunpack.c.l.b16 %v7471
        %v8276 = vunpack.c.l.b16 %v7472
        %v8277 = vunpack.c.l.b16 %v7473
        %v8278 = vpack.c.b16 %v8267, %v8266
        %v8279 = vpack.c.b16 %v8269, %v8268
        %v8280 = vpack.c.b16 %v8271, %v8270
        %v8281 = vpack.c.b16 %v8273, %v8272
        %v8282 = vpack.c.b16 %v8275, %v8274
        %v8283 = vpack.c.b16 %v8277, %v8276
        %v8291 = vsel %vm2398, %v7963, 0
        %8293 = vmatprep.subr.bf16.mxu0 0
        %8294 = vmatpush1.bf16.msra.mxu0 %v8278
        %8295 = vmatprep.subr.bf16.mxu0 0
        %8296 = vmatpush1.bf16.msra.mxu0 %v8279
        %8297 = vmatprep.subr.bf16.mxu0 0
        %8298 = vmatpush1.bf16.msra.mxu0 %v8280
        %8299 = vmatprep.subr.bf16.mxu0 0
        %8300 = vmatpush1.bf16.msra.mxu0 %v8281
        %8301 = vmatprep.subr.bf16.mxu0 0
        %8302 = vmatpush1.bf16.msra.mxu0 %v8282
        %8303 = vmatprep.subr.bf16.mxu0 0
        %8304 = vmatpush1.bf16.msra.mxu0 %v8283
        %8305 = vmatprep.subr.bf16.mxu0 0
        %8306 = vmatpush1.bf16.msra.mxu0 0
        %8307 = vmatprep.subr.bf16.mxu0 0
        %8308 = vmatpush1.bf16.msra.mxu0 0
        %8309 = vmatprep.subr.bf16.mxu0 0
        %8310 = vmatpush1.bf16.msra.mxu0 0
        %8311 = vmatprep.subr.bf16.mxu0 0
        %8312 = vmatpush1.bf16.msra.mxu0 0
        %8313 = vmatprep.subr.bf16.mxu0 0
        %8314 = vmatpush1.bf16.msra.mxu0 0
        %8315 = vmatprep.subr.bf16.mxu0 0
        %8316 = vmatpush1.bf16.msra.mxu0 0
        %8317 = vmatprep.subr.bf16.mxu0 0
        %8318 = vmatpush1.bf16.msra.mxu0 0
        %8319 = vmatprep.subr.bf16.mxu0 0
        %8320 = vmatpush1.bf16.msra.mxu0 0
        %8321 = vmatprep.subr.bf16.mxu0 0
        %8322 = vmatpush1.bf16.msra.mxu0 0
        %8323 = vmatprep.subr.bf16.mxu0 0
        %8324 = vmatpush1.bf16.msra.mxu0 0
        %8325 = vmatprep.mubr.bf16.mxu0 0
        %8326 = vmatmul.mubr.bf16.gmra.mrb[0].mxu0 %v8291
        %v8327 = vpop.f32.mrb[0].mxu0
        %v8328 = vadd.f32 %v8128, %v8327
        %v8329 = vpop.f32.mrb[0].mxu0
        %v8330 = vpop.f32.mrb[0].mxu0
        %v8331 = vadd.f32 %v8131, %v8330
        %v8332 = vpop.f32.mrb[0].mxu0
        %8333 = vmatprep.mubr.bf16.mxu0 0
        %8334 = vmatmul.mubr.bf16.gmra.mrb[0].mxu0 %v8046
        %v8335 = vpop.f32.mrb[0].mxu0
        %v8336 = vadd.f32 %v8136, %v8335
        %v8337 = vpop.f32.mrb[0].mxu0
        %v8338 = vpop.f32.mrb[0].mxu0
        %v8339 = vadd.f32 %v8139, %v8338
        %v8340 = vpop.f32.mrb[0].mxu0
        %8341 = vmatprep.mubr.bf16.mxu0 0
        %8342 = vmatmul.mubr.bf16.gmra.mrb[0].mxu0 %v8049
        %v8343 = vpop.f32.mrb[0].mxu0
        %v8344 = vadd.f32 %v8144, %v8343
        %v8345 = vpop.f32.mrb[0].mxu0
        %v8346 = vpop.f32.mrb[0].mxu0
        %v8347 = vadd.f32 %v8147, %v8346
        %v8348 = vpop.f32.mrb[0].mxu0
        %8349 = vmatprep.mubr.bf16.mxu0 0
        %8350 = vmatmul.mubr.bf16.gmra.mrb[0].mxu0 %v8052
        %v8351 = vpop.f32.mrb[0].mxu0
        %v8352 = vadd.f32 %v8152, %v8351
        %v8353 = vpop.f32.mrb[0].mxu0
        %v8354 = vpop.f32.mrb[0].mxu0
        %v8355 = vadd.f32 %v8155, %v8354
        %v8356 = vpop.f32.mrb[0].mxu0
        %8357 = vmatprep.mubr.bf16.mxu0 0
        %8358 = vmatmul.mubr.bf16.gmra.mrb[0].mxu0 %v8055
        %v8359 = vpop.f32.mrb[0].mxu0
        %v8360 = vadd.f32 %v8160, %v8359
        %v8361 = vpop.f32.mrb[0].mxu0
        %v8362 = vpop.f32.mrb[0].mxu0
        %v8363 = vadd.f32 %v8163, %v8362
        %v8364 = vpop.f32.mrb[0].mxu0
        %8365 = vmatprep.mubr.bf16.mxu0 0
        %8366 = vmatmul.mubr.bf16.gmra.mrb[0].mxu0 %v8058
        %v8367 = vpop.f32.mrb[0].mxu0
        %v8368 = vadd.f32 %v8168, %v8367
        %v8369 = vpop.f32.mrb[0].mxu0
        %v8370 = vpop.f32.mrb[0].mxu0
        %v8371 = vadd.f32 %v8171, %v8370
        %v8372 = vpop.f32.mrb[0].mxu0
        %8373 = vmatprep.mubr.bf16.mxu0 0
        %8374 = vmatmul.mubr.bf16.gmra.mrb[0].mxu0 %v8061
        %v8375 = vpop.f32.mrb[0].mxu0
        %v8376 = vadd.f32 %v8176, %v8375
        %v8377 = vpop.f32.mrb[0].mxu0
        %v8378 = vpop.f32.mrb[0].mxu0
        %v8379 = vadd.f32 %v8179, %v8378
        %v8380 = vpop.f32.mrb[0].mxu0
        %8381 = vmatprep.mubr.bf16.mxu0 0
        %8382 = vmatmul.mubr.bf16.gmra.mrb[0].mxu0 %v8064
        %v8383 = vpop.f32.mrb[0].mxu0
        %v8384 = vadd.f32 %v8184, %v8383
        %v8385 = vpop.f32.mrb[0].mxu0
        %v8386 = vpop.f32.mrb[0].mxu0
        %v8387 = vadd.f32 %v8187, %v8386
        %v8388 = vpop.f32.mrb[0].mxu0
        %8389 = vmatprep.mubr.bf16.mxu0 0
        %8390 = vmatmul.mubr.bf16.gmra.mrb[0].mxu0 %v8067
        %v8391 = vpop.f32.mrb[0].mxu0
        %v8392 = vadd.f32 %v8192, %v8391
        %v8393 = vpop.f32.mrb[0].mxu0
        %v8394 = vpop.f32.mrb[0].mxu0
        %v8395 = vadd.f32 %v8195, %v8394
        %v8396 = vpop.f32.mrb[0].mxu0
        %8397 = vmatprep.mubr.bf16.mxu0 0
        %8398 = vmatmul.mubr.bf16.gmra.mrb[0].mxu0 %v8070
        %v8399 = vpop.f32.mrb[0].mxu0
        %v8400 = vadd.f32 %v8200, %v8399
        %v8401 = vpop.f32.mrb[0].mxu0
        %v8402 = vpop.f32.mrb[0].mxu0
        %v8403 = vadd.f32 %v8203, %v8402
        %v8404 = vpop.f32.mrb[0].mxu0
        %8405 = vmatprep.mubr.bf16.mxu0 0
        %8406 = vmatmul.mubr.bf16.gmra.mrb[0].mxu0 %v8073
        %v8407 = vpop.f32.mrb[0].mxu0
        %v8408 = vadd.f32 %v8208, %v8407
        %v8409 = vpop.f32.mrb[0].mxu0
        %v8410 = vpop.f32.mrb[0].mxu0
        %v8411 = vadd.f32 %v8211, %v8410
        %v8412 = vpop.f32.mrb[0].mxu0
        %8413 = vmatprep.mubr.bf16.mxu0 0
        %8414 = vmatmul.mubr.bf16.gmra.mrb[0].mxu0 %v8076
        %v8415 = vpop.f32.mrb[0].mxu0
        %v8416 = vadd.f32 %v8216, %v8415
        %v8417 = vpop.f32.mrb[0].mxu0
        %v8418 = vpop.f32.mrb[0].mxu0
        %v8419 = vadd.f32 %v8219, %v8418
        %v8420 = vpop.f32.mrb[0].mxu0
        %8421 = vmatprep.mubr.bf16.mxu0 0
        %8422 = vmatmul.mubr.bf16.gmra.mrb[0].mxu0 %v8079
        %v8423 = vpop.f32.mrb[0].mxu0
        %v8424 = vadd.f32 %v8224, %v8423
        %v8425 = vpop.f32.mrb[0].mxu0
        %v8426 = vpop.f32.mrb[0].mxu0
        %v8427 = vadd.f32 %v8227, %v8426
        %v8428 = vpop.f32.mrb[0].mxu0
        %8429 = vmatprep.mubr.bf16.mxu0 0
        %8430 = vmatmul.mubr.bf16.gmra.mrb[0].mxu0 %v8082
        %v8431 = vpop.f32.mrb[0].mxu0
        %v8432 = vadd.f32 %v8232, %v8431
        %v8433 = vpop.f32.mrb[0].mxu0
        %v8434 = vpop.f32.mrb[0].mxu0
        %v8435 = vadd.f32 %v8235, %v8434
        %v8436 = vpop.f32.mrb[0].mxu0
        %8437 = vmatprep.mubr.bf16.mxu0 0
        %8438 = vmatmul.mubr.bf16.gmra.mrb[0].mxu0 %v8085
        %v8439 = vpop.f32.mrb[0].mxu0
        %v8440 = vadd.f32 %v8240, %v8439
        %v8441 = vpop.f32.mrb[0].mxu0
        %v8442 = vpop.f32.mrb[0].mxu0
        %v8443 = vadd.f32 %v8243, %v8442
        %v8444 = vpop.f32.mrb[0].mxu0
        %8445 = vmatprep.mubr.bf16.mxu0 0
        %8446 = vmatmul.mubr.bf16.gmra.mrb[0].mxu0 %v8088
        %v8447 = vpop.f32.mrb[0].mxu0
        %v8448 = vadd.f32 %v8248, %v8447
        %v8449 = vpop.f32.mrb[0].mxu0
        %v8450 = vpop.f32.mrb[0].mxu0
        %v8451 = vadd.f32 %v8251, %v8450
        %v8452 = vpop.f32.mrb[0].mxu0
        %8453 = vdwg.mxu0
        %v8457 = vrot.slane %v7459, 1
        %v8458 = vrot.slane %v7460, 1
        %v8459 = vsel %vm564, %v8457, %v8458
        %v8460 = vrot.slane %v7461, 1
        %v8461 = vsel %vm564, %v8458, %v8460
        %8462 = vrot.lane.b32.xlu0 %v8459, 32
        %v8463 = vpop.permute.xlu0 %8462
        %8464 = vrot.lane.b32.xlu0 %v8461, 32
        %v8465 = vpop.permute.xlu0 %8464
        %v8468 = vrot.slane %v7459, 2
        %v8469 = vrot.slane %v7460, 2
        %v8470 = vsel %vm741, %v8468, %v8469
        %v8471 = vrot.slane %v7461, 2
        %v8472 = vsel %vm741, %v8469, %v8471
        %8473 = vrot.lane.b32.xlu0 %v8470, 64
        %v8474 = vpop.permute.xlu0 %8473
        %8475 = vrot.lane.b32.xlu0 %v8472, 64
        %v8476 = vpop.permute.xlu0 %8475
        %v8479 = vsel %vm334, %v7459, %v8463
        %v8480 = vsel %vm334, %v7460, %v8465
        %v8481 = vsel %vm2283, %v8479, %v8474
        %v8482 = vsel %vm2283, %v8480, %v8476
        %v8483 = vpack.c.bf16 %v8482, %v8481
        %v8496 = vunpack.c.l.b16 %v7486
        %v8497 = vunpack.c.l.b16 %v7487
        %v8498 = vunpack.c.l.b16 %v7488
        %v8499 = vunpack.c.l.b16 %v7489
        %v8500 = vunpack.c.l.b16 %v7490
        %v8501 = vunpack.c.l.b16 %v7491
        %v8502 = vunpack.c.l.b16 %v7492
        %v8503 = vunpack.c.l.b16 %v7493
        %v8504 = vunpack.c.l.b16 %v7494
        %v8505 = vunpack.c.l.b16 %v7495
        %v8506 = vunpack.c.l.b16 %v7496
        %v8507 = vunpack.c.l.b16 %v7497
        %v8508 = vpack.c.b16 %v8497, %v8496
        %v8509 = vpack.c.b16 %v8499, %v8498
        %v8510 = vpack.c.b16 %v8501, %v8500
        %v8511 = vpack.c.b16 %v8503, %v8502
        %v8512 = vpack.c.b16 %v8505, %v8504
        %v8513 = vpack.c.b16 %v8507, %v8506
        %v8521 = vsel %vm2398, %v8483, 0
        %8523 = vmatprep.subr.bf16.mxu0 0
        %8524 = vmatpush1.bf16.msra.mxu0 %v8508
        %8525 = vmatprep.subr.bf16.mxu0 0
        %8526 = vmatpush1.bf16.msra.mxu0 %v8509
        %8527 = vmatprep.subr.bf16.mxu0 0
        %8528 = vmatpush1.bf16.msra.mxu0 %v8510
        %8529 = vmatprep.subr.bf16.mxu0 0
        %8530 = vmatpush1.bf16.msra.mxu0 %v8511
        %8531 = vmatprep.subr.bf16.mxu0 0
        %8532 = vmatpush1.bf16.msra.mxu0 %v8512
        %8533 = vmatprep.subr.bf16.mxu0 0
        %8534 = vmatpush1.bf16.msra.mxu0 %v8513
        %8535 = vmatprep.subr.bf16.mxu0 0
        %8536 = vmatpush1.bf16.msra.mxu0 0
        %8537 = vmatprep.subr.bf16.mxu0 0
        %8538 = vmatpush1.bf16.msra.mxu0 0
        %8539 = vmatprep.subr.bf16.mxu0 0
        %8540 = vmatpush1.bf16.msra.mxu0 0
        %8541 = vmatprep.subr.bf16.mxu0 0
        %8542 = vmatpush1.bf16.msra.mxu0 0
        %8543 = vmatprep.subr.bf16.mxu0 0
        %8544 = vmatpush1.bf16.msra.mxu0 0
        %8545 = vmatprep.subr.bf16.mxu0 0
        %8546 = vmatpush1.bf16.msra.mxu0 0
        %8547 = vmatprep.subr.bf16.mxu0 0
        %8548 = vmatpush1.bf16.msra.mxu0 0
        %8549 = vmatprep.subr.bf16.mxu0 0
        %8550 = vmatpush1.bf16.msra.mxu0 0
        %8551 = vmatprep.subr.bf16.mxu0 0
        %8552 = vmatpush1.bf16.msra.mxu0 0
        %8553 = vmatprep.subr.bf16.mxu0 0
        %8554 = vmatpush1.bf16.msra.mxu0 0
        %8555 = vmatprep.mubr.bf16.mxu0 0
        %8556 = vmatmul.mubr.bf16.gmra.mrb[0].mxu0 %v8049
        %v8557 = vpop.f32.mrb[0].mxu0
        %v8558 = vadd.f32 0.0, %v8557
        %v8559 = vpop.f32.mrb[0].mxu0
        %v8560 = vpop.f32.mrb[0].mxu0
        %v8561 = vadd.f32 0.0, %v8560
        %v8562 = vpop.f32.mrb[0].mxu0
        %8563 = vmatprep.mubr.bf16.mxu0 0
        %8564 = vmatmul.mubr.bf16.gmra.mrb[0].mxu0 %v8052
        %v8565 = vpop.f32.mrb[0].mxu0
        %v8566 = vadd.f32 0.0, %v8565
        %v8567 = vpop.f32.mrb[0].mxu0
        %v8568 = vpop.f32.mrb[0].mxu0
        %v8569 = vadd.f32 0.0, %v8568
        %v8570 = vpop.f32.mrb[0].mxu0
        %8571 = vmatprep.mubr.bf16.mxu0 0
        %8572 = vmatmul.mubr.bf16.gmra.mrb[0].mxu0 %v8055
        %v8573 = vpop.f32.mrb[0].mxu0
        %v8574 = vadd.f32 0.0, %v8573
        %v8575 = vpop.f32.mrb[0].mxu0
        %v8576 = vpop.f32.mrb[0].mxu0
        %v8577 = vadd.f32 0.0, %v8576
        %v8578 = vpop.f32.mrb[0].mxu0
        %8579 = vmatprep.mubr.bf16.mxu0 0
        %8580 = vmatmul.mubr.bf16.gmra.mrb[0].mxu0 %v8058
        %v8581 = vpop.f32.mrb[0].mxu0
        %v8582 = vadd.f32 0.0, %v8581
        %v8583 = vpop.f32.mrb[0].mxu0
        %v8584 = vpop.f32.mrb[0].mxu0
        %v8585 = vadd.f32 0.0, %v8584
        %v8586 = vpop.f32.mrb[0].mxu0
        %8587 = vmatprep.mubr.bf16.mxu0 0
        %8588 = vmatmul.mubr.bf16.gmra.mrb[0].mxu0 %v8061
        %v8589 = vpop.f32.mrb[0].mxu0
        %v8590 = vadd.f32 0.0, %v8589
        %v8591 = vpop.f32.mrb[0].mxu0
        %v8592 = vpop.f32.mrb[0].mxu0
        %v8593 = vadd.f32 0.0, %v8592
        %v8594 = vpop.f32.mrb[0].mxu0
        %8595 = vmatprep.mubr.bf16.mxu0 0
        %8596 = vmatmul.mubr.bf16.gmra.mrb[0].mxu0 %v8064
        %v8597 = vpop.f32.mrb[0].mxu0
        %v8598 = vadd.f32 0.0, %v8597
        %v8599 = vpop.f32.mrb[0].mxu0
        %v8600 = vpop.f32.mrb[0].mxu0
        %v8601 = vadd.f32 0.0, %v8600
        %v8602 = vpop.f32.mrb[0].mxu0
        %8603 = vmatprep.mubr.bf16.mxu0 0
        %8604 = vmatmul.mubr.bf16.gmra.mrb[0].mxu0 %v8067
        %v8605 = vpop.f32.mrb[0].mxu0
        %v8606 = vadd.f32 0.0, %v8605
        %v8607 = vpop.f32.mrb[0].mxu0
        %v8608 = vpop.f32.mrb[0].mxu0
        %v8609 = vadd.f32 0.0, %v8608
        %v8610 = vpop.f32.mrb[0].mxu0
        %8611 = vmatprep.mubr.bf16.mxu0 0
        %8612 = vmatmul.mubr.bf16.gmra.mrb[0].mxu0 %v8070
        %v8613 = vpop.f32.mrb[0].mxu0
        %v8614 = vadd.f32 0.0, %v8613
        %v8615 = vpop.f32.mrb[0].mxu0
        %v8616 = vpop.f32.mrb[0].mxu0
        %v8617 = vadd.f32 0.0, %v8616
        %v8618 = vpop.f32.mrb[0].mxu0
        %8619 = vmatprep.mubr.bf16.mxu0 0
        %8620 = vmatmul.mubr.bf16.gmra.mrb[0].mxu0 %v8073
        %v8621 = vpop.f32.mrb[0].mxu0
        %v8622 = vadd.f32 0.0, %v8621
        %v8623 = vpop.f32.mrb[0].mxu0
        %v8624 = vpop.f32.mrb[0].mxu0
        %v8625 = vadd.f32 0.0, %v8624
        %v8626 = vpop.f32.mrb[0].mxu0
        %8627 = vmatprep.mubr.bf16.mxu0 0
        %8628 = vmatmul.mubr.bf16.gmra.mrb[0].mxu0 %v8076
        %v8629 = vpop.f32.mrb[0].mxu0
        %v8630 = vadd.f32 0.0, %v8629
        %v8631 = vpop.f32.mrb[0].mxu0
        %v8632 = vpop.f32.mrb[0].mxu0
        %v8633 = vadd.f32 0.0, %v8632
        %v8634 = vpop.f32.mrb[0].mxu0
        %8635 = vmatprep.mubr.bf16.mxu0 0
        %8636 = vmatmul.mubr.bf16.gmra.mrb[0].mxu0 %v8079
        %v8637 = vpop.f32.mrb[0].mxu0
        %v8638 = vadd.f32 0.0, %v8637
        %v8639 = vpop.f32.mrb[0].mxu0
        %v8640 = vpop.f32.mrb[0].mxu0
        %v8641 = vadd.f32 0.0, %v8640
        %v8642 = vpop.f32.mrb[0].mxu0
        %8643 = vmatprep.mubr.bf16.mxu0 0
        %8644 = vmatmul.mubr.bf16.gmra.mrb[0].mxu0 %v8082
        %v8645 = vpop.f32.mrb[0].mxu0
        %v8646 = vadd.f32 0.0, %v8645
        %v8647 = vpop.f32.mrb[0].mxu0
        %v8648 = vpop.f32.mrb[0].mxu0
        %v8649 = vadd.f32 0.0, %v8648
        %v8650 = vpop.f32.mrb[0].mxu0
        %8651 = vmatprep.mubr.bf16.mxu0 0
        %8652 = vmatmul.mubr.bf16.gmra.mrb[0].mxu0 %v8085
        %v8653 = vpop.f32.mrb[0].mxu0
        %v8654 = vadd.f32 0.0, %v8653
        %v8655 = vpop.f32.mrb[0].mxu0
        %v8656 = vpop.f32.mrb[0].mxu0
        %v8657 = vadd.f32 0.0, %v8656
        %v8658 = vpop.f32.mrb[0].mxu0
        %8659 = vmatprep.mubr.bf16.mxu0 0
        %8660 = vmatmul.mubr.bf16.gmra.mrb[0].mxu0 %v8088
        %v8661 = vpop.f32.mrb[0].mxu0
        %v8662 = vadd.f32 0.0, %v8661
        %v8663 = vpop.f32.mrb[0].mxu0
        %v8664 = vpop.f32.mrb[0].mxu0
        %v8665 = vadd.f32 0.0, %v8664
        %v8666 = vpop.f32.mrb[0].mxu0
        %8667 = vmatprep.mubr.bf16.mxu0 0
        %8668 = vmatmul.mubr.bf16.gmra.mrb[0].mxu0 %v8091
        %v8669 = vpop.f32.mrb[0].mxu0
        %v8670 = vadd.f32 0.0, %v8669
        %v8671 = vpop.f32.mrb[0].mxu0
        %v8672 = vpop.f32.mrb[0].mxu0
        %v8673 = vadd.f32 0.0, %v8672
        %v8674 = vpop.f32.mrb[0].mxu0
        %8675 = vmatprep.mubr.bf16.mxu0 0
        %8676 = vmatmul.mubr.bf16.gmra.mrb[0].mxu0 %v8521
        %v8677 = vpop.f32.mrb[0].mxu0
        %v8678 = vadd.f32 0.0, %v8677
        %v8679 = vpop.f32.mrb[0].mxu0
        %v8680 = vpop.f32.mrb[0].mxu0
        %v8681 = vadd.f32 0.0, %v8680
        %v8682 = vpop.f32.mrb[0].mxu0
        %8683 = vdwg.mxu0
        %v8684 = vadd.f32 %v8328, %v8558
        %v8685 = vadd.f32 %v8331, %v8561
        %v8686 = vadd.f32 %v8336, %v8566
        %v8687 = vadd.f32 %v8339, %v8569
        %v8688 = vadd.f32 %v8344, %v8574
        %v8689 = vadd.f32 %v8347, %v8577
        %v8690 = vadd.f32 %v8352, %v8582
        %v8691 = vadd.f32 %v8355, %v8585
        %v8692 = vadd.f32 %v8360, %v8590
        %v8693 = vadd.f32 %v8363, %v8593
        %v8694 = vadd.f32 %v8368, %v8598
        %v8695 = vadd.f32 %v8371, %v8601
        %v8696 = vadd.f32 %v8376, %v8606
        %v8697 = vadd.f32 %v8379, %v8609
        %v8698 = vadd.f32 %v8384, %v8614
        %v8699 = vadd.f32 %v8387, %v8617
        %v8700 = vadd.f32 %v8392, %v8622
        %v8701 = vadd.f32 %v8395, %v8625
        %v8702 = vadd.f32 %v8400, %v8630
        %v8703 = vadd.f32 %v8403, %v8633
        %v8704 = vadd.f32 %v8408, %v8638
        %v8705 = vadd.f32 %v8411, %v8641
        %v8706 = vadd.f32 %v8416, %v8646
        %v8707 = vadd.f32 %v8419, %v8649
        %v8708 = vadd.f32 %v8424, %v8654
        %v8709 = vadd.f32 %v8427, %v8657
        %v8710 = vadd.f32 %v8432, %v8662
        %v8711 = vadd.f32 %v8435, %v8665
        %v8712 = vadd.f32 %v8440, %v8670
        %v8713 = vadd.f32 %v8443, %v8673
        %v8714 = vadd.f32 %v8448, %v8678
        %v8715 = vadd.f32 %v8451, %v8681
        %v8717 = vlaneseq
        %v8718 = vshrl.u32 %v8717, 7
        %v8719 = vsub.s32 0, %v8718
        %v8720 = vrot.slane %v7498, %v8719
        %v8722 = vadd.f32 %v8684, %v8720
        %v8723 = vadd.f32 %v8685, %v8720
        %v8724 = vadd.f32 %v8686, %v8720
        %v8725 = vadd.f32 %v8687, %v8720
        %v8726 = vadd.f32 %v8688, %v8720
        %v8727 = vadd.f32 %v8689, %v8720
        %v8728 = vadd.f32 %v8690, %v8720
        %v8729 = vadd.f32 %v8691, %v8720
        %v8730 = vadd.f32 %v8692, %v8720
        %v8731 = vadd.f32 %v8693, %v8720
        %v8732 = vadd.f32 %v8694, %v8720
        %v8733 = vadd.f32 %v8695, %v8720
        %v8734 = vadd.f32 %v8696, %v8720
        %v8735 = vadd.f32 %v8697, %v8720
        %v8736 = vadd.f32 %v8698, %v8720
        %v8737 = vadd.f32 %v8699, %v8720
        %v8738 = vadd.f32 %v8700, %v8720
        %v8739 = vadd.f32 %v8701, %v8720
        %v8740 = vadd.f32 %v8702, %v8720
        %v8741 = vadd.f32 %v8703, %v8720
        %v8742 = vadd.f32 %v8704, %v8720
        %v8743 = vadd.f32 %v8705, %v8720
        %v8744 = vadd.f32 %v8706, %v8720
        %v8745 = vadd.f32 %v8707, %v8720
        %v8746 = vadd.f32 %v8708, %v8720
        %v8747 = vadd.f32 %v8709, %v8720
        %v8748 = vadd.f32 %v8710, %v8720
        %v8749 = vadd.f32 %v8711, %v8720
        %v8750 = vadd.f32 %v8712, %v8720
        %v8751 = vadd.f32 %v8713, %v8720
        %v8752 = vadd.f32 %v8714, %v8720
        %v8753 = vadd.f32 %v8715, %v8720
        %v8754 = vadd.f32 %v8722, %v1695
        %v8755 = vadd.f32 %v8723, %v1696
        %v8756 = vadd.f32 %v8724, %v1697
        %v8757 = vadd.f32 %v8725, %v1698
        %v8758 = vadd.f32 %v8726, %v1699
        %v8759 = vadd.f32 %v8727, %v1700
        %v8760 = vadd.f32 %v8728, %v1701
        %v8761 = vadd.f32 %v8729, %v1702
        %v8762 = vadd.f32 %v8730, %v1703
        %v8763 = vadd.f32 %v8731, %v1704
        %v8764 = vadd.f32 %v8732, %v1705
        %v8765 = vadd.f32 %v8733, %v1706
        %v8766 = vadd.f32 %v8734, %v1707
        %v8767 = vadd.f32 %v8735, %v1708
        %v8768 = vadd.f32 %v8736, %v1709
        %v8769 = vadd.f32 %v8737, %v1710
        %v8770 = vadd.f32 %v8738, %v1711
        %v8771 = vadd.f32 %v8739, %v1712
        %v8772 = vadd.f32 %v8740, %v1713
        %v8773 = vadd.f32 %v8741, %v1714
        %v8774 = vadd.f32 %v8742, %v1715
        %v8775 = vadd.f32 %v8743, %v1716
        %v8776 = vadd.f32 %v8744, %v1717
        %v8777 = vadd.f32 %v8745, %v1718
        %v8778 = vadd.f32 %v8746, %v1719
        %v8779 = vadd.f32 %v8747, %v1720
        %v8780 = vadd.f32 %v8748, %v1721
        %v8781 = vadd.f32 %v8749, %v1722
        %v8782 = vadd.f32 %v8750, %v1723
        %v8783 = vadd.f32 %v8751, %v1724
        %v8784 = vadd.f32 %v8752, %v1725
        %v8785 = vadd.f32 %v8753, %v1726
        %8786 = vst.msk [vmem:[%s271] sm:$0xff] %vm334, %v8754
        %8787 = vst.msk [vmem:[%s271 + $0x8] sm:$0xff] %vm334, %v8755
        %8788 = vst.msk [vmem:[%s271 + $0x10] sm:$0xff] %vm334, %v8756
        %8789 = vst.msk [vmem:[%s271 + $0x18] sm:$0xff] %vm334, %v8757
        %8790 = vst.msk [vmem:[%s271 + $0x20] sm:$0xff] %vm334, %v8758
        %8791 = vst.msk [vmem:[%s271 + $0x28] sm:$0xff] %vm334, %v8759
        %8792 = vst.msk [vmem:[%s271 + $0x30] sm:$0xff] %vm334, %v8760
        %8793 = vst.msk [vmem:[%s271 + $0x38] sm:$0xff] %vm334, %v8761
        %8794 = vst.msk [vmem:[%s271 + $0x40] sm:$0xff] %vm334, %v8762
        %8795 = vst.msk [vmem:[%s271 + $0x48] sm:$0xff] %vm334, %v8763
        %8796 = vst.msk [vmem:[%s271 + $0x50] sm:$0xff] %vm334, %v8764
        %8797 = vst.msk [vmem:[%s271 + $0x58] sm:$0xff] %vm334, %v8765
        %8798 = vst.msk [vmem:[%s271 + $0x60] sm:$0xff] %vm334, %v8766
        %8799 = vst.msk [vmem:[%s271 + $0x68] sm:$0xff] %vm334, %v8767
        %8800 = vst.msk [vmem:[%s271 + $0x70] sm:$0xff] %vm334, %v8768
        %8801 = vst.msk [vmem:[%s271 + $0x78] sm:$0xff] %vm334, %v8769
        %8802 = vst.msk [vmem:[%s271 + $0x80] sm:$0xff] %vm334, %v8770
        %8803 = vst.msk [vmem:[%s271 + $0x88] sm:$0xff] %vm334, %v8771
        %8804 = vst.msk [vmem:[%s271 + $0x90] sm:$0xff] %vm334, %v8772
        %8805 = vst.msk [vmem:[%s271 + $0x98] sm:$0xff] %vm334, %v8773
        %8806 = vst.msk [vmem:[%s271 + $0xa0] sm:$0xff] %vm334, %v8774
        %8807 = vst.msk [vmem:[%s271 + $0xa8] sm:$0xff] %vm334, %v8775
        %8808 = vst.msk [vmem:[%s271 + $0xb0] sm:$0xff] %vm334, %v8776
        %8809 = vst.msk [vmem:[%s271 + $0xb8] sm:$0xff] %vm334, %v8777
        %8810 = vst.msk [vmem:[%s271 + $0xc0] sm:$0xff] %vm334, %v8778
        %8811 = vst.msk [vmem:[%s271 + $0xc8] sm:$0xff] %vm334, %v8779
        %8812 = vst.msk [vmem:[%s271 + $0xd0] sm:$0xff] %vm334, %v8780
        %8813 = vst.msk [vmem:[%s271 + $0xd8] sm:$0xff] %vm334, %v8781
        %8814 = vst.msk [vmem:[%s271 + $0xe0] sm:$0xff] %vm334, %v8782
        %8815 = vst.msk [vmem:[%s271 + $0xe8] sm:$0xff] %vm334, %v8783
        %8816 = vst.msk [vmem:[%s271 + $0xf0] sm:$0xff] %vm334, %v8784
        %8817 = vst.msk [vmem:[%s271 + $0xf8] sm:$0xff] %vm334, %v8785
        %s8818 = sand.u32 %s181, 1
        %s8819 = scalar_lea.sflag [#allocation5], %s8818
        %s8820 = sand.u32 %s181, 1
        %s8821 = smul.addr %s8820, 256
        %s8822 = scalar_lea.vmem [#allocation4], %s8821
        // Predicated region
        $region49: #{tpu_custom_call.1} parent=47 // pred_check
          %p8823 = pneg %p191
        $region50: #{tpu_custom_call.1} parent=47 // pred_check_branch
          %8825 = sbr.rel (%p8823) target = $region52
        $region51: #{tpu_custom_call.1} parent=47 // pred_region
          %s8827 = ssub.s32 4096, 4096
          %8828 = vsyncadd %s8819, %s8827
          %s8829 = smul.addr %s21, 32
          %s8830 = smul.addr %s8829, 128
          %s8831 = scalar_lea.hbm %s7, %s8830
          %s8832 = sshll.u32 %s8822, 4
          %s8833 = int_to_ptr.vmem [resolvable:$true] %s8832
          %8838 = dma.vmem_to_hbm [thread:$0]  %s8833, 4096, %s8831, %s8819, 128, 128, 8
        $region52: #{tpu_custom_call.1} parent=47 // pred_fallthru
          _
      $region48: #{tpu_custom_call.1} parent=5 // pred_fallthru
        _
      %p8839 = scmp.le.s32.totalorder 2, %s16
      // Predicated region
      $region53: #{tpu_custom_call.1} parent=5 // pred_check
        %p8840 = pneg %p8839
      $region54: #{tpu_custom_call.1} parent=5 // pred_check_branch
        %8842 = sbr.rel (%p8840) target = $region56
      $region55: #{tpu_custom_call.1} parent=5 // pred_region
        %s8843 = ssub.s32 %s16, 2
        // Predicated region
        $region57: #{tpu_custom_call.1} parent=55 // pred_check
          %p8844 = pneg %p197
        $region58: #{tpu_custom_call.1} parent=55 // pred_check_branch
          %8846 = sbr.rel (%p8844) target = $region60
        $region59: #{tpu_custom_call.1} parent=55 // pred_region
          %s8847 = sand.u32 %s182, 1
          %s8848 = scalar_lea.sflag [#allocation5], %s8847
          %s8849 = sand.u32 %s182, 1
          %s8850 = smul.addr %s8849, 256
          %s8851 = scalar_lea.vmem [#allocation4], %s8850
          %8852 = dma.done %s8848, 4096
        $region60: #{tpu_custom_call.1} parent=55 // pred_fallthru
          _
      $region56: #{tpu_custom_call.1} parent=5 // pred_fallthru
        _
    $region6: #{tpu_custom_call.1} parent=1 // loop_footer
      %s20 = sadd.s32 1, %s16
    $region7: #{tpu_custom_call.1} parent=1 // loop_footer_branch
      %15 = sbr.rel target = $region3
    $region8: #{tpu_custom_call.1} parent=1 // loop_exit
      _
    %8853 = vsyncpa [#allocation5], 1
    %s8854 = scalar_lea.sflag [#allocation5], 1
    %8855 = vsyncpa %s8854, 1

</llo_original>
